<compile_context>
chip_gen: v5e
topology: v5e:2x2
jax: 0.10.0
libtpu: 0.0.40
codegen_flags: <defaults>
</compile_context>

<pallas_src>
import functools

import numpy as np
import jax
import jax.numpy as jnp
from jax import lax
from jax.experimental import pallas as pl
from jax.experimental.pallas import tpu as pltpu


# ----------------------------- Pallas kernels ------------------------------

def _convT_kernel(x_ref, w_ref, b_ref, o_ref):
    """ConvTranspose2d(k=2, s=2) as one matmul per image.

    x_ref: (1, H*W, Cin) bf16; w_ref: (Cin, 4*Cout) bf16 (taps packed (dy,dx)-major in lanes);
    b_ref: (1, 4*Cout) f32;    o_ref: (1, H*W, 4*Cout) bf16 ("block" layout; the wrapper does
    the depth-to-space interleave with a single reshape/transpose).
    """
    y = jnp.dot(x_ref[0], w_ref[...], preferred_element_type=jnp.float32) + b_ref[...]
    o_ref[0] = y.astype(o_ref.dtype)


def _conv3x3_body(x2d, w_ref, scale_ref, shift_ref, o_ref, xpad_ref, H, W):
    """3x3 conv (pad=1) + fused bias/BN/ReLU epilogue on one (H*W, Cin) image slab.

    The slab is staged into a VMEM scratch zero-padded by one image row on each side; each of
    the 9 taps is then a row-shifted (H*W, Cin) x (Cin, Cout) slab matmul (bf16 in, f32 acc).
    Column wrap-around of the dx=0 / dx=2 taps is zeroed with an iota mask.
    """
    M = H * W
    Cout = o_ref.shape[-1]

    xpad_ref[...] = jnp.zeros_like(xpad_ref)
    xpad_ref[pl.ds(W + 1, M), :] = x2d.astype(xpad_ref.dtype)

    col = lax.broadcasted_iota(jnp.int32, (M, 1), 0) % W
    not_left = col != 0
    not_right = col != (W - 1)

    acc = jnp.zeros((M, Cout), jnp.float32)
    for dy in range(3):
        for dx in range(3):
            patch = xpad_ref[pl.ds(dy * W + dx, M), :]          # (M, Cin) f32
            if dx == 0:
                patch = jnp.where(not_left, patch, 0.0)
            elif dx == 2:
                patch = jnp.where(not_right, patch, 0.0)
            acc = acc + jnp.dot(patch.astype(jnp.bfloat16), w_ref[dy, dx],
                                preferred_element_type=jnp.float32)

    y = jnp.maximum(acc * scale_ref[...] + shift_ref[...], 0.0)   # fused bias + BN + ReLU
    o_ref[0] = y.astype(o_ref.dtype)


def _conv3x3_fused_kernel(x_ref, w_ref, scale_ref, shift_ref, o_ref, xpad_ref, *, H, W):
    _conv3x3_body(x_ref[0], w_ref, scale_ref, shift_ref, o_ref, xpad_ref, H, W)


def _conv3x3_fused_add_kernel(a_ref, b_ref, w_ref, scale_ref, shift_ref, o_ref, xpad_ref, *,
                              H, W):
    x2d = a_ref[0].astype(jnp.float32) + b_ref[0].astype(jnp.float32)   # fused skip add
    _conv3x3_body(x2d, w_ref, scale_ref, shift_ref, o_ref, xpad_ref, H, W)


# ----------------------------- Pallas wrappers ------------------------------

def convT_blocks(x1f, wcat, bcat):
    """x1f: (N, H*W, Cin) bf16 -> (N, H*W, 4*Cout) bf16 (the 4 taps live in the lane dim)."""
    N, M, Cin = x1f.shape
    C4 = wcat.shape[-1]
    return pl.pallas_call(
        _convT_kernel,
        out_shape=jax.ShapeDtypeStruct((N, M, C4), jnp.bfloat16),
        grid=(N,),
        in_specs=[
            pl.BlockSpec((1, M, Cin), lambda n: (n, 0, 0)),
            pl.BlockSpec((Cin, C4), lambda n: (0, 0)),
            pl.BlockSpec((1, C4), lambda n: (0, 0)),
        ],
        out_specs=pl.BlockSpec((1, M, C4), lambda n: (n, 0, 0)),
        compiler_params=pltpu.CompilerParams(dimension_semantics=("parallel",)),
    )(x1f, wcat, bcat)


def conv3x3_bn_relu(xf, w, scale, shift, *, W, skip=None, out_dtype=jnp.bfloat16):
    """Fused Conv3x3(pad=1) + bias + BN(eval) + ReLU (+ optional skip-add on the input).

    xf/skip: (N, H*W, Cin) bf16; w: (3, 3, Cin, Cout) bf16; scale/shift: (1, Cout) f32.
    """
    N, M, Cin = xf.shape
    H = M // W
    Cout = w.shape[-1]

    act_spec = pl.BlockSpec((1, M, Cin), lambda n: (n, 0, 0))
    other_specs = [
        pl.BlockSpec((3, 3, Cin, Cout), lambda n: (0, 0, 0, 0)),
        pl.BlockSpec((1, Cout), lambda n: (0, 0)),
        pl.BlockSpec((1, Cout), lambda n: (0, 0)),
    ]
    if skip is None:
        kernel = functools.partial(_conv3x3_fused_kernel, H=H, W=W)
        in_specs = [act_spec] + other_specs
        args = (xf, w, scale, shift)
    else:
        kernel = functools.partial(_conv3x3_fused_add_kernel, H=H, W=W)
        in_specs = [act_spec, act_spec] + other_specs
        args = (xf, skip, w, scale, shift)

    return pl.pallas_call(
        kernel,
        out_shape=jax.ShapeDtypeStruct((N, M, Cout), out_dtype),
        grid=(N,),
        in_specs=in_specs,
        out_specs=pl.BlockSpec((1, M, Cout), lambda n: (n, 0, 0)),
        scratch_shapes=[pltpu.VMEM((M + 2 * W + 2, Cin), jnp.float32)],
        compiler_params=pltpu.CompilerParams(dimension_semantics=("parallel",)),
    )(*args)


# ----------------------------- Up forward (Pallas path) ------------------------------

def up_pallas(x1_nchw, x2_nchw, p):
    """Up.forward(x1, x2): NCHW in / NCHW out, matching the PyTorch module."""
    x1 = jnp.transpose(x1_nchw, (0, 2, 3, 1)).astype(jnp.bfloat16)   # NHWC
    x2 = jnp.transpose(x2_nchw, (0, 2, 3, 1)).astype(jnp.bfloat16)
    N, H1, W1, Cin = x1.shape
    H, W = 2 * H1, 2 * W1
    Ct = p['wt'].shape[-1]                 # == Cin (ConvTranspose2d(in_c, in_c, 2, 2))

    # --- ConvTranspose2d(k=2, s=2): one matmul against the packed (Cin, 4*Ct) weight ---
    wcat = p['wt'].transpose(2, 0, 1, 3).reshape(Cin, 4 * Ct).astype(jnp.bfloat16)
    bcat = jnp.tile(p['bt'], 4).reshape(1, 4 * Ct).astype(jnp.float32)
    yblk = convT_blocks(x1.reshape(N, H1 * W1, Cin), wcat, bcat)
    # depth-to-space: (N, h, w, dy, dx, c) -> rows (2h+dy)*W + (2w+dx); pure layout glue.
    u1 = (yblk.reshape(N, H1, W1, 2, 2, Ct)
              .transpose(0, 1, 3, 2, 4, 5)
              .reshape(N, H * W, Ct))

    # --- DoubleConv with fused skip-add / bias / BN / ReLU ---
    s1, t1 = p['bn1']
    h = conv3x3_bn_relu(u1, p['w1'].astype(jnp.bfloat16),
                        s1.reshape(1, -1), (p['b1'] * s1 + t1).reshape(1, -1),
                        W=W, skip=x2.reshape(N, H * W, Ct), out_dtype=jnp.bfloat16)
    s2, t2 = p['bn2']
    h = conv3x3_bn_relu(h, p['w2'].astype(jnp.bfloat16),
                        s2.reshape(1, -1), (p['b2'] * s2 + t2).reshape(1, -1),
                        W=W, skip=None, out_dtype=jnp.float32)

    Cout = p['w2'].shape[-1]
    return jnp.transpose(h.reshape(N, H, W, Cout), (0, 3, 1, 2))     # NHWC -> NCHW


# ----------------------------- pure-JAX f32 reference ------------------------------

def _conv3x3_ref(x, w, b):
    return lax.conv_general_dilated(
        x, w, window_strides=(1, 1), padding='SAME',
        dimension_numbers=('NHWC', 'HWIO', 'NHWC'),
        precision=lax.Precision.HIGHEST) + b


def up_reference(x1_nchw, x2_nchw, p):
    x1 = jnp.transpose(x1_nchw, (0, 2, 3, 1))
    x2 = jnp.transpose(x2_nchw, (0, 2, 3, 1))
    N, H1, W1, _ = x1.shape
    Ct = p['wt'].shape[-1]
    # ConvTranspose2d(k=2, s=2): out[n, 2h+dy, 2w+dx, o] = sum_i x[n,h,w,i] * wt[dy,dx,i,o] + bt
    y = jnp.einsum('nhwi,yxio->nhywxo', x1, p['wt'], precision=lax.Precision.HIGHEST)
    y = y.reshape(N, 2 * H1, 2 * W1, Ct) + p['bt']
    u = y + x2
    s1, t1 = p['bn1']
    h = jnp.maximum(_conv3x3_ref(u, p['w1'], p['b1']) * s1 + t1, 0.0)
    s2, t2 = p['bn2']
    h = jnp.maximum(_conv3x3_ref(h, p['w2'], p['b2']) * s2 + t2, 0.0)
    return jnp.transpose(h, (0, 3, 1, 2))


# ----------------------------- deterministic parameter init ------------------------------

def init_bn(key, c):
    k1, k2, k3, k4 = jax.random.split(key, 4)
    gamma = 1.0 + 0.1 * jax.random.normal(k1, (c,), jnp.float32)
    beta = 0.1 * jax.random.normal(k2, (c,), jnp.float32)
    mean = 0.1 * jax.random.normal(k3, (c,), jnp.float32)
    var = 1.0 + 0.1 * jax.random.uniform(k4, (c,), jnp.float32)
    scale = gamma * lax.rsqrt(var + 1e-5)
    shift = beta - mean * scale
    return scale, shift


def init_conv(key, kh, kw, cin, cout):
    k1, k2 = jax.random.split(key)
    w = jax.random.normal(k1, (kh, kw, cin, cout), jnp.float32) / np.sqrt(kh * kw * cin)
    b = 0.05 * jax.random.normal(k2, (cout,), jnp.float32)
    return w, b


def init_up(key, in_c, out_c):
    ks = jax.random.split(key, 5)
    wt, bt = init_conv(ks[0], 2, 2, in_c, in_c)     # ConvTranspose2d(in_c, in_c, 2, 2)
    w1, b1 = init_conv(ks[1], 3, 3, in_c, out_c)
    bn1 = init_bn(ks[2], out_c)
    w2, b2 = init_conv(ks[3], 3, 3, out_c, out_c)
    bn2 = init_bn(ks[4], out_c)
    return dict(wt=wt, bt=bt, w1=w1, b1=b1, bn1=bn1, w2=w2, b2=b2, bn2=bn2)


# ----------------------------- main ------------------------------

if __name__ == "__main__":
    key = jax.random.PRNGKey(0)
    kp, ka, kb = jax.random.split(key, 3)

    in_c, out_c = 128, 64
    N, H1, W1 = 2, 8, 8                      # x1 spatial; x2 / output spatial is 2x
    params = init_up(kp, in_c, out_c)
    x1 = jax.random.normal(ka, (N, in_c, H1, W1), jnp.float32)
    x2 = jax.random.normal(kb, (N, in_c, 2 * H1, 2 * W1), jnp.float32)

    pallas_fwd = jax.jit(up_pallas)
    ref_fwd = jax.jit(up_reference)

    out = jax.block_until_ready(pallas_fwd(x1, x2, params))
    ref = jax.block_until_ready(ref_fwd(x1, x2, params))

    assert out.shape == (N, out_c, 2 * H1, 2 * W1)
    # bf16 MXU operands with f32 accumulation -> loosened absolute tolerance vs f32 reference.
    np.testing.assert_allclose(np.asarray(out), np.asarray(ref), rtol=5e-2, atol=4e-2)
    print("KERNEL_OK")
</pallas_src>

<mosaic_0001>
module attributes {stable_mosaic.version = 11 : i64} {
  func.func @_convT_kernel(%arg0: i32, %arg1: memref<1x64x128xbf16, #tpu.memory_space<vmem>>, %arg2: memref<128x512xbf16, #tpu.memory_space<vmem>>, %arg3: memref<1x512xf32, #tpu.memory_space<vmem>>, %arg4: memref<1x64x512xbf16, #tpu.memory_space<vmem>>) attributes {dimension_semantics = [#tpu.dimension_semantics<parallel>], iteration_bounds = array<i64: 2>, scalar_prefetch = 0 : i64, scratch_operands = 0 : i64, tpu.core_type = #tpu.core_type<tc>, window_params = [{transform_indices = @transform_0, window_bounds = array<i64: 1, 64, 128>}, {pipeline_mode = #tpu.pipeline_mode<synchronous>, transform_indices = @transform_1, window_bounds = array<i64: 128, 512>}, {pipeline_mode = #tpu.pipeline_mode<synchronous>, transform_indices = @transform_2, window_bounds = array<i64: 1, 512>}, {transform_indices = @transform_3, window_bounds = array<i64: 1, 64, 512>}]} {
    %c0 = arith.constant 0 : index
    %c0_0 = arith.constant 0 : index
    %c0_1 = arith.constant 0 : index
    %0 = vector.load %arg1[%c0, %c0_0, %c0_1] : memref<1x64x128xbf16, #tpu.memory_space<vmem>>, vector<1x64x128xbf16>
    %1 = vector.shape_cast %0 : vector<1x64x128xbf16> to vector<64x128xbf16>
    %c0_2 = arith.constant 0 : index
    %c0_3 = arith.constant 0 : index
    %2 = vector.load %arg2[%c0_2, %c0_3] : memref<128x512xbf16, #tpu.memory_space<vmem>>, vector<128x512xbf16>
    %cst = arith.constant dense<0.000000e+00> : vector<64x512xf32>
    %3 = tpu.matmul %1, %2, %cst {dimension_numbers = #tpu.dot_dimension_numbers<[1], [0], [0], [1], [0, 0, 1, 1], [], []>} : vector<64x128xbf16>, vector<128x512xbf16>, vector<64x512xf32> -> vector<64x512xf32>
    %c0_4 = arith.constant 0 : index
    %c0_5 = arith.constant 0 : index
    %4 = vector.load %arg3[%c0_4, %c0_5] : memref<1x512xf32, #tpu.memory_space<vmem>>, vector<1x512xf32>
    %5 = vector.broadcast %4 : vector<1x512xf32> to vector<64x512xf32>
    %6 = arith.addf %3, %5 : vector<64x512xf32>
    %7 = arith.truncf %6 : vector<64x512xf32> to vector<64x512xbf16>
    %c0_6 = arith.constant 0 : index
    %c0_7 = arith.constant 0 : index
    %c0_8 = arith.constant 0 : index
    %8 = vector.load %arg4[%c0_6, %c0_7, %c0_8] : memref<1x64x512xbf16, #tpu.memory_space<vmem>>, vector<1x64x512xbf16>
    %9 = vector.shape_cast %8 : vector<1x64x512xbf16> to vector<64x512xbf16>
    %10 = vector.shape_cast %7 : vector<64x512xbf16> to vector<1x64x512xbf16>
    tpu.vector_store %arg4[%c0_6, %c0_7, %c0_8], %10 {strides = array<i32>} : memref<1x64x512xbf16, #tpu.memory_space<vmem>>, vector<1x64x512xbf16>,
    return
  }
  func.func @transform_0(%arg0: i32) -> (i32, i32, i32) {
    %c0_i32 = arith.constant 0 : i32
    %c0_i32_0 = arith.constant 0 : i32
    %c0_i32_1 = arith.constant 0 : i32
    return %arg0, %c0_i32, %c0_i32_0 : i32, i32, i32
  }
  func.func @transform_1(%arg0: i32) -> (i32, i32) {
    %c0_i32 = arith.constant 0 : i32
    %c0_i32_0 = arith.constant 0 : i32
    %c0_i32_1 = arith.constant 0 : i32
    return %c0_i32, %c0_i32_0 : i32, i32
  }
  func.func @transform_2(%arg0: i32) -> (i32, i32) {
    %c0_i32 = arith.constant 0 : i32
    %c0_i32_0 = arith.constant 0 : i32
    %c0_i32_1 = arith.constant 0 : i32
    return %c0_i32, %c0_i32_0 : i32, i32
  }
  func.func @transform_3(%arg0: i32) -> (i32, i32, i32) {
    %c0_i32 = arith.constant 0 : i32
    %c0_i32_0 = arith.constant 0 : i32
    %c0_i32_1 = arith.constant 0 : i32
    return %arg0, %c0_i32, %c0_i32_0 : i32, i32, i32
  }
}

module attributes {stable_mosaic.version = 11 : i64} {
  func.func @_conv3x3_fused_add_kernel(%arg0: i32, %arg1: memref<1x256x128xbf16, #tpu.memory_space<vmem>>, %arg2: memref<1x256x128xbf16, #tpu.memory_space<vmem>>, %arg3: memref<3x3x128x64xbf16, #tpu.memory_space<vmem>>, %arg4: memref<1x64xf32, #tpu.memory_space<vmem>>, %arg5: memref<1x64xf32, #tpu.memory_space<vmem>>, %arg6: memref<1x256x64xbf16, #tpu.memory_space<vmem>>, %arg7: memref<290x128xf32, #tpu.memory_space<vmem>>) attributes {dimension_semantics = [#tpu.dimension_semantics<parallel>], iteration_bounds = array<i64: 2>, scalar_prefetch = 0 : i64, scratch_operands = 1 : i64, tpu.core_type = #tpu.core_type<tc>, window_params = [{transform_indices = @transform_0, window_bounds = array<i64: 1, 256, 128>}, {transform_indices = @transform_1, window_bounds = array<i64: 1, 256, 128>}, {pipeline_mode = #tpu.pipeline_mode<synchronous>, transform_indices = @transform_2, window_bounds = array<i64: 3, 3, 128, 64>}, {pipeline_mode = #tpu.pipeline_mode<synchronous>, transform_indices = @transform_3, window_bounds = array<i64: 1, 64>}, {pipeline_mode = #tpu.pipeline_mode<synchronous>, transform_indices = @transform_4, window_bounds = array<i64: 1, 64>}, {transform_indices = @transform_5, window_bounds = array<i64: 1, 256, 64>}]} {
    %c0 = arith.constant 0 : index
    %c0_0 = arith.constant 0 : index
    %c0_1 = arith.constant 0 : index
    %0 = vector.load %arg1[%c0, %c0_0, %c0_1] : memref<1x256x128xbf16, #tpu.memory_space<vmem>>, vector<1x256x128xbf16>
    %1 = vector.shape_cast %0 : vector<1x256x128xbf16> to vector<256x128xbf16>
    %2 = arith.extf %1 : vector<256x128xbf16> to vector<256x128xf32>
    %c0_2 = arith.constant 0 : index
    %c0_3 = arith.constant 0 : index
    %c0_4 = arith.constant 0 : index
    %3 = vector.load %arg2[%c0_2, %c0_3, %c0_4] : memref<1x256x128xbf16, #tpu.memory_space<vmem>>, vector<1x256x128xbf16>
    %4 = vector.shape_cast %3 : vector<1x256x128xbf16> to vector<256x128xbf16>
    %5 = arith.extf %4 : vector<256x128xbf16> to vector<256x128xf32>
    %6 = arith.addf %2, %5 : vector<256x128xf32>
    %cst = arith.constant 0.000000e+00 : f32
    %7 = vector.broadcast %cst : f32 to vector<290x128xf32>
    %c0_5 = arith.constant 0 : index
    %c0_6 = arith.constant 0 : index
    %8 = vector.load %arg7[%c0_5, %c0_6] : memref<290x128xf32, #tpu.memory_space<vmem>>, vector<290x128xf32>
    tpu.vector_store %arg7[%c0_5, %c0_6], %7 {strides = array<i32>} : memref<290x128xf32, #tpu.memory_space<vmem>>, vector<290x128xf32>,
    %c17 = arith.constant 17 : index
    %c0_7 = arith.constant 0 : index
    %9 = vector.load %arg7[%c17, %c0_7] : memref<290x128xf32, #tpu.memory_space<vmem>>, vector<256x128xf32>
    tpu.vector_store %arg7[%c17, %c0_7], %6 {strides = array<i32>} : memref<290x128xf32, #tpu.memory_space<vmem>>, vector<256x128xf32>,
    %10 = tpu.iota {dimensions = array<i32: 0>} : vector<256x1xi32>
    %c16_i32 = arith.constant 16 : i32
    %c0_i32 = arith.constant 0 : i32
    %11 = arith.cmpi eq, %c16_i32, %c0_i32 : i32
    %c1_i32 = arith.constant 1 : i32
    %12 = arith.select %11, %c1_i32, %c16_i32 : i32
    %13 = vector.broadcast %12 : i32 to vector<256x1xi32>
    %14 = arith.remsi %10, %13 : vector<256x1xi32>
    %c0_i32_8 = arith.constant 0 : i32
    %15 = vector.broadcast %c0_i32_8 : i32 to vector<256x1xi32>
    %16 = arith.cmpi ne, %14, %15 : vector<256x1xi32>
    %c0_i32_9 = arith.constant 0 : i32
    %17 = vector.broadcast %c0_i32_9 : i32 to vector<256x1xi32>
    %18 = arith.cmpi slt, %14, %17 : vector<256x1xi32>
    %c0_i32_10 = arith.constant 0 : i32
    %19 = arith.cmpi slt, %12, %c0_i32_10 : i32
    %20 = vector.broadcast %19 : i1 to vector<256x1xi1>
    %21 = vector.broadcast %20 : vector<256x1xi1> to vector<256x1xi1>
    %22 = arith.xori %18, %21 : vector<256x1xi1>
    %23 = arith.andi %22, %16 : vector<256x1xi1>
    %24 = vector.broadcast %12 : i32 to vector<256x1xi32>
    %25 = arith.addi %14, %24 : vector<256x1xi32>
    %26 = arith.select %23, %25, %14 : vector<256x1xi1>, vector<256x1xi32>
    %c0_i32_11 = arith.constant 0 : i32
    %27 = vector.broadcast %c0_i32_11 : i32 to vector<256x1xi32>
    %28 = arith.cmpi ne, %26, %27 : vector<256x1xi32>
    %c15_i32 = arith.constant 15 : i32
    %29 = vector.broadcast %c15_i32 : i32 to vector<256x1xi32>
    %30 = arith.cmpi ne, %26, %29 : vector<256x1xi32>
    %cst_12 = arith.constant 0.000000e+00 : f32
    %31 = vector.broadcast %cst_12 : f32 to vector<256x64xf32>
    %c0_13 = arith.constant 0 : index
    %c0_14 = arith.constant 0 : index
    %32 = vector.load %arg7[%c0_13, %c0_14] : memref<290x128xf32, #tpu.memory_space<vmem>>, vector<256x128xf32>
    %cst_15 = arith.constant 0.000000e+00 : f32
    %33 = vector.shape_cast %28 : vector<256x1xi1> to vector<256x1xi1>
    %34 = vector.broadcast %33 : vector<256x1xi1> to vector<256x128xi1>
    %35 = vector.broadcast %cst_15 : f32 to vector<256x128xf32>
    %36 = arith.select %34, %32, %35 : vector<256x128xi1>, vector<256x128xf32>
    %37 = arith.truncf %36 : vector<256x128xf32> to vector<256x128xbf16>
    %c0_16 = arith.constant 0 : index
    %c0_17 = arith.constant 0 : index
    %c0_18 = arith.constant 0 : index
    %c0_19 = arith.constant 0 : index
    %38 = vector.load %arg3[%c0_16, %c0_17, %c0_18, %c0_19] : memref<3x3x128x64xbf16, #tpu.memory_space<vmem>>, vector<1x1x128x64xbf16>
    %39 = vector.shape_cast %38 : vector<1x1x128x64xbf16> to vector<128x64xbf16>
    %cst_20 = arith.constant dense<0.000000e+00> : vector<256x64xf32>
    %40 = tpu.matmul %37, %39, %cst_20 {dimension_numbers = #tpu.dot_dimension_numbers<[1], [0], [0], [1], [0, 0, 1, 1], [], []>} : vector<256x128xbf16>, vector<128x64xbf16>, vector<256x64xf32> -> vector<256x64xf32>
    %41 = arith.addf %31, %40 : vector<256x64xf32>
    %c1 = arith.constant 1 : index
    %c0_21 = arith.constant 0 : index
    %42 = vector.load %arg7[%c1, %c0_21] : memref<290x128xf32, #tpu.memory_space<vmem>>, vector<256x128xf32>
    %43 = arith.truncf %42 : vector<256x128xf32> to vector<256x128xbf16>
    %c0_22 = arith.constant 0 : index
    %c1_23 = arith.constant 1 : index
    %c0_24 = arith.constant 0 : index
    %c0_25 = arith.constant 0 : index
    %44 = vector.load %arg3[%c0_22, %c1_23, %c0_24, %c0_25] : memref<3x3x128x64xbf16, #tpu.memory_space<vmem>>, vector<1x1x128x64xbf16>
    %45 = vector.shape_cast %44 : vector<1x1x128x64xbf16> to vector<128x64xbf16>
    %cst_26 = arith.constant dense<0.000000e+00> : vector<256x64xf32>
    %46 = tpu.matmul %43, %45, %cst_26 {dimension_numbers = #tpu.dot_dimension_numbers<[1], [0], [0], [1], [0, 0, 1, 1], [], []>} : vector<256x128xbf16>, vector<128x64xbf16>, vector<256x64xf32> -> vector<256x64xf32>
    %47 = arith.addf %41, %46 : vector<256x64xf32>
    %c2 = arith.constant 2 : index
    %c0_27 = arith.constant 0 : index
    %48 = vector.load %arg7[%c2, %c0_27] : memref<290x128xf32, #tpu.memory_space<vmem>>, vector<256x128xf32>
    %cst_28 = arith.constant 0.000000e+00 : f32
    %49 = vector.shape_cast %30 : vector<256x1xi1> to vector<256x1xi1>
    %50 = vector.broadcast %49 : vector<256x1xi1> to vector<256x128xi1>
    %51 = vector.broadcast %cst_28 : f32 to vector<256x128xf32>
    %52 = arith.select %50, %48, %51 : vector<256x128xi1>, vector<256x128xf32>
    %53 = arith.truncf %52 : vector<256x128xf32> to vector<256x128xbf16>
    %c0_29 = arith.constant 0 : index
    %c2_30 = arith.constant 2 : index
    %c0_31 = arith.constant 0 : index
    %c0_32 = arith.constant 0 : index
    %54 = vector.load %arg3[%c0_29, %c2_30, %c0_31, %c0_32] : memref<3x3x128x64xbf16, #tpu.memory_space<vmem>>, vector<1x1x128x64xbf16>
    %55 = vector.shape_cast %54 : vector<1x1x128x64xbf16> to vector<128x64xbf16>
    %cst_33 = arith.constant dense<0.000000e+00> : vector<256x64xf32>
    %56 = tpu.matmul %53, %55, %cst_33 {dimension_numbers = #tpu.dot_dimension_numbers<[1], [0], [0], [1], [0, 0, 1, 1], [], []>} : vector<256x128xbf16>, vector<128x64xbf16>, vector<256x64xf32> -> vector<256x64xf32>
    %57 = arith.addf %47, %56 : vector<256x64xf32>
    %c16 = arith.constant 16 : index
    %c0_34 = arith.constant 0 : index
    %58 = vector.load %arg7[%c16, %c0_34] : memref<290x128xf32, #tpu.memory_space<vmem>>, vector<256x128xf32>
    %cst_35 = arith.constant 0.000000e+00 : f32
    %59 = vector.shape_cast %28 : vector<256x1xi1> to vector<256x1xi1>
    %60 = vector.broadcast %59 : vector<256x1xi1> to vector<256x128xi1>
    %61 = vector.broadcast %cst_35 : f32 to vector<256x128xf32>
    %62 = arith.select %60, %58, %61 : vector<256x128xi1>, vector<256x128xf32>
    %63 = arith.truncf %62 : vector<256x128xf32> to vector<256x128xbf16>
    %c1_36 = arith.constant 1 : index
    %c0_37 = arith.constant 0 : index
    %c0_38 = arith.constant 0 : index
    %c0_39 = arith.constant 0 : index
    %64 = vector.load %arg3[%c1_36, %c0_37, %c0_38, %c0_39] : memref<3x3x128x64xbf16, #tpu.memory_space<vmem>>, vector<1x1x128x64xbf16>
    %65 = vector.shape_cast %64 : vector<1x1x128x64xbf16> to vector<128x64xbf16>
    %cst_40 = arith.constant dense<0.000000e+00> : vector<256x64xf32>
    %66 = tpu.matmul %63, %65, %cst_40 {dimension_numbers = #tpu.dot_dimension_numbers<[1], [0], [0], [1], [0, 0, 1, 1], [], []>} : vector<256x128xbf16>, vector<128x64xbf16>, vector<256x64xf32> -> vector<256x64xf32>
    %67 = arith.addf %57, %66 : vector<256x64xf32>
    %c17_41 = arith.constant 17 : index
    %c0_42 = arith.constant 0 : index
    %68 = vector.load %arg7[%c17_41, %c0_42] : memref<290x128xf32, #tpu.memory_space<vmem>>, vector<256x128xf32>
    %69 = arith.truncf %68 : vector<256x128xf32> to vector<256x128xbf16>
    %c1_43 = arith.constant 1 : index
    %c1_44 = arith.constant 1 : index
    %c0_45 = arith.constant 0 : index
    %c0_46 = arith.constant 0 : index
    %70 = vector.load %arg3[%c1_43, %c1_44, %c0_45, %c0_46] : memref<3x3x128x64xbf16, #tpu.memory_space<vmem>>, vector<1x1x128x64xbf16>
    %71 = vector.shape_cast %70 : vector<1x1x128x64xbf16> to vector<128x64xbf16>
    %cst_47 = arith.constant dense<0.000000e+00> : vector<256x64xf32>
    %72 = tpu.matmul %69, %71, %cst_47 {dimension_numbers = #tpu.dot_dimension_numbers<[1], [0], [0], [1], [0, 0, 1, 1], [], []>} : vector<256x128xbf16>, vector<128x64xbf16>, vector<256x64xf32> -> vector<256x64xf32>
    %73 = arith.addf %67, %72 : vector<256x64xf32>
    %c18 = arith.constant 18 : index
    %c0_48 = arith.constant 0 : index
    %74 = vector.load %arg7[%c18, %c0_48] : memref<290x128xf32, #tpu.memory_space<vmem>>, vector<256x128xf32>
    %cst_49 = arith.constant 0.000000e+00 : f32
    %75 = vector.shape_cast %30 : vector<256x1xi1> to vector<256x1xi1>
    %76 = vector.broadcast %75 : vector<256x1xi1> to vector<256x128xi1>
    %77 = vector.broadcast %cst_49 : f32 to vector<256x128xf32>
    %78 = arith.select %76, %74, %77 : vector<256x128xi1>, vector<256x128xf32>
    %79 = arith.truncf %78 : vector<256x128xf32> to vector<256x128xbf16>
    %c1_50 = arith.constant 1 : index
    %c2_51 = arith.constant 2 : index
    %c0_52 = arith.constant 0 : index
    %c0_53 = arith.constant 0 : index
    %80 = vector.load %arg3[%c1_50, %c2_51, %c0_52, %c0_53] : memref<3x3x128x64xbf16, #tpu.memory_space<vmem>>, vector<1x1x128x64xbf16>
    %81 = vector.shape_cast %80 : vector<1x1x128x64xbf16> to vector<128x64xbf16>
    %cst_54 = arith.constant dense<0.000000e+00> : vector<256x64xf32>
    %82 = tpu.matmul %79, %81, %cst_54 {dimension_numbers = #tpu.dot_dimension_numbers<[1], [0], [0], [1], [0, 0, 1, 1], [], []>} : vector<256x128xbf16>, vector<128x64xbf16>, vector<256x64xf32> -> vector<256x64xf32>
    %83 = arith.addf %73, %82 : vector<256x64xf32>
    %c32 = arith.constant 32 : index
    %c0_55 = arith.constant 0 : index
    %84 = vector.load %arg7[%c32, %c0_55] : memref<290x128xf32, #tpu.memory_space<vmem>>, vector<256x128xf32>
    %cst_56 = arith.constant 0.000000e+00 : f32
    %85 = vector.shape_cast %28 : vector<256x1xi1> to vector<256x1xi1>
    %86 = vector.broadcast %85 : vector<256x1xi1> to vector<256x128xi1>
    %87 = vector.broadcast %cst_56 : f32 to vector<256x128xf32>
    %88 = arith.select %86, %84, %87 : vector<256x128xi1>, vector<256x128xf32>
    %89 = arith.truncf %88 : vector<256x128xf32> to vector<256x128xbf16>
    %c2_57 = arith.constant 2 : index
    %c0_58 = arith.constant 0 : index
    %c0_59 = arith.constant 0 : index
    %c0_60 = arith.constant 0 : index
    %90 = vector.load %arg3[%c2_57, %c0_58, %c0_59, %c0_60] : memref<3x3x128x64xbf16, #tpu.memory_space<vmem>>, vector<1x1x128x64xbf16>
    %91 = vector.shape_cast %90 : vector<1x1x128x64xbf16> to vector<128x64xbf16>
    %cst_61 = arith.constant dense<0.000000e+00> : vector<256x64xf32>
    %92 = tpu.matmul %89, %91, %cst_61 {dimension_numbers = #tpu.dot_dimension_numbers<[1], [0], [0], [1], [0, 0, 1, 1], [], []>} : vector<256x128xbf16>, vector<128x64xbf16>, vector<256x64xf32> -> vector<256x64xf32>
    %93 = arith.addf %83, %92 : vector<256x64xf32>
    %c33 = arith.constant 33 : index
    %c0_62 = arith.constant 0 : index
    %94 = vector.load %arg7[%c33, %c0_62] : memref<290x128xf32, #tpu.memory_space<vmem>>, vector<256x128xf32>
    %95 = arith.truncf %94 : vector<256x128xf32> to vector<256x128xbf16>
    %c2_63 = arith.constant 2 : index
    %c1_64 = arith.constant 1 : index
    %c0_65 = arith.constant 0 : index
    %c0_66 = arith.constant 0 : index
    %96 = vector.load %arg3[%c2_63, %c1_64, %c0_65, %c0_66] : memref<3x3x128x64xbf16, #tpu.memory_space<vmem>>, vector<1x1x128x64xbf16>
    %97 = vector.shape_cast %96 : vector<1x1x128x64xbf16> to vector<128x64xbf16>
    %cst_67 = arith.constant dense<0.000000e+00> : vector<256x64xf32>
    %98 = tpu.matmul %95, %97, %cst_67 {dimension_numbers = #tpu.dot_dimension_numbers<[1], [0], [0], [1], [0, 0, 1, 1], [], []>} : vector<256x128xbf16>, vector<128x64xbf16>, vector<256x64xf32> -> vector<256x64xf32>
    %99 = arith.addf %93, %98 : vector<256x64xf32>
    %c34 = arith.constant 34 : index
    %c0_68 = arith.constant 0 : index
    %100 = vector.load %arg7[%c34, %c0_68] : memref<290x128xf32, #tpu.memory_space<vmem>>, vector<256x128xf32>
    %cst_69 = arith.constant 0.000000e+00 : f32
    %101 = vector.shape_cast %30 : vector<256x1xi1> to vector<256x1xi1>
    %102 = vector.broadcast %101 : vector<256x1xi1> to vector<256x128xi1>
    %103 = vector.broadcast %cst_69 : f32 to vector<256x128xf32>
    %104 = arith.select %102, %100, %103 : vector<256x128xi1>, vector<256x128xf32>
    %105 = arith.truncf %104 : vector<256x128xf32> to vector<256x128xbf16>
    %c2_70 = arith.constant 2 : index
    %c2_71 = arith.constant 2 : index
    %c0_72 = arith.constant 0 : index
    %c0_73 = arith.constant 0 : index
    %106 = vector.load %arg3[%c2_70, %c2_71, %c0_72, %c0_73] : memref<3x3x128x64xbf16, #tpu.memory_space<vmem>>, vector<1x1x128x64xbf16>
    %107 = vector.shape_cast %106 : vector<1x1x128x64xbf16> to vector<128x64xbf16>
    %cst_74 = arith.constant dense<0.000000e+00> : vector<256x64xf32>
    %108 = tpu.matmul %105, %107, %cst_74 {dimension_numbers = #tpu.dot_dimension_numbers<[1], [0], [0], [1], [0, 0, 1, 1], [], []>} : vector<256x128xbf16>, vector<128x64xbf16>, vector<256x64xf32> -> vector<256x64xf32>
    %109 = arith.addf %99, %108 : vector<256x64xf32>
    %c0_75 = arith.constant 0 : index
    %c0_76 = arith.constant 0 : index
    %110 = vector.load %arg4[%c0_75, %c0_76] : memref<1x64xf32, #tpu.memory_space<vmem>>, vector<1x64xf32>
    %111 = vector.broadcast %110 : vector<1x64xf32> to vector<256x64xf32>
    %112 = arith.mulf %109, %111 : vector<256x64xf32>
    %c0_77 = arith.constant 0 : index
    %c0_78 = arith.constant 0 : index
    %113 = vector.load %arg5[%c0_77, %c0_78] : memref<1x64xf32, #tpu.memory_space<vmem>>, vector<1x64xf32>
    %114 = vector.broadcast %113 : vector<1x64xf32> to vector<256x64xf32>
    %115 = arith.addf %112, %114 : vector<256x64xf32>
    %cst_79 = arith.constant 0.000000e+00 : f32
    %116 = vector.broadcast %cst_79 : f32 to vector<256x64xf32>
    %117 = arith.maximumf %115, %116 : vector<256x64xf32>
    %118 = arith.truncf %117 : vector<256x64xf32> to vector<256x64xbf16>
    %c0_80 = arith.constant 0 : index
    %c0_81 = arith.constant 0 : index
    %c0_82 = arith.constant 0 : index
    %119 = vector.load %arg6[%c0_80, %c0_81, %c0_82] : memref<1x256x64xbf16, #tpu.memory_space<vmem>>, vector<1x256x64xbf16>
    %120 = vector.shape_cast %119 : vector<1x256x64xbf16> to vector<256x64xbf16>
    %121 = vector.shape_cast %118 : vector<256x64xbf16> to vector<1x256x64xbf16>
    tpu.vector_store %arg6[%c0_80, %c0_81, %c0_82], %121 {strides = array<i32>} : memref<1x256x64xbf16, #tpu.memory_space<vmem>>, vector<1x256x64xbf16>,
    return
  }
  func.func @transform_0(%arg0: i32) -> (i32, i32, i32) {
    %c0_i32 = arith.constant 0 : i32
    %c0_i32_0 = arith.constant 0 : i32
    %c0_i32_1 = arith.constant 0 : i32
    return %arg0, %c0_i32, %c0_i32_0 : i32, i32, i32
  }
  func.func @transform_1(%arg0: i32) -> (i32, i32, i32) {
    %c0_i32 = arith.constant 0 : i32
    %c0_i32_0 = arith.constant 0 : i32
    %c0_i32_1 = arith.constant 0 : i32
    return %arg0, %c0_i32, %c0_i32_0 : i32, i32, i32
  }
  func.func @transform_2(%arg0: i32) -> (i32, i32, i32, i32) {
    %c0_i32 = arith.constant 0 : i32
    %c0_i32_0 = arith.constant 0 : i32
    %c0_i32_1 = arith.constant 0 : i32
    %c0_i32_2 = arith.constant 0 : i32
    %c0_i32_3 = arith.constant 0 : i32
    return %c0_i32, %c0_i32_0, %c0_i32_1, %c0_i32_2 : i32, i32, i32, i32
  }
  func.func @transform_3(%arg0: i32) -> (i32, i32) {
    %c0_i32 = arith.constant 0 : i32
    %c0_i32_0 = arith.constant 0 : i32
    %c0_i32_1 = arith.constant 0 : i32
    return %c0_i32, %c0_i32_0 : i32, i32
  }
  func.func @transform_4(%arg0: i32) -> (i32, i32) {
    %c0_i32 = arith.constant 0 : i32
    %c0_i32_0 = arith.constant 0 : i32
    %c0_i32_1 = arith.constant 0 : i32
    return %c0_i32, %c0_i32_0 : i32, i32
  }
  func.func @transform_5(%arg0: i32) -> (i32, i32, i32) {
    %c0_i32 = arith.constant 0 : i32
    %c0_i32_0 = arith.constant 0 : i32
    %c0_i32_1 = arith.constant 0 : i32
    return %arg0, %c0_i32, %c0_i32_0 : i32, i32, i32
  }
}

module attributes {stable_mosaic.version = 11 : i64} {
  func.func @_conv3x3_fused_kernel(%arg0: i32, %arg1: memref<1x256x64xbf16, #tpu.memory_space<vmem>>, %arg2: memref<3x3x64x64xbf16, #tpu.memory_space<vmem>>, %arg3: memref<1x64xf32, #tpu.memory_space<vmem>>, %arg4: memref<1x64xf32, #tpu.memory_space<vmem>>, %arg5: memref<1x256x64xf32, #tpu.memory_space<vmem>>, %arg6: memref<290x64xf32, #tpu.memory_space<vmem>>) attributes {dimension_semantics = [#tpu.dimension_semantics<parallel>], iteration_bounds = array<i64: 2>, scalar_prefetch = 0 : i64, scratch_operands = 1 : i64, tpu.core_type = #tpu.core_type<tc>, window_params = [{transform_indices = @transform_0, window_bounds = array<i64: 1, 256, 64>}, {pipeline_mode = #tpu.pipeline_mode<synchronous>, transform_indices = @transform_1, window_bounds = array<i64: 3, 3, 64, 64>}, {pipeline_mode = #tpu.pipeline_mode<synchronous>, transform_indices = @transform_2, window_bounds = array<i64: 1, 64>}, {pipeline_mode = #tpu.pipeline_mode<synchronous>, transform_indices = @transform_3, window_bounds = array<i64: 1, 64>}, {transform_indices = @transform_4, window_bounds = array<i64: 1, 256, 64>}]} {
    %c0 = arith.constant 0 : index
    %c0_0 = arith.constant 0 : index
    %c0_1 = arith.constant 0 : index
    %0 = vector.load %arg1[%c0, %c0_0, %c0_1] : memref<1x256x64xbf16, #tpu.memory_space<vmem>>, vector<1x256x64xbf16>
    %1 = vector.shape_cast %0 : vector<1x256x64xbf16> to vector<256x64xbf16>
    %cst = arith.constant 0.000000e+00 : f32
    %2 = vector.broadcast %cst : f32 to vector<290x64xf32>
    %c0_2 = arith.constant 0 : index
    %c0_3 = arith.constant 0 : index
    %3 = vector.load %arg6[%c0_2, %c0_3] : memref<290x64xf32, #tpu.memory_space<vmem>>, vector<290x64xf32>
    tpu.vector_store %arg6[%c0_2, %c0_3], %2 {strides = array<i32>} : memref<290x64xf32, #tpu.memory_space<vmem>>, vector<290x64xf32>,
    %4 = arith.extf %1 : vector<256x64xbf16> to vector<256x64xf32>
    %c17 = arith.constant 17 : index
    %c0_4 = arith.constant 0 : index
    %5 = vector.load %arg6[%c17, %c0_4] : memref<290x64xf32, #tpu.memory_space<vmem>>, vector<256x64xf32>
    tpu.vector_store %arg6[%c17, %c0_4], %4 {strides = array<i32>} : memref<290x64xf32, #tpu.memory_space<vmem>>, vector<256x64xf32>,
    %6 = tpu.iota {dimensions = array<i32: 0>} : vector<256x1xi32>
    %c16_i32 = arith.constant 16 : i32
    %c0_i32 = arith.constant 0 : i32
    %7 = arith.cmpi eq, %c16_i32, %c0_i32 : i32
    %c1_i32 = arith.constant 1 : i32
    %8 = arith.select %7, %c1_i32, %c16_i32 : i32
    %9 = vector.broadcast %8 : i32 to vector<256x1xi32>
    %10 = arith.remsi %6, %9 : vector<256x1xi32>
    %c0_i32_5 = arith.constant 0 : i32
    %11 = vector.broadcast %c0_i32_5 : i32 to vector<256x1xi32>
    %12 = arith.cmpi ne, %10, %11 : vector<256x1xi32>
    %c0_i32_6 = arith.constant 0 : i32
    %13 = vector.broadcast %c0_i32_6 : i32 to vector<256x1xi32>
    %14 = arith.cmpi slt, %10, %13 : vector<256x1xi32>
    %c0_i32_7 = arith.constant 0 : i32
    %15 = arith.cmpi slt, %8, %c0_i32_7 : i32
    %16 = vector.broadcast %15 : i1 to vector<256x1xi1>
    %17 = vector.broadcast %16 : vector<256x1xi1> to vector<256x1xi1>
    %18 = arith.xori %14, %17 : vector<256x1xi1>
    %19 = arith.andi %18, %12 : vector<256x1xi1>
    %20 = vector.broadcast %8 : i32 to vector<256x1xi32>
    %21 = arith.addi %10, %20 : vector<256x1xi32>
    %22 = arith.select %19, %21, %10 : vector<256x1xi1>, vector<256x1xi32>
    %c0_i32_8 = arith.constant 0 : i32
    %23 = vector.broadcast %c0_i32_8 : i32 to vector<256x1xi32>
    %24 = arith.cmpi ne, %22, %23 : vector<256x1xi32>
    %c15_i32 = arith.constant 15 : i32
    %25 = vector.broadcast %c15_i32 : i32 to vector<256x1xi32>
    %26 = arith.cmpi ne, %22, %25 : vector<256x1xi32>
    %cst_9 = arith.constant 0.000000e+00 : f32
    %27 = vector.broadcast %cst_9 : f32 to vector<256x64xf32>
    %c0_10 = arith.constant 0 : index
    %c0_11 = arith.constant 0 : index
    %28 = vector.load %arg6[%c0_10, %c0_11] : memref<290x64xf32, #tpu.memory_space<vmem>>, vector<256x64xf32>
    %cst_12 = arith.constant 0.000000e+00 : f32
    %29 = vector.shape_cast %24 : vector<256x1xi1> to vector<256x1xi1>
    %30 = vector.broadcast %29 : vector<256x1xi1> to vector<256x64xi1>
    %31 = vector.broadcast %cst_12 : f32 to vector<256x64xf32>
    %32 = arith.select %30, %28, %31 : vector<256x64xi1>, vector<256x64xf32>
    %33 = arith.truncf %32 : vector<256x64xf32> to vector<256x64xbf16>
    %c0_13 = arith.constant 0 : index
    %c0_14 = arith.constant 0 : index
    %c0_15 = arith.constant 0 : index
    %c0_16 = arith.constant 0 : index
    %34 = vector.load %arg2[%c0_13, %c0_14, %c0_15, %c0_16] : memref<3x3x64x64xbf16, #tpu.memory_space<vmem>>, vector<1x1x64x64xbf16>
    %35 = vector.shape_cast %34 : vector<1x1x64x64xbf16> to vector<64x64xbf16>
    %cst_17 = arith.constant dense<0.000000e+00> : vector<256x64xf32>
    %36 = tpu.matmul %33, %35, %cst_17 {dimension_numbers = #tpu.dot_dimension_numbers<[1], [0], [0], [1], [0, 0, 1, 1], [], []>} : vector<256x64xbf16>, vector<64x64xbf16>, vector<256x64xf32> -> vector<256x64xf32>
    %37 = arith.addf %27, %36 : vector<256x64xf32>
    %c1 = arith.constant 1 : index
    %c0_18 = arith.constant 0 : index
    %38 = vector.load %arg6[%c1, %c0_18] : memref<290x64xf32, #tpu.memory_space<vmem>>, vector<256x64xf32>
    %39 = arith.truncf %38 : vector<256x64xf32> to vector<256x64xbf16>
    %c0_19 = arith.constant 0 : index
    %c1_20 = arith.constant 1 : index
    %c0_21 = arith.constant 0 : index
    %c0_22 = arith.constant 0 : index
    %40 = vector.load %arg2[%c0_19, %c1_20, %c0_21, %c0_22] : memref<3x3x64x64xbf16, #tpu.memory_space<vmem>>, vector<1x1x64x64xbf16>
    %41 = vector.shape_cast %40 : vector<1x1x64x64xbf16> to vector<64x64xbf16>
    %cst_23 = arith.constant dense<0.000000e+00> : vector<256x64xf32>
    %42 = tpu.matmul %39, %41, %cst_23 {dimension_numbers = #tpu.dot_dimension_numbers<[1], [0], [0], [1], [0, 0, 1, 1], [], []>} : vector<256x64xbf16>, vector<64x64xbf16>, vector<256x64xf32> -> vector<256x64xf32>
    %43 = arith.addf %37, %42 : vector<256x64xf32>
    %c2 = arith.constant 2 : index
    %c0_24 = arith.constant 0 : index
    %44 = vector.load %arg6[%c2, %c0_24] : memref<290x64xf32, #tpu.memory_space<vmem>>, vector<256x64xf32>
    %cst_25 = arith.constant 0.000000e+00 : f32
    %45 = vector.shape_cast %26 : vector<256x1xi1> to vector<256x1xi1>
    %46 = vector.broadcast %45 : vector<256x1xi1> to vector<256x64xi1>
    %47 = vector.broadcast %cst_25 : f32 to vector<256x64xf32>
    %48 = arith.select %46, %44, %47 : vector<256x64xi1>, vector<256x64xf32>
    %49 = arith.truncf %48 : vector<256x64xf32> to vector<256x64xbf16>
    %c0_26 = arith.constant 0 : index
    %c2_27 = arith.constant 2 : index
    %c0_28 = arith.constant 0 : index
    %c0_29 = arith.constant 0 : index
    %50 = vector.load %arg2[%c0_26, %c2_27, %c0_28, %c0_29] : memref<3x3x64x64xbf16, #tpu.memory_space<vmem>>, vector<1x1x64x64xbf16>
    %51 = vector.shape_cast %50 : vector<1x1x64x64xbf16> to vector<64x64xbf16>
    %cst_30 = arith.constant dense<0.000000e+00> : vector<256x64xf32>
    %52 = tpu.matmul %49, %51, %cst_30 {dimension_numbers = #tpu.dot_dimension_numbers<[1], [0], [0], [1], [0, 0, 1, 1], [], []>} : vector<256x64xbf16>, vector<64x64xbf16>, vector<256x64xf32> -> vector<256x64xf32>
    %53 = arith.addf %43, %52 : vector<256x64xf32>
    %c16 = arith.constant 16 : index
    %c0_31 = arith.constant 0 : index
    %54 = vector.load %arg6[%c16, %c0_31] : memref<290x64xf32, #tpu.memory_space<vmem>>, vector<256x64xf32>
    %cst_32 = arith.constant 0.000000e+00 : f32
    %55 = vector.shape_cast %24 : vector<256x1xi1> to vector<256x1xi1>
    %56 = vector.broadcast %55 : vector<256x1xi1> to vector<256x64xi1>
    %57 = vector.broadcast %cst_32 : f32 to vector<256x64xf32>
    %58 = arith.select %56, %54, %57 : vector<256x64xi1>, vector<256x64xf32>
    %59 = arith.truncf %58 : vector<256x64xf32> to vector<256x64xbf16>
    %c1_33 = arith.constant 1 : index
    %c0_34 = arith.constant 0 : index
    %c0_35 = arith.constant 0 : index
    %c0_36 = arith.constant 0 : index
    %60 = vector.load %arg2[%c1_33, %c0_34, %c0_35, %c0_36] : memref<3x3x64x64xbf16, #tpu.memory_space<vmem>>, vector<1x1x64x64xbf16>
    %61 = vector.shape_cast %60 : vector<1x1x64x64xbf16> to vector<64x64xbf16>
    %cst_37 = arith.constant dense<0.000000e+00> : vector<256x64xf32>
    %62 = tpu.matmul %59, %61, %cst_37 {dimension_numbers = #tpu.dot_dimension_numbers<[1], [0], [0], [1], [0, 0, 1, 1], [], []>} : vector<256x64xbf16>, vector<64x64xbf16>, vector<256x64xf32> -> vector<256x64xf32>
    %63 = arith.addf %53, %62 : vector<256x64xf32>
    %c17_38 = arith.constant 17 : index
    %c0_39 = arith.constant 0 : index
    %64 = vector.load %arg6[%c17_38, %c0_39] : memref<290x64xf32, #tpu.memory_space<vmem>>, vector<256x64xf32>
    %65 = arith.truncf %64 : vector<256x64xf32> to vector<256x64xbf16>
    %c1_40 = arith.constant 1 : index
    %c1_41 = arith.constant 1 : index
    %c0_42 = arith.constant 0 : index
    %c0_43 = arith.constant 0 : index
    %66 = vector.load %arg2[%c1_40, %c1_41, %c0_42, %c0_43] : memref<3x3x64x64xbf16, #tpu.memory_space<vmem>>, vector<1x1x64x64xbf16>
    %67 = vector.shape_cast %66 : vector<1x1x64x64xbf16> to vector<64x64xbf16>
    %cst_44 = arith.constant dense<0.000000e+00> : vector<256x64xf32>
    %68 = tpu.matmul %65, %67, %cst_44 {dimension_numbers = #tpu.dot_dimension_numbers<[1], [0], [0], [1], [0, 0, 1, 1], [], []>} : vector<256x64xbf16>, vector<64x64xbf16>, vector<256x64xf32> -> vector<256x64xf32>
    %69 = arith.addf %63, %68 : vector<256x64xf32>
    %c18 = arith.constant 18 : index
    %c0_45 = arith.constant 0 : index
    %70 = vector.load %arg6[%c18, %c0_45] : memref<290x64xf32, #tpu.memory_space<vmem>>, vector<256x64xf32>
    %cst_46 = arith.constant 0.000000e+00 : f32
    %71 = vector.shape_cast %26 : vector<256x1xi1> to vector<256x1xi1>
    %72 = vector.broadcast %71 : vector<256x1xi1> to vector<256x64xi1>
    %73 = vector.broadcast %cst_46 : f32 to vector<256x64xf32>
    %74 = arith.select %72, %70, %73 : vector<256x64xi1>, vector<256x64xf32>
    %75 = arith.truncf %74 : vector<256x64xf32> to vector<256x64xbf16>
    %c1_47 = arith.constant 1 : index
    %c2_48 = arith.constant 2 : index
    %c0_49 = arith.constant 0 : index
    %c0_50 = arith.constant 0 : index
    %76 = vector.load %arg2[%c1_47, %c2_48, %c0_49, %c0_50] : memref<3x3x64x64xbf16, #tpu.memory_space<vmem>>, vector<1x1x64x64xbf16>
    %77 = vector.shape_cast %76 : vector<1x1x64x64xbf16> to vector<64x64xbf16>
    %cst_51 = arith.constant dense<0.000000e+00> : vector<256x64xf32>
    %78 = tpu.matmul %75, %77, %cst_51 {dimension_numbers = #tpu.dot_dimension_numbers<[1], [0], [0], [1], [0, 0, 1, 1], [], []>} : vector<256x64xbf16>, vector<64x64xbf16>, vector<256x64xf32> -> vector<256x64xf32>
    %79 = arith.addf %69, %78 : vector<256x64xf32>
    %c32 = arith.constant 32 : index
    %c0_52 = arith.constant 0 : index
    %80 = vector.load %arg6[%c32, %c0_52] : memref<290x64xf32, #tpu.memory_space<vmem>>, vector<256x64xf32>
    %cst_53 = arith.constant 0.000000e+00 : f32
    %81 = vector.shape_cast %24 : vector<256x1xi1> to vector<256x1xi1>
    %82 = vector.broadcast %81 : vector<256x1xi1> to vector<256x64xi1>
    %83 = vector.broadcast %cst_53 : f32 to vector<256x64xf32>
    %84 = arith.select %82, %80, %83 : vector<256x64xi1>, vector<256x64xf32>
    %85 = arith.truncf %84 : vector<256x64xf32> to vector<256x64xbf16>
    %c2_54 = arith.constant 2 : index
    %c0_55 = arith.constant 0 : index
    %c0_56 = arith.constant 0 : index
    %c0_57 = arith.constant 0 : index
    %86 = vector.load %arg2[%c2_54, %c0_55, %c0_56, %c0_57] : memref<3x3x64x64xbf16, #tpu.memory_space<vmem>>, vector<1x1x64x64xbf16>
    %87 = vector.shape_cast %86 : vector<1x1x64x64xbf16> to vector<64x64xbf16>
    %cst_58 = arith.constant dense<0.000000e+00> : vector<256x64xf32>
    %88 = tpu.matmul %85, %87, %cst_58 {dimension_numbers = #tpu.dot_dimension_numbers<[1], [0], [0], [1], [0, 0, 1, 1], [], []>} : vector<256x64xbf16>, vector<64x64xbf16>, vector<256x64xf32> -> vector<256x64xf32>
    %89 = arith.addf %79, %88 : vector<256x64xf32>
    %c33 = arith.constant 33 : index
    %c0_59 = arith.constant 0 : index
    %90 = vector.load %arg6[%c33, %c0_59] : memref<290x64xf32, #tpu.memory_space<vmem>>, vector<256x64xf32>
    %91 = arith.truncf %90 : vector<256x64xf32> to vector<256x64xbf16>
    %c2_60 = arith.constant 2 : index
    %c1_61 = arith.constant 1 : index
    %c0_62 = arith.constant 0 : index
    %c0_63 = arith.constant 0 : index
    %92 = vector.load %arg2[%c2_60, %c1_61, %c0_62, %c0_63] : memref<3x3x64x64xbf16, #tpu.memory_space<vmem>>, vector<1x1x64x64xbf16>
    %93 = vector.shape_cast %92 : vector<1x1x64x64xbf16> to vector<64x64xbf16>
    %cst_64 = arith.constant dense<0.000000e+00> : vector<256x64xf32>
    %94 = tpu.matmul %91, %93, %cst_64 {dimension_numbers = #tpu.dot_dimension_numbers<[1], [0], [0], [1], [0, 0, 1, 1], [], []>} : vector<256x64xbf16>, vector<64x64xbf16>, vector<256x64xf32> -> vector<256x64xf32>
    %95 = arith.addf %89, %94 : vector<256x64xf32>
    %c34 = arith.constant 34 : index
    %c0_65 = arith.constant 0 : index
    %96 = vector.load %arg6[%c34, %c0_65] : memref<290x64xf32, #tpu.memory_space<vmem>>, vector<256x64xf32>
    %cst_66 = arith.constant 0.000000e+00 : f32
    %97 = vector.shape_cast %26 : vector<256x1xi1> to vector<256x1xi1>
    %98 = vector.broadcast %97 : vector<256x1xi1> to vector<256x64xi1>
    %99 = vector.broadcast %cst_66 : f32 to vector<256x64xf32>
    %100 = arith.select %98, %96, %99 : vector<256x64xi1>, vector<256x64xf32>
    %101 = arith.truncf %100 : vector<256x64xf32> to vector<256x64xbf16>
    %c2_67 = arith.constant 2 : index
    %c2_68 = arith.constant 2 : index
    %c0_69 = arith.constant 0 : index
    %c0_70 = arith.constant 0 : index
    %102 = vector.load %arg2[%c2_67, %c2_68, %c0_69, %c0_70] : memref<3x3x64x64xbf16, #tpu.memory_space<vmem>>, vector<1x1x64x64xbf16>
    %103 = vector.shape_cast %102 : vector<1x1x64x64xbf16> to vector<64x64xbf16>
    %cst_71 = arith.constant dense<0.000000e+00> : vector<256x64xf32>
    %104 = tpu.matmul %101, %103, %cst_71 {dimension_numbers = #tpu.dot_dimension_numbers<[1], [0], [0], [1], [0, 0, 1, 1], [], []>} : vector<256x64xbf16>, vector<64x64xbf16>, vector<256x64xf32> -> vector<256x64xf32>
    %105 = arith.addf %95, %104 : vector<256x64xf32>
    %c0_72 = arith.constant 0 : index
    %c0_73 = arith.constant 0 : index
    %106 = vector.load %arg3[%c0_72, %c0_73] : memref<1x64xf32, #tpu.memory_space<vmem>>, vector<1x64xf32>
    %107 = vector.broadcast %106 : vector<1x64xf32> to vector<256x64xf32>
    %108 = arith.mulf %105, %107 : vector<256x64xf32>
    %c0_74 = arith.constant 0 : index
    %c0_75 = arith.constant 0 : index
    %109 = vector.load %arg4[%c0_74, %c0_75] : memref<1x64xf32, #tpu.memory_space<vmem>>, vector<1x64xf32>
    %110 = vector.broadcast %109 : vector<1x64xf32> to vector<256x64xf32>
    %111 = arith.addf %108, %110 : vector<256x64xf32>
    %cst_76 = arith.constant 0.000000e+00 : f32
    %112 = vector.broadcast %cst_76 : f32 to vector<256x64xf32>
    %113 = arith.maximumf %111, %112 : vector<256x64xf32>
    %c0_77 = arith.constant 0 : index
    %c0_78 = arith.constant 0 : index
    %c0_79 = arith.constant 0 : index
    %114 = vector.load %arg5[%c0_77, %c0_78, %c0_79] : memref<1x256x64xf32, #tpu.memory_space<vmem>>, vector<1x256x64xf32>
    %115 = vector.shape_cast %114 : vector<1x256x64xf32> to vector<256x64xf32>
    %116 = vector.shape_cast %113 : vector<256x64xf32> to vector<1x256x64xf32>
    tpu.vector_store %arg5[%c0_77, %c0_78, %c0_79], %116 {strides = array<i32>} : memref<1x256x64xf32, #tpu.memory_space<vmem>>, vector<1x256x64xf32>,
    return
  }
  func.func @transform_0(%arg0: i32) -> (i32, i32, i32) {
    %c0_i32 = arith.constant 0 : i32
    %c0_i32_0 = arith.constant 0 : i32
    %c0_i32_1 = arith.constant 0 : i32
    return %arg0, %c0_i32, %c0_i32_0 : i32, i32, i32
  }
  func.func @transform_1(%arg0: i32) -> (i32, i32, i32, i32) {
    %c0_i32 = arith.constant 0 : i32
    %c0_i32_0 = arith.constant 0 : i32
    %c0_i32_1 = arith.constant 0 : i32
    %c0_i32_2 = arith.constant 0 : i32
    %c0_i32_3 = arith.constant 0 : i32
    return %c0_i32, %c0_i32_0, %c0_i32_1, %c0_i32_2 : i32, i32, i32, i32
  }
  func.func @transform_2(%arg0: i32) -> (i32, i32) {
    %c0_i32 = arith.constant 0 : i32
    %c0_i32_0 = arith.constant 0 : i32
    %c0_i32_1 = arith.constant 0 : i32
    return %c0_i32, %c0_i32_0 : i32, i32
  }
  func.func @transform_3(%arg0: i32) -> (i32, i32) {
    %c0_i32 = arith.constant 0 : i32
    %c0_i32_0 = arith.constant 0 : i32
    %c0_i32_1 = arith.constant 0 : i32
    return %c0_i32, %c0_i32_0 : i32, i32
  }
  func.func @transform_4(%arg0: i32) -> (i32, i32, i32) {
    %c0_i32 = arith.constant 0 : i32
    %c0_i32_0 = arith.constant 0 : i32
    %c0_i32_1 = arith.constant 0 : i32
    return %arg0, %c0_i32, %c0_i32_0 : i32, i32, i32
  }
}

</mosaic_0001>

<llo_original>
// kernel: tile.8
$region0: #{tile.8}
  #allocation0 [shape = 's32[1]{0}', space=sflag, size = 0x4, scoped, tag = 'scoped memory for tile.8']
  %s0 = inlined_call_operand.vmem [shape: f32[128], index: 0, kind: input, shape index: {}]
  %s1 = inlined_call_operand.vmem [shape: f32[4,128], index: 1, kind: output, shape index: {}]
  // Predicated region
  $region2: #{tile.8} parent=0 // pred_check
    _
  $region3: #{tile.8} parent=0 // pred_check_branch
    %3 = sbr.rel (0) target = $region5
  $region4: #{tile.8} parent=0 // pred_region
    _
  $region5: #{tile.8} parent=0 // pred_fallthru
    _
  %v4 = vld [vmem:[%s0] ss:$0 sm:$0xff]
  %5 = vst [vmem:[%s1] sm:$0xf] %v4

// kernel: up_pallas.3
$region0: #{up_pallas.3}
  #allocation0 [shape = 'u32[]', space=smem, size = 0x4, offset = 0x4, fixed_abs, tag = 'smem constant byte address 0x4 - core index']
  #allocation1 [shape = 'u32[72,128]{1,0:T(1,128)}', space=vmem, size = 0x9000, scoped, tag = 'internal scratch']
  %s0 = inlined_call_operand.vmem [shape: bf16[2,64,128], index: 0, kind: input, shape index: {}]
  %s1 = inlined_call_operand.vmem [shape: bf16[128,512], index: 1, kind: input, shape index: {}]
  %s2 = inlined_call_operand.vmem [shape: f32[1,512], index: 2, kind: input, shape index: {}]
  %s3 = inlined_call_operand.vmem [shape: bf16[2,64,512], index: 3, kind: output, shape index: {}]
  %s4 = sld [smem:[#allocation0]]
  $region45: #{up_pallas.3} parent=0
    _
  %s6 = ssub.s32 1, %s4
  %s7 = scalar_select 0, %s6, %s4
  loop: start=0, step=1, limit=4
  $region2: #{up_pallas.3} parent=0 // loop_pre_header
    _
  $region3: #{up_pallas.3} parent=0 // loop_header
    %s9 = sphi 0, %s13
    %p10 = scmp.ge.s32.totalorder %s9, 4
    %s19 = sphi 0, %s21
    %s22 = sphi 0, %s19
    %s23 = sphi 0, %s22
    %s39 = sphi 0, %s23
    %s43 = sphi 0, %s43
    %s45 = sphi 0, %s43
    %s46 = sphi 0, %s45
    %s60 = sphi 0, %s46
    %s64 = sphi 0, %s64
    %s66 = sphi 0, %s64
    %s67 = sphi 0, %s66
    %s81 = sphi 0, %s67
    %s87 = sphi 0, %s89
    %s90 = sphi 0, %s87
    %s91 = sphi 0, %s90
    %s107 = sphi 0, %s91
  $region4: #{up_pallas.3} parent=0 // loop_header_branch
    %12 = sbr.rel (%p10) target = $region8
  $region5: #{up_pallas.3} parent=0 // loop_body
    %s14 = ssub.s32 %s9, 1
    %s15 = ssub.s32 %s9, 2
    %s16 = sadd.s32 %s9, 1
    %s17 = ssub.s32 %s9, %s16
    %p18 = scmp.eq.s32.totalorder %s17, 0
    %s20 = sadd.s32 %s19, 1
    %s21 = scalar_select %p18, %s19, %s20
    %p24 = pneg %p18
    %p25 = scmp.eq.s32.totalorder %s9, 1
    %p26 = por %p24, %p25
    %p27 = scmp.ne.s32.totalorder %s19, %s22
    %p28 = scmp.eq.s32.totalorder %s9, 0
    %p29 = por %p27, %p28
    %p30 = scmp.ne.s32.totalorder %s19, %s22
    %p31 = scmp.eq.s32.totalorder %s14, 1
    %p32 = por %p30, %p31
    %p33 = scmp.ne.s32.totalorder %s22, %s23
    %p34 = scmp.eq.s32.totalorder %s14, 0
    %p35 = por %p33, %p34
    %p36 = scmp.ne.s32.totalorder %s22, %s23
    %p37 = scmp.eq.s32.totalorder %s15, 1
    %p38 = por %p36, %p37
    %p40 = scmp.ne.s32.totalorder %s23, %s39
    %p41 = scmp.eq.s32.totalorder %s15, 0
    %p42 = por %p40, %p41
    %s44 = sadd.s32 %s43, 1
    %p47 = scmp.eq.s32.totalorder %s9, 1
    %p48 = scmp.ne.s32.totalorder %s43, %s45
    %p49 = scmp.eq.s32.totalorder %s9, 0
    %p50 = por %p48, %p49
    %p51 = scmp.ne.s32.totalorder %s43, %s45
    %p52 = scmp.eq.s32.totalorder %s14, 1
    %p53 = por %p51, %p52
    %p54 = scmp.ne.s32.totalorder %s45, %s46
    %p55 = scmp.eq.s32.totalorder %s14, 0
    %p56 = por %p54, %p55
    %p57 = scmp.ne.s32.totalorder %s45, %s46
    %p58 = scmp.eq.s32.totalorder %s15, 1
    %p59 = por %p57, %p58
    %p61 = scmp.ne.s32.totalorder %s46, %s60
    %p62 = scmp.eq.s32.totalorder %s15, 0
    %p63 = por %p61, %p62
    %s65 = sadd.s32 %s64, 1
    %p68 = scmp.eq.s32.totalorder %s9, 1
    %p69 = scmp.ne.s32.totalorder %s64, %s66
    %p70 = scmp.eq.s32.totalorder %s9, 0
    %p71 = por %p69, %p70
    %p72 = scmp.ne.s32.totalorder %s64, %s66
    %p73 = scmp.eq.s32.totalorder %s14, 1
    %p74 = por %p72, %p73
    %p75 = scmp.ne.s32.totalorder %s66, %s67
    %p76 = scmp.eq.s32.totalorder %s14, 0
    %p77 = por %p75, %p76
    %p78 = scmp.ne.s32.totalorder %s66, %s67
    %p79 = scmp.eq.s32.totalorder %s15, 1
    %p80 = por %p78, %p79
    %p82 = scmp.ne.s32.totalorder %s67, %s81
    %p83 = scmp.eq.s32.totalorder %s15, 0
    %p84 = por %p82, %p83
    %s85 = ssub.s32 %s9, %s16
    %p86 = scmp.eq.s32.totalorder %s85, 0
    %s88 = sadd.s32 %s87, 1
    %s89 = scalar_select %p86, %s87, %s88
    %p92 = pneg %p86
    %p93 = scmp.eq.s32.totalorder %s9, 1
    %p94 = por %p92, %p93
    %p95 = scmp.ne.s32.totalorder %s87, %s90
    %p96 = scmp.eq.s32.totalorder %s9, 0
    %p97 = por %p95, %p96
    %p98 = scmp.ne.s32.totalorder %s87, %s90
    %p99 = scmp.eq.s32.totalorder %s14, 1
    %p100 = por %p98, %p99
    %p101 = scmp.ne.s32.totalorder %s90, %s91
    %p102 = scmp.eq.s32.totalorder %s14, 0
    %p103 = por %p101, %p102
    %p104 = scmp.ne.s32.totalorder %s90, %s91
    %p105 = scmp.eq.s32.totalorder %s15, 1
    %p106 = por %p104, %p105
    %p108 = scmp.ne.s32.totalorder %s91, %s107
    %p109 = scmp.eq.s32.totalorder %s15, 0
    %p110 = por %p108, %p109
    %p111 = scmp.le.s32.totalorder 1, %s9
    %p112 = scmp.lt.s32.totalorder %s9, 3
    %p113 = pnand %p111, %p112
    %p114 = pneg %p113
    // Predicated region
    $region9: #{up_pallas.3} parent=5 // pred_check
      _
    $region10: #{up_pallas.3} parent=5 // pred_check_branch
      %116 = sbr.rel (%p113) target = $region12
    $region11: #{up_pallas.3} parent=5 // pred_region
      %s117 = ssub.s32 %s9, 1
      // Predicated region
      $region13: #{up_pallas.3} parent=11 // pred_check
        %p118 = pneg %p56
      $region14: #{up_pallas.3} parent=11 // pred_check_branch
        %120 = sbr.rel (%p118) target = $region16
      $region15: #{up_pallas.3} parent=11 // pred_region
        _
      $region16: #{up_pallas.3} parent=11 // pred_fallthru
        _
      // Predicated region
      $region17: #{up_pallas.3} parent=11 // pred_check
        %p121 = pneg %p77
      $region18: #{up_pallas.3} parent=11 // pred_check_branch
        %123 = sbr.rel (%p121) target = $region20
      $region19: #{up_pallas.3} parent=11 // pred_region
        _
      $region20: #{up_pallas.3} parent=11 // pred_fallthru
        _
    $region12: #{up_pallas.3} parent=5 // pred_fallthru
      _
    %p124 = scmp.lt.s32.totalorder %s9, 2
    // Predicated region
    $region21: #{up_pallas.3} parent=5 // pred_check
      %p125 = pneg %p124
    $region22: #{up_pallas.3} parent=5 // pred_check_branch
      %127 = sbr.rel (%p125) target = $region24
    $region23: #{up_pallas.3} parent=5 // pred_region
      // Predicated region
      $region25: #{up_pallas.3} parent=23 // pred_check
        %p128 = pneg %p29
      $region26: #{up_pallas.3} parent=23 // pred_check_branch
        %130 = sbr.rel (%p128) target = $region28
      $region27: #{up_pallas.3} parent=23 // pred_region
        %p131 = scmp.lt.s32.totalorder %s9, 1
        %s132 = scalar_select %p131, %s9, 1
        %s133 = smul.addr %s132, 8
        %s134 = smul.addr %s133, 4
        %s135 = scalar_lea.vmem %s0, %s134
      $region28: #{up_pallas.3} parent=23 // pred_fallthru
        _
    $region24: #{up_pallas.3} parent=5 // pred_fallthru
      _
    %p136 = scmp.le.s32.totalorder 1, %s9
    %p137 = scmp.lt.s32.totalorder %s9, 3
    %p138 = pnand %p136, %p137
    %p139 = pneg %p138
    // Predicated region
    $region29: #{up_pallas.3} parent=5 // pred_check
      _
    $region30: #{up_pallas.3} parent=5 // pred_check_branch
      %141 = sbr.rel (%p138) target = $region32
    $region31: #{up_pallas.3} parent=5 // pred_region
      %s142 = ssub.s32 %s9, 1
      %p143 = scmp.lt.s32.totalorder %s14, 1
      %s144 = scalar_select %p143, %s14, 1
      %s145 = smul.addr %s144, 8
      %s146 = smul.addr %s145, 4
      %s147 = scalar_lea.vmem %s0, %s146
      %p148 = pneg %p35
      %p149 = pneg %p32
      %p150 = pneg %p56
      %p151 = pneg %p53
      %p152 = pneg %p77
      %p153 = pneg %p74
      %p154 = pneg %p103
      %p155 = pneg %p100
      %p156 = scmp.lt.s32.totalorder %s14, 1
      %s157 = scalar_select %p156, %s14, 1
      %s158 = smul.addr %s157, 32
      %s159 = smul.addr %s158, 4
      %s160 = scalar_lea.vmem %s3, %s159
      %p161 = scmp.lt.s32.totalorder %s14, 1
      %s162 = scalar_select %p161, %s14, 1
      %s163 = smul.addr %s162, 8
      %s164 = smul.addr %s163, 4
      %s165 = scalar_lea.vmem %s0, %s164
      %p166 = scmp.lt.s32.totalorder %s14, 1
      %s167 = scalar_select %p166, %s14, 1
      %s168 = smul.addr %s167, 32
      %s169 = smul.addr %s168, 4
      %s170 = scalar_lea.vmem %s3, %s169
      %v171 = vld [vmem:[%s165] sm:$0xf]
      %v172 = vld [vmem:[%s165 + $0x4] sm:$0xf]
      %v173 = vld [vmem:[%s165 + $0x8] sm:$0xf]
      %v174 = vld [vmem:[%s165 + $0xc] sm:$0xf]
      %v175 = vld [vmem:[%s165 + $0x10] sm:$0xf]
      %v176 = vld [vmem:[%s165 + $0x14] sm:$0xf]
      %v177 = vld [vmem:[%s165 + $0x18] sm:$0xf]
      %v178 = vld [vmem:[%s165 + $0x1c] sm:$0xf]
      %v179 = vld [vmem:[%s1] sm:$0xff]
      %v180 = vld [vmem:[%s1 + $0x8] sm:$0xff]
      %v181 = vld [vmem:[%s1 + $0x10] sm:$0xff]
      %v182 = vld [vmem:[%s1 + $0x18] sm:$0xff]
      %v183 = vld [vmem:[%s1 + $0x20] sm:$0xff]
      %v184 = vld [vmem:[%s1 + $0x28] sm:$0xff]
      %v185 = vld [vmem:[%s1 + $0x30] sm:$0xff]
      %v186 = vld [vmem:[%s1 + $0x38] sm:$0xff]
      %v187 = vld [vmem:[%s1 + $0x40] sm:$0xff]
      %v188 = vld [vmem:[%s1 + $0x48] sm:$0xff]
      %v189 = vld [vmem:[%s1 + $0x50] sm:$0xff]
      %v190 = vld [vmem:[%s1 + $0x58] sm:$0xff]
      %v191 = vld [vmem:[%s1 + $0x60] sm:$0xff]
      %v192 = vld [vmem:[%s1 + $0x68] sm:$0xff]
      %v193 = vld [vmem:[%s1 + $0x70] sm:$0xff]
      %v194 = vld [vmem:[%s1 + $0x78] sm:$0xff]
      %v195 = vld [vmem:[%s1 + $0x80] sm:$0xff]
      %v196 = vld [vmem:[%s1 + $0x88] sm:$0xff]
      %v197 = vld [vmem:[%s1 + $0x90] sm:$0xff]
      %v198 = vld [vmem:[%s1 + $0x98] sm:$0xff]
      %v199 = vld [vmem:[%s1 + $0xa0] sm:$0xff]
      %v200 = vld [vmem:[%s1 + $0xa8] sm:$0xff]
      %v201 = vld [vmem:[%s1 + $0xb0] sm:$0xff]
      %v202 = vld [vmem:[%s1 + $0xb8] sm:$0xff]
      %v203 = vld [vmem:[%s1 + $0xc0] sm:$0xff]
      %v204 = vld [vmem:[%s1 + $0xc8] sm:$0xff]
      %v205 = vld [vmem:[%s1 + $0xd0] sm:$0xff]
      %v206 = vld [vmem:[%s1 + $0xd8] sm:$0xff]
      %v207 = vld [vmem:[%s1 + $0xe0] sm:$0xff]
      %v208 = vld [vmem:[%s1 + $0xe8] sm:$0xff]
      %v209 = vld [vmem:[%s1 + $0xf0] sm:$0xff]
      %v210 = vld [vmem:[%s1 + $0xf8] sm:$0xff]
      %v211 = vld [vmem:[%s2] sm:$0xf]
      %v213 = vperm.slane %v211, 0
      %v214 = vperm.slane %v211, 1
      %v215 = vperm.slane %v211, 2
      %v216 = vperm.slane %v211, 3
      %v229 = vunpack.c.l.b16 %v171
      %v230 = vunpack.c.l.b16 %v172
      %v231 = vunpack.c.l.b16 %v173
      %v232 = vunpack.c.l.b16 %v174
      %v233 = vunpack.c.l.b16 %v175
      %v234 = vunpack.c.l.b16 %v176
      %v235 = vunpack.c.l.b16 %v177
      %v236 = vunpack.c.l.b16 %v178
      %v237 = vpack.c.b16 %v230, %v229
      %v238 = vpack.c.b16 %v232, %v231
      %v239 = vpack.c.b16 %v234, %v233
      %v240 = vpack.c.b16 %v236, %v235
      %v277 = vunpack.c.l.b16 %v179
      %v278 = vunpack.c.h.b16 %v179
      %v279 = vunpack.c.l.b16 %v180
      %v280 = vunpack.c.h.b16 %v180
      %v281 = vunpack.c.l.b16 %v181
      %v282 = vunpack.c.h.b16 %v181
      %v283 = vunpack.c.l.b16 %v182
      %v284 = vunpack.c.h.b16 %v182
      %v285 = vunpack.c.l.b16 %v183
      %v286 = vunpack.c.h.b16 %v183
      %v287 = vunpack.c.l.b16 %v184
      %v288 = vunpack.c.h.b16 %v184
      %v289 = vunpack.c.l.b16 %v185
      %v290 = vunpack.c.h.b16 %v185
      %v291 = vunpack.c.l.b16 %v186
      %v292 = vunpack.c.h.b16 %v186
      %v293 = vunpack.c.l.b16 %v187
      %v294 = vunpack.c.h.b16 %v187
      %v295 = vunpack.c.l.b16 %v188
      %v296 = vunpack.c.h.b16 %v188
      %v297 = vunpack.c.l.b16 %v189
      %v298 = vunpack.c.h.b16 %v189
      %v299 = vunpack.c.l.b16 %v190
      %v300 = vunpack.c.h.b16 %v190
      %v301 = vunpack.c.l.b16 %v191
      %v302 = vunpack.c.h.b16 %v191
      %v303 = vunpack.c.l.b16 %v192
      %v304 = vunpack.c.h.b16 %v192
      %v305 = vunpack.c.l.b16 %v193
      %v306 = vunpack.c.h.b16 %v193
      %v307 = vunpack.c.l.b16 %v194
      %v308 = vunpack.c.h.b16 %v194
      %v309 = vunpack.c.l.b16 %v195
      %v310 = vunpack.c.h.b16 %v195
      %v311 = vunpack.c.l.b16 %v196
      %v312 = vunpack.c.h.b16 %v196
      %v313 = vunpack.c.l.b16 %v197
      %v314 = vunpack.c.h.b16 %v197
      %v315 = vunpack.c.l.b16 %v198
      %v316 = vunpack.c.h.b16 %v198
      %v317 = vunpack.c.l.b16 %v199
      %v318 = vunpack.c.h.b16 %v199
      %v319 = vunpack.c.l.b16 %v200
      %v320 = vunpack.c.h.b16 %v200
      %v321 = vunpack.c.l.b16 %v201
      %v322 = vunpack.c.h.b16 %v201
      %v323 = vunpack.c.l.b16 %v202
      %v324 = vunpack.c.h.b16 %v202
      %v325 = vunpack.c.l.b16 %v203
      %v326 = vunpack.c.h.b16 %v203
      %v327 = vunpack.c.l.b16 %v204
      %v328 = vunpack.c.h.b16 %v204
      %v329 = vunpack.c.l.b16 %v205
      %v330 = vunpack.c.h.b16 %v205
      %v331 = vunpack.c.l.b16 %v206
      %v332 = vunpack.c.h.b16 %v206
      %v333 = vunpack.c.l.b16 %v207
      %v334 = vunpack.c.h.b16 %v207
      %v335 = vunpack.c.l.b16 %v208
      %v336 = vunpack.c.h.b16 %v208
      %v337 = vunpack.c.l.b16 %v209
      %v338 = vunpack.c.h.b16 %v209
      %v339 = vunpack.c.l.b16 %v210
      %v340 = vunpack.c.h.b16 %v210
      %v341 = vpack.c.b16 %v281, %v277
      %v342 = vpack.c.b16 %v282, %v278
      %v343 = vpack.c.b16 %v283, %v279
      %v344 = vpack.c.b16 %v284, %v280
      %v345 = vpack.c.b16 %v289, %v285
      %v346 = vpack.c.b16 %v290, %v286
      %v347 = vpack.c.b16 %v291, %v287
      %v348 = vpack.c.b16 %v292, %v288
      %v349 = vpack.c.b16 %v297, %v293
      %v350 = vpack.c.b16 %v298, %v294
      %v351 = vpack.c.b16 %v299, %v295
      %v352 = vpack.c.b16 %v300, %v296
      %v353 = vpack.c.b16 %v305, %v301
      %v354 = vpack.c.b16 %v306, %v302
      %v355 = vpack.c.b16 %v307, %v303
      %v356 = vpack.c.b16 %v308, %v304
      %v357 = vpack.c.b16 %v313, %v309
      %v358 = vpack.c.b16 %v314, %v310
      %v359 = vpack.c.b16 %v315, %v311
      %v360 = vpack.c.b16 %v316, %v312
      %v361 = vpack.c.b16 %v321, %v317
      %v362 = vpack.c.b16 %v322, %v318
      %v363 = vpack.c.b16 %v323, %v319
      %v364 = vpack.c.b16 %v324, %v320
      %v365 = vpack.c.b16 %v329, %v325
      %v366 = vpack.c.b16 %v330, %v326
      %v367 = vpack.c.b16 %v331, %v327
      %v368 = vpack.c.b16 %v332, %v328
      %v369 = vpack.c.b16 %v337, %v333
      %v370 = vpack.c.b16 %v338, %v334
      %v371 = vpack.c.b16 %v339, %v335
      %v372 = vpack.c.b16 %v340, %v336
      %405 = vmatpush.bf16.msra.mxu0 %v369
      %406 = vmatpush.bf16.msra.mxu0 %v365
      %407 = vmatpush.bf16.msra.mxu0 %v361
      %408 = vmatpush.bf16.msra.mxu0 %v357
      %409 = vmatpush.bf16.msra.mxu0 %v353
      %410 = vmatpush.bf16.msra.mxu0 %v349
      %411 = vmatpush.bf16.msra.mxu0 %v345
      %412 = vmatpush.bf16.msra.mxu0 %v341
      %413 = vmatmul.bf16.gmra.mxu0 %v237
      %v414 = vpop.f32.mrf.mxu0
      %v415 = vadd.f32 %v213, %v414
      %v416 = vpop.f32.mrf.mxu0
      %v417 = vadd.f32 %v213, %v416
      %418 = vmatmul.bf16.gmra.mxu0 %v238
      %v419 = vpop.f32.mrf.mxu0
      %v420 = vadd.f32 %v213, %v419
      %v421 = vpop.f32.mrf.mxu0
      %v422 = vadd.f32 %v213, %v421
      %423 = vmatmul.bf16.gmra.mxu0 %v239
      %v424 = vpop.f32.mrf.mxu0
      %v425 = vadd.f32 %v213, %v424
      %v426 = vpop.f32.mrf.mxu0
      %v427 = vadd.f32 %v213, %v426
      %428 = vmatmul.bf16.gmra.mxu0 %v240
      %v429 = vpop.f32.mrf.mxu0
      %v430 = vadd.f32 %v213, %v429
      %v431 = vpop.f32.mrf.mxu0
      %v432 = vadd.f32 %v213, %v431
      %433 = vdwg.mxu0
      %434 = vmatpush.bf16.msra.mxu0 %v370
      %435 = vmatpush.bf16.msra.mxu0 %v366
      %436 = vmatpush.bf16.msra.mxu0 %v362
      %437 = vmatpush.bf16.msra.mxu0 %v358
      %438 = vmatpush.bf16.msra.mxu0 %v354
      %439 = vmatpush.bf16.msra.mxu0 %v350
      %440 = vmatpush.bf16.msra.mxu0 %v346
      %441 = vmatpush.bf16.msra.mxu0 %v342
      %442 = vmatmul.bf16.gmra.mxu0 %v237
      %v443 = vpop.f32.mrf.mxu0
      %v444 = vadd.f32 %v214, %v443
      %v445 = vpop.f32.mrf.mxu0
      %v446 = vadd.f32 %v214, %v445
      %447 = vmatmul.bf16.gmra.mxu0 %v238
      %v448 = vpop.f32.mrf.mxu0
      %v449 = vadd.f32 %v214, %v448
      %v450 = vpop.f32.mrf.mxu0
      %v451 = vadd.f32 %v214, %v450
      %452 = vmatmul.bf16.gmra.mxu0 %v239
      %v453 = vpop.f32.mrf.mxu0
      %v454 = vadd.f32 %v214, %v453
      %v455 = vpop.f32.mrf.mxu0
      %v456 = vadd.f32 %v214, %v455
      %457 = vmatmul.bf16.gmra.mxu0 %v240
      %v458 = vpop.f32.mrf.mxu0
      %v459 = vadd.f32 %v214, %v458
      %v460 = vpop.f32.mrf.mxu0
      %v461 = vadd.f32 %v214, %v460
      %462 = vdwg.mxu0
      %463 = vmatpush.bf16.msra.mxu0 %v371
      %464 = vmatpush.bf16.msra.mxu0 %v367
      %465 = vmatpush.bf16.msra.mxu0 %v363
      %466 = vmatpush.bf16.msra.mxu0 %v359
      %467 = vmatpush.bf16.msra.mxu0 %v355
      %468 = vmatpush.bf16.msra.mxu0 %v351
      %469 = vmatpush.bf16.msra.mxu0 %v347
      %470 = vmatpush.bf16.msra.mxu0 %v343
      %471 = vmatmul.bf16.gmra.mxu0 %v237
      %v472 = vpop.f32.mrf.mxu0
      %v473 = vadd.f32 %v215, %v472
      %v474 = vpop.f32.mrf.mxu0
      %v475 = vadd.f32 %v215, %v474
      %476 = vmatmul.bf16.gmra.mxu0 %v238
      %v477 = vpop.f32.mrf.mxu0
      %v478 = vadd.f32 %v215, %v477
      %v479 = vpop.f32.mrf.mxu0
      %v480 = vadd.f32 %v215, %v479
      %481 = vmatmul.bf16.gmra.mxu0 %v239
      %v482 = vpop.f32.mrf.mxu0
      %v483 = vadd.f32 %v215, %v482
      %v484 = vpop.f32.mrf.mxu0
      %v485 = vadd.f32 %v215, %v484
      %486 = vmatmul.bf16.gmra.mxu0 %v240
      %v487 = vpop.f32.mrf.mxu0
      %v488 = vadd.f32 %v215, %v487
      %v489 = vpop.f32.mrf.mxu0
      %v490 = vadd.f32 %v215, %v489
      %491 = vdwg.mxu0
      %492 = vmatpush.bf16.msra.mxu0 %v372
      %493 = vmatpush.bf16.msra.mxu0 %v368
      %494 = vmatpush.bf16.msra.mxu0 %v364
      %495 = vmatpush.bf16.msra.mxu0 %v360
      %496 = vmatpush.bf16.msra.mxu0 %v356
      %497 = vmatpush.bf16.msra.mxu0 %v352
      %498 = vmatpush.bf16.msra.mxu0 %v348
      %499 = vmatpush.bf16.msra.mxu0 %v344
      %500 = vmatmul.bf16.gmra.mxu0 %v237
      %v501 = vpop.f32.mrf.mxu0
      %v502 = vadd.f32 %v216, %v501
      %v503 = vpop.f32.mrf.mxu0
      %v504 = vadd.f32 %v216, %v503
      %505 = vmatmul.bf16.gmra.mxu0 %v238
      %v506 = vpop.f32.mrf.mxu0
      %v507 = vadd.f32 %v216, %v506
      %v508 = vpop.f32.mrf.mxu0
      %v509 = vadd.f32 %v216, %v508
      %510 = vmatmul.bf16.gmra.mxu0 %v239
      %v511 = vpop.f32.mrf.mxu0
      %v512 = vadd.f32 %v216, %v511
      %v513 = vpop.f32.mrf.mxu0
      %v514 = vadd.f32 %v216, %v513
      %515 = vmatmul.bf16.gmra.mxu0 %v240
      %v516 = vpop.f32.mrf.mxu0
      %v517 = vadd.f32 %v216, %v516
      %v518 = vpop.f32.mrf.mxu0
      %v519 = vadd.f32 %v216, %v518
      %520 = vdwg.mxu0
      %v521 = vpack.c.bf16 %v444, %v415
      %v522 = vpack.c.bf16 %v502, %v473
      %v523 = vpack.c.bf16 %v446, %v417
      %v524 = vpack.c.bf16 %v504, %v475
      %v525 = vpack.c.bf16 %v449, %v420
      %v526 = vpack.c.bf16 %v507, %v478
      %v527 = vpack.c.bf16 %v451, %v422
      %v528 = vpack.c.bf16 %v509, %v480
      %v529 = vpack.c.bf16 %v454, %v425
      %v530 = vpack.c.bf16 %v512, %v483
      %v531 = vpack.c.bf16 %v456, %v427
      %v532 = vpack.c.bf16 %v514, %v485
      %v533 = vpack.c.bf16 %v459, %v430
      %v534 = vpack.c.bf16 %v517, %v488
      %v535 = vpack.c.bf16 %v461, %v432
      %v536 = vpack.c.bf16 %v519, %v490
      %537 = vst [vmem:[%s170] sm:$0xff] %v521
      %538 = vst [vmem:[%s170 + $0x8] sm:$0xff] %v522
      %539 = vst [vmem:[%s170 + $0x10] sm:$0xff] %v523
      %540 = vst [vmem:[%s170 + $0x18] sm:$0xff] %v524
      %541 = vst [vmem:[%s170 + $0x20] sm:$0xff] %v525
      %542 = vst [vmem:[%s170 + $0x28] sm:$0xff] %v526
      %543 = vst [vmem:[%s170 + $0x30] sm:$0xff] %v527
      %544 = vst [vmem:[%s170 + $0x38] sm:$0xff] %v528
      %545 = vst [vmem:[%s170 + $0x40] sm:$0xff] %v529
      %546 = vst [vmem:[%s170 + $0x48] sm:$0xff] %v530
      %547 = vst [vmem:[%s170 + $0x50] sm:$0xff] %v531
      %548 = vst [vmem:[%s170 + $0x58] sm:$0xff] %v532
      %549 = vst [vmem:[%s170 + $0x60] sm:$0xff] %v533
      %550 = vst [vmem:[%s170 + $0x68] sm:$0xff] %v534
      %551 = vst [vmem:[%s170 + $0x70] sm:$0xff] %v535
      %552 = vst [vmem:[%s170 + $0x78] sm:$0xff] %v536
      %p553 = scmp.lt.s32.totalorder %s14, 1
      %s554 = scalar_select %p553, %s14, 1
      %s555 = smul.addr %s554, 32
      %s556 = smul.addr %s555, 4
      %s557 = scalar_lea.vmem %s3, %s556
      // Predicated region
      $region33: #{up_pallas.3} parent=31 // pred_check
        %p558 = pneg %p100
      $region34: #{up_pallas.3} parent=31 // pred_check_branch
        %560 = sbr.rel (%p558) target = $region36
      $region35: #{up_pallas.3} parent=31 // pred_region
        _
      $region36: #{up_pallas.3} parent=31 // pred_fallthru
        _
    $region32: #{up_pallas.3} parent=5 // pred_fallthru
      _
    %p561 = scmp.le.s32.totalorder 2, %s9
    // Predicated region
    $region37: #{up_pallas.3} parent=5 // pred_check
      %p562 = pneg %p561
    $region38: #{up_pallas.3} parent=5 // pred_check_branch
      %564 = sbr.rel (%p562) target = $region40
    $region39: #{up_pallas.3} parent=5 // pred_region
      %s565 = ssub.s32 %s9, 2
      // Predicated region
      $region41: #{up_pallas.3} parent=39 // pred_check
        %p566 = pneg %p106
      $region42: #{up_pallas.3} parent=39 // pred_check_branch
        %568 = sbr.rel (%p566) target = $region44
      $region43: #{up_pallas.3} parent=39 // pred_region
        %p569 = scmp.lt.s32.totalorder %s15, 1
        %s570 = scalar_select %p569, %s15, 1
        %s571 = smul.addr %s570, 32
        %s572 = smul.addr %s571, 4
        %s573 = scalar_lea.vmem %s3, %s572
      $region44: #{up_pallas.3} parent=39 // pred_fallthru
        _
    $region40: #{up_pallas.3} parent=5 // pred_fallthru
      _
  $region6: #{up_pallas.3} parent=0 // loop_footer
    %s13 = sadd.s32 1, %s9
  $region7: #{up_pallas.3} parent=0 // loop_footer_branch
    %8 = sbr.rel target = $region3
  $region8: #{up_pallas.3} parent=0 // loop_exit
    _

// kernel: up_pallas.5
$region0: #{up_pallas.5}
  #allocation0 [shape = 'u32[]', space=smem, size = 0x4, offset = 0x4, fixed_abs, tag = 'smem constant byte address 0x4 - core index']
  #allocation1 [shape = 'u32[72,128]{1,0:T(1,128)}', space=vmem, size = 0x9000, scoped, tag = 'internal scratch']
  #allocation2 [shape = 'f32[290,64]{1,0:T(8,128)}', space=vmem, size = 0x25000, scoped, tag = 'scratch operand']
  %s0 = inlined_call_operand.vmem [shape: bf16[2,256,64], index: 0, kind: input, shape index: {}]
  %s1 = inlined_call_operand.vmem [shape: bf16[3,3,64,64], index: 1, kind: input, shape index: {}]
  %s2 = inlined_call_operand.vmem [shape: f32[1,64], index: 2, kind: input, shape index: {}]
  %s3 = inlined_call_operand.vmem [shape: f32[1,64], index: 3, kind: input, shape index: {}]
  %s4 = inlined_call_operand.hbm [shape: f32[2,256,64], index: 4, kind: output, shape index: {}]
  %s5 = sld [smem:[#allocation0]]
  $region49: #{up_pallas.5} parent=0
    _
  %s7 = ssub.s32 1, %s5
  %s8 = scalar_select 0, %s7, %s5
  $region1: #{up_pallas.5} parent=0
    #allocation3 [shape = 'u8[262144]{0}', space=vmem, size = 0x40000, scoped, tag = 'output window, operand 0']
    #allocation4 [shape = 's32[2]{0}', space=sflag, size = 0x8, scoped, tag = 'scoped memory for up_pallas.5']
    %9 = vsyncpa [#allocation4], 0
    %s10 = scalar_lea.sflag [#allocation4], 1
    %11 = vsyncpa %s10, 0
    loop: start=0, step=1, limit=4
    $region2: #{up_pallas.5} parent=1 // loop_pre_header
      _
    $region3: #{up_pallas.5} parent=1 // loop_header
      %s13 = sphi 0, %s17
      %p14 = scmp.ge.s32.totalorder %s13, 4
      %s23 = sphi 0, %s25
      %s26 = sphi 0, %s23
      %s27 = sphi 0, %s26
      %s43 = sphi 0, %s27
      %s47 = sphi 0, %s47
      %s49 = sphi 0, %s47
      %s50 = sphi 0, %s49
      %s64 = sphi 0, %s50
      %s68 = sphi 0, %s68
      %s70 = sphi 0, %s68
      %s71 = sphi 0, %s70
      %s85 = sphi 0, %s71
      %s89 = sphi 0, %s89
      %s91 = sphi 0, %s89
      %s92 = sphi 0, %s91
      %s106 = sphi 0, %s92
      %s112 = sphi 0, %s114
      %s115 = sphi 0, %s112
      %s116 = sphi 0, %s115
      %s132 = sphi 0, %s116
    $region4: #{up_pallas.5} parent=1 // loop_header_branch
      %16 = sbr.rel (%p14) target = $region8
    $region5: #{up_pallas.5} parent=1 // loop_body
      %s18 = ssub.s32 %s13, 1
      %s19 = ssub.s32 %s13, 2
      %s20 = sadd.s32 %s13, 1
      %s21 = ssub.s32 %s13, %s20
      %p22 = scmp.eq.s32.totalorder %s21, 0
      %s24 = sadd.s32 %s23, 1
      %s25 = scalar_select %p22, %s23, %s24
      %p28 = pneg %p22
      %p29 = scmp.eq.s32.totalorder %s13, 1
      %p30 = por %p28, %p29
      %p31 = scmp.ne.s32.totalorder %s23, %s26
      %p32 = scmp.eq.s32.totalorder %s13, 0
      %p33 = por %p31, %p32
      %p34 = scmp.ne.s32.totalorder %s23, %s26
      %p35 = scmp.eq.s32.totalorder %s18, 1
      %p36 = por %p34, %p35
      %p37 = scmp.ne.s32.totalorder %s26, %s27
      %p38 = scmp.eq.s32.totalorder %s18, 0
      %p39 = por %p37, %p38
      %p40 = scmp.ne.s32.totalorder %s26, %s27
      %p41 = scmp.eq.s32.totalorder %s19, 1
      %p42 = por %p40, %p41
      %p44 = scmp.ne.s32.totalorder %s27, %s43
      %p45 = scmp.eq.s32.totalorder %s19, 0
      %p46 = por %p44, %p45
      %s48 = sadd.s32 %s47, 1
      %p51 = scmp.eq.s32.totalorder %s13, 1
      %p52 = scmp.ne.s32.totalorder %s47, %s49
      %p53 = scmp.eq.s32.totalorder %s13, 0
      %p54 = por %p52, %p53
      %p55 = scmp.ne.s32.totalorder %s47, %s49
      %p56 = scmp.eq.s32.totalorder %s18, 1
      %p57 = por %p55, %p56
      %p58 = scmp.ne.s32.totalorder %s49, %s50
      %p59 = scmp.eq.s32.totalorder %s18, 0
      %p60 = por %p58, %p59
      %p61 = scmp.ne.s32.totalorder %s49, %s50
      %p62 = scmp.eq.s32.totalorder %s19, 1
      %p63 = por %p61, %p62
      %p65 = scmp.ne.s32.totalorder %s50, %s64
      %p66 = scmp.eq.s32.totalorder %s19, 0
      %p67 = por %p65, %p66
      %s69 = sadd.s32 %s68, 1
      %p72 = scmp.eq.s32.totalorder %s13, 1
      %p73 = scmp.ne.s32.totalorder %s68, %s70
      %p74 = scmp.eq.s32.totalorder %s13, 0
      %p75 = por %p73, %p74
      %p76 = scmp.ne.s32.totalorder %s68, %s70
      %p77 = scmp.eq.s32.totalorder %s18, 1
      %p78 = por %p76, %p77
      %p79 = scmp.ne.s32.totalorder %s70, %s71
      %p80 = scmp.eq.s32.totalorder %s18, 0
      %p81 = por %p79, %p80
      %p82 = scmp.ne.s32.totalorder %s70, %s71
      %p83 = scmp.eq.s32.totalorder %s19, 1
      %p84 = por %p82, %p83
      %p86 = scmp.ne.s32.totalorder %s71, %s85
      %p87 = scmp.eq.s32.totalorder %s19, 0
      %p88 = por %p86, %p87
      %s90 = sadd.s32 %s89, 1
      %p93 = scmp.eq.s32.totalorder %s13, 1
      %p94 = scmp.ne.s32.totalorder %s89, %s91
      %p95 = scmp.eq.s32.totalorder %s13, 0
      %p96 = por %p94, %p95
      %p97 = scmp.ne.s32.totalorder %s89, %s91
      %p98 = scmp.eq.s32.totalorder %s18, 1
      %p99 = por %p97, %p98
      %p100 = scmp.ne.s32.totalorder %s91, %s92
      %p101 = scmp.eq.s32.totalorder %s18, 0
      %p102 = por %p100, %p101
      %p103 = scmp.ne.s32.totalorder %s91, %s92
      %p104 = scmp.eq.s32.totalorder %s19, 1
      %p105 = por %p103, %p104
      %p107 = scmp.ne.s32.totalorder %s92, %s106
      %p108 = scmp.eq.s32.totalorder %s19, 0
      %p109 = por %p107, %p108
      %s110 = ssub.s32 %s13, %s20
      %p111 = scmp.eq.s32.totalorder %s110, 0
      %s113 = sadd.s32 %s112, 1
      %s114 = scalar_select %p111, %s112, %s113
      %p117 = pneg %p111
      %p118 = scmp.eq.s32.totalorder %s13, 1
      %p119 = por %p117, %p118
      %p120 = scmp.ne.s32.totalorder %s112, %s115
      %p121 = scmp.eq.s32.totalorder %s13, 0
      %p122 = por %p120, %p121
      %p123 = scmp.ne.s32.totalorder %s112, %s115
      %p124 = scmp.eq.s32.totalorder %s18, 1
      %p125 = por %p123, %p124
      %p126 = scmp.ne.s32.totalorder %s115, %s116
      %p127 = scmp.eq.s32.totalorder %s18, 0
      %p128 = por %p126, %p127
      %p129 = scmp.ne.s32.totalorder %s115, %s116
      %p130 = scmp.eq.s32.totalorder %s19, 1
      %p131 = por %p129, %p130
      %p133 = scmp.ne.s32.totalorder %s116, %s132
      %p134 = scmp.eq.s32.totalorder %s19, 0
      %p135 = por %p133, %p134
      %p136 = scmp.le.s32.totalorder 1, %s13
      %p137 = scmp.lt.s32.totalorder %s13, 3
      %p138 = pnand %p136, %p137
      %p139 = pneg %p138
      // Predicated region
      $region9: #{up_pallas.5} parent=5 // pred_check
        _
      $region10: #{up_pallas.5} parent=5 // pred_check_branch
        %141 = sbr.rel (%p138) target = $region12
      $region11: #{up_pallas.5} parent=5 // pred_region
        %s142 = ssub.s32 %s13, 1
        // Predicated region
        $region13: #{up_pallas.5} parent=11 // pred_check
          %p143 = pneg %p60
        $region14: #{up_pallas.5} parent=11 // pred_check_branch
          %145 = sbr.rel (%p143) target = $region16
        $region15: #{up_pallas.5} parent=11 // pred_region
          _
        $region16: #{up_pallas.5} parent=11 // pred_fallthru
          _
        // Predicated region
        $region17: #{up_pallas.5} parent=11 // pred_check
          %p146 = pneg %p81
        $region18: #{up_pallas.5} parent=11 // pred_check_branch
          %148 = sbr.rel (%p146) target = $region20
        $region19: #{up_pallas.5} parent=11 // pred_region
          _
        $region20: #{up_pallas.5} parent=11 // pred_fallthru
          _
        // Predicated region
        $region21: #{up_pallas.5} parent=11 // pred_check
          %p149 = pneg %p102
        $region22: #{up_pallas.5} parent=11 // pred_check_branch
          %151 = sbr.rel (%p149) target = $region24
        $region23: #{up_pallas.5} parent=11 // pred_region
          _
        $region24: #{up_pallas.5} parent=11 // pred_fallthru
          _
      $region12: #{up_pallas.5} parent=5 // pred_fallthru
        _
      %p152 = scmp.lt.s32.totalorder %s13, 2
      // Predicated region
      $region25: #{up_pallas.5} parent=5 // pred_check
        %p153 = pneg %p152
      $region26: #{up_pallas.5} parent=5 // pred_check_branch
        %155 = sbr.rel (%p153) target = $region28
      $region27: #{up_pallas.5} parent=5 // pred_region
        // Predicated region
        $region29: #{up_pallas.5} parent=27 // pred_check
          %p156 = pneg %p33
        $region30: #{up_pallas.5} parent=27 // pred_check_branch
          %158 = sbr.rel (%p156) target = $region32
        $region31: #{up_pallas.5} parent=27 // pred_region
          %p159 = scmp.lt.s32.totalorder %s13, 1
          %s160 = scalar_select %p159, %s13, 1
          %s161 = smul.addr %s160, 32
          %s162 = smul.addr %s161, 4
          %s163 = scalar_lea.vmem %s0, %s162
        $region32: #{up_pallas.5} parent=27 // pred_fallthru
          _
      $region28: #{up_pallas.5} parent=5 // pred_fallthru
        _
      %p164 = scmp.le.s32.totalorder 1, %s13
      %p165 = scmp.lt.s32.totalorder %s13, 3
      %p166 = pnand %p164, %p165
      %p167 = pneg %p166
      // Predicated region
      $region33: #{up_pallas.5} parent=5 // pred_check
        _
      $region34: #{up_pallas.5} parent=5 // pred_check_branch
        %169 = sbr.rel (%p166) target = $region36
      $region35: #{up_pallas.5} parent=5 // pred_region
        %s170 = ssub.s32 %s13, 1
        %p171 = scmp.lt.s32.totalorder %s18, 1
        %s172 = scalar_select %p171, %s18, 1
        %s173 = smul.addr %s172, 32
        %s174 = smul.addr %s173, 4
        %s175 = scalar_lea.vmem %s0, %s174
        %p176 = pneg %p39
        %p177 = pneg %p36
        %p178 = pneg %p60
        %p179 = pneg %p57
        %p180 = pneg %p81
        %p181 = pneg %p78
        %p182 = pneg %p102
        %p183 = pneg %p99
        %p184 = pneg %p128
        %p185 = pneg %p125
        %s186 = sand.u32 %s115, 1
        %s187 = scalar_lea.sflag [#allocation4], %s186
        %s188 = sand.u32 %s115, 1
        %s189 = smul.addr %s188, 256
        %s190 = scalar_lea.vmem [#allocation3], %s189
        %p191 = scmp.lt.s32.totalorder %s18, 1
        %s192 = scalar_select %p191, %s18, 1
        %s193 = smul.addr %s192, 32
        %s194 = smul.addr %s193, 4
        %s195 = scalar_lea.vmem %s0, %s194
        %v197 = vld [vmem:[%s195] sm:$0xf]
        %v198 = vld [vmem:[%s195 + $0x4] sm:$0xf]
        %v199 = vld [vmem:[%s195 + $0x8] sm:$0xf]
        %v200 = vld [vmem:[%s195 + $0xc] sm:$0xf]
        %v201 = vld [vmem:[%s195 + $0x10] sm:$0xf]
        %v202 = vld [vmem:[%s195 + $0x14] sm:$0xf]
        %v203 = vld [vmem:[%s195 + $0x18] sm:$0xf]
        %v204 = vld [vmem:[%s195 + $0x1c] sm:$0xf]
        %v205 = vld [vmem:[%s195 + $0x20] sm:$0xf]
        %v206 = vld [vmem:[%s195 + $0x24] sm:$0xf]
        %v207 = vld [vmem:[%s195 + $0x28] sm:$0xf]
        %v208 = vld [vmem:[%s195 + $0x2c] sm:$0xf]
        %v209 = vld [vmem:[%s195 + $0x30] sm:$0xf]
        %v210 = vld [vmem:[%s195 + $0x34] sm:$0xf]
        %v211 = vld [vmem:[%s195 + $0x38] sm:$0xf]
        %v212 = vld [vmem:[%s195 + $0x3c] sm:$0xf]
        %v213 = vld [vmem:[%s195 + $0x40] sm:$0xf]
        %v214 = vld [vmem:[%s195 + $0x44] sm:$0xf]
        %v215 = vld [vmem:[%s195 + $0x48] sm:$0xf]
        %v216 = vld [vmem:[%s195 + $0x4c] sm:$0xf]
        %v217 = vld [vmem:[%s195 + $0x50] sm:$0xf]
        %v218 = vld [vmem:[%s195 + $0x54] sm:$0xf]
        %v219 = vld [vmem:[%s195 + $0x58] sm:$0xf]
        %v220 = vld [vmem:[%s195 + $0x5c] sm:$0xf]
        %v221 = vld [vmem:[%s195 + $0x60] sm:$0xf]
        %v222 = vld [vmem:[%s195 + $0x64] sm:$0xf]
        %v223 = vld [vmem:[%s195 + $0x68] sm:$0xf]
        %v224 = vld [vmem:[%s195 + $0x6c] sm:$0xf]
        %v225 = vld [vmem:[%s195 + $0x70] sm:$0xf]
        %v226 = vld [vmem:[%s195 + $0x74] sm:$0xf]
        %v227 = vld [vmem:[%s195 + $0x78] sm:$0xf]
        %v228 = vld [vmem:[%s195 + $0x7c] sm:$0xf]
        %vm229 = vcmask 523264
        %230 = vst.msk [vmem:[#allocation2] sm:$0xff] %vm229, 0.0
        %231 = vst.msk [vmem:[#allocation2 + $0x8] sm:$0xff] %vm229, 0.0
        %232 = vst.msk [vmem:[#allocation2 + $0x10] sm:$0xff] %vm229, 0.0
        %233 = vst.msk [vmem:[#allocation2 + $0x18] sm:$0xff] %vm229, 0.0
        %234 = vst.msk [vmem:[#allocation2 + $0x20] sm:$0xff] %vm229, 0.0
        %235 = vst.msk [vmem:[#allocation2 + $0x28] sm:$0xff] %vm229, 0.0
        %236 = vst.msk [vmem:[#allocation2 + $0x30] sm:$0xff] %vm229, 0.0
        %237 = vst.msk [vmem:[#allocation2 + $0x38] sm:$0xff] %vm229, 0.0
        %238 = vst.msk [vmem:[#allocation2 + $0x40] sm:$0xff] %vm229, 0.0
        %239 = vst.msk [vmem:[#allocation2 + $0x48] sm:$0xff] %vm229, 0.0
        %240 = vst.msk [vmem:[#allocation2 + $0x50] sm:$0xff] %vm229, 0.0
        %241 = vst.msk [vmem:[#allocation2 + $0x58] sm:$0xff] %vm229, 0.0
        %242 = vst.msk [vmem:[#allocation2 + $0x60] sm:$0xff] %vm229, 0.0
        %243 = vst.msk [vmem:[#allocation2 + $0x68] sm:$0xff] %vm229, 0.0
        %244 = vst.msk [vmem:[#allocation2 + $0x70] sm:$0xff] %vm229, 0.0
        %245 = vst.msk [vmem:[#allocation2 + $0x78] sm:$0xff] %vm229, 0.0
        %246 = vst.msk [vmem:[#allocation2 + $0x80] sm:$0xff] %vm229, 0.0
        %247 = vst.msk [vmem:[#allocation2 + $0x88] sm:$0xff] %vm229, 0.0
        %248 = vst.msk [vmem:[#allocation2 + $0x90] sm:$0xff] %vm229, 0.0
        %249 = vst.msk [vmem:[#allocation2 + $0x98] sm:$0xff] %vm229, 0.0
        %250 = vst.msk [vmem:[#allocation2 + $0xa0] sm:$0xff] %vm229, 0.0
        %251 = vst.msk [vmem:[#allocation2 + $0xa8] sm:$0xff] %vm229, 0.0
        %252 = vst.msk [vmem:[#allocation2 + $0xb0] sm:$0xff] %vm229, 0.0
        %253 = vst.msk [vmem:[#allocation2 + $0xb8] sm:$0xff] %vm229, 0.0
        %254 = vst.msk [vmem:[#allocation2 + $0xc0] sm:$0xff] %vm229, 0.0
        %255 = vst.msk [vmem:[#allocation2 + $0xc8] sm:$0xff] %vm229, 0.0
        %256 = vst.msk [vmem:[#allocation2 + $0xd0] sm:$0xff] %vm229, 0.0
        %257 = vst.msk [vmem:[#allocation2 + $0xd8] sm:$0xff] %vm229, 0.0
        %258 = vst.msk [vmem:[#allocation2 + $0xe0] sm:$0xff] %vm229, 0.0
        %259 = vst.msk [vmem:[#allocation2 + $0xe8] sm:$0xff] %vm229, 0.0
        %260 = vst.msk [vmem:[#allocation2 + $0xf0] sm:$0xff] %vm229, 0.0
        %261 = vst.msk [vmem:[#allocation2 + $0xf8] sm:$0xff] %vm229, 0.0
        %262 = vst.msk [vmem:[#allocation2 + $0x100] sm:$0xff] %vm229, 0.0
        %263 = vst.msk [vmem:[#allocation2 + $0x108] sm:$0xff] %vm229, 0.0
        %264 = vst.msk [vmem:[#allocation2 + $0x110] sm:$0xff] %vm229, 0.0
        %265 = vst.msk [vmem:[#allocation2 + $0x118] sm:$0xff] %vm229, 0.0
        %vm266 = vcmask 517120
        %267 = vst.msk [vmem:[#allocation2 + $0x120] sm:$0x3] %vm266, 0.0
        %v268 = vunpack.c.l.bf16 %v197
        %v269 = vunpack.c.l.bf16 %v198
        %v270 = vunpack.c.l.bf16 %v199
        %v271 = vunpack.c.l.bf16 %v200
        %v272 = vunpack.c.l.bf16 %v201
        %v273 = vunpack.c.l.bf16 %v202
        %v274 = vunpack.c.l.bf16 %v203
        %v275 = vunpack.c.l.bf16 %v204
        %v276 = vunpack.c.l.bf16 %v205
        %v277 = vunpack.c.l.bf16 %v206
        %v278 = vunpack.c.l.bf16 %v207
        %v279 = vunpack.c.l.bf16 %v208
        %v280 = vunpack.c.l.bf16 %v209
        %v281 = vunpack.c.l.bf16 %v210
        %v282 = vunpack.c.l.bf16 %v211
        %v283 = vunpack.c.l.bf16 %v212
        %v284 = vunpack.c.l.bf16 %v213
        %v285 = vunpack.c.l.bf16 %v214
        %v286 = vunpack.c.l.bf16 %v215
        %v287 = vunpack.c.l.bf16 %v216
        %v288 = vunpack.c.l.bf16 %v217
        %v289 = vunpack.c.l.bf16 %v218
        %v290 = vunpack.c.l.bf16 %v219
        %v291 = vunpack.c.l.bf16 %v220
        %v292 = vunpack.c.l.bf16 %v221
        %v293 = vunpack.c.l.bf16 %v222
        %v294 = vunpack.c.l.bf16 %v223
        %v295 = vunpack.c.l.bf16 %v224
        %v296 = vunpack.c.l.bf16 %v225
        %v297 = vunpack.c.l.bf16 %v226
        %v298 = vunpack.c.l.bf16 %v227
        %v299 = vunpack.c.l.bf16 %v228
        %300 = vst.msk [vmem:[#allocation2 + $0x11] sm:$0xff] %vm229, %v268
        %301 = vst.msk [vmem:[#allocation2 + $0x19] sm:$0xff] %vm229, %v269
        %302 = vst.msk [vmem:[#allocation2 + $0x21] sm:$0xff] %vm229, %v270
        %303 = vst.msk [vmem:[#allocation2 + $0x29] sm:$0xff] %vm229, %v271
        %304 = vst.msk [vmem:[#allocation2 + $0x31] sm:$0xff] %vm229, %v272
        %305 = vst.msk [vmem:[#allocation2 + $0x39] sm:$0xff] %vm229, %v273
        %306 = vst.msk [vmem:[#allocation2 + $0x41] sm:$0xff] %vm229, %v274
        %307 = vst.msk [vmem:[#allocation2 + $0x49] sm:$0xff] %vm229, %v275
        %308 = vst.msk [vmem:[#allocation2 + $0x51] sm:$0xff] %vm229, %v276
        %309 = vst.msk [vmem:[#allocation2 + $0x59] sm:$0xff] %vm229, %v277
        %310 = vst.msk [vmem:[#allocation2 + $0x61] sm:$0xff] %vm229, %v278
        %311 = vst.msk [vmem:[#allocation2 + $0x69] sm:$0xff] %vm229, %v279
        %312 = vst.msk [vmem:[#allocation2 + $0x71] sm:$0xff] %vm229, %v280
        %313 = vst.msk [vmem:[#allocation2 + $0x79] sm:$0xff] %vm229, %v281
        %314 = vst.msk [vmem:[#allocation2 + $0x81] sm:$0xff] %vm229, %v282
        %315 = vst.msk [vmem:[#allocation2 + $0x89] sm:$0xff] %vm229, %v283
        %316 = vst.msk [vmem:[#allocation2 + $0x91] sm:$0xff] %vm229, %v284
        %317 = vst.msk [vmem:[#allocation2 + $0x99] sm:$0xff] %vm229, %v285
        %318 = vst.msk [vmem:[#allocation2 + $0xa1] sm:$0xff] %vm229, %v286
        %319 = vst.msk [vmem:[#allocation2 + $0xa9] sm:$0xff] %vm229, %v287
        %320 = vst.msk [vmem:[#allocation2 + $0xb1] sm:$0xff] %vm229, %v288
        %321 = vst.msk [vmem:[#allocation2 + $0xb9] sm:$0xff] %vm229, %v289
        %322 = vst.msk [vmem:[#allocation2 + $0xc1] sm:$0xff] %vm229, %v290
        %323 = vst.msk [vmem:[#allocation2 + $0xc9] sm:$0xff] %vm229, %v291
        %324 = vst.msk [vmem:[#allocation2 + $0xd1] sm:$0xff] %vm229, %v292
        %325 = vst.msk [vmem:[#allocation2 + $0xd9] sm:$0xff] %vm229, %v293
        %326 = vst.msk [vmem:[#allocation2 + $0xe1] sm:$0xff] %vm229, %v294
        %327 = vst.msk [vmem:[#allocation2 + $0xe9] sm:$0xff] %vm229, %v295
        %328 = vst.msk [vmem:[#allocation2 + $0xf1] sm:$0xff] %vm229, %v296
        %329 = vst.msk [vmem:[#allocation2 + $0xf9] sm:$0xff] %vm229, %v297
        %330 = vst.msk [vmem:[#allocation2 + $0x101] sm:$0xff] %vm229, %v298
        %331 = vst.msk [vmem:[#allocation2 + $0x109] sm:$0xff] %vm229, %v299
        %v332 = vlaneseq
        %v333 = vshrl.u32 %v332, 7
        %v334 = vadd.s32 %v333, 8
        %v335 = vadd.s32 %v333, 16
        %v336 = vadd.s32 %v333, 24
        %v337 = vadd.s32 %v333, 32
        %v338 = vadd.s32 %v333, 40
        %v339 = vadd.s32 %v333, 48
        %v340 = vadd.s32 %v333, 56
        %v341 = vadd.s32 %v333, 64
        %v342 = vadd.s32 %v333, 72
        %v343 = vadd.s32 %v333, 80
        %v344 = vadd.s32 %v333, 88
        %v345 = vadd.s32 %v333, 96
        %v346 = vadd.s32 %v333, 104
        %v347 = vadd.s32 %v333, 112
        %v348 = vadd.s32 %v333, 120
        %v349 = vadd.s32 %v333, 128
        %v350 = vadd.s32 %v333, 136
        %v351 = vadd.s32 %v333, 144
        %v352 = vadd.s32 %v333, 152
        %v353 = vadd.s32 %v333, 160
        %v354 = vadd.s32 %v333, 168
        %v355 = vadd.s32 %v333, 176
        %v356 = vadd.s32 %v333, 184
        %v357 = vadd.s32 %v333, 192
        %v358 = vadd.s32 %v333, 200
        %v359 = vadd.s32 %v333, 208
        %v360 = vadd.s32 %v333, 216
        %v361 = vadd.s32 %v333, 224
        %v362 = vadd.s32 %v333, 232
        %v363 = vadd.s32 %v333, 240
        %v364 = vadd.s32 %v333, 248
        %vm365 = vcmp.lt.s32.totalorder %v333, 0
        %v366 = vsub.s32 0, %v333
        %v367 = vsel %vm365, %v366, %v333
        %v368 = vshrl.u32 %v367, 4
        %v369 = vand.u32 %v367, 15
        %v370 = vsub.s32 0, %v369
        %v371 = vsel %vm365, %v370, %v369
        %vm372 = vcmp.lt.s32.totalorder %v334, 0
        %v373 = vsub.s32 0, %v334
        %v374 = vsel %vm372, %v373, %v334
        %v375 = vshrl.u32 %v374, 4
        %v376 = vand.u32 %v374, 15
        %v377 = vsub.s32 0, %v376
        %v378 = vsel %vm372, %v377, %v376
        %vm379 = vcmp.lt.s32.totalorder %v335, 0
        %v380 = vsub.s32 0, %v335
        %v381 = vsel %vm379, %v380, %v335
        %v382 = vshrl.u32 %v381, 4
        %v383 = vand.u32 %v381, 15
        %v384 = vsub.s32 0, %v383
        %v385 = vsel %vm379, %v384, %v383
        %vm386 = vcmp.lt.s32.totalorder %v336, 0
        %v387 = vsub.s32 0, %v336
        %v388 = vsel %vm386, %v387, %v336
        %v389 = vshrl.u32 %v388, 4
        %v390 = vand.u32 %v388, 15
        %v391 = vsub.s32 0, %v390
        %v392 = vsel %vm386, %v391, %v390
        %vm393 = vcmp.lt.s32.totalorder %v337, 0
        %v394 = vsub.s32 0, %v337
        %v395 = vsel %vm393, %v394, %v337
        %v396 = vshrl.u32 %v395, 4
        %v397 = vand.u32 %v395, 15
        %v398 = vsub.s32 0, %v397
        %v399 = vsel %vm393, %v398, %v397
        %vm400 = vcmp.lt.s32.totalorder %v338, 0
        %v401 = vsub.s32 0, %v338
        %v402 = vsel %vm400, %v401, %v338
        %v403 = vshrl.u32 %v402, 4
        %v404 = vand.u32 %v402, 15
        %v405 = vsub.s32 0, %v404
        %v406 = vsel %vm400, %v405, %v404
        %vm407 = vcmp.lt.s32.totalorder %v339, 0
        %v408 = vsub.s32 0, %v339
        %v409 = vsel %vm407, %v408, %v339
        %v410 = vshrl.u32 %v409, 4
        %v411 = vand.u32 %v409, 15
        %v412 = vsub.s32 0, %v411
        %v413 = vsel %vm407, %v412, %v411
        %vm414 = vcmp.lt.s32.totalorder %v340, 0
        %v415 = vsub.s32 0, %v340
        %v416 = vsel %vm414, %v415, %v340
        %v417 = vshrl.u32 %v416, 4
        %v418 = vand.u32 %v416, 15
        %v419 = vsub.s32 0, %v418
        %v420 = vsel %vm414, %v419, %v418
        %vm421 = vcmp.lt.s32.totalorder %v341, 0
        %v422 = vsub.s32 0, %v341
        %v423 = vsel %vm421, %v422, %v341
        %v424 = vshrl.u32 %v423, 4
        %v425 = vand.u32 %v423, 15
        %v426 = vsub.s32 0, %v425
        %v427 = vsel %vm421, %v426, %v425
        %vm428 = vcmp.lt.s32.totalorder %v342, 0
        %v429 = vsub.s32 0, %v342
        %v430 = vsel %vm428, %v429, %v342
        %v431 = vshrl.u32 %v430, 4
        %v432 = vand.u32 %v430, 15
        %v433 = vsub.s32 0, %v432
        %v434 = vsel %vm428, %v433, %v432
        %vm435 = vcmp.lt.s32.totalorder %v343, 0
        %v436 = vsub.s32 0, %v343
        %v437 = vsel %vm435, %v436, %v343
        %v438 = vshrl.u32 %v437, 4
        %v439 = vand.u32 %v437, 15
        %v440 = vsub.s32 0, %v439
        %v441 = vsel %vm435, %v440, %v439
        %vm442 = vcmp.lt.s32.totalorder %v344, 0
        %v443 = vsub.s32 0, %v344
        %v444 = vsel %vm442, %v443, %v344
        %v445 = vshrl.u32 %v444, 4
        %v446 = vand.u32 %v444, 15
        %v447 = vsub.s32 0, %v446
        %v448 = vsel %vm442, %v447, %v446
        %vm449 = vcmp.lt.s32.totalorder %v345, 0
        %v450 = vsub.s32 0, %v345
        %v451 = vsel %vm449, %v450, %v345
        %v452 = vshrl.u32 %v451, 4
        %v453 = vand.u32 %v451, 15
        %v454 = vsub.s32 0, %v453
        %v455 = vsel %vm449, %v454, %v453
        %vm456 = vcmp.lt.s32.totalorder %v346, 0
        %v457 = vsub.s32 0, %v346
        %v458 = vsel %vm456, %v457, %v346
        %v459 = vshrl.u32 %v458, 4
        %v460 = vand.u32 %v458, 15
        %v461 = vsub.s32 0, %v460
        %v462 = vsel %vm456, %v461, %v460
        %vm463 = vcmp.lt.s32.totalorder %v347, 0
        %v464 = vsub.s32 0, %v347
        %v465 = vsel %vm463, %v464, %v347
        %v466 = vshrl.u32 %v465, 4
        %v467 = vand.u32 %v465, 15
        %v468 = vsub.s32 0, %v467
        %v469 = vsel %vm463, %v468, %v467
        %vm470 = vcmp.lt.s32.totalorder %v348, 0
        %v471 = vsub.s32 0, %v348
        %v472 = vsel %vm470, %v471, %v348
        %v473 = vshrl.u32 %v472, 4
        %v474 = vand.u32 %v472, 15
        %v475 = vsub.s32 0, %v474
        %v476 = vsel %vm470, %v475, %v474
        %vm477 = vcmp.lt.s32.totalorder %v349, 0
        %v478 = vsub.s32 0, %v349
        %v479 = vsel %vm477, %v478, %v349
        %v480 = vshrl.u32 %v479, 4
        %v481 = vand.u32 %v479, 15
        %v482 = vsub.s32 0, %v481
        %v483 = vsel %vm477, %v482, %v481
        %vm484 = vcmp.lt.s32.totalorder %v350, 0
        %v485 = vsub.s32 0, %v350
        %v486 = vsel %vm484, %v485, %v350
        %v487 = vshrl.u32 %v486, 4
        %v488 = vand.u32 %v486, 15
        %v489 = vsub.s32 0, %v488
        %v490 = vsel %vm484, %v489, %v488
        %vm491 = vcmp.lt.s32.totalorder %v351, 0
        %v492 = vsub.s32 0, %v351
        %v493 = vsel %vm491, %v492, %v351
        %v494 = vshrl.u32 %v493, 4
        %v495 = vand.u32 %v493, 15
        %v496 = vsub.s32 0, %v495
        %v497 = vsel %vm491, %v496, %v495
        %vm498 = vcmp.lt.s32.totalorder %v352, 0
        %v499 = vsub.s32 0, %v352
        %v500 = vsel %vm498, %v499, %v352
        %v501 = vshrl.u32 %v500, 4
        %v502 = vand.u32 %v500, 15
        %v503 = vsub.s32 0, %v502
        %v504 = vsel %vm498, %v503, %v502
        %vm505 = vcmp.lt.s32.totalorder %v353, 0
        %v506 = vsub.s32 0, %v353
        %v507 = vsel %vm505, %v506, %v353
        %v508 = vshrl.u32 %v507, 4
        %v509 = vand.u32 %v507, 15
        %v510 = vsub.s32 0, %v509
        %v511 = vsel %vm505, %v510, %v509
        %vm512 = vcmp.lt.s32.totalorder %v354, 0
        %v513 = vsub.s32 0, %v354
        %v514 = vsel %vm512, %v513, %v354
        %v515 = vshrl.u32 %v514, 4
        %v516 = vand.u32 %v514, 15
        %v517 = vsub.s32 0, %v516
        %v518 = vsel %vm512, %v517, %v516
        %vm519 = vcmp.lt.s32.totalorder %v355, 0
        %v520 = vsub.s32 0, %v355
        %v521 = vsel %vm519, %v520, %v355
        %v522 = vshrl.u32 %v521, 4
        %v523 = vand.u32 %v521, 15
        %v524 = vsub.s32 0, %v523
        %v525 = vsel %vm519, %v524, %v523
        %vm526 = vcmp.lt.s32.totalorder %v356, 0
        %v527 = vsub.s32 0, %v356
        %v528 = vsel %vm526, %v527, %v356
        %v529 = vshrl.u32 %v528, 4
        %v530 = vand.u32 %v528, 15
        %v531 = vsub.s32 0, %v530
        %v532 = vsel %vm526, %v531, %v530
        %vm533 = vcmp.lt.s32.totalorder %v357, 0
        %v534 = vsub.s32 0, %v357
        %v535 = vsel %vm533, %v534, %v357
        %v536 = vshrl.u32 %v535, 4
        %v537 = vand.u32 %v535, 15
        %v538 = vsub.s32 0, %v537
        %v539 = vsel %vm533, %v538, %v537
        %vm540 = vcmp.lt.s32.totalorder %v358, 0
        %v541 = vsub.s32 0, %v358
        %v542 = vsel %vm540, %v541, %v358
        %v543 = vshrl.u32 %v542, 4
        %v544 = vand.u32 %v542, 15
        %v545 = vsub.s32 0, %v544
        %v546 = vsel %vm540, %v545, %v544
        %vm547 = vcmp.lt.s32.totalorder %v359, 0
        %v548 = vsub.s32 0, %v359
        %v549 = vsel %vm547, %v548, %v359
        %v550 = vshrl.u32 %v549, 4
        %v551 = vand.u32 %v549, 15
        %v552 = vsub.s32 0, %v551
        %v553 = vsel %vm547, %v552, %v551
        %vm554 = vcmp.lt.s32.totalorder %v360, 0
        %v555 = vsub.s32 0, %v360
        %v556 = vsel %vm554, %v555, %v360
        %v557 = vshrl.u32 %v556, 4
        %v558 = vand.u32 %v556, 15
        %v559 = vsub.s32 0, %v558
        %v560 = vsel %vm554, %v559, %v558
        %vm561 = vcmp.lt.s32.totalorder %v361, 0
        %v562 = vsub.s32 0, %v361
        %v563 = vsel %vm561, %v562, %v361
        %v564 = vshrl.u32 %v563, 4
        %v565 = vand.u32 %v563, 15
        %v566 = vsub.s32 0, %v565
        %v567 = vsel %vm561, %v566, %v565
        %vm568 = vcmp.lt.s32.totalorder %v362, 0
        %v569 = vsub.s32 0, %v362
        %v570 = vsel %vm568, %v569, %v362
        %v571 = vshrl.u32 %v570, 4
        %v572 = vand.u32 %v570, 15
        %v573 = vsub.s32 0, %v572
        %v574 = vsel %vm568, %v573, %v572
        %vm575 = vcmp.lt.s32.totalorder %v363, 0
        %v576 = vsub.s32 0, %v363
        %v577 = vsel %vm575, %v576, %v363
        %v578 = vshrl.u32 %v577, 4
        %v579 = vand.u32 %v577, 15
        %v580 = vsub.s32 0, %v579
        %v581 = vsel %vm575, %v580, %v579
        %vm582 = vcmp.lt.s32.totalorder %v364, 0
        %v583 = vsub.s32 0, %v364
        %v584 = vsel %vm582, %v583, %v364
        %v585 = vshrl.u32 %v584, 4
        %v586 = vand.u32 %v584, 15
        %v587 = vsub.s32 0, %v586
        %v588 = vsel %vm582, %v587, %v586
        %vm589 = vcmp.ne.s32.totalorder %v371, 0
        %vm590 = vcmp.ne.s32.totalorder %v378, 0
        %vm591 = vcmp.ne.s32.totalorder %v385, 0
        %vm592 = vcmp.ne.s32.totalorder %v392, 0
        %vm593 = vcmp.ne.s32.totalorder %v399, 0
        %vm594 = vcmp.ne.s32.totalorder %v406, 0
        %vm595 = vcmp.ne.s32.totalorder %v413, 0
        %vm596 = vcmp.ne.s32.totalorder %v420, 0
        %vm597 = vcmp.ne.s32.totalorder %v427, 0
        %vm598 = vcmp.ne.s32.totalorder %v434, 0
        %vm599 = vcmp.ne.s32.totalorder %v441, 0
        %vm600 = vcmp.ne.s32.totalorder %v448, 0
        %vm601 = vcmp.ne.s32.totalorder %v455, 0
        %vm602 = vcmp.ne.s32.totalorder %v462, 0
        %vm603 = vcmp.ne.s32.totalorder %v469, 0
        %vm604 = vcmp.ne.s32.totalorder %v476, 0
        %vm605 = vcmp.ne.s32.totalorder %v483, 0
        %vm606 = vcmp.ne.s32.totalorder %v490, 0
        %vm607 = vcmp.ne.s32.totalorder %v497, 0
        %vm608 = vcmp.ne.s32.totalorder %v504, 0
        %vm609 = vcmp.ne.s32.totalorder %v511, 0
        %vm610 = vcmp.ne.s32.totalorder %v518, 0
        %vm611 = vcmp.ne.s32.totalorder %v525, 0
        %vm612 = vcmp.ne.s32.totalorder %v532, 0
        %vm613 = vcmp.ne.s32.totalorder %v539, 0
        %vm614 = vcmp.ne.s32.totalorder %v546, 0
        %vm615 = vcmp.ne.s32.totalorder %v553, 0
        %vm616 = vcmp.ne.s32.totalorder %v560, 0
        %vm617 = vcmp.ne.s32.totalorder %v567, 0
        %vm618 = vcmp.ne.s32.totalorder %v574, 0
        %vm619 = vcmp.ne.s32.totalorder %v581, 0
        %vm620 = vcmp.ne.s32.totalorder %v588, 0
        %vm621 = vcmp.lt.s32.totalorder %v371, 0
        %vm622 = vcmp.lt.s32.totalorder %v378, 0
        %vm623 = vcmp.lt.s32.totalorder %v385, 0
        %vm624 = vcmp.lt.s32.totalorder %v392, 0
        %vm625 = vcmp.lt.s32.totalorder %v399, 0
        %vm626 = vcmp.lt.s32.totalorder %v406, 0
        %vm627 = vcmp.lt.s32.totalorder %v413, 0
        %vm628 = vcmp.lt.s32.totalorder %v420, 0
        %vm629 = vcmp.lt.s32.totalorder %v427, 0
        %vm630 = vcmp.lt.s32.totalorder %v434, 0
        %vm631 = vcmp.lt.s32.totalorder %v441, 0
        %vm632 = vcmp.lt.s32.totalorder %v448, 0
        %vm633 = vcmp.lt.s32.totalorder %v455, 0
        %vm634 = vcmp.lt.s32.totalorder %v462, 0
        %vm635 = vcmp.lt.s32.totalorder %v469, 0
        %vm636 = vcmp.lt.s32.totalorder %v476, 0
        %vm637 = vcmp.lt.s32.totalorder %v483, 0
        %vm638 = vcmp.lt.s32.totalorder %v490, 0
        %vm639 = vcmp.lt.s32.totalorder %v497, 0
        %vm640 = vcmp.lt.s32.totalorder %v504, 0
        %vm641 = vcmp.lt.s32.totalorder %v511, 0
        %vm642 = vcmp.lt.s32.totalorder %v518, 0
        %vm643 = vcmp.lt.s32.totalorder %v525, 0
        %vm644 = vcmp.lt.s32.totalorder %v532, 0
        %vm645 = vcmp.lt.s32.totalorder %v539, 0
        %vm646 = vcmp.lt.s32.totalorder %v546, 0
        %vm647 = vcmp.lt.s32.totalorder %v553, 0
        %vm648 = vcmp.lt.s32.totalorder %v560, 0
        %vm649 = vcmp.lt.s32.totalorder %v567, 0
        %vm650 = vcmp.lt.s32.totalorder %v574, 0
        %vm651 = vcmp.lt.s32.totalorder %v581, 0
        %vm652 = vcmp.lt.s32.totalorder %v588, 0
        %vm653 = vmand %vm621, %vm589
        %vm654 = vmand %vm622, %vm590
        %vm655 = vmand %vm623, %vm591
        %vm656 = vmand %vm624, %vm592
        %vm657 = vmand %vm625, %vm593
        %vm658 = vmand %vm626, %vm594
        %vm659 = vmand %vm627, %vm595
        %vm660 = vmand %vm628, %vm596
        %vm661 = vmand %vm629, %vm597
        %vm662 = vmand %vm630, %vm598
        %vm663 = vmand %vm631, %vm599
        %vm664 = vmand %vm632, %vm600
        %vm665 = vmand %vm633, %vm601
        %vm666 = vmand %vm634, %vm602
        %vm667 = vmand %vm635, %vm603
        %vm668 = vmand %vm636, %vm604
        %vm669 = vmand %vm637, %vm605
        %vm670 = vmand %vm638, %vm606
        %vm671 = vmand %vm639, %vm607
        %vm672 = vmand %vm640, %vm608
        %vm673 = vmand %vm641, %vm609
        %vm674 = vmand %vm642, %vm610
        %vm675 = vmand %vm643, %vm611
        %vm676 = vmand %vm644, %vm612
        %vm677 = vmand %vm645, %vm613
        %vm678 = vmand %vm646, %vm614
        %vm679 = vmand %vm647, %vm615
        %vm680 = vmand %vm648, %vm616
        %vm681 = vmand %vm649, %vm617
        %vm682 = vmand %vm650, %vm618
        %vm683 = vmand %vm651, %vm619
        %vm684 = vmand %vm652, %vm620
        %v685 = vadd.s32 %v371, 16
        %v686 = vadd.s32 %v378, 16
        %v687 = vadd.s32 %v385, 16
        %v688 = vadd.s32 %v392, 16
        %v689 = vadd.s32 %v399, 16
        %v690 = vadd.s32 %v406, 16
        %v691 = vadd.s32 %v413, 16
        %v692 = vadd.s32 %v420, 16
        %v693 = vadd.s32 %v427, 16
        %v694 = vadd.s32 %v434, 16
        %v695 = vadd.s32 %v441, 16
        %v696 = vadd.s32 %v448, 16
        %v697 = vadd.s32 %v455, 16
        %v698 = vadd.s32 %v462, 16
        %v699 = vadd.s32 %v469, 16
        %v700 = vadd.s32 %v476, 16
        %v701 = vadd.s32 %v483, 16
        %v702 = vadd.s32 %v490, 16
        %v703 = vadd.s32 %v497, 16
        %v704 = vadd.s32 %v504, 16
        %v705 = vadd.s32 %v511, 16
        %v706 = vadd.s32 %v518, 16
        %v707 = vadd.s32 %v525, 16
        %v708 = vadd.s32 %v532, 16
        %v709 = vadd.s32 %v539, 16
        %v710 = vadd.s32 %v546, 16
        %v711 = vadd.s32 %v553, 16
        %v712 = vadd.s32 %v560, 16
        %v713 = vadd.s32 %v567, 16
        %v714 = vadd.s32 %v574, 16
        %v715 = vadd.s32 %v581, 16
        %v716 = vadd.s32 %v588, 16
        %v717 = vsel %vm653, %v685, %v371
        %v718 = vsel %vm654, %v686, %v378
        %v719 = vsel %vm655, %v687, %v385
        %v720 = vsel %vm656, %v688, %v392
        %v721 = vsel %vm657, %v689, %v399
        %v722 = vsel %vm658, %v690, %v406
        %v723 = vsel %vm659, %v691, %v413
        %v724 = vsel %vm660, %v692, %v420
        %v725 = vsel %vm661, %v693, %v427
        %v726 = vsel %vm662, %v694, %v434
        %v727 = vsel %vm663, %v695, %v441
        %v728 = vsel %vm664, %v696, %v448
        %v729 = vsel %vm665, %v697, %v455
        %v730 = vsel %vm666, %v698, %v462
        %v731 = vsel %vm667, %v699, %v469
        %v732 = vsel %vm668, %v700, %v476
        %v733 = vsel %vm669, %v701, %v483
        %v734 = vsel %vm670, %v702, %v490
        %v735 = vsel %vm671, %v703, %v497
        %v736 = vsel %vm672, %v704, %v504
        %v737 = vsel %vm673, %v705, %v511
        %v738 = vsel %vm674, %v706, %v518
        %v739 = vsel %vm675, %v707, %v525
        %v740 = vsel %vm676, %v708, %v532
        %v741 = vsel %vm677, %v709, %v539
        %v742 = vsel %vm678, %v710, %v546
        %v743 = vsel %vm679, %v711, %v553
        %v744 = vsel %vm680, %v712, %v560
        %v745 = vsel %vm681, %v713, %v567
        %v746 = vsel %vm682, %v714, %v574
        %v747 = vsel %vm683, %v715, %v581
        %v748 = vsel %vm684, %v716, %v588
        %vm749 = vcmp.ne.s32.totalorder %v717, 0
        %vm750 = vcmp.ne.s32.totalorder %v718, 0
        %vm751 = vcmp.ne.s32.totalorder %v719, 0
        %vm752 = vcmp.ne.s32.totalorder %v720, 0
        %vm753 = vcmp.ne.s32.totalorder %v721, 0
        %vm754 = vcmp.ne.s32.totalorder %v722, 0
        %vm755 = vcmp.ne.s32.totalorder %v723, 0
        %vm756 = vcmp.ne.s32.totalorder %v724, 0
        %vm757 = vcmp.ne.s32.totalorder %v725, 0
        %vm758 = vcmp.ne.s32.totalorder %v726, 0
        %vm759 = vcmp.ne.s32.totalorder %v727, 0
        %vm760 = vcmp.ne.s32.totalorder %v728, 0
        %vm761 = vcmp.ne.s32.totalorder %v729, 0
        %vm762 = vcmp.ne.s32.totalorder %v730, 0
        %vm763 = vcmp.ne.s32.totalorder %v731, 0
        %vm764 = vcmp.ne.s32.totalorder %v732, 0
        %vm765 = vcmp.ne.s32.totalorder %v733, 0
        %vm766 = vcmp.ne.s32.totalorder %v734, 0
        %vm767 = vcmp.ne.s32.totalorder %v735, 0
        %vm768 = vcmp.ne.s32.totalorder %v736, 0
        %vm769 = vcmp.ne.s32.totalorder %v737, 0
        %vm770 = vcmp.ne.s32.totalorder %v738, 0
        %vm771 = vcmp.ne.s32.totalorder %v739, 0
        %vm772 = vcmp.ne.s32.totalorder %v740, 0
        %vm773 = vcmp.ne.s32.totalorder %v741, 0
        %vm774 = vcmp.ne.s32.totalorder %v742, 0
        %vm775 = vcmp.ne.s32.totalorder %v743, 0
        %vm776 = vcmp.ne.s32.totalorder %v744, 0
        %vm777 = vcmp.ne.s32.totalorder %v745, 0
        %vm778 = vcmp.ne.s32.totalorder %v746, 0
        %vm779 = vcmp.ne.s32.totalorder %v747, 0
        %vm780 = vcmp.ne.s32.totalorder %v748, 0
        %vm781 = vcmp.ne.s32.totalorder %v717, 15
        %vm782 = vcmp.ne.s32.totalorder %v718, 15
        %vm783 = vcmp.ne.s32.totalorder %v719, 15
        %vm784 = vcmp.ne.s32.totalorder %v720, 15
        %vm785 = vcmp.ne.s32.totalorder %v721, 15
        %vm786 = vcmp.ne.s32.totalorder %v722, 15
        %vm787 = vcmp.ne.s32.totalorder %v723, 15
        %vm788 = vcmp.ne.s32.totalorder %v724, 15
        %vm789 = vcmp.ne.s32.totalorder %v725, 15
        %vm790 = vcmp.ne.s32.totalorder %v726, 15
        %vm791 = vcmp.ne.s32.totalorder %v727, 15
        %vm792 = vcmp.ne.s32.totalorder %v728, 15
        %vm793 = vcmp.ne.s32.totalorder %v729, 15
        %vm794 = vcmp.ne.s32.totalorder %v730, 15
        %vm795 = vcmp.ne.s32.totalorder %v731, 15
        %vm796 = vcmp.ne.s32.totalorder %v732, 15
        %vm797 = vcmp.ne.s32.totalorder %v733, 15
        %vm798 = vcmp.ne.s32.totalorder %v734, 15
        %vm799 = vcmp.ne.s32.totalorder %v735, 15
        %vm800 = vcmp.ne.s32.totalorder %v736, 15
        %vm801 = vcmp.ne.s32.totalorder %v737, 15
        %vm802 = vcmp.ne.s32.totalorder %v738, 15
        %vm803 = vcmp.ne.s32.totalorder %v739, 15
        %vm804 = vcmp.ne.s32.totalorder %v740, 15
        %vm805 = vcmp.ne.s32.totalorder %v741, 15
        %vm806 = vcmp.ne.s32.totalorder %v742, 15
        %vm807 = vcmp.ne.s32.totalorder %v743, 15
        %vm808 = vcmp.ne.s32.totalorder %v744, 15
        %vm809 = vcmp.ne.s32.totalorder %v745, 15
        %vm810 = vcmp.ne.s32.totalorder %v746, 15
        %vm811 = vcmp.ne.s32.totalorder %v747, 15
        %vm812 = vcmp.ne.s32.totalorder %v748, 15
        %v813 = vld [vmem:[#allocation2] sm:$0xff]
        %v814 = vld [vmem:[#allocation2 + $0x8] sm:$0xff]
        %v815 = vld [vmem:[#allocation2 + $0x10] sm:$0xff]
        %v816 = vld [vmem:[#allocation2 + $0x18] sm:$0xff]
        %v817 = vld [vmem:[#allocation2 + $0x20] sm:$0xff]
        %v818 = vld [vmem:[#allocation2 + $0x28] sm:$0xff]
        %v819 = vld [vmem:[#allocation2 + $0x30] sm:$0xff]
        %v820 = vld [vmem:[#allocation2 + $0x38] sm:$0xff]
        %v821 = vld [vmem:[#allocation2 + $0x40] sm:$0xff]
        %v822 = vld [vmem:[#allocation2 + $0x48] sm:$0xff]
        %v823 = vld [vmem:[#allocation2 + $0x50] sm:$0xff]
        %v824 = vld [vmem:[#allocation2 + $0x58] sm:$0xff]
        %v825 = vld [vmem:[#allocation2 + $0x60] sm:$0xff]
        %v826 = vld [vmem:[#allocation2 + $0x68] sm:$0xff]
        %v827 = vld [vmem:[#allocation2 + $0x70] sm:$0xff]
        %v828 = vld [vmem:[#allocation2 + $0x78] sm:$0xff]
        %v829 = vld [vmem:[#allocation2 + $0x80] sm:$0xff]
        %v830 = vld [vmem:[#allocation2 + $0x88] sm:$0xff]
        %v831 = vld [vmem:[#allocation2 + $0x90] sm:$0xff]
        %v832 = vld [vmem:[#allocation2 + $0x98] sm:$0xff]
        %v833 = vld [vmem:[#allocation2 + $0xa0] sm:$0xff]
        %v834 = vld [vmem:[#allocation2 + $0xa8] sm:$0xff]
        %v835 = vld [vmem:[#allocation2 + $0xb0] sm:$0xff]
        %v836 = vld [vmem:[#allocation2 + $0xb8] sm:$0xff]
        %v837 = vld [vmem:[#allocation2 + $0xc0] sm:$0xff]
        %v838 = vld [vmem:[#allocation2 + $0xc8] sm:$0xff]
        %v839 = vld [vmem:[#allocation2 + $0xd0] sm:$0xff]
        %v840 = vld [vmem:[#allocation2 + $0xd8] sm:$0xff]
        %v841 = vld [vmem:[#allocation2 + $0xe0] sm:$0xff]
        %v842 = vld [vmem:[#allocation2 + $0xe8] sm:$0xff]
        %v843 = vld [vmem:[#allocation2 + $0xf0] sm:$0xff]
        %v844 = vld [vmem:[#allocation2 + $0xf8] sm:$0xff]
        %v845 = vsel %vm749, 1, 0
        %v846 = vsel %vm750, 1, 0
        %v847 = vsel %vm751, 1, 0
        %v848 = vsel %vm752, 1, 0
        %v849 = vsel %vm753, 1, 0
        %v850 = vsel %vm754, 1, 0
        %v851 = vsel %vm755, 1, 0
        %v852 = vsel %vm756, 1, 0
        %v853 = vsel %vm757, 1, 0
        %v854 = vsel %vm758, 1, 0
        %v855 = vsel %vm759, 1, 0
        %v856 = vsel %vm760, 1, 0
        %v857 = vsel %vm761, 1, 0
        %v858 = vsel %vm762, 1, 0
        %v859 = vsel %vm763, 1, 0
        %v860 = vsel %vm764, 1, 0
        %v861 = vsel %vm765, 1, 0
        %v862 = vsel %vm766, 1, 0
        %v863 = vsel %vm767, 1, 0
        %v864 = vsel %vm768, 1, 0
        %v865 = vsel %vm769, 1, 0
        %v866 = vsel %vm770, 1, 0
        %v867 = vsel %vm771, 1, 0
        %v868 = vsel %vm772, 1, 0
        %v869 = vsel %vm773, 1, 0
        %v870 = vsel %vm774, 1, 0
        %v871 = vsel %vm775, 1, 0
        %v872 = vsel %vm776, 1, 0
        %v873 = vsel %vm777, 1, 0
        %v874 = vsel %vm778, 1, 0
        %v875 = vsel %vm779, 1, 0
        %v876 = vsel %vm780, 1, 0
        %vm877 = vcmp.eq.s32.totalorder %v845, 1
        %vm878 = vcmp.eq.s32.totalorder %v846, 1
        %vm879 = vcmp.eq.s32.totalorder %v847, 1
        %vm880 = vcmp.eq.s32.totalorder %v848, 1
        %vm881 = vcmp.eq.s32.totalorder %v849, 1
        %vm882 = vcmp.eq.s32.totalorder %v850, 1
        %vm883 = vcmp.eq.s32.totalorder %v851, 1
        %vm884 = vcmp.eq.s32.totalorder %v852, 1
        %vm885 = vcmp.eq.s32.totalorder %v853, 1
        %vm886 = vcmp.eq.s32.totalorder %v854, 1
        %vm887 = vcmp.eq.s32.totalorder %v855, 1
        %vm888 = vcmp.eq.s32.totalorder %v856, 1
        %vm889 = vcmp.eq.s32.totalorder %v857, 1
        %vm890 = vcmp.eq.s32.totalorder %v858, 1
        %vm891 = vcmp.eq.s32.totalorder %v859, 1
        %vm892 = vcmp.eq.s32.totalorder %v860, 1
        %vm893 = vcmp.eq.s32.totalorder %v861, 1
        %vm894 = vcmp.eq.s32.totalorder %v862, 1
        %vm895 = vcmp.eq.s32.totalorder %v863, 1
        %vm896 = vcmp.eq.s32.totalorder %v864, 1
        %vm897 = vcmp.eq.s32.totalorder %v865, 1
        %vm898 = vcmp.eq.s32.totalorder %v866, 1
        %vm899 = vcmp.eq.s32.totalorder %v867, 1
        %vm900 = vcmp.eq.s32.totalorder %v868, 1
        %vm901 = vcmp.eq.s32.totalorder %v869, 1
        %vm902 = vcmp.eq.s32.totalorder %v870, 1
        %vm903 = vcmp.eq.s32.totalorder %v871, 1
        %vm904 = vcmp.eq.s32.totalorder %v872, 1
        %vm905 = vcmp.eq.s32.totalorder %v873, 1
        %vm906 = vcmp.eq.s32.totalorder %v874, 1
        %vm907 = vcmp.eq.s32.totalorder %v875, 1
        %vm908 = vcmp.eq.s32.totalorder %v876, 1
        %v909 = vsel %vm877, %v813, 0.0
        %v910 = vsel %vm878, %v814, 0.0
        %v911 = vsel %vm879, %v815, 0.0
        %v912 = vsel %vm880, %v816, 0.0
        %v913 = vsel %vm881, %v817, 0.0
        %v914 = vsel %vm882, %v818, 0.0
        %v915 = vsel %vm883, %v819, 0.0
        %v916 = vsel %vm884, %v820, 0.0
        %v917 = vsel %vm885, %v821, 0.0
        %v918 = vsel %vm886, %v822, 0.0
        %v919 = vsel %vm887, %v823, 0.0
        %v920 = vsel %vm888, %v824, 0.0
        %v921 = vsel %vm889, %v825, 0.0
        %v922 = vsel %vm890, %v826, 0.0
        %v923 = vsel %vm891, %v827, 0.0
        %v924 = vsel %vm892, %v828, 0.0
        %v925 = vsel %vm893, %v829, 0.0
        %v926 = vsel %vm894, %v830, 0.0
        %v927 = vsel %vm895, %v831, 0.0
        %v928 = vsel %vm896, %v832, 0.0
        %v929 = vsel %vm897, %v833, 0.0
        %v930 = vsel %vm898, %v834, 0.0
        %v931 = vsel %vm899, %v835, 0.0
        %v932 = vsel %vm900, %v836, 0.0
        %v933 = vsel %vm901, %v837, 0.0
        %v934 = vsel %vm902, %v838, 0.0
        %v935 = vsel %vm903, %v839, 0.0
        %v936 = vsel %vm904, %v840, 0.0
        %v937 = vsel %vm905, %v841, 0.0
        %v938 = vsel %vm906, %v842, 0.0
        %v939 = vsel %vm907, %v843, 0.0
        %v940 = vsel %vm908, %v844, 0.0
        %v941 = vpack.c.bf16 %v910, %v909
        %v942 = vpack.c.bf16 %v912, %v911
        %v943 = vpack.c.bf16 %v914, %v913
        %v944 = vpack.c.bf16 %v916, %v915
        %v945 = vpack.c.bf16 %v918, %v917
        %v946 = vpack.c.bf16 %v920, %v919
        %v947 = vpack.c.bf16 %v922, %v921
        %v948 = vpack.c.bf16 %v924, %v923
        %v949 = vpack.c.bf16 %v926, %v925
        %v950 = vpack.c.bf16 %v928, %v927
        %v951 = vpack.c.bf16 %v930, %v929
        %v952 = vpack.c.bf16 %v932, %v931
        %v953 = vpack.c.bf16 %v934, %v933
        %v954 = vpack.c.bf16 %v936, %v935
        %v955 = vpack.c.bf16 %v938, %v937
        %v956 = vpack.c.bf16 %v940, %v939
        %v957 = vld [vmem:[%s1] sm:$0xf]
        %v958 = vld [vmem:[%s1 + $0x4] sm:$0xf]
        %v959 = vld [vmem:[%s1 + $0x8] sm:$0xf]
        %v960 = vld [vmem:[%s1 + $0xc] sm:$0xf]
        %v961 = vld [vmem:[%s1 + $0x10] sm:$0xf]
        %v962 = vld [vmem:[%s1 + $0x14] sm:$0xf]
        %v963 = vld [vmem:[%s1 + $0x18] sm:$0xf]
        %v964 = vld [vmem:[%s1 + $0x1c] sm:$0xf]
        %v965 = vld [vmem:[#allocation2 + $0x1] sm:$0xff]
        %v966 = vld [vmem:[#allocation2 + $0x9] sm:$0xff]
        %v967 = vld [vmem:[#allocation2 + $0x11] sm:$0xff]
        %v968 = vld [vmem:[#allocation2 + $0x19] sm:$0xff]
        %v969 = vld [vmem:[#allocation2 + $0x21] sm:$0xff]
        %v970 = vld [vmem:[#allocation2 + $0x29] sm:$0xff]
        %v971 = vld [vmem:[#allocation2 + $0x31] sm:$0xff]
        %v972 = vld [vmem:[#allocation2 + $0x39] sm:$0xff]
        %v973 = vld [vmem:[#allocation2 + $0x41] sm:$0xff]
        %v974 = vld [vmem:[#allocation2 + $0x49] sm:$0xff]
        %v975 = vld [vmem:[#allocation2 + $0x51] sm:$0xff]
        %v976 = vld [vmem:[#allocation2 + $0x59] sm:$0xff]
        %v977 = vld [vmem:[#allocation2 + $0x61] sm:$0xff]
        %v978 = vld [vmem:[#allocation2 + $0x69] sm:$0xff]
        %v979 = vld [vmem:[#allocation2 + $0x71] sm:$0xff]
        %v980 = vld [vmem:[#allocation2 + $0x79] sm:$0xff]
        %v981 = vld [vmem:[#allocation2 + $0x81] sm:$0xff]
        %v982 = vld [vmem:[#allocation2 + $0x89] sm:$0xff]
        %v983 = vld [vmem:[#allocation2 + $0x91] sm:$0xff]
        %v984 = vld [vmem:[#allocation2 + $0x99] sm:$0xff]
        %v985 = vld [vmem:[#allocation2 + $0xa1] sm:$0xff]
        %v986 = vld [vmem:[#allocation2 + $0xa9] sm:$0xff]
        %v987 = vld [vmem:[#allocation2 + $0xb1] sm:$0xff]
        %v988 = vld [vmem:[#allocation2 + $0xb9] sm:$0xff]
        %v989 = vld [vmem:[#allocation2 + $0xc1] sm:$0xff]
        %v990 = vld [vmem:[#allocation2 + $0xc9] sm:$0xff]
        %v991 = vld [vmem:[#allocation2 + $0xd1] sm:$0xff]
        %v992 = vld [vmem:[#allocation2 + $0xd9] sm:$0xff]
        %v993 = vld [vmem:[#allocation2 + $0xe1] sm:$0xff]
        %v994 = vld [vmem:[#allocation2 + $0xe9] sm:$0xff]
        %v995 = vld [vmem:[#allocation2 + $0xf1] sm:$0xff]
        %v996 = vld [vmem:[#allocation2 + $0xf9] sm:$0xff]
        %v997 = vpack.c.bf16 %v966, %v965
        %v998 = vpack.c.bf16 %v968, %v967
        %v999 = vpack.c.bf16 %v970, %v969
        %v1000 = vpack.c.bf16 %v972, %v971
        %v1001 = vpack.c.bf16 %v974, %v973
        %v1002 = vpack.c.bf16 %v976, %v975
        %v1003 = vpack.c.bf16 %v978, %v977
        %v1004 = vpack.c.bf16 %v980, %v979
        %v1005 = vpack.c.bf16 %v982, %v981
        %v1006 = vpack.c.bf16 %v984, %v983
        %v1007 = vpack.c.bf16 %v986, %v985
        %v1008 = vpack.c.bf16 %v988, %v987
        %v1009 = vpack.c.bf16 %v990, %v989
        %v1010 = vpack.c.bf16 %v992, %v991
        %v1011 = vpack.c.bf16 %v994, %v993
        %v1012 = vpack.c.bf16 %v996, %v995
        %s1013 = scalar_lea.vmem %s1, 32
        %v1014 = vld [vmem:[%s1013] sm:$0xf]
        %v1015 = vld [vmem:[%s1013 + $0x4] sm:$0xf]
        %v1016 = vld [vmem:[%s1013 + $0x8] sm:$0xf]
        %v1017 = vld [vmem:[%s1013 + $0xc] sm:$0xf]
        %v1018 = vld [vmem:[%s1013 + $0x10] sm:$0xf]
        %v1019 = vld [vmem:[%s1013 + $0x14] sm:$0xf]
        %v1020 = vld [vmem:[%s1013 + $0x18] sm:$0xf]
        %v1021 = vld [vmem:[%s1013 + $0x1c] sm:$0xf]
        %v1030 = vunpack.c.l.b16 %v1014
        %v1031 = vunpack.c.l.b16 %v1015
        %v1032 = vunpack.c.l.b16 %v1016
        %v1033 = vunpack.c.l.b16 %v1017
        %v1034 = vunpack.c.l.b16 %v1018
        %v1035 = vunpack.c.l.b16 %v1019
        %v1036 = vunpack.c.l.b16 %v1020
        %v1037 = vunpack.c.l.b16 %v1021
        %v1038 = vpack.c.b16 %v1031, %v1030
        %v1039 = vpack.c.b16 %v1033, %v1032
        %v1040 = vpack.c.b16 %v1035, %v1034
        %v1041 = vpack.c.b16 %v1037, %v1036
        %v1047 = vsel %vm229, %v997, 0
        %v1050 = vsel %vm229, %v998, 0
        %v1053 = vsel %vm229, %v999, 0
        %v1056 = vsel %vm229, %v1000, 0
        %v1059 = vsel %vm229, %v1001, 0
        %v1062 = vsel %vm229, %v1002, 0
        %v1065 = vsel %vm229, %v1003, 0
        %v1068 = vsel %vm229, %v1004, 0
        %v1071 = vsel %vm229, %v1005, 0
        %v1074 = vsel %vm229, %v1006, 0
        %v1077 = vsel %vm229, %v1007, 0
        %v1080 = vsel %vm229, %v1008, 0
        %v1083 = vsel %vm229, %v1009, 0
        %v1086 = vsel %vm229, %v1010, 0
        %v1089 = vsel %vm229, %v1011, 0
        %v1092 = vsel %vm229, %v1012, 0
        %1094 = vmatpush.bf16.msra.mxu0 0
        %1095 = vmatpush.bf16.msra.mxu0 0
        %1096 = vmatpush.bf16.msra.mxu0 0
        %1097 = vmatpush.bf16.msra.mxu0 0
        %1098 = vmatpush.bf16.msra.mxu0 %v1041
        %1099 = vmatpush.bf16.msra.mxu0 %v1040
        %1100 = vmatpush.bf16.msra.mxu0 %v1039
        %1101 = vmatpush.bf16.msra.mxu0 %v1038
        %1102 = vmatmul.bf16.gmra.mxu0 %v1047
        %v1103 = vpop.f32.mrf.mxu0
        %v1104 = vadd.f32 0.0, %v1103
        %v1105 = vpop.f32.mrf.mxu0
        %v1106 = vadd.f32 0.0, %v1105
        %1107 = vmatmul.bf16.gmra.mxu0 %v1050
        %v1108 = vpop.f32.mrf.mxu0
        %v1109 = vadd.f32 0.0, %v1108
        %v1110 = vpop.f32.mrf.mxu0
        %v1111 = vadd.f32 0.0, %v1110
        %1112 = vmatmul.bf16.gmra.mxu0 %v1053
        %v1113 = vpop.f32.mrf.mxu0
        %v1114 = vadd.f32 0.0, %v1113
        %v1115 = vpop.f32.mrf.mxu0
        %v1116 = vadd.f32 0.0, %v1115
        %1117 = vmatmul.bf16.gmra.mxu0 %v1056
        %v1118 = vpop.f32.mrf.mxu0
        %v1119 = vadd.f32 0.0, %v1118
        %v1120 = vpop.f32.mrf.mxu0
        %v1121 = vadd.f32 0.0, %v1120
        %1122 = vmatmul.bf16.gmra.mxu0 %v1059
        %v1123 = vpop.f32.mrf.mxu0
        %v1124 = vadd.f32 0.0, %v1123
        %v1125 = vpop.f32.mrf.mxu0
        %v1126 = vadd.f32 0.0, %v1125
        %1127 = vmatmul.bf16.gmra.mxu0 %v1062
        %v1128 = vpop.f32.mrf.mxu0
        %v1129 = vadd.f32 0.0, %v1128
        %v1130 = vpop.f32.mrf.mxu0
        %v1131 = vadd.f32 0.0, %v1130
        %1132 = vmatmul.bf16.gmra.mxu0 %v1065
        %v1133 = vpop.f32.mrf.mxu0
        %v1134 = vadd.f32 0.0, %v1133
        %v1135 = vpop.f32.mrf.mxu0
        %v1136 = vadd.f32 0.0, %v1135
        %1137 = vmatmul.bf16.gmra.mxu0 %v1068
        %v1138 = vpop.f32.mrf.mxu0
        %v1139 = vadd.f32 0.0, %v1138
        %v1140 = vpop.f32.mrf.mxu0
        %v1141 = vadd.f32 0.0, %v1140
        %1142 = vmatmul.bf16.gmra.mxu0 %v1071
        %v1143 = vpop.f32.mrf.mxu0
        %v1144 = vadd.f32 0.0, %v1143
        %v1145 = vpop.f32.mrf.mxu0
        %v1146 = vadd.f32 0.0, %v1145
        %1147 = vmatmul.bf16.gmra.mxu0 %v1074
        %v1148 = vpop.f32.mrf.mxu0
        %v1149 = vadd.f32 0.0, %v1148
        %v1150 = vpop.f32.mrf.mxu0
        %v1151 = vadd.f32 0.0, %v1150
        %1152 = vmatmul.bf16.gmra.mxu0 %v1077
        %v1153 = vpop.f32.mrf.mxu0
        %v1154 = vadd.f32 0.0, %v1153
        %v1155 = vpop.f32.mrf.mxu0
        %v1156 = vadd.f32 0.0, %v1155
        %1157 = vmatmul.bf16.gmra.mxu0 %v1080
        %v1158 = vpop.f32.mrf.mxu0
        %v1159 = vadd.f32 0.0, %v1158
        %v1160 = vpop.f32.mrf.mxu0
        %v1161 = vadd.f32 0.0, %v1160
        %1162 = vmatmul.bf16.gmra.mxu0 %v1083
        %v1163 = vpop.f32.mrf.mxu0
        %v1164 = vadd.f32 0.0, %v1163
        %v1165 = vpop.f32.mrf.mxu0
        %v1166 = vadd.f32 0.0, %v1165
        %1167 = vmatmul.bf16.gmra.mxu0 %v1086
        %v1168 = vpop.f32.mrf.mxu0
        %v1169 = vadd.f32 0.0, %v1168
        %v1170 = vpop.f32.mrf.mxu0
        %v1171 = vadd.f32 0.0, %v1170
        %1172 = vmatmul.bf16.gmra.mxu0 %v1089
        %v1173 = vpop.f32.mrf.mxu0
        %v1174 = vadd.f32 0.0, %v1173
        %v1175 = vpop.f32.mrf.mxu0
        %v1176 = vadd.f32 0.0, %v1175
        %1177 = vmatmul.bf16.gmra.mxu0 %v1092
        %v1178 = vpop.f32.mrf.mxu0
        %v1179 = vadd.f32 0.0, %v1178
        %v1180 = vpop.f32.mrf.mxu0
        %v1181 = vadd.f32 0.0, %v1180
        %1182 = vdwg.mxu0
        %v1191 = vunpack.c.l.b16 %v957
        %v1192 = vunpack.c.l.b16 %v958
        %v1193 = vunpack.c.l.b16 %v959
        %v1194 = vunpack.c.l.b16 %v960
        %v1195 = vunpack.c.l.b16 %v961
        %v1196 = vunpack.c.l.b16 %v962
        %v1197 = vunpack.c.l.b16 %v963
        %v1198 = vunpack.c.l.b16 %v964
        %v1199 = vpack.c.b16 %v1192, %v1191
        %v1200 = vpack.c.b16 %v1194, %v1193
        %v1201 = vpack.c.b16 %v1196, %v1195
        %v1202 = vpack.c.b16 %v1198, %v1197
        %v1208 = vsel %vm229, %v941, 0
        %v1211 = vsel %vm229, %v942, 0
        %v1214 = vsel %vm229, %v943, 0
        %v1217 = vsel %vm229, %v944, 0
        %v1220 = vsel %vm229, %v945, 0
        %v1223 = vsel %vm229, %v946, 0
        %v1226 = vsel %vm229, %v947, 0
        %v1229 = vsel %vm229, %v948, 0
        %v1232 = vsel %vm229, %v949, 0
        %v1235 = vsel %vm229, %v950, 0
        %v1238 = vsel %vm229, %v951, 0
        %v1241 = vsel %vm229, %v952, 0
        %v1244 = vsel %vm229, %v953, 0
        %v1247 = vsel %vm229, %v954, 0
        %v1250 = vsel %vm229, %v955, 0
        %v1253 = vsel %vm229, %v956, 0
        %1255 = vmatpush.bf16.msra.mxu0 0
        %1256 = vmatpush.bf16.msra.mxu0 0
        %1257 = vmatpush.bf16.msra.mxu0 0
        %1258 = vmatpush.bf16.msra.mxu0 0
        %1259 = vmatpush.bf16.msra.mxu0 %v1202
        %1260 = vmatpush.bf16.msra.mxu0 %v1201
        %1261 = vmatpush.bf16.msra.mxu0 %v1200
        %1262 = vmatpush.bf16.msra.mxu0 %v1199
        %1263 = vmatmul.bf16.gmra.mxu0 %v1208
        %v1264 = vpop.f32.mrf.mxu0
        %v1265 = vadd.f32 %v1104, %v1264
        %v1266 = vpop.f32.mrf.mxu0
        %v1267 = vadd.f32 %v1106, %v1266
        %1268 = vmatmul.bf16.gmra.mxu0 %v1211
        %v1269 = vpop.f32.mrf.mxu0
        %v1270 = vadd.f32 %v1109, %v1269
        %v1271 = vpop.f32.mrf.mxu0
        %v1272 = vadd.f32 %v1111, %v1271
        %1273 = vmatmul.bf16.gmra.mxu0 %v1214
        %v1274 = vpop.f32.mrf.mxu0
        %v1275 = vadd.f32 %v1114, %v1274
        %v1276 = vpop.f32.mrf.mxu0
        %v1277 = vadd.f32 %v1116, %v1276
        %1278 = vmatmul.bf16.gmra.mxu0 %v1217
        %v1279 = vpop.f32.mrf.mxu0
        %v1280 = vadd.f32 %v1119, %v1279
        %v1281 = vpop.f32.mrf.mxu0
        %v1282 = vadd.f32 %v1121, %v1281
        %1283 = vmatmul.bf16.gmra.mxu0 %v1220
        %v1284 = vpop.f32.mrf.mxu0
        %v1285 = vadd.f32 %v1124, %v1284
        %v1286 = vpop.f32.mrf.mxu0
        %v1287 = vadd.f32 %v1126, %v1286
        %1288 = vmatmul.bf16.gmra.mxu0 %v1223
        %v1289 = vpop.f32.mrf.mxu0
        %v1290 = vadd.f32 %v1129, %v1289
        %v1291 = vpop.f32.mrf.mxu0
        %v1292 = vadd.f32 %v1131, %v1291
        %1293 = vmatmul.bf16.gmra.mxu0 %v1226
        %v1294 = vpop.f32.mrf.mxu0
        %v1295 = vadd.f32 %v1134, %v1294
        %v1296 = vpop.f32.mrf.mxu0
        %v1297 = vadd.f32 %v1136, %v1296
        %1298 = vmatmul.bf16.gmra.mxu0 %v1229
        %v1299 = vpop.f32.mrf.mxu0
        %v1300 = vadd.f32 %v1139, %v1299
        %v1301 = vpop.f32.mrf.mxu0
        %v1302 = vadd.f32 %v1141, %v1301
        %1303 = vmatmul.bf16.gmra.mxu0 %v1232
        %v1304 = vpop.f32.mrf.mxu0
        %v1305 = vadd.f32 %v1144, %v1304
        %v1306 = vpop.f32.mrf.mxu0
        %v1307 = vadd.f32 %v1146, %v1306
        %1308 = vmatmul.bf16.gmra.mxu0 %v1235
        %v1309 = vpop.f32.mrf.mxu0
        %v1310 = vadd.f32 %v1149, %v1309
        %v1311 = vpop.f32.mrf.mxu0
        %v1312 = vadd.f32 %v1151, %v1311
        %1313 = vmatmul.bf16.gmra.mxu0 %v1238
        %v1314 = vpop.f32.mrf.mxu0
        %v1315 = vadd.f32 %v1154, %v1314
        %v1316 = vpop.f32.mrf.mxu0
        %v1317 = vadd.f32 %v1156, %v1316
        %1318 = vmatmul.bf16.gmra.mxu0 %v1241
        %v1319 = vpop.f32.mrf.mxu0
        %v1320 = vadd.f32 %v1159, %v1319
        %v1321 = vpop.f32.mrf.mxu0
        %v1322 = vadd.f32 %v1161, %v1321
        %1323 = vmatmul.bf16.gmra.mxu0 %v1244
        %v1324 = vpop.f32.mrf.mxu0
        %v1325 = vadd.f32 %v1164, %v1324
        %v1326 = vpop.f32.mrf.mxu0
        %v1327 = vadd.f32 %v1166, %v1326
        %1328 = vmatmul.bf16.gmra.mxu0 %v1247
        %v1329 = vpop.f32.mrf.mxu0
        %v1330 = vadd.f32 %v1169, %v1329
        %v1331 = vpop.f32.mrf.mxu0
        %v1332 = vadd.f32 %v1171, %v1331
        %1333 = vmatmul.bf16.gmra.mxu0 %v1250
        %v1334 = vpop.f32.mrf.mxu0
        %v1335 = vadd.f32 %v1174, %v1334
        %v1336 = vpop.f32.mrf.mxu0
        %v1337 = vadd.f32 %v1176, %v1336
        %1338 = vmatmul.bf16.gmra.mxu0 %v1253
        %v1339 = vpop.f32.mrf.mxu0
        %v1340 = vadd.f32 %v1179, %v1339
        %v1341 = vpop.f32.mrf.mxu0
        %v1342 = vadd.f32 %v1181, %v1341
        %1343 = vdwg.mxu0
        %v1344 = vld [vmem:[#allocation2 + $0x2] sm:$0xff]
        %v1345 = vld [vmem:[#allocation2 + $0xa] sm:$0xff]
        %v1346 = vld [vmem:[#allocation2 + $0x12] sm:$0xff]
        %v1347 = vld [vmem:[#allocation2 + $0x1a] sm:$0xff]
        %v1348 = vld [vmem:[#allocation2 + $0x22] sm:$0xff]
        %v1349 = vld [vmem:[#allocation2 + $0x2a] sm:$0xff]
        %v1350 = vld [vmem:[#allocation2 + $0x32] sm:$0xff]
        %v1351 = vld [vmem:[#allocation2 + $0x3a] sm:$0xff]
        %v1352 = vld [vmem:[#allocation2 + $0x42] sm:$0xff]
        %v1353 = vld [vmem:[#allocation2 + $0x4a] sm:$0xff]
        %v1354 = vld [vmem:[#allocation2 + $0x52] sm:$0xff]
        %v1355 = vld [vmem:[#allocation2 + $0x5a] sm:$0xff]
        %v1356 = vld [vmem:[#allocation2 + $0x62] sm:$0xff]
        %v1357 = vld [vmem:[#allocation2 + $0x6a] sm:$0xff]
        %v1358 = vld [vmem:[#allocation2 + $0x72] sm:$0xff]
        %v1359 = vld [vmem:[#allocation2 + $0x7a] sm:$0xff]
        %v1360 = vld [vmem:[#allocation2 + $0x82] sm:$0xff]
        %v1361 = vld [vmem:[#allocation2 + $0x8a] sm:$0xff]
        %v1362 = vld [vmem:[#allocation2 + $0x92] sm:$0xff]
        %v1363 = vld [vmem:[#allocation2 + $0x9a] sm:$0xff]
        %v1364 = vld [vmem:[#allocation2 + $0xa2] sm:$0xff]
        %v1365 = vld [vmem:[#allocation2 + $0xaa] sm:$0xff]
        %v1366 = vld [vmem:[#allocation2 + $0xb2] sm:$0xff]
        %v1367 = vld [vmem:[#allocation2 + $0xba] sm:$0xff]
        %v1368 = vld [vmem:[#allocation2 + $0xc2] sm:$0xff]
        %v1369 = vld [vmem:[#allocation2 + $0xca] sm:$0xff]
        %v1370 = vld [vmem:[#allocation2 + $0xd2] sm:$0xff]
        %v1371 = vld [vmem:[#allocation2 + $0xda] sm:$0xff]
        %v1372 = vld [vmem:[#allocation2 + $0xe2] sm:$0xff]
        %v1373 = vld [vmem:[#allocation2 + $0xea] sm:$0xff]
        %v1374 = vld [vmem:[#allocation2 + $0xf2] sm:$0xff]
        %v1375 = vld [vmem:[#allocation2 + $0xfa] sm:$0xff]
        %v1376 = vsel %vm781, 1, 0
        %v1377 = vsel %vm782, 1, 0
        %v1378 = vsel %vm783, 1, 0
        %v1379 = vsel %vm784, 1, 0
        %v1380 = vsel %vm785, 1, 0
        %v1381 = vsel %vm786, 1, 0
        %v1382 = vsel %vm787, 1, 0
        %v1383 = vsel %vm788, 1, 0
        %v1384 = vsel %vm789, 1, 0
        %v1385 = vsel %vm790, 1, 0
        %v1386 = vsel %vm791, 1, 0
        %v1387 = vsel %vm792, 1, 0
        %v1388 = vsel %vm793, 1, 0
        %v1389 = vsel %vm794, 1, 0
        %v1390 = vsel %vm795, 1, 0
        %v1391 = vsel %vm796, 1, 0
        %v1392 = vsel %vm797, 1, 0
        %v1393 = vsel %vm798, 1, 0
        %v1394 = vsel %vm799, 1, 0
        %v1395 = vsel %vm800, 1, 0
        %v1396 = vsel %vm801, 1, 0
        %v1397 = vsel %vm802, 1, 0
        %v1398 = vsel %vm803, 1, 0
        %v1399 = vsel %vm804, 1, 0
        %v1400 = vsel %vm805, 1, 0
        %v1401 = vsel %vm806, 1, 0
        %v1402 = vsel %vm807, 1, 0
        %v1403 = vsel %vm808, 1, 0
        %v1404 = vsel %vm809, 1, 0
        %v1405 = vsel %vm810, 1, 0
        %v1406 = vsel %vm811, 1, 0
        %v1407 = vsel %vm812, 1, 0
        %vm1408 = vcmp.eq.s32.totalorder %v1376, 1
        %vm1409 = vcmp.eq.s32.totalorder %v1377, 1
        %vm1410 = vcmp.eq.s32.totalorder %v1378, 1
        %vm1411 = vcmp.eq.s32.totalorder %v1379, 1
        %vm1412 = vcmp.eq.s32.totalorder %v1380, 1
        %vm1413 = vcmp.eq.s32.totalorder %v1381, 1
        %vm1414 = vcmp.eq.s32.totalorder %v1382, 1
        %vm1415 = vcmp.eq.s32.totalorder %v1383, 1
        %vm1416 = vcmp.eq.s32.totalorder %v1384, 1
        %vm1417 = vcmp.eq.s32.totalorder %v1385, 1
        %vm1418 = vcmp.eq.s32.totalorder %v1386, 1
        %vm1419 = vcmp.eq.s32.totalorder %v1387, 1
        %vm1420 = vcmp.eq.s32.totalorder %v1388, 1
        %vm1421 = vcmp.eq.s32.totalorder %v1389, 1
        %vm1422 = vcmp.eq.s32.totalorder %v1390, 1
        %vm1423 = vcmp.eq.s32.totalorder %v1391, 1
        %vm1424 = vcmp.eq.s32.totalorder %v1392, 1
        %vm1425 = vcmp.eq.s32.totalorder %v1393, 1
        %vm1426 = vcmp.eq.s32.totalorder %v1394, 1
        %vm1427 = vcmp.eq.s32.totalorder %v1395, 1
        %vm1428 = vcmp.eq.s32.totalorder %v1396, 1
        %vm1429 = vcmp.eq.s32.totalorder %v1397, 1
        %vm1430 = vcmp.eq.s32.totalorder %v1398, 1
        %vm1431 = vcmp.eq.s32.totalorder %v1399, 1
        %vm1432 = vcmp.eq.s32.totalorder %v1400, 1
        %vm1433 = vcmp.eq.s32.totalorder %v1401, 1
        %vm1434 = vcmp.eq.s32.totalorder %v1402, 1
        %vm1435 = vcmp.eq.s32.totalorder %v1403, 1
        %vm1436 = vcmp.eq.s32.totalorder %v1404, 1
        %vm1437 = vcmp.eq.s32.totalorder %v1405, 1
        %vm1438 = vcmp.eq.s32.totalorder %v1406, 1
        %vm1439 = vcmp.eq.s32.totalorder %v1407, 1
        %v1440 = vsel %vm1408, %v1344, 0.0
        %v1441 = vsel %vm1409, %v1345, 0.0
        %v1442 = vsel %vm1410, %v1346, 0.0
        %v1443 = vsel %vm1411, %v1347, 0.0
        %v1444 = vsel %vm1412, %v1348, 0.0
        %v1445 = vsel %vm1413, %v1349, 0.0
        %v1446 = vsel %vm1414, %v1350, 0.0
        %v1447 = vsel %vm1415, %v1351, 0.0
        %v1448 = vsel %vm1416, %v1352, 0.0
        %v1449 = vsel %vm1417, %v1353, 0.0
        %v1450 = vsel %vm1418, %v1354, 0.0
        %v1451 = vsel %vm1419, %v1355, 0.0
        %v1452 = vsel %vm1420, %v1356, 0.0
        %v1453 = vsel %vm1421, %v1357, 0.0
        %v1454 = vsel %vm1422, %v1358, 0.0
        %v1455 = vsel %vm1423, %v1359, 0.0
        %v1456 = vsel %vm1424, %v1360, 0.0
        %v1457 = vsel %vm1425, %v1361, 0.0
        %v1458 = vsel %vm1426, %v1362, 0.0
        %v1459 = vsel %vm1427, %v1363, 0.0
        %v1460 = vsel %vm1428, %v1364, 0.0
        %v1461 = vsel %vm1429, %v1365, 0.0
        %v1462 = vsel %vm1430, %v1366, 0.0
        %v1463 = vsel %vm1431, %v1367, 0.0
        %v1464 = vsel %vm1432, %v1368, 0.0
        %v1465 = vsel %vm1433, %v1369, 0.0
        %v1466 = vsel %vm1434, %v1370, 0.0
        %v1467 = vsel %vm1435, %v1371, 0.0
        %v1468 = vsel %vm1436, %v1372, 0.0
        %v1469 = vsel %vm1437, %v1373, 0.0
        %v1470 = vsel %vm1438, %v1374, 0.0
        %v1471 = vsel %vm1439, %v1375, 0.0
        %v1472 = vpack.c.bf16 %v1441, %v1440
        %v1473 = vpack.c.bf16 %v1443, %v1442
        %v1474 = vpack.c.bf16 %v1445, %v1444
        %v1475 = vpack.c.bf16 %v1447, %v1446
        %v1476 = vpack.c.bf16 %v1449, %v1448
        %v1477 = vpack.c.bf16 %v1451, %v1450
        %v1478 = vpack.c.bf16 %v1453, %v1452
        %v1479 = vpack.c.bf16 %v1455, %v1454
        %v1480 = vpack.c.bf16 %v1457, %v1456
        %v1481 = vpack.c.bf16 %v1459, %v1458
        %v1482 = vpack.c.bf16 %v1461, %v1460
        %v1483 = vpack.c.bf16 %v1463, %v1462
        %v1484 = vpack.c.bf16 %v1465, %v1464
        %v1485 = vpack.c.bf16 %v1467, %v1466
        %v1486 = vpack.c.bf16 %v1469, %v1468
        %v1487 = vpack.c.bf16 %v1471, %v1470
        %s1488 = scalar_lea.vmem %s1, 64
        %v1489 = vld [vmem:[%s1488] sm:$0xf]
        %v1490 = vld [vmem:[%s1488 + $0x4] sm:$0xf]
        %v1491 = vld [vmem:[%s1488 + $0x8] sm:$0xf]
        %v1492 = vld [vmem:[%s1488 + $0xc] sm:$0xf]
        %v1493 = vld [vmem:[%s1488 + $0x10] sm:$0xf]
        %v1494 = vld [vmem:[%s1488 + $0x14] sm:$0xf]
        %v1495 = vld [vmem:[%s1488 + $0x18] sm:$0xf]
        %v1496 = vld [vmem:[%s1488 + $0x1c] sm:$0xf]
        %v1505 = vunpack.c.l.b16 %v1489
        %v1506 = vunpack.c.l.b16 %v1490
        %v1507 = vunpack.c.l.b16 %v1491
        %v1508 = vunpack.c.l.b16 %v1492
        %v1509 = vunpack.c.l.b16 %v1493
        %v1510 = vunpack.c.l.b16 %v1494
        %v1511 = vunpack.c.l.b16 %v1495
        %v1512 = vunpack.c.l.b16 %v1496
        %v1513 = vpack.c.b16 %v1506, %v1505
        %v1514 = vpack.c.b16 %v1508, %v1507
        %v1515 = vpack.c.b16 %v1510, %v1509
        %v1516 = vpack.c.b16 %v1512, %v1511
        %v1522 = vsel %vm229, %v1472, 0
        %v1525 = vsel %vm229, %v1473, 0
        %v1528 = vsel %vm229, %v1474, 0
        %v1531 = vsel %vm229, %v1475, 0
        %v1534 = vsel %vm229, %v1476, 0
        %v1537 = vsel %vm229, %v1477, 0
        %v1540 = vsel %vm229, %v1478, 0
        %v1543 = vsel %vm229, %v1479, 0
        %v1546 = vsel %vm229, %v1480, 0
        %v1549 = vsel %vm229, %v1481, 0
        %v1552 = vsel %vm229, %v1482, 0
        %v1555 = vsel %vm229, %v1483, 0
        %v1558 = vsel %vm229, %v1484, 0
        %v1561 = vsel %vm229, %v1485, 0
        %v1564 = vsel %vm229, %v1486, 0
        %v1567 = vsel %vm229, %v1487, 0
        %1569 = vmatpush.bf16.msra.mxu0 0
        %1570 = vmatpush.bf16.msra.mxu0 0
        %1571 = vmatpush.bf16.msra.mxu0 0
        %1572 = vmatpush.bf16.msra.mxu0 0
        %1573 = vmatpush.bf16.msra.mxu0 %v1516
        %1574 = vmatpush.bf16.msra.mxu0 %v1515
        %1575 = vmatpush.bf16.msra.mxu0 %v1514
        %1576 = vmatpush.bf16.msra.mxu0 %v1513
        %1577 = vmatmul.bf16.gmra.mxu0 %v1522
        %v1578 = vpop.f32.mrf.mxu0
        %v1579 = vadd.f32 0.0, %v1578
        %v1580 = vpop.f32.mrf.mxu0
        %v1581 = vadd.f32 0.0, %v1580
        %1582 = vmatmul.bf16.gmra.mxu0 %v1525
        %v1583 = vpop.f32.mrf.mxu0
        %v1584 = vadd.f32 0.0, %v1583
        %v1585 = vpop.f32.mrf.mxu0
        %v1586 = vadd.f32 0.0, %v1585
        %1587 = vmatmul.bf16.gmra.mxu0 %v1528
        %v1588 = vpop.f32.mrf.mxu0
        %v1589 = vadd.f32 0.0, %v1588
        %v1590 = vpop.f32.mrf.mxu0
        %v1591 = vadd.f32 0.0, %v1590
        %1592 = vmatmul.bf16.gmra.mxu0 %v1531
        %v1593 = vpop.f32.mrf.mxu0
        %v1594 = vadd.f32 0.0, %v1593
        %v1595 = vpop.f32.mrf.mxu0
        %v1596 = vadd.f32 0.0, %v1595
        %1597 = vmatmul.bf16.gmra.mxu0 %v1534
        %v1598 = vpop.f32.mrf.mxu0
        %v1599 = vadd.f32 0.0, %v1598
        %v1600 = vpop.f32.mrf.mxu0
        %v1601 = vadd.f32 0.0, %v1600
        %1602 = vmatmul.bf16.gmra.mxu0 %v1537
        %v1603 = vpop.f32.mrf.mxu0
        %v1604 = vadd.f32 0.0, %v1603
        %v1605 = vpop.f32.mrf.mxu0
        %v1606 = vadd.f32 0.0, %v1605
        %1607 = vmatmul.bf16.gmra.mxu0 %v1540
        %v1608 = vpop.f32.mrf.mxu0
        %v1609 = vadd.f32 0.0, %v1608
        %v1610 = vpop.f32.mrf.mxu0
        %v1611 = vadd.f32 0.0, %v1610
        %1612 = vmatmul.bf16.gmra.mxu0 %v1543
        %v1613 = vpop.f32.mrf.mxu0
        %v1614 = vadd.f32 0.0, %v1613
        %v1615 = vpop.f32.mrf.mxu0
        %v1616 = vadd.f32 0.0, %v1615
        %1617 = vmatmul.bf16.gmra.mxu0 %v1546
        %v1618 = vpop.f32.mrf.mxu0
        %v1619 = vadd.f32 0.0, %v1618
        %v1620 = vpop.f32.mrf.mxu0
        %v1621 = vadd.f32 0.0, %v1620
        %1622 = vmatmul.bf16.gmra.mxu0 %v1549
        %v1623 = vpop.f32.mrf.mxu0
        %v1624 = vadd.f32 0.0, %v1623
        %v1625 = vpop.f32.mrf.mxu0
        %v1626 = vadd.f32 0.0, %v1625
        %1627 = vmatmul.bf16.gmra.mxu0 %v1552
        %v1628 = vpop.f32.mrf.mxu0
        %v1629 = vadd.f32 0.0, %v1628
        %v1630 = vpop.f32.mrf.mxu0
        %v1631 = vadd.f32 0.0, %v1630
        %1632 = vmatmul.bf16.gmra.mxu0 %v1555
        %v1633 = vpop.f32.mrf.mxu0
        %v1634 = vadd.f32 0.0, %v1633
        %v1635 = vpop.f32.mrf.mxu0
        %v1636 = vadd.f32 0.0, %v1635
        %1637 = vmatmul.bf16.gmra.mxu0 %v1558
        %v1638 = vpop.f32.mrf.mxu0
        %v1639 = vadd.f32 0.0, %v1638
        %v1640 = vpop.f32.mrf.mxu0
        %v1641 = vadd.f32 0.0, %v1640
        %1642 = vmatmul.bf16.gmra.mxu0 %v1561
        %v1643 = vpop.f32.mrf.mxu0
        %v1644 = vadd.f32 0.0, %v1643
        %v1645 = vpop.f32.mrf.mxu0
        %v1646 = vadd.f32 0.0, %v1645
        %1647 = vmatmul.bf16.gmra.mxu0 %v1564
        %v1648 = vpop.f32.mrf.mxu0
        %v1649 = vadd.f32 0.0, %v1648
        %v1650 = vpop.f32.mrf.mxu0
        %v1651 = vadd.f32 0.0, %v1650
        %1652 = vmatmul.bf16.gmra.mxu0 %v1567
        %v1653 = vpop.f32.mrf.mxu0
        %v1654 = vadd.f32 0.0, %v1653
        %v1655 = vpop.f32.mrf.mxu0
        %v1656 = vadd.f32 0.0, %v1655
        %1657 = vdwg.mxu0
        %v1658 = vadd.f32 %v1265, %v1579
        %v1659 = vadd.f32 %v1267, %v1581
        %v1660 = vadd.f32 %v1270, %v1584
        %v1661 = vadd.f32 %v1272, %v1586
        %v1662 = vadd.f32 %v1275, %v1589
        %v1663 = vadd.f32 %v1277, %v1591
        %v1664 = vadd.f32 %v1280, %v1594
        %v1665 = vadd.f32 %v1282, %v1596
        %v1666 = vadd.f32 %v1285, %v1599
        %v1667 = vadd.f32 %v1287, %v1601
        %v1668 = vadd.f32 %v1290, %v1604
        %v1669 = vadd.f32 %v1292, %v1606
        %v1670 = vadd.f32 %v1295, %v1609
        %v1671 = vadd.f32 %v1297, %v1611
        %v1672 = vadd.f32 %v1300, %v1614
        %v1673 = vadd.f32 %v1302, %v1616
        %v1674 = vadd.f32 %v1305, %v1619
        %v1675 = vadd.f32 %v1307, %v1621
        %v1676 = vadd.f32 %v1310, %v1624
        %v1677 = vadd.f32 %v1312, %v1626
        %v1678 = vadd.f32 %v1315, %v1629
        %v1679 = vadd.f32 %v1317, %v1631
        %v1680 = vadd.f32 %v1320, %v1634
        %v1681 = vadd.f32 %v1322, %v1636
        %v1682 = vadd.f32 %v1325, %v1639
        %v1683 = vadd.f32 %v1327, %v1641
        %v1684 = vadd.f32 %v1330, %v1644
        %v1685 = vadd.f32 %v1332, %v1646
        %v1686 = vadd.f32 %v1335, %v1649
        %v1687 = vadd.f32 %v1337, %v1651
        %v1688 = vadd.f32 %v1340, %v1654
        %v1689 = vadd.f32 %v1342, %v1656
        %v1690 = vld [vmem:[#allocation2 + $0x10] sm:$0xff]
        %v1691 = vld [vmem:[#allocation2 + $0x18] sm:$0xff]
        %v1692 = vld [vmem:[#allocation2 + $0x20] sm:$0xff]
        %v1693 = vld [vmem:[#allocation2 + $0x28] sm:$0xff]
        %v1694 = vld [vmem:[#allocation2 + $0x30] sm:$0xff]
        %v1695 = vld [vmem:[#allocation2 + $0x38] sm:$0xff]
        %v1696 = vld [vmem:[#allocation2 + $0x40] sm:$0xff]
        %v1697 = vld [vmem:[#allocation2 + $0x48] sm:$0xff]
        %v1698 = vld [vmem:[#allocation2 + $0x50] sm:$0xff]
        %v1699 = vld [vmem:[#allocation2 + $0x58] sm:$0xff]
        %v1700 = vld [vmem:[#allocation2 + $0x60] sm:$0xff]
        %v1701 = vld [vmem:[#allocation2 + $0x68] sm:$0xff]
        %v1702 = vld [vmem:[#allocation2 + $0x70] sm:$0xff]
        %v1703 = vld [vmem:[#allocation2 + $0x78] sm:$0xff]
        %v1704 = vld [vmem:[#allocation2 + $0x80] sm:$0xff]
        %v1705 = vld [vmem:[#allocation2 + $0x88] sm:$0xff]
        %v1706 = vld [vmem:[#allocation2 + $0x90] sm:$0xff]
        %v1707 = vld [vmem:[#allocation2 + $0x98] sm:$0xff]
        %v1708 = vld [vmem:[#allocation2 + $0xa0] sm:$0xff]
        %v1709 = vld [vmem:[#allocation2 + $0xa8] sm:$0xff]
        %v1710 = vld [vmem:[#allocation2 + $0xb0] sm:$0xff]
        %v1711 = vld [vmem:[#allocation2 + $0xb8] sm:$0xff]
        %v1712 = vld [vmem:[#allocation2 + $0xc0] sm:$0xff]
        %v1713 = vld [vmem:[#allocation2 + $0xc8] sm:$0xff]
        %v1714 = vld [vmem:[#allocation2 + $0xd0] sm:$0xff]
        %v1715 = vld [vmem:[#allocation2 + $0xd8] sm:$0xff]
        %v1716 = vld [vmem:[#allocation2 + $0xe0] sm:$0xff]
        %v1717 = vld [vmem:[#allocation2 + $0xe8] sm:$0xff]
        %v1718 = vld [vmem:[#allocation2 + $0xf0] sm:$0xff]
        %v1719 = vld [vmem:[#allocation2 + $0xf8] sm:$0xff]
        %v1720 = vld [vmem:[#allocation2 + $0x100] sm:$0xff]
        %v1721 = vld [vmem:[#allocation2 + $0x108] sm:$0xff]
        %v1722 = vsel %vm877, %v1690, 0.0
        %v1723 = vsel %vm878, %v1691, 0.0
        %v1724 = vsel %vm879, %v1692, 0.0
        %v1725 = vsel %vm880, %v1693, 0.0
        %v1726 = vsel %vm881, %v1694, 0.0
        %v1727 = vsel %vm882, %v1695, 0.0
        %v1728 = vsel %vm883, %v1696, 0.0
        %v1729 = vsel %vm884, %v1697, 0.0
        %v1730 = vsel %vm885, %v1698, 0.0
        %v1731 = vsel %vm886, %v1699, 0.0
        %v1732 = vsel %vm887, %v1700, 0.0
        %v1733 = vsel %vm888, %v1701, 0.0
        %v1734 = vsel %vm889, %v1702, 0.0
        %v1735 = vsel %vm890, %v1703, 0.0
        %v1736 = vsel %vm891, %v1704, 0.0
        %v1737 = vsel %vm892, %v1705, 0.0
        %v1738 = vsel %vm893, %v1706, 0.0
        %v1739 = vsel %vm894, %v1707, 0.0
        %v1740 = vsel %vm895, %v1708, 0.0
        %v1741 = vsel %vm896, %v1709, 0.0
        %v1742 = vsel %vm897, %v1710, 0.0
        %v1743 = vsel %vm898, %v1711, 0.0
        %v1744 = vsel %vm899, %v1712, 0.0
        %v1745 = vsel %vm900, %v1713, 0.0
        %v1746 = vsel %vm901, %v1714, 0.0
        %v1747 = vsel %vm902, %v1715, 0.0
        %v1748 = vsel %vm903, %v1716, 0.0
        %v1749 = vsel %vm904, %v1717, 0.0
        %v1750 = vsel %vm905, %v1718, 0.0
        %v1751 = vsel %vm906, %v1719, 0.0
        %v1752 = vsel %vm907, %v1720, 0.0
        %v1753 = vsel %vm908, %v1721, 0.0
        %v1754 = vpack.c.bf16 %v1723, %v1722
        %v1755 = vpack.c.bf16 %v1725, %v1724
        %v1756 = vpack.c.bf16 %v1727, %v1726
        %v1757 = vpack.c.bf16 %v1729, %v1728
        %v1758 = vpack.c.bf16 %v1731, %v1730
        %v1759 = vpack.c.bf16 %v1733, %v1732
        %v1760 = vpack.c.bf16 %v1735, %v1734
        %v1761 = vpack.c.bf16 %v1737, %v1736
        %v1762 = vpack.c.bf16 %v1739, %v1738
        %v1763 = vpack.c.bf16 %v1741, %v1740
        %v1764 = vpack.c.bf16 %v1743, %v1742
        %v1765 = vpack.c.bf16 %v1745, %v1744
        %v1766 = vpack.c.bf16 %v1747, %v1746
        %v1767 = vpack.c.bf16 %v1749, %v1748
        %v1768 = vpack.c.bf16 %v1751, %v1750
        %v1769 = vpack.c.bf16 %v1753, %v1752
        %s1770 = scalar_lea.vmem %s1, 96
        %v1771 = vld [vmem:[%s1770] sm:$0xf]
        %v1772 = vld [vmem:[%s1770 + $0x4] sm:$0xf]
        %v1773 = vld [vmem:[%s1770 + $0x8] sm:$0xf]
        %v1774 = vld [vmem:[%s1770 + $0xc] sm:$0xf]
        %v1775 = vld [vmem:[%s1770 + $0x10] sm:$0xf]
        %v1776 = vld [vmem:[%s1770 + $0x14] sm:$0xf]
        %v1777 = vld [vmem:[%s1770 + $0x18] sm:$0xf]
        %v1778 = vld [vmem:[%s1770 + $0x1c] sm:$0xf]
        %v1787 = vunpack.c.l.b16 %v1771
        %v1788 = vunpack.c.l.b16 %v1772
        %v1789 = vunpack.c.l.b16 %v1773
        %v1790 = vunpack.c.l.b16 %v1774
        %v1791 = vunpack.c.l.b16 %v1775
        %v1792 = vunpack.c.l.b16 %v1776
        %v1793 = vunpack.c.l.b16 %v1777
        %v1794 = vunpack.c.l.b16 %v1778
        %v1795 = vpack.c.b16 %v1788, %v1787
        %v1796 = vpack.c.b16 %v1790, %v1789
        %v1797 = vpack.c.b16 %v1792, %v1791
        %v1798 = vpack.c.b16 %v1794, %v1793
        %v1804 = vsel %vm229, %v1754, 0
        %v1807 = vsel %vm229, %v1755, 0
        %v1810 = vsel %vm229, %v1756, 0
        %v1813 = vsel %vm229, %v1757, 0
        %v1816 = vsel %vm229, %v1758, 0
        %v1819 = vsel %vm229, %v1759, 0
        %v1822 = vsel %vm229, %v1760, 0
        %v1825 = vsel %vm229, %v1761, 0
        %v1828 = vsel %vm229, %v1762, 0
        %v1831 = vsel %vm229, %v1763, 0
        %v1834 = vsel %vm229, %v1764, 0
        %v1837 = vsel %vm229, %v1765, 0
        %v1840 = vsel %vm229, %v1766, 0
        %v1843 = vsel %vm229, %v1767, 0
        %v1846 = vsel %vm229, %v1768, 0
        %v1849 = vsel %vm229, %v1769, 0
        %1851 = vmatpush.bf16.msra.mxu0 0
        %1852 = vmatpush.bf16.msra.mxu0 0
        %1853 = vmatpush.bf16.msra.mxu0 0
        %1854 = vmatpush.bf16.msra.mxu0 0
        %1855 = vmatpush.bf16.msra.mxu0 %v1798
        %1856 = vmatpush.bf16.msra.mxu0 %v1797
        %1857 = vmatpush.bf16.msra.mxu0 %v1796
        %1858 = vmatpush.bf16.msra.mxu0 %v1795
        %1859 = vmatmul.bf16.gmra.mxu0 %v1804
        %v1860 = vpop.f32.mrf.mxu0
        %v1861 = vadd.f32 0.0, %v1860
        %v1862 = vpop.f32.mrf.mxu0
        %v1863 = vadd.f32 0.0, %v1862
        %1864 = vmatmul.bf16.gmra.mxu0 %v1807
        %v1865 = vpop.f32.mrf.mxu0
        %v1866 = vadd.f32 0.0, %v1865
        %v1867 = vpop.f32.mrf.mxu0
        %v1868 = vadd.f32 0.0, %v1867
        %1869 = vmatmul.bf16.gmra.mxu0 %v1810
        %v1870 = vpop.f32.mrf.mxu0
        %v1871 = vadd.f32 0.0, %v1870
        %v1872 = vpop.f32.mrf.mxu0
        %v1873 = vadd.f32 0.0, %v1872
        %1874 = vmatmul.bf16.gmra.mxu0 %v1813
        %v1875 = vpop.f32.mrf.mxu0
        %v1876 = vadd.f32 0.0, %v1875
        %v1877 = vpop.f32.mrf.mxu0
        %v1878 = vadd.f32 0.0, %v1877
        %1879 = vmatmul.bf16.gmra.mxu0 %v1816
        %v1880 = vpop.f32.mrf.mxu0
        %v1881 = vadd.f32 0.0, %v1880
        %v1882 = vpop.f32.mrf.mxu0
        %v1883 = vadd.f32 0.0, %v1882
        %1884 = vmatmul.bf16.gmra.mxu0 %v1819
        %v1885 = vpop.f32.mrf.mxu0
        %v1886 = vadd.f32 0.0, %v1885
        %v1887 = vpop.f32.mrf.mxu0
        %v1888 = vadd.f32 0.0, %v1887
        %1889 = vmatmul.bf16.gmra.mxu0 %v1822
        %v1890 = vpop.f32.mrf.mxu0
        %v1891 = vadd.f32 0.0, %v1890
        %v1892 = vpop.f32.mrf.mxu0
        %v1893 = vadd.f32 0.0, %v1892
        %1894 = vmatmul.bf16.gmra.mxu0 %v1825
        %v1895 = vpop.f32.mrf.mxu0
        %v1896 = vadd.f32 0.0, %v1895
        %v1897 = vpop.f32.mrf.mxu0
        %v1898 = vadd.f32 0.0, %v1897
        %1899 = vmatmul.bf16.gmra.mxu0 %v1828
        %v1900 = vpop.f32.mrf.mxu0
        %v1901 = vadd.f32 0.0, %v1900
        %v1902 = vpop.f32.mrf.mxu0
        %v1903 = vadd.f32 0.0, %v1902
        %1904 = vmatmul.bf16.gmra.mxu0 %v1831
        %v1905 = vpop.f32.mrf.mxu0
        %v1906 = vadd.f32 0.0, %v1905
        %v1907 = vpop.f32.mrf.mxu0
        %v1908 = vadd.f32 0.0, %v1907
        %1909 = vmatmul.bf16.gmra.mxu0 %v1834
        %v1910 = vpop.f32.mrf.mxu0
        %v1911 = vadd.f32 0.0, %v1910
        %v1912 = vpop.f32.mrf.mxu0
        %v1913 = vadd.f32 0.0, %v1912
        %1914 = vmatmul.bf16.gmra.mxu0 %v1837
        %v1915 = vpop.f32.mrf.mxu0
        %v1916 = vadd.f32 0.0, %v1915
        %v1917 = vpop.f32.mrf.mxu0
        %v1918 = vadd.f32 0.0, %v1917
        %1919 = vmatmul.bf16.gmra.mxu0 %v1840
        %v1920 = vpop.f32.mrf.mxu0
        %v1921 = vadd.f32 0.0, %v1920
        %v1922 = vpop.f32.mrf.mxu0
        %v1923 = vadd.f32 0.0, %v1922
        %1924 = vmatmul.bf16.gmra.mxu0 %v1843
        %v1925 = vpop.f32.mrf.mxu0
        %v1926 = vadd.f32 0.0, %v1925
        %v1927 = vpop.f32.mrf.mxu0
        %v1928 = vadd.f32 0.0, %v1927
        %1929 = vmatmul.bf16.gmra.mxu0 %v1846
        %v1930 = vpop.f32.mrf.mxu0
        %v1931 = vadd.f32 0.0, %v1930
        %v1932 = vpop.f32.mrf.mxu0
        %v1933 = vadd.f32 0.0, %v1932
        %1934 = vmatmul.bf16.gmra.mxu0 %v1849
        %v1935 = vpop.f32.mrf.mxu0
        %v1936 = vadd.f32 0.0, %v1935
        %v1937 = vpop.f32.mrf.mxu0
        %v1938 = vadd.f32 0.0, %v1937
        %1939 = vdwg.mxu0
        %v1940 = vadd.f32 %v1658, %v1861
        %v1941 = vadd.f32 %v1659, %v1863
        %v1942 = vadd.f32 %v1660, %v1866
        %v1943 = vadd.f32 %v1661, %v1868
        %v1944 = vadd.f32 %v1662, %v1871
        %v1945 = vadd.f32 %v1663, %v1873
        %v1946 = vadd.f32 %v1664, %v1876
        %v1947 = vadd.f32 %v1665, %v1878
        %v1948 = vadd.f32 %v1666, %v1881
        %v1949 = vadd.f32 %v1667, %v1883
        %v1950 = vadd.f32 %v1668, %v1886
        %v1951 = vadd.f32 %v1669, %v1888
        %v1952 = vadd.f32 %v1670, %v1891
        %v1953 = vadd.f32 %v1671, %v1893
        %v1954 = vadd.f32 %v1672, %v1896
        %v1955 = vadd.f32 %v1673, %v1898
        %v1956 = vadd.f32 %v1674, %v1901
        %v1957 = vadd.f32 %v1675, %v1903
        %v1958 = vadd.f32 %v1676, %v1906
        %v1959 = vadd.f32 %v1677, %v1908
        %v1960 = vadd.f32 %v1678, %v1911
        %v1961 = vadd.f32 %v1679, %v1913
        %v1962 = vadd.f32 %v1680, %v1916
        %v1963 = vadd.f32 %v1681, %v1918
        %v1964 = vadd.f32 %v1682, %v1921
        %v1965 = vadd.f32 %v1683, %v1923
        %v1966 = vadd.f32 %v1684, %v1926
        %v1967 = vadd.f32 %v1685, %v1928
        %v1968 = vadd.f32 %v1686, %v1931
        %v1969 = vadd.f32 %v1687, %v1933
        %v1970 = vadd.f32 %v1688, %v1936
        %v1971 = vadd.f32 %v1689, %v1938
        %v1972 = vld [vmem:[#allocation2 + $0x11] sm:$0xff]
        %v1973 = vld [vmem:[#allocation2 + $0x19] sm:$0xff]
        %v1974 = vld [vmem:[#allocation2 + $0x21] sm:$0xff]
        %v1975 = vld [vmem:[#allocation2 + $0x29] sm:$0xff]
        %v1976 = vld [vmem:[#allocation2 + $0x31] sm:$0xff]
        %v1977 = vld [vmem:[#allocation2 + $0x39] sm:$0xff]
        %v1978 = vld [vmem:[#allocation2 + $0x41] sm:$0xff]
        %v1979 = vld [vmem:[#allocation2 + $0x49] sm:$0xff]
        %v1980 = vld [vmem:[#allocation2 + $0x51] sm:$0xff]
        %v1981 = vld [vmem:[#allocation2 + $0x59] sm:$0xff]
        %v1982 = vld [vmem:[#allocation2 + $0x61] sm:$0xff]
        %v1983 = vld [vmem:[#allocation2 + $0x69] sm:$0xff]
        %v1984 = vld [vmem:[#allocation2 + $0x71] sm:$0xff]
        %v1985 = vld [vmem:[#allocation2 + $0x79] sm:$0xff]
        %v1986 = vld [vmem:[#allocation2 + $0x81] sm:$0xff]
        %v1987 = vld [vmem:[#allocation2 + $0x89] sm:$0xff]
        %v1988 = vld [vmem:[#allocation2 + $0x91] sm:$0xff]
        %v1989 = vld [vmem:[#allocation2 + $0x99] sm:$0xff]
        %v1990 = vld [vmem:[#allocation2 + $0xa1] sm:$0xff]
        %v1991 = vld [vmem:[#allocation2 + $0xa9] sm:$0xff]
        %v1992 = vld [vmem:[#allocation2 + $0xb1] sm:$0xff]
        %v1993 = vld [vmem:[#allocation2 + $0xb9] sm:$0xff]
        %v1994 = vld [vmem:[#allocation2 + $0xc1] sm:$0xff]
        %v1995 = vld [vmem:[#allocation2 + $0xc9] sm:$0xff]
        %v1996 = vld [vmem:[#allocation2 + $0xd1] sm:$0xff]
        %v1997 = vld [vmem:[#allocation2 + $0xd9] sm:$0xff]
        %v1998 = vld [vmem:[#allocation2 + $0xe1] sm:$0xff]
        %v1999 = vld [vmem:[#allocation2 + $0xe9] sm:$0xff]
        %v2000 = vld [vmem:[#allocation2 + $0xf1] sm:$0xff]
        %v2001 = vld [vmem:[#allocation2 + $0xf9] sm:$0xff]
        %v2002 = vld [vmem:[#allocation2 + $0x101] sm:$0xff]
        %v2003 = vld [vmem:[#allocation2 + $0x109] sm:$0xff]
        %v2004 = vpack.c.bf16 %v1973, %v1972
        %v2005 = vpack.c.bf16 %v1975, %v1974
        %v2006 = vpack.c.bf16 %v1977, %v1976
        %v2007 = vpack.c.bf16 %v1979, %v1978
        %v2008 = vpack.c.bf16 %v1981, %v1980
        %v2009 = vpack.c.bf16 %v1983, %v1982
        %v2010 = vpack.c.bf16 %v1985, %v1984
        %v2011 = vpack.c.bf16 %v1987, %v1986
        %v2012 = vpack.c.bf16 %v1989, %v1988
        %v2013 = vpack.c.bf16 %v1991, %v1990
        %v2014 = vpack.c.bf16 %v1993, %v1992
        %v2015 = vpack.c.bf16 %v1995, %v1994
        %v2016 = vpack.c.bf16 %v1997, %v1996
        %v2017 = vpack.c.bf16 %v1999, %v1998
        %v2018 = vpack.c.bf16 %v2001, %v2000
        %v2019 = vpack.c.bf16 %v2003, %v2002
        %s2020 = scalar_lea.vmem %s1, 128
        %v2021 = vld [vmem:[%s2020] sm:$0xf]
        %v2022 = vld [vmem:[%s2020 + $0x4] sm:$0xf]
        %v2023 = vld [vmem:[%s2020 + $0x8] sm:$0xf]
        %v2024 = vld [vmem:[%s2020 + $0xc] sm:$0xf]
        %v2025 = vld [vmem:[%s2020 + $0x10] sm:$0xf]
        %v2026 = vld [vmem:[%s2020 + $0x14] sm:$0xf]
        %v2027 = vld [vmem:[%s2020 + $0x18] sm:$0xf]
        %v2028 = vld [vmem:[%s2020 + $0x1c] sm:$0xf]
        %v2037 = vunpack.c.l.b16 %v2021
        %v2038 = vunpack.c.l.b16 %v2022
        %v2039 = vunpack.c.l.b16 %v2023
        %v2040 = vunpack.c.l.b16 %v2024
        %v2041 = vunpack.c.l.b16 %v2025
        %v2042 = vunpack.c.l.b16 %v2026
        %v2043 = vunpack.c.l.b16 %v2027
        %v2044 = vunpack.c.l.b16 %v2028
        %v2045 = vpack.c.b16 %v2038, %v2037
        %v2046 = vpack.c.b16 %v2040, %v2039
        %v2047 = vpack.c.b16 %v2042, %v2041
        %v2048 = vpack.c.b16 %v2044, %v2043
        %v2054 = vsel %vm229, %v2004, 0
        %v2057 = vsel %vm229, %v2005, 0
        %v2060 = vsel %vm229, %v2006, 0
        %v2063 = vsel %vm229, %v2007, 0
        %v2066 = vsel %vm229, %v2008, 0
        %v2069 = vsel %vm229, %v2009, 0
        %v2072 = vsel %vm229, %v2010, 0
        %v2075 = vsel %vm229, %v2011, 0
        %v2078 = vsel %vm229, %v2012, 0
        %v2081 = vsel %vm229, %v2013, 0
        %v2084 = vsel %vm229, %v2014, 0
        %v2087 = vsel %vm229, %v2015, 0
        %v2090 = vsel %vm229, %v2016, 0
        %v2093 = vsel %vm229, %v2017, 0
        %v2096 = vsel %vm229, %v2018, 0
        %v2099 = vsel %vm229, %v2019, 0
        %2101 = vmatpush.bf16.msra.mxu0 0
        %2102 = vmatpush.bf16.msra.mxu0 0
        %2103 = vmatpush.bf16.msra.mxu0 0
        %2104 = vmatpush.bf16.msra.mxu0 0
        %2105 = vmatpush.bf16.msra.mxu0 %v2048
        %2106 = vmatpush.bf16.msra.mxu0 %v2047
        %2107 = vmatpush.bf16.msra.mxu0 %v2046
        %2108 = vmatpush.bf16.msra.mxu0 %v2045
        %2109 = vmatmul.bf16.gmra.mxu0 %v2054
        %v2110 = vpop.f32.mrf.mxu0
        %v2111 = vadd.f32 0.0, %v2110
        %v2112 = vpop.f32.mrf.mxu0
        %v2113 = vadd.f32 0.0, %v2112
        %2114 = vmatmul.bf16.gmra.mxu0 %v2057
        %v2115 = vpop.f32.mrf.mxu0
        %v2116 = vadd.f32 0.0, %v2115
        %v2117 = vpop.f32.mrf.mxu0
        %v2118 = vadd.f32 0.0, %v2117
        %2119 = vmatmul.bf16.gmra.mxu0 %v2060
        %v2120 = vpop.f32.mrf.mxu0
        %v2121 = vadd.f32 0.0, %v2120
        %v2122 = vpop.f32.mrf.mxu0
        %v2123 = vadd.f32 0.0, %v2122
        %2124 = vmatmul.bf16.gmra.mxu0 %v2063
        %v2125 = vpop.f32.mrf.mxu0
        %v2126 = vadd.f32 0.0, %v2125
        %v2127 = vpop.f32.mrf.mxu0
        %v2128 = vadd.f32 0.0, %v2127
        %2129 = vmatmul.bf16.gmra.mxu0 %v2066
        %v2130 = vpop.f32.mrf.mxu0
        %v2131 = vadd.f32 0.0, %v2130
        %v2132 = vpop.f32.mrf.mxu0
        %v2133 = vadd.f32 0.0, %v2132
        %2134 = vmatmul.bf16.gmra.mxu0 %v2069
        %v2135 = vpop.f32.mrf.mxu0
        %v2136 = vadd.f32 0.0, %v2135
        %v2137 = vpop.f32.mrf.mxu0
        %v2138 = vadd.f32 0.0, %v2137
        %2139 = vmatmul.bf16.gmra.mxu0 %v2072
        %v2140 = vpop.f32.mrf.mxu0
        %v2141 = vadd.f32 0.0, %v2140
        %v2142 = vpop.f32.mrf.mxu0
        %v2143 = vadd.f32 0.0, %v2142
        %2144 = vmatmul.bf16.gmra.mxu0 %v2075
        %v2145 = vpop.f32.mrf.mxu0
        %v2146 = vadd.f32 0.0, %v2145
        %v2147 = vpop.f32.mrf.mxu0
        %v2148 = vadd.f32 0.0, %v2147
        %2149 = vmatmul.bf16.gmra.mxu0 %v2078
        %v2150 = vpop.f32.mrf.mxu0
        %v2151 = vadd.f32 0.0, %v2150
        %v2152 = vpop.f32.mrf.mxu0
        %v2153 = vadd.f32 0.0, %v2152
        %2154 = vmatmul.bf16.gmra.mxu0 %v2081
        %v2155 = vpop.f32.mrf.mxu0
        %v2156 = vadd.f32 0.0, %v2155
        %v2157 = vpop.f32.mrf.mxu0
        %v2158 = vadd.f32 0.0, %v2157
        %2159 = vmatmul.bf16.gmra.mxu0 %v2084
        %v2160 = vpop.f32.mrf.mxu0
        %v2161 = vadd.f32 0.0, %v2160
        %v2162 = vpop.f32.mrf.mxu0
        %v2163 = vadd.f32 0.0, %v2162
        %2164 = vmatmul.bf16.gmra.mxu0 %v2087
        %v2165 = vpop.f32.mrf.mxu0
        %v2166 = vadd.f32 0.0, %v2165
        %v2167 = vpop.f32.mrf.mxu0
        %v2168 = vadd.f32 0.0, %v2167
        %2169 = vmatmul.bf16.gmra.mxu0 %v2090
        %v2170 = vpop.f32.mrf.mxu0
        %v2171 = vadd.f32 0.0, %v2170
        %v2172 = vpop.f32.mrf.mxu0
        %v2173 = vadd.f32 0.0, %v2172
        %2174 = vmatmul.bf16.gmra.mxu0 %v2093
        %v2175 = vpop.f32.mrf.mxu0
        %v2176 = vadd.f32 0.0, %v2175
        %v2177 = vpop.f32.mrf.mxu0
        %v2178 = vadd.f32 0.0, %v2177
        %2179 = vmatmul.bf16.gmra.mxu0 %v2096
        %v2180 = vpop.f32.mrf.mxu0
        %v2181 = vadd.f32 0.0, %v2180
        %v2182 = vpop.f32.mrf.mxu0
        %v2183 = vadd.f32 0.0, %v2182
        %2184 = vmatmul.bf16.gmra.mxu0 %v2099
        %v2185 = vpop.f32.mrf.mxu0
        %v2186 = vadd.f32 0.0, %v2185
        %v2187 = vpop.f32.mrf.mxu0
        %v2188 = vadd.f32 0.0, %v2187
        %2189 = vdwg.mxu0
        %v2190 = vadd.f32 %v1940, %v2111
        %v2191 = vadd.f32 %v1941, %v2113
        %v2192 = vadd.f32 %v1942, %v2116
        %v2193 = vadd.f32 %v1943, %v2118
        %v2194 = vadd.f32 %v1944, %v2121
        %v2195 = vadd.f32 %v1945, %v2123
        %v2196 = vadd.f32 %v1946, %v2126
        %v2197 = vadd.f32 %v1947, %v2128
        %v2198 = vadd.f32 %v1948, %v2131
        %v2199 = vadd.f32 %v1949, %v2133
        %v2200 = vadd.f32 %v1950, %v2136
        %v2201 = vadd.f32 %v1951, %v2138
        %v2202 = vadd.f32 %v1952, %v2141
        %v2203 = vadd.f32 %v1953, %v2143
        %v2204 = vadd.f32 %v1954, %v2146
        %v2205 = vadd.f32 %v1955, %v2148
        %v2206 = vadd.f32 %v1956, %v2151
        %v2207 = vadd.f32 %v1957, %v2153
        %v2208 = vadd.f32 %v1958, %v2156
        %v2209 = vadd.f32 %v1959, %v2158
        %v2210 = vadd.f32 %v1960, %v2161
        %v2211 = vadd.f32 %v1961, %v2163
        %v2212 = vadd.f32 %v1962, %v2166
        %v2213 = vadd.f32 %v1963, %v2168
        %v2214 = vadd.f32 %v1964, %v2171
        %v2215 = vadd.f32 %v1965, %v2173
        %v2216 = vadd.f32 %v1966, %v2176
        %v2217 = vadd.f32 %v1967, %v2178
        %v2218 = vadd.f32 %v1968, %v2181
        %v2219 = vadd.f32 %v1969, %v2183
        %v2220 = vadd.f32 %v1970, %v2186
        %v2221 = vadd.f32 %v1971, %v2188
        %v2222 = vld [vmem:[#allocation2 + $0x12] sm:$0xff]
        %v2223 = vld [vmem:[#allocation2 + $0x1a] sm:$0xff]
        %v2224 = vld [vmem:[#allocation2 + $0x22] sm:$0xff]
        %v2225 = vld [vmem:[#allocation2 + $0x2a] sm:$0xff]
        %v2226 = vld [vmem:[#allocation2 + $0x32] sm:$0xff]
        %v2227 = vld [vmem:[#allocation2 + $0x3a] sm:$0xff]
        %v2228 = vld [vmem:[#allocation2 + $0x42] sm:$0xff]
        %v2229 = vld [vmem:[#allocation2 + $0x4a] sm:$0xff]
        %v2230 = vld [vmem:[#allocation2 + $0x52] sm:$0xff]
        %v2231 = vld [vmem:[#allocation2 + $0x5a] sm:$0xff]
        %v2232 = vld [vmem:[#allocation2 + $0x62] sm:$0xff]
        %v2233 = vld [vmem:[#allocation2 + $0x6a] sm:$0xff]
        %v2234 = vld [vmem:[#allocation2 + $0x72] sm:$0xff]
        %v2235 = vld [vmem:[#allocation2 + $0x7a] sm:$0xff]
        %v2236 = vld [vmem:[#allocation2 + $0x82] sm:$0xff]
        %v2237 = vld [vmem:[#allocation2 + $0x8a] sm:$0xff]
        %v2238 = vld [vmem:[#allocation2 + $0x92] sm:$0xff]
        %v2239 = vld [vmem:[#allocation2 + $0x9a] sm:$0xff]
        %v2240 = vld [vmem:[#allocation2 + $0xa2] sm:$0xff]
        %v2241 = vld [vmem:[#allocation2 + $0xaa] sm:$0xff]
        %v2242 = vld [vmem:[#allocation2 + $0xb2] sm:$0xff]
        %v2243 = vld [vmem:[#allocation2 + $0xba] sm:$0xff]
        %v2244 = vld [vmem:[#allocation2 + $0xc2] sm:$0xff]
        %v2245 = vld [vmem:[#allocation2 + $0xca] sm:$0xff]
        %v2246 = vld [vmem:[#allocation2 + $0xd2] sm:$0xff]
        %v2247 = vld [vmem:[#allocation2 + $0xda] sm:$0xff]
        %v2248 = vld [vmem:[#allocation2 + $0xe2] sm:$0xff]
        %v2249 = vld [vmem:[#allocation2 + $0xea] sm:$0xff]
        %v2250 = vld [vmem:[#allocation2 + $0xf2] sm:$0xff]
        %v2251 = vld [vmem:[#allocation2 + $0xfa] sm:$0xff]
        %v2252 = vld [vmem:[#allocation2 + $0x102] sm:$0xff]
        %v2253 = vld [vmem:[#allocation2 + $0x10a] sm:$0xff]
        %v2254 = vsel %vm1408, %v2222, 0.0
        %v2255 = vsel %vm1409, %v2223, 0.0
        %v2256 = vsel %vm1410, %v2224, 0.0
        %v2257 = vsel %vm1411, %v2225, 0.0
        %v2258 = vsel %vm1412, %v2226, 0.0
        %v2259 = vsel %vm1413, %v2227, 0.0
        %v2260 = vsel %vm1414, %v2228, 0.0
        %v2261 = vsel %vm1415, %v2229, 0.0
        %v2262 = vsel %vm1416, %v2230, 0.0
        %v2263 = vsel %vm1417, %v2231, 0.0
        %v2264 = vsel %vm1418, %v2232, 0.0
        %v2265 = vsel %vm1419, %v2233, 0.0
        %v2266 = vsel %vm1420, %v2234, 0.0
        %v2267 = vsel %vm1421, %v2235, 0.0
        %v2268 = vsel %vm1422, %v2236, 0.0
        %v2269 = vsel %vm1423, %v2237, 0.0
        %v2270 = vsel %vm1424, %v2238, 0.0
        %v2271 = vsel %vm1425, %v2239, 0.0
        %v2272 = vsel %vm1426, %v2240, 0.0
        %v2273 = vsel %vm1427, %v2241, 0.0
        %v2274 = vsel %vm1428, %v2242, 0.0
        %v2275 = vsel %vm1429, %v2243, 0.0
        %v2276 = vsel %vm1430, %v2244, 0.0
        %v2277 = vsel %vm1431, %v2245, 0.0
        %v2278 = vsel %vm1432, %v2246, 0.0
        %v2279 = vsel %vm1433, %v2247, 0.0
        %v2280 = vsel %vm1434, %v2248, 0.0
        %v2281 = vsel %vm1435, %v2249, 0.0
        %v2282 = vsel %vm1436, %v2250, 0.0
        %v2283 = vsel %vm1437, %v2251, 0.0
        %v2284 = vsel %vm1438, %v2252, 0.0
        %v2285 = vsel %vm1439, %v2253, 0.0
        %v2286 = vpack.c.bf16 %v2255, %v2254
        %v2287 = vpack.c.bf16 %v2257, %v2256
        %v2288 = vpack.c.bf16 %v2259, %v2258
        %v2289 = vpack.c.bf16 %v2261, %v2260
        %v2290 = vpack.c.bf16 %v2263, %v2262
        %v2291 = vpack.c.bf16 %v2265, %v2264
        %v2292 = vpack.c.bf16 %v2267, %v2266
        %v2293 = vpack.c.bf16 %v2269, %v2268
        %v2294 = vpack.c.bf16 %v2271, %v2270
        %v2295 = vpack.c.bf16 %v2273, %v2272
        %v2296 = vpack.c.bf16 %v2275, %v2274
        %v2297 = vpack.c.bf16 %v2277, %v2276
        %v2298 = vpack.c.bf16 %v2279, %v2278
        %v2299 = vpack.c.bf16 %v2281, %v2280
        %v2300 = vpack.c.bf16 %v2283, %v2282
        %v2301 = vpack.c.bf16 %v2285, %v2284
        %s2302 = scalar_lea.vmem %s1, 160
        %v2303 = vld [vmem:[%s2302] sm:$0xf]
        %v2304 = vld [vmem:[%s2302 + $0x4] sm:$0xf]
        %v2305 = vld [vmem:[%s2302 + $0x8] sm:$0xf]
        %v2306 = vld [vmem:[%s2302 + $0xc] sm:$0xf]
        %v2307 = vld [vmem:[%s2302 + $0x10] sm:$0xf]
        %v2308 = vld [vmem:[%s2302 + $0x14] sm:$0xf]
        %v2309 = vld [vmem:[%s2302 + $0x18] sm:$0xf]
        %v2310 = vld [vmem:[%s2302 + $0x1c] sm:$0xf]
        %v2319 = vunpack.c.l.b16 %v2303
        %v2320 = vunpack.c.l.b16 %v2304
        %v2321 = vunpack.c.l.b16 %v2305
        %v2322 = vunpack.c.l.b16 %v2306
        %v2323 = vunpack.c.l.b16 %v2307
        %v2324 = vunpack.c.l.b16 %v2308
        %v2325 = vunpack.c.l.b16 %v2309
        %v2326 = vunpack.c.l.b16 %v2310
        %v2327 = vpack.c.b16 %v2320, %v2319
        %v2328 = vpack.c.b16 %v2322, %v2321
        %v2329 = vpack.c.b16 %v2324, %v2323
        %v2330 = vpack.c.b16 %v2326, %v2325
        %v2336 = vsel %vm229, %v2286, 0
        %v2339 = vsel %vm229, %v2287, 0
        %v2342 = vsel %vm229, %v2288, 0
        %v2345 = vsel %vm229, %v2289, 0
        %v2348 = vsel %vm229, %v2290, 0
        %v2351 = vsel %vm229, %v2291, 0
        %v2354 = vsel %vm229, %v2292, 0
        %v2357 = vsel %vm229, %v2293, 0
        %v2360 = vsel %vm229, %v2294, 0
        %v2363 = vsel %vm229, %v2295, 0
        %v2366 = vsel %vm229, %v2296, 0
        %v2369 = vsel %vm229, %v2297, 0
        %v2372 = vsel %vm229, %v2298, 0
        %v2375 = vsel %vm229, %v2299, 0
        %v2378 = vsel %vm229, %v2300, 0
        %v2381 = vsel %vm229, %v2301, 0
        %2383 = vmatpush.bf16.msra.mxu0 0
        %2384 = vmatpush.bf16.msra.mxu0 0
        %2385 = vmatpush.bf16.msra.mxu0 0
        %2386 = vmatpush.bf16.msra.mxu0 0
        %2387 = vmatpush.bf16.msra.mxu0 %v2330
        %2388 = vmatpush.bf16.msra.mxu0 %v2329
        %2389 = vmatpush.bf16.msra.mxu0 %v2328
        %2390 = vmatpush.bf16.msra.mxu0 %v2327
        %2391 = vmatmul.bf16.gmra.mxu0 %v2336
        %v2392 = vpop.f32.mrf.mxu0
        %v2393 = vadd.f32 0.0, %v2392
        %v2394 = vpop.f32.mrf.mxu0
        %v2395 = vadd.f32 0.0, %v2394
        %2396 = vmatmul.bf16.gmra.mxu0 %v2339
        %v2397 = vpop.f32.mrf.mxu0
        %v2398 = vadd.f32 0.0, %v2397
        %v2399 = vpop.f32.mrf.mxu0
        %v2400 = vadd.f32 0.0, %v2399
        %2401 = vmatmul.bf16.gmra.mxu0 %v2342
        %v2402 = vpop.f32.mrf.mxu0
        %v2403 = vadd.f32 0.0, %v2402
        %v2404 = vpop.f32.mrf.mxu0
        %v2405 = vadd.f32 0.0, %v2404
        %2406 = vmatmul.bf16.gmra.mxu0 %v2345
        %v2407 = vpop.f32.mrf.mxu0
        %v2408 = vadd.f32 0.0, %v2407
        %v2409 = vpop.f32.mrf.mxu0
        %v2410 = vadd.f32 0.0, %v2409
        %2411 = vmatmul.bf16.gmra.mxu0 %v2348
        %v2412 = vpop.f32.mrf.mxu0
        %v2413 = vadd.f32 0.0, %v2412
        %v2414 = vpop.f32.mrf.mxu0
        %v2415 = vadd.f32 0.0, %v2414
        %2416 = vmatmul.bf16.gmra.mxu0 %v2351
        %v2417 = vpop.f32.mrf.mxu0
        %v2418 = vadd.f32 0.0, %v2417
        %v2419 = vpop.f32.mrf.mxu0
        %v2420 = vadd.f32 0.0, %v2419
        %2421 = vmatmul.bf16.gmra.mxu0 %v2354
        %v2422 = vpop.f32.mrf.mxu0
        %v2423 = vadd.f32 0.0, %v2422
        %v2424 = vpop.f32.mrf.mxu0
        %v2425 = vadd.f32 0.0, %v2424
        %2426 = vmatmul.bf16.gmra.mxu0 %v2357
        %v2427 = vpop.f32.mrf.mxu0
        %v2428 = vadd.f32 0.0, %v2427
        %v2429 = vpop.f32.mrf.mxu0
        %v2430 = vadd.f32 0.0, %v2429
        %2431 = vmatmul.bf16.gmra.mxu0 %v2360
        %v2432 = vpop.f32.mrf.mxu0
        %v2433 = vadd.f32 0.0, %v2432
        %v2434 = vpop.f32.mrf.mxu0
        %v2435 = vadd.f32 0.0, %v2434
        %2436 = vmatmul.bf16.gmra.mxu0 %v2363
        %v2437 = vpop.f32.mrf.mxu0
        %v2438 = vadd.f32 0.0, %v2437
        %v2439 = vpop.f32.mrf.mxu0
        %v2440 = vadd.f32 0.0, %v2439
        %2441 = vmatmul.bf16.gmra.mxu0 %v2366
        %v2442 = vpop.f32.mrf.mxu0
        %v2443 = vadd.f32 0.0, %v2442
        %v2444 = vpop.f32.mrf.mxu0
        %v2445 = vadd.f32 0.0, %v2444
        %2446 = vmatmul.bf16.gmra.mxu0 %v2369
        %v2447 = vpop.f32.mrf.mxu0
        %v2448 = vadd.f32 0.0, %v2447
        %v2449 = vpop.f32.mrf.mxu0
        %v2450 = vadd.f32 0.0, %v2449
        %2451 = vmatmul.bf16.gmra.mxu0 %v2372
        %v2452 = vpop.f32.mrf.mxu0
        %v2453 = vadd.f32 0.0, %v2452
        %v2454 = vpop.f32.mrf.mxu0
        %v2455 = vadd.f32 0.0, %v2454
        %2456 = vmatmul.bf16.gmra.mxu0 %v2375
        %v2457 = vpop.f32.mrf.mxu0
        %v2458 = vadd.f32 0.0, %v2457
        %v2459 = vpop.f32.mrf.mxu0
        %v2460 = vadd.f32 0.0, %v2459
        %2461 = vmatmul.bf16.gmra.mxu0 %v2378
        %v2462 = vpop.f32.mrf.mxu0
        %v2463 = vadd.f32 0.0, %v2462
        %v2464 = vpop.f32.mrf.mxu0
        %v2465 = vadd.f32 0.0, %v2464
        %2466 = vmatmul.bf16.gmra.mxu0 %v2381
        %v2467 = vpop.f32.mrf.mxu0
        %v2468 = vadd.f32 0.0, %v2467
        %v2469 = vpop.f32.mrf.mxu0
        %v2470 = vadd.f32 0.0, %v2469
        %2471 = vdwg.mxu0
        %v2472 = vadd.f32 %v2190, %v2393
        %v2473 = vadd.f32 %v2191, %v2395
        %v2474 = vadd.f32 %v2192, %v2398
        %v2475 = vadd.f32 %v2193, %v2400
        %v2476 = vadd.f32 %v2194, %v2403
        %v2477 = vadd.f32 %v2195, %v2405
        %v2478 = vadd.f32 %v2196, %v2408
        %v2479 = vadd.f32 %v2197, %v2410
        %v2480 = vadd.f32 %v2198, %v2413
        %v2481 = vadd.f32 %v2199, %v2415
        %v2482 = vadd.f32 %v2200, %v2418
        %v2483 = vadd.f32 %v2201, %v2420
        %v2484 = vadd.f32 %v2202, %v2423
        %v2485 = vadd.f32 %v2203, %v2425
        %v2486 = vadd.f32 %v2204, %v2428
        %v2487 = vadd.f32 %v2205, %v2430
        %v2488 = vadd.f32 %v2206, %v2433
        %v2489 = vadd.f32 %v2207, %v2435
        %v2490 = vadd.f32 %v2208, %v2438
        %v2491 = vadd.f32 %v2209, %v2440
        %v2492 = vadd.f32 %v2210, %v2443
        %v2493 = vadd.f32 %v2211, %v2445
        %v2494 = vadd.f32 %v2212, %v2448
        %v2495 = vadd.f32 %v2213, %v2450
        %v2496 = vadd.f32 %v2214, %v2453
        %v2497 = vadd.f32 %v2215, %v2455
        %v2498 = vadd.f32 %v2216, %v2458
        %v2499 = vadd.f32 %v2217, %v2460
        %v2500 = vadd.f32 %v2218, %v2463
        %v2501 = vadd.f32 %v2219, %v2465
        %v2502 = vadd.f32 %v2220, %v2468
        %v2503 = vadd.f32 %v2221, %v2470
        %v2504 = vld [vmem:[#allocation2 + $0x20] sm:$0xff]
        %v2505 = vld [vmem:[#allocation2 + $0x28] sm:$0xff]
        %v2506 = vld [vmem:[#allocation2 + $0x30] sm:$0xff]
        %v2507 = vld [vmem:[#allocation2 + $0x38] sm:$0xff]
        %v2508 = vld [vmem:[#allocation2 + $0x40] sm:$0xff]
        %v2509 = vld [vmem:[#allocation2 + $0x48] sm:$0xff]
        %v2510 = vld [vmem:[#allocation2 + $0x50] sm:$0xff]
        %v2511 = vld [vmem:[#allocation2 + $0x58] sm:$0xff]
        %v2512 = vld [vmem:[#allocation2 + $0x60] sm:$0xff]
        %v2513 = vld [vmem:[#allocation2 + $0x68] sm:$0xff]
        %v2514 = vld [vmem:[#allocation2 + $0x70] sm:$0xff]
        %v2515 = vld [vmem:[#allocation2 + $0x78] sm:$0xff]
        %v2516 = vld [vmem:[#allocation2 + $0x80] sm:$0xff]
        %v2517 = vld [vmem:[#allocation2 + $0x88] sm:$0xff]
        %v2518 = vld [vmem:[#allocation2 + $0x90] sm:$0xff]
        %v2519 = vld [vmem:[#allocation2 + $0x98] sm:$0xff]
        %v2520 = vld [vmem:[#allocation2 + $0xa0] sm:$0xff]
        %v2521 = vld [vmem:[#allocation2 + $0xa8] sm:$0xff]
        %v2522 = vld [vmem:[#allocation2 + $0xb0] sm:$0xff]
        %v2523 = vld [vmem:[#allocation2 + $0xb8] sm:$0xff]
        %v2524 = vld [vmem:[#allocation2 + $0xc0] sm:$0xff]
        %v2525 = vld [vmem:[#allocation2 + $0xc8] sm:$0xff]
        %v2526 = vld [vmem:[#allocation2 + $0xd0] sm:$0xff]
        %v2527 = vld [vmem:[#allocation2 + $0xd8] sm:$0xff]
        %v2528 = vld [vmem:[#allocation2 + $0xe0] sm:$0xff]
        %v2529 = vld [vmem:[#allocation2 + $0xe8] sm:$0xff]
        %v2530 = vld [vmem:[#allocation2 + $0xf0] sm:$0xff]
        %v2531 = vld [vmem:[#allocation2 + $0xf8] sm:$0xff]
        %v2532 = vld [vmem:[#allocation2 + $0x100] sm:$0xff]
        %v2533 = vld [vmem:[#allocation2 + $0x108] sm:$0xff]
        %v2534 = vld [vmem:[#allocation2 + $0x110] sm:$0xff]
        %v2535 = vld [vmem:[#allocation2 + $0x118] sm:$0xff]
        %v2536 = vsel %vm877, %v2504, 0.0
        %v2537 = vsel %vm878, %v2505, 0.0
        %v2538 = vsel %vm879, %v2506, 0.0
        %v2539 = vsel %vm880, %v2507, 0.0
        %v2540 = vsel %vm881, %v2508, 0.0
        %v2541 = vsel %vm882, %v2509, 0.0
        %v2542 = vsel %vm883, %v2510, 0.0
        %v2543 = vsel %vm884, %v2511, 0.0
        %v2544 = vsel %vm885, %v2512, 0.0
        %v2545 = vsel %vm886, %v2513, 0.0
        %v2546 = vsel %vm887, %v2514, 0.0
        %v2547 = vsel %vm888, %v2515, 0.0
        %v2548 = vsel %vm889, %v2516, 0.0
        %v2549 = vsel %vm890, %v2517, 0.0
        %v2550 = vsel %vm891, %v2518, 0.0
        %v2551 = vsel %vm892, %v2519, 0.0
        %v2552 = vsel %vm893, %v2520, 0.0
        %v2553 = vsel %vm894, %v2521, 0.0
        %v2554 = vsel %vm895, %v2522, 0.0
        %v2555 = vsel %vm896, %v2523, 0.0
        %v2556 = vsel %vm897, %v2524, 0.0
        %v2557 = vsel %vm898, %v2525, 0.0
        %v2558 = vsel %vm899, %v2526, 0.0
        %v2559 = vsel %vm900, %v2527, 0.0
        %v2560 = vsel %vm901, %v2528, 0.0
        %v2561 = vsel %vm902, %v2529, 0.0
        %v2562 = vsel %vm903, %v2530, 0.0
        %v2563 = vsel %vm904, %v2531, 0.0
        %v2564 = vsel %vm905, %v2532, 0.0
        %v2565 = vsel %vm906, %v2533, 0.0
        %v2566 = vsel %vm907, %v2534, 0.0
        %v2567 = vsel %vm908, %v2535, 0.0
        %v2568 = vpack.c.bf16 %v2537, %v2536
        %v2569 = vpack.c.bf16 %v2539, %v2538
        %v2570 = vpack.c.bf16 %v2541, %v2540
        %v2571 = vpack.c.bf16 %v2543, %v2542
        %v2572 = vpack.c.bf16 %v2545, %v2544
        %v2573 = vpack.c.bf16 %v2547, %v2546
        %v2574 = vpack.c.bf16 %v2549, %v2548
        %v2575 = vpack.c.bf16 %v2551, %v2550
        %v2576 = vpack.c.bf16 %v2553, %v2552
        %v2577 = vpack.c.bf16 %v2555, %v2554
        %v2578 = vpack.c.bf16 %v2557, %v2556
        %v2579 = vpack.c.bf16 %v2559, %v2558
        %v2580 = vpack.c.bf16 %v2561, %v2560
        %v2581 = vpack.c.bf16 %v2563, %v2562
        %v2582 = vpack.c.bf16 %v2565, %v2564
        %v2583 = vpack.c.bf16 %v2567, %v2566
        %s2584 = scalar_lea.vmem %s1, 192
        %v2585 = vld [vmem:[%s2584] sm:$0xf]
        %v2586 = vld [vmem:[%s2584 + $0x4] sm:$0xf]
        %v2587 = vld [vmem:[%s2584 + $0x8] sm:$0xf]
        %v2588 = vld [vmem:[%s2584 + $0xc] sm:$0xf]
        %v2589 = vld [vmem:[%s2584 + $0x10] sm:$0xf]
        %v2590 = vld [vmem:[%s2584 + $0x14] sm:$0xf]
        %v2591 = vld [vmem:[%s2584 + $0x18] sm:$0xf]
        %v2592 = vld [vmem:[%s2584 + $0x1c] sm:$0xf]
        %v2601 = vunpack.c.l.b16 %v2585
        %v2602 = vunpack.c.l.b16 %v2586
        %v2603 = vunpack.c.l.b16 %v2587
        %v2604 = vunpack.c.l.b16 %v2588
        %v2605 = vunpack.c.l.b16 %v2589
        %v2606 = vunpack.c.l.b16 %v2590
        %v2607 = vunpack.c.l.b16 %v2591
        %v2608 = vunpack.c.l.b16 %v2592
        %v2609 = vpack.c.b16 %v2602, %v2601
        %v2610 = vpack.c.b16 %v2604, %v2603
        %v2611 = vpack.c.b16 %v2606, %v2605
        %v2612 = vpack.c.b16 %v2608, %v2607
        %v2618 = vsel %vm229, %v2568, 0
        %v2621 = vsel %vm229, %v2569, 0
        %v2624 = vsel %vm229, %v2570, 0
        %v2627 = vsel %vm229, %v2571, 0
        %v2630 = vsel %vm229, %v2572, 0
        %v2633 = vsel %vm229, %v2573, 0
        %v2636 = vsel %vm229, %v2574, 0
        %v2639 = vsel %vm229, %v2575, 0
        %v2642 = vsel %vm229, %v2576, 0
        %v2645 = vsel %vm229, %v2577, 0
        %v2648 = vsel %vm229, %v2578, 0
        %v2651 = vsel %vm229, %v2579, 0
        %v2654 = vsel %vm229, %v2580, 0
        %v2657 = vsel %vm229, %v2581, 0
        %v2660 = vsel %vm229, %v2582, 0
        %v2663 = vsel %vm229, %v2583, 0
        %2665 = vmatpush.bf16.msra.mxu0 0
        %2666 = vmatpush.bf16.msra.mxu0 0
        %2667 = vmatpush.bf16.msra.mxu0 0
        %2668 = vmatpush.bf16.msra.mxu0 0
        %2669 = vmatpush.bf16.msra.mxu0 %v2612
        %2670 = vmatpush.bf16.msra.mxu0 %v2611
        %2671 = vmatpush.bf16.msra.mxu0 %v2610
        %2672 = vmatpush.bf16.msra.mxu0 %v2609
        %2673 = vmatmul.bf16.gmra.mxu0 %v2618
        %v2674 = vpop.f32.mrf.mxu0
        %v2675 = vadd.f32 0.0, %v2674
        %v2676 = vpop.f32.mrf.mxu0
        %v2677 = vadd.f32 0.0, %v2676
        %2678 = vmatmul.bf16.gmra.mxu0 %v2621
        %v2679 = vpop.f32.mrf.mxu0
        %v2680 = vadd.f32 0.0, %v2679
        %v2681 = vpop.f32.mrf.mxu0
        %v2682 = vadd.f32 0.0, %v2681
        %2683 = vmatmul.bf16.gmra.mxu0 %v2624
        %v2684 = vpop.f32.mrf.mxu0
        %v2685 = vadd.f32 0.0, %v2684
        %v2686 = vpop.f32.mrf.mxu0
        %v2687 = vadd.f32 0.0, %v2686
        %2688 = vmatmul.bf16.gmra.mxu0 %v2627
        %v2689 = vpop.f32.mrf.mxu0
        %v2690 = vadd.f32 0.0, %v2689
        %v2691 = vpop.f32.mrf.mxu0
        %v2692 = vadd.f32 0.0, %v2691
        %2693 = vmatmul.bf16.gmra.mxu0 %v2630
        %v2694 = vpop.f32.mrf.mxu0
        %v2695 = vadd.f32 0.0, %v2694
        %v2696 = vpop.f32.mrf.mxu0
        %v2697 = vadd.f32 0.0, %v2696
        %2698 = vmatmul.bf16.gmra.mxu0 %v2633
        %v2699 = vpop.f32.mrf.mxu0
        %v2700 = vadd.f32 0.0, %v2699
        %v2701 = vpop.f32.mrf.mxu0
        %v2702 = vadd.f32 0.0, %v2701
        %2703 = vmatmul.bf16.gmra.mxu0 %v2636
        %v2704 = vpop.f32.mrf.mxu0
        %v2705 = vadd.f32 0.0, %v2704
        %v2706 = vpop.f32.mrf.mxu0
        %v2707 = vadd.f32 0.0, %v2706
        %2708 = vmatmul.bf16.gmra.mxu0 %v2639
        %v2709 = vpop.f32.mrf.mxu0
        %v2710 = vadd.f32 0.0, %v2709
        %v2711 = vpop.f32.mrf.mxu0
        %v2712 = vadd.f32 0.0, %v2711
        %2713 = vmatmul.bf16.gmra.mxu0 %v2642
        %v2714 = vpop.f32.mrf.mxu0
        %v2715 = vadd.f32 0.0, %v2714
        %v2716 = vpop.f32.mrf.mxu0
        %v2717 = vadd.f32 0.0, %v2716
        %2718 = vmatmul.bf16.gmra.mxu0 %v2645
        %v2719 = vpop.f32.mrf.mxu0
        %v2720 = vadd.f32 0.0, %v2719
        %v2721 = vpop.f32.mrf.mxu0
        %v2722 = vadd.f32 0.0, %v2721
        %2723 = vmatmul.bf16.gmra.mxu0 %v2648
        %v2724 = vpop.f32.mrf.mxu0
        %v2725 = vadd.f32 0.0, %v2724
        %v2726 = vpop.f32.mrf.mxu0
        %v2727 = vadd.f32 0.0, %v2726
        %2728 = vmatmul.bf16.gmra.mxu0 %v2651
        %v2729 = vpop.f32.mrf.mxu0
        %v2730 = vadd.f32 0.0, %v2729
        %v2731 = vpop.f32.mrf.mxu0
        %v2732 = vadd.f32 0.0, %v2731
        %2733 = vmatmul.bf16.gmra.mxu0 %v2654
        %v2734 = vpop.f32.mrf.mxu0
        %v2735 = vadd.f32 0.0, %v2734
        %v2736 = vpop.f32.mrf.mxu0
        %v2737 = vadd.f32 0.0, %v2736
        %2738 = vmatmul.bf16.gmra.mxu0 %v2657
        %v2739 = vpop.f32.mrf.mxu0
        %v2740 = vadd.f32 0.0, %v2739
        %v2741 = vpop.f32.mrf.mxu0
        %v2742 = vadd.f32 0.0, %v2741
        %2743 = vmatmul.bf16.gmra.mxu0 %v2660
        %v2744 = vpop.f32.mrf.mxu0
        %v2745 = vadd.f32 0.0, %v2744
        %v2746 = vpop.f32.mrf.mxu0
        %v2747 = vadd.f32 0.0, %v2746
        %2748 = vmatmul.bf16.gmra.mxu0 %v2663
        %v2749 = vpop.f32.mrf.mxu0
        %v2750 = vadd.f32 0.0, %v2749
        %v2751 = vpop.f32.mrf.mxu0
        %v2752 = vadd.f32 0.0, %v2751
        %2753 = vdwg.mxu0
        %v2754 = vadd.f32 %v2472, %v2675
        %v2755 = vadd.f32 %v2473, %v2677
        %v2756 = vadd.f32 %v2474, %v2680
        %v2757 = vadd.f32 %v2475, %v2682
        %v2758 = vadd.f32 %v2476, %v2685
        %v2759 = vadd.f32 %v2477, %v2687
        %v2760 = vadd.f32 %v2478, %v2690
        %v2761 = vadd.f32 %v2479, %v2692
        %v2762 = vadd.f32 %v2480, %v2695
        %v2763 = vadd.f32 %v2481, %v2697
        %v2764 = vadd.f32 %v2482, %v2700
        %v2765 = vadd.f32 %v2483, %v2702
        %v2766 = vadd.f32 %v2484, %v2705
        %v2767 = vadd.f32 %v2485, %v2707
        %v2768 = vadd.f32 %v2486, %v2710
        %v2769 = vadd.f32 %v2487, %v2712
        %v2770 = vadd.f32 %v2488, %v2715
        %v2771 = vadd.f32 %v2489, %v2717
        %v2772 = vadd.f32 %v2490, %v2720
        %v2773 = vadd.f32 %v2491, %v2722
        %v2774 = vadd.f32 %v2492, %v2725
        %v2775 = vadd.f32 %v2493, %v2727
        %v2776 = vadd.f32 %v2494, %v2730
        %v2777 = vadd.f32 %v2495, %v2732
        %v2778 = vadd.f32 %v2496, %v2735
        %v2779 = vadd.f32 %v2497, %v2737
        %v2780 = vadd.f32 %v2498, %v2740
        %v2781 = vadd.f32 %v2499, %v2742
        %v2782 = vadd.f32 %v2500, %v2745
        %v2783 = vadd.f32 %v2501, %v2747
        %v2784 = vadd.f32 %v2502, %v2750
        %v2785 = vadd.f32 %v2503, %v2752
        %v2786 = vld [vmem:[#allocation2 + $0x21] sm:$0xff]
        %v2787 = vld [vmem:[#allocation2 + $0x29] sm:$0xff]
        %v2788 = vld [vmem:[#allocation2 + $0x31] sm:$0xff]
        %v2789 = vld [vmem:[#allocation2 + $0x39] sm:$0xff]
        %v2790 = vld [vmem:[#allocation2 + $0x41] sm:$0xff]
        %v2791 = vld [vmem:[#allocation2 + $0x49] sm:$0xff]
        %v2792 = vld [vmem:[#allocation2 + $0x51] sm:$0xff]
        %v2793 = vld [vmem:[#allocation2 + $0x59] sm:$0xff]
        %v2794 = vld [vmem:[#allocation2 + $0x61] sm:$0xff]
        %v2795 = vld [vmem:[#allocation2 + $0x69] sm:$0xff]
        %v2796 = vld [vmem:[#allocation2 + $0x71] sm:$0xff]
        %v2797 = vld [vmem:[#allocation2 + $0x79] sm:$0xff]
        %v2798 = vld [vmem:[#allocation2 + $0x81] sm:$0xff]
        %v2799 = vld [vmem:[#allocation2 + $0x89] sm:$0xff]
        %v2800 = vld [vmem:[#allocation2 + $0x91] sm:$0xff]
        %v2801 = vld [vmem:[#allocation2 + $0x99] sm:$0xff]
        %v2802 = vld [vmem:[#allocation2 + $0xa1] sm:$0xff]
        %v2803 = vld [vmem:[#allocation2 + $0xa9] sm:$0xff]
        %v2804 = vld [vmem:[#allocation2 + $0xb1] sm:$0xff]
        %v2805 = vld [vmem:[#allocation2 + $0xb9] sm:$0xff]
        %v2806 = vld [vmem:[#allocation2 + $0xc1] sm:$0xff]
        %v2807 = vld [vmem:[#allocation2 + $0xc9] sm:$0xff]
        %v2808 = vld [vmem:[#allocation2 + $0xd1] sm:$0xff]
        %v2809 = vld [vmem:[#allocation2 + $0xd9] sm:$0xff]
        %v2810 = vld [vmem:[#allocation2 + $0xe1] sm:$0xff]
        %v2811 = vld [vmem:[#allocation2 + $0xe9] sm:$0xff]
        %v2812 = vld [vmem:[#allocation2 + $0xf1] sm:$0xff]
        %v2813 = vld [vmem:[#allocation2 + $0xf9] sm:$0xff]
        %v2814 = vld [vmem:[#allocation2 + $0x101] sm:$0xff]
        %v2815 = vld [vmem:[#allocation2 + $0x109] sm:$0xff]
        %v2816 = vld [vmem:[#allocation2 + $0x111] sm:$0xff]
        %v2817 = vld [vmem:[#allocation2 + $0x119] sm:$0xff]
        %v2818 = vpack.c.bf16 %v2787, %v2786
        %v2819 = vpack.c.bf16 %v2789, %v2788
        %v2820 = vpack.c.bf16 %v2791, %v2790
        %v2821 = vpack.c.bf16 %v2793, %v2792
        %v2822 = vpack.c.bf16 %v2795, %v2794
        %v2823 = vpack.c.bf16 %v2797, %v2796
        %v2824 = vpack.c.bf16 %v2799, %v2798
        %v2825 = vpack.c.bf16 %v2801, %v2800
        %v2826 = vpack.c.bf16 %v2803, %v2802
        %v2827 = vpack.c.bf16 %v2805, %v2804
        %v2828 = vpack.c.bf16 %v2807, %v2806
        %v2829 = vpack.c.bf16 %v2809, %v2808
        %v2830 = vpack.c.bf16 %v2811, %v2810
        %v2831 = vpack.c.bf16 %v2813, %v2812
        %v2832 = vpack.c.bf16 %v2815, %v2814
        %v2833 = vpack.c.bf16 %v2817, %v2816
        %s2834 = scalar_lea.vmem %s1, 224
        %v2835 = vld [vmem:[%s2834] sm:$0xf]
        %v2836 = vld [vmem:[%s2834 + $0x4] sm:$0xf]
        %v2837 = vld [vmem:[%s2834 + $0x8] sm:$0xf]
        %v2838 = vld [vmem:[%s2834 + $0xc] sm:$0xf]
        %v2839 = vld [vmem:[%s2834 + $0x10] sm:$0xf]
        %v2840 = vld [vmem:[%s2834 + $0x14] sm:$0xf]
        %v2841 = vld [vmem:[%s2834 + $0x18] sm:$0xf]
        %v2842 = vld [vmem:[%s2834 + $0x1c] sm:$0xf]
        %v2851 = vunpack.c.l.b16 %v2835
        %v2852 = vunpack.c.l.b16 %v2836
        %v2853 = vunpack.c.l.b16 %v2837
        %v2854 = vunpack.c.l.b16 %v2838
        %v2855 = vunpack.c.l.b16 %v2839
        %v2856 = vunpack.c.l.b16 %v2840
        %v2857 = vunpack.c.l.b16 %v2841
        %v2858 = vunpack.c.l.b16 %v2842
        %v2859 = vpack.c.b16 %v2852, %v2851
        %v2860 = vpack.c.b16 %v2854, %v2853
        %v2861 = vpack.c.b16 %v2856, %v2855
        %v2862 = vpack.c.b16 %v2858, %v2857
        %v2868 = vsel %vm229, %v2818, 0
        %v2871 = vsel %vm229, %v2819, 0
        %v2874 = vsel %vm229, %v2820, 0
        %v2877 = vsel %vm229, %v2821, 0
        %v2880 = vsel %vm229, %v2822, 0
        %v2883 = vsel %vm229, %v2823, 0
        %v2886 = vsel %vm229, %v2824, 0
        %v2889 = vsel %vm229, %v2825, 0
        %v2892 = vsel %vm229, %v2826, 0
        %v2895 = vsel %vm229, %v2827, 0
        %v2898 = vsel %vm229, %v2828, 0
        %v2901 = vsel %vm229, %v2829, 0
        %v2904 = vsel %vm229, %v2830, 0
        %v2907 = vsel %vm229, %v2831, 0
        %v2910 = vsel %vm229, %v2832, 0
        %v2913 = vsel %vm229, %v2833, 0
        %2915 = vmatpush.bf16.msra.mxu0 0
        %2916 = vmatpush.bf16.msra.mxu0 0
        %2917 = vmatpush.bf16.msra.mxu0 0
        %2918 = vmatpush.bf16.msra.mxu0 0
        %2919 = vmatpush.bf16.msra.mxu0 %v2862
        %2920 = vmatpush.bf16.msra.mxu0 %v2861
        %2921 = vmatpush.bf16.msra.mxu0 %v2860
        %2922 = vmatpush.bf16.msra.mxu0 %v2859
        %2923 = vmatmul.bf16.gmra.mxu0 %v2868
        %v2924 = vpop.f32.mrf.mxu0
        %v2925 = vadd.f32 0.0, %v2924
        %v2926 = vpop.f32.mrf.mxu0
        %v2927 = vadd.f32 0.0, %v2926
        %2928 = vmatmul.bf16.gmra.mxu0 %v2871
        %v2929 = vpop.f32.mrf.mxu0
        %v2930 = vadd.f32 0.0, %v2929
        %v2931 = vpop.f32.mrf.mxu0
        %v2932 = vadd.f32 0.0, %v2931
        %2933 = vmatmul.bf16.gmra.mxu0 %v2874
        %v2934 = vpop.f32.mrf.mxu0
        %v2935 = vadd.f32 0.0, %v2934
        %v2936 = vpop.f32.mrf.mxu0
        %v2937 = vadd.f32 0.0, %v2936
        %2938 = vmatmul.bf16.gmra.mxu0 %v2877
        %v2939 = vpop.f32.mrf.mxu0
        %v2940 = vadd.f32 0.0, %v2939
        %v2941 = vpop.f32.mrf.mxu0
        %v2942 = vadd.f32 0.0, %v2941
        %2943 = vmatmul.bf16.gmra.mxu0 %v2880
        %v2944 = vpop.f32.mrf.mxu0
        %v2945 = vadd.f32 0.0, %v2944
        %v2946 = vpop.f32.mrf.mxu0
        %v2947 = vadd.f32 0.0, %v2946
        %2948 = vmatmul.bf16.gmra.mxu0 %v2883
        %v2949 = vpop.f32.mrf.mxu0
        %v2950 = vadd.f32 0.0, %v2949
        %v2951 = vpop.f32.mrf.mxu0
        %v2952 = vadd.f32 0.0, %v2951
        %2953 = vmatmul.bf16.gmra.mxu0 %v2886
        %v2954 = vpop.f32.mrf.mxu0
        %v2955 = vadd.f32 0.0, %v2954
        %v2956 = vpop.f32.mrf.mxu0
        %v2957 = vadd.f32 0.0, %v2956
        %2958 = vmatmul.bf16.gmra.mxu0 %v2889
        %v2959 = vpop.f32.mrf.mxu0
        %v2960 = vadd.f32 0.0, %v2959
        %v2961 = vpop.f32.mrf.mxu0
        %v2962 = vadd.f32 0.0, %v2961
        %2963 = vmatmul.bf16.gmra.mxu0 %v2892
        %v2964 = vpop.f32.mrf.mxu0
        %v2965 = vadd.f32 0.0, %v2964
        %v2966 = vpop.f32.mrf.mxu0
        %v2967 = vadd.f32 0.0, %v2966
        %2968 = vmatmul.bf16.gmra.mxu0 %v2895
        %v2969 = vpop.f32.mrf.mxu0
        %v2970 = vadd.f32 0.0, %v2969
        %v2971 = vpop.f32.mrf.mxu0
        %v2972 = vadd.f32 0.0, %v2971
        %2973 = vmatmul.bf16.gmra.mxu0 %v2898
        %v2974 = vpop.f32.mrf.mxu0
        %v2975 = vadd.f32 0.0, %v2974
        %v2976 = vpop.f32.mrf.mxu0
        %v2977 = vadd.f32 0.0, %v2976
        %2978 = vmatmul.bf16.gmra.mxu0 %v2901
        %v2979 = vpop.f32.mrf.mxu0
        %v2980 = vadd.f32 0.0, %v2979
        %v2981 = vpop.f32.mrf.mxu0
        %v2982 = vadd.f32 0.0, %v2981
        %2983 = vmatmul.bf16.gmra.mxu0 %v2904
        %v2984 = vpop.f32.mrf.mxu0
        %v2985 = vadd.f32 0.0, %v2984
        %v2986 = vpop.f32.mrf.mxu0
        %v2987 = vadd.f32 0.0, %v2986
        %2988 = vmatmul.bf16.gmra.mxu0 %v2907
        %v2989 = vpop.f32.mrf.mxu0
        %v2990 = vadd.f32 0.0, %v2989
        %v2991 = vpop.f32.mrf.mxu0
        %v2992 = vadd.f32 0.0, %v2991
        %2993 = vmatmul.bf16.gmra.mxu0 %v2910
        %v2994 = vpop.f32.mrf.mxu0
        %v2995 = vadd.f32 0.0, %v2994
        %v2996 = vpop.f32.mrf.mxu0
        %v2997 = vadd.f32 0.0, %v2996
        %2998 = vmatmul.bf16.gmra.mxu0 %v2913
        %v2999 = vpop.f32.mrf.mxu0
        %v3000 = vadd.f32 0.0, %v2999
        %v3001 = vpop.f32.mrf.mxu0
        %v3002 = vadd.f32 0.0, %v3001
        %3003 = vdwg.mxu0
        %v3004 = vadd.f32 %v2754, %v2925
        %v3005 = vadd.f32 %v2755, %v2927
        %v3006 = vadd.f32 %v2756, %v2930
        %v3007 = vadd.f32 %v2757, %v2932
        %v3008 = vadd.f32 %v2758, %v2935
        %v3009 = vadd.f32 %v2759, %v2937
        %v3010 = vadd.f32 %v2760, %v2940
        %v3011 = vadd.f32 %v2761, %v2942
        %v3012 = vadd.f32 %v2762, %v2945
        %v3013 = vadd.f32 %v2763, %v2947
        %v3014 = vadd.f32 %v2764, %v2950
        %v3015 = vadd.f32 %v2765, %v2952
        %v3016 = vadd.f32 %v2766, %v2955
        %v3017 = vadd.f32 %v2767, %v2957
        %v3018 = vadd.f32 %v2768, %v2960
        %v3019 = vadd.f32 %v2769, %v2962
        %v3020 = vadd.f32 %v2770, %v2965
        %v3021 = vadd.f32 %v2771, %v2967
        %v3022 = vadd.f32 %v2772, %v2970
        %v3023 = vadd.f32 %v2773, %v2972
        %v3024 = vadd.f32 %v2774, %v2975
        %v3025 = vadd.f32 %v2775, %v2977
        %v3026 = vadd.f32 %v2776, %v2980
        %v3027 = vadd.f32 %v2777, %v2982
        %v3028 = vadd.f32 %v2778, %v2985
        %v3029 = vadd.f32 %v2779, %v2987
        %v3030 = vadd.f32 %v2780, %v2990
        %v3031 = vadd.f32 %v2781, %v2992
        %v3032 = vadd.f32 %v2782, %v2995
        %v3033 = vadd.f32 %v2783, %v2997
        %v3034 = vadd.f32 %v2784, %v3000
        %v3035 = vadd.f32 %v2785, %v3002
        %v3036 = vld [vmem:[#allocation2 + $0x22] sm:$0xff]
        %v3037 = vld [vmem:[#allocation2 + $0x2a] sm:$0xff]
        %v3038 = vld [vmem:[#allocation2 + $0x32] sm:$0xff]
        %v3039 = vld [vmem:[#allocation2 + $0x3a] sm:$0xff]
        %v3040 = vld [vmem:[#allocation2 + $0x42] sm:$0xff]
        %v3041 = vld [vmem:[#allocation2 + $0x4a] sm:$0xff]
        %v3042 = vld [vmem:[#allocation2 + $0x52] sm:$0xff]
        %v3043 = vld [vmem:[#allocation2 + $0x5a] sm:$0xff]
        %v3044 = vld [vmem:[#allocation2 + $0x62] sm:$0xff]
        %v3045 = vld [vmem:[#allocation2 + $0x6a] sm:$0xff]
        %v3046 = vld [vmem:[#allocation2 + $0x72] sm:$0xff]
        %v3047 = vld [vmem:[#allocation2 + $0x7a] sm:$0xff]
        %v3048 = vld [vmem:[#allocation2 + $0x82] sm:$0xff]
        %v3049 = vld [vmem:[#allocation2 + $0x8a] sm:$0xff]
        %v3050 = vld [vmem:[#allocation2 + $0x92] sm:$0xff]
        %v3051 = vld [vmem:[#allocation2 + $0x9a] sm:$0xff]
        %v3052 = vld [vmem:[#allocation2 + $0xa2] sm:$0xff]
        %v3053 = vld [vmem:[#allocation2 + $0xaa] sm:$0xff]
        %v3054 = vld [vmem:[#allocation2 + $0xb2] sm:$0xff]
        %v3055 = vld [vmem:[#allocation2 + $0xba] sm:$0xff]
        %v3056 = vld [vmem:[#allocation2 + $0xc2] sm:$0xff]
        %v3057 = vld [vmem:[#allocation2 + $0xca] sm:$0xff]
        %v3058 = vld [vmem:[#allocation2 + $0xd2] sm:$0xff]
        %v3059 = vld [vmem:[#allocation2 + $0xda] sm:$0xff]
        %v3060 = vld [vmem:[#allocation2 + $0xe2] sm:$0xff]
        %v3061 = vld [vmem:[#allocation2 + $0xea] sm:$0xff]
        %v3062 = vld [vmem:[#allocation2 + $0xf2] sm:$0xff]
        %v3063 = vld [vmem:[#allocation2 + $0xfa] sm:$0xff]
        %v3064 = vld [vmem:[#allocation2 + $0x102] sm:$0xff]
        %v3065 = vld [vmem:[#allocation2 + $0x10a] sm:$0xff]
        %v3066 = vld [vmem:[#allocation2 + $0x112] sm:$0xff]
        %v3067 = vld [vmem:[#allocation2 + $0x11a] sm:$0xff]
        %v3068 = vsel %vm1408, %v3036, 0.0
        %v3069 = vsel %vm1409, %v3037, 0.0
        %v3070 = vsel %vm1410, %v3038, 0.0
        %v3071 = vsel %vm1411, %v3039, 0.0
        %v3072 = vsel %vm1412, %v3040, 0.0
        %v3073 = vsel %vm1413, %v3041, 0.0
        %v3074 = vsel %vm1414, %v3042, 0.0
        %v3075 = vsel %vm1415, %v3043, 0.0
        %v3076 = vsel %vm1416, %v3044, 0.0
        %v3077 = vsel %vm1417, %v3045, 0.0
        %v3078 = vsel %vm1418, %v3046, 0.0
        %v3079 = vsel %vm1419, %v3047, 0.0
        %v3080 = vsel %vm1420, %v3048, 0.0
        %v3081 = vsel %vm1421, %v3049, 0.0
        %v3082 = vsel %vm1422, %v3050, 0.0
        %v3083 = vsel %vm1423, %v3051, 0.0
        %v3084 = vsel %vm1424, %v3052, 0.0
        %v3085 = vsel %vm1425, %v3053, 0.0
        %v3086 = vsel %vm1426, %v3054, 0.0
        %v3087 = vsel %vm1427, %v3055, 0.0
        %v3088 = vsel %vm1428, %v3056, 0.0
        %v3089 = vsel %vm1429, %v3057, 0.0
        %v3090 = vsel %vm1430, %v3058, 0.0
        %v3091 = vsel %vm1431, %v3059, 0.0
        %v3092 = vsel %vm1432, %v3060, 0.0
        %v3093 = vsel %vm1433, %v3061, 0.0
        %v3094 = vsel %vm1434, %v3062, 0.0
        %v3095 = vsel %vm1435, %v3063, 0.0
        %v3096 = vsel %vm1436, %v3064, 0.0
        %v3097 = vsel %vm1437, %v3065, 0.0
        %v3098 = vsel %vm1438, %v3066, 0.0
        %v3099 = vsel %vm1439, %v3067, 0.0
        %v3100 = vpack.c.bf16 %v3069, %v3068
        %v3101 = vpack.c.bf16 %v3071, %v3070
        %v3102 = vpack.c.bf16 %v3073, %v3072
        %v3103 = vpack.c.bf16 %v3075, %v3074
        %v3104 = vpack.c.bf16 %v3077, %v3076
        %v3105 = vpack.c.bf16 %v3079, %v3078
        %v3106 = vpack.c.bf16 %v3081, %v3080
        %v3107 = vpack.c.bf16 %v3083, %v3082
        %v3108 = vpack.c.bf16 %v3085, %v3084
        %v3109 = vpack.c.bf16 %v3087, %v3086
        %v3110 = vpack.c.bf16 %v3089, %v3088
        %v3111 = vpack.c.bf16 %v3091, %v3090
        %v3112 = vpack.c.bf16 %v3093, %v3092
        %v3113 = vpack.c.bf16 %v3095, %v3094
        %v3114 = vpack.c.bf16 %v3097, %v3096
        %v3115 = vpack.c.bf16 %v3099, %v3098
        %s3116 = scalar_lea.vmem %s1, 256
        %v3117 = vld [vmem:[%s3116] sm:$0xf]
        %v3118 = vld [vmem:[%s3116 + $0x4] sm:$0xf]
        %v3119 = vld [vmem:[%s3116 + $0x8] sm:$0xf]
        %v3120 = vld [vmem:[%s3116 + $0xc] sm:$0xf]
        %v3121 = vld [vmem:[%s3116 + $0x10] sm:$0xf]
        %v3122 = vld [vmem:[%s3116 + $0x14] sm:$0xf]
        %v3123 = vld [vmem:[%s3116 + $0x18] sm:$0xf]
        %v3124 = vld [vmem:[%s3116 + $0x1c] sm:$0xf]
        %v3133 = vunpack.c.l.b16 %v3117
        %v3134 = vunpack.c.l.b16 %v3118
        %v3135 = vunpack.c.l.b16 %v3119
        %v3136 = vunpack.c.l.b16 %v3120
        %v3137 = vunpack.c.l.b16 %v3121
        %v3138 = vunpack.c.l.b16 %v3122
        %v3139 = vunpack.c.l.b16 %v3123
        %v3140 = vunpack.c.l.b16 %v3124
        %v3141 = vpack.c.b16 %v3134, %v3133
        %v3142 = vpack.c.b16 %v3136, %v3135
        %v3143 = vpack.c.b16 %v3138, %v3137
        %v3144 = vpack.c.b16 %v3140, %v3139
        %v3150 = vsel %vm229, %v3100, 0
        %v3153 = vsel %vm229, %v3101, 0
        %v3156 = vsel %vm229, %v3102, 0
        %v3159 = vsel %vm229, %v3103, 0
        %v3162 = vsel %vm229, %v3104, 0
        %v3165 = vsel %vm229, %v3105, 0
        %v3168 = vsel %vm229, %v3106, 0
        %v3171 = vsel %vm229, %v3107, 0
        %v3174 = vsel %vm229, %v3108, 0
        %v3177 = vsel %vm229, %v3109, 0
        %v3180 = vsel %vm229, %v3110, 0
        %v3183 = vsel %vm229, %v3111, 0
        %v3186 = vsel %vm229, %v3112, 0
        %v3189 = vsel %vm229, %v3113, 0
        %v3192 = vsel %vm229, %v3114, 0
        %v3195 = vsel %vm229, %v3115, 0
        %3197 = vmatpush.bf16.msra.mxu0 0
        %3198 = vmatpush.bf16.msra.mxu0 0
        %3199 = vmatpush.bf16.msra.mxu0 0
        %3200 = vmatpush.bf16.msra.mxu0 0
        %3201 = vmatpush.bf16.msra.mxu0 %v3144
        %3202 = vmatpush.bf16.msra.mxu0 %v3143
        %3203 = vmatpush.bf16.msra.mxu0 %v3142
        %3204 = vmatpush.bf16.msra.mxu0 %v3141
        %3205 = vmatmul.bf16.gmra.mxu0 %v3150
        %v3206 = vpop.f32.mrf.mxu0
        %v3207 = vadd.f32 0.0, %v3206
        %v3208 = vpop.f32.mrf.mxu0
        %v3209 = vadd.f32 0.0, %v3208
        %3210 = vmatmul.bf16.gmra.mxu0 %v3153
        %v3211 = vpop.f32.mrf.mxu0
        %v3212 = vadd.f32 0.0, %v3211
        %v3213 = vpop.f32.mrf.mxu0
        %v3214 = vadd.f32 0.0, %v3213
        %3215 = vmatmul.bf16.gmra.mxu0 %v3156
        %v3216 = vpop.f32.mrf.mxu0
        %v3217 = vadd.f32 0.0, %v3216
        %v3218 = vpop.f32.mrf.mxu0
        %v3219 = vadd.f32 0.0, %v3218
        %3220 = vmatmul.bf16.gmra.mxu0 %v3159
        %v3221 = vpop.f32.mrf.mxu0
        %v3222 = vadd.f32 0.0, %v3221
        %v3223 = vpop.f32.mrf.mxu0
        %v3224 = vadd.f32 0.0, %v3223
        %3225 = vmatmul.bf16.gmra.mxu0 %v3162
        %v3226 = vpop.f32.mrf.mxu0
        %v3227 = vadd.f32 0.0, %v3226
        %v3228 = vpop.f32.mrf.mxu0
        %v3229 = vadd.f32 0.0, %v3228
        %3230 = vmatmul.bf16.gmra.mxu0 %v3165
        %v3231 = vpop.f32.mrf.mxu0
        %v3232 = vadd.f32 0.0, %v3231
        %v3233 = vpop.f32.mrf.mxu0
        %v3234 = vadd.f32 0.0, %v3233
        %3235 = vmatmul.bf16.gmra.mxu0 %v3168
        %v3236 = vpop.f32.mrf.mxu0
        %v3237 = vadd.f32 0.0, %v3236
        %v3238 = vpop.f32.mrf.mxu0
        %v3239 = vadd.f32 0.0, %v3238
        %3240 = vmatmul.bf16.gmra.mxu0 %v3171
        %v3241 = vpop.f32.mrf.mxu0
        %v3242 = vadd.f32 0.0, %v3241
        %v3243 = vpop.f32.mrf.mxu0
        %v3244 = vadd.f32 0.0, %v3243
        %3245 = vmatmul.bf16.gmra.mxu0 %v3174
        %v3246 = vpop.f32.mrf.mxu0
        %v3247 = vadd.f32 0.0, %v3246
        %v3248 = vpop.f32.mrf.mxu0
        %v3249 = vadd.f32 0.0, %v3248
        %3250 = vmatmul.bf16.gmra.mxu0 %v3177
        %v3251 = vpop.f32.mrf.mxu0
        %v3252 = vadd.f32 0.0, %v3251
        %v3253 = vpop.f32.mrf.mxu0
        %v3254 = vadd.f32 0.0, %v3253
        %3255 = vmatmul.bf16.gmra.mxu0 %v3180
        %v3256 = vpop.f32.mrf.mxu0
        %v3257 = vadd.f32 0.0, %v3256
        %v3258 = vpop.f32.mrf.mxu0
        %v3259 = vadd.f32 0.0, %v3258
        %3260 = vmatmul.bf16.gmra.mxu0 %v3183
        %v3261 = vpop.f32.mrf.mxu0
        %v3262 = vadd.f32 0.0, %v3261
        %v3263 = vpop.f32.mrf.mxu0
        %v3264 = vadd.f32 0.0, %v3263
        %3265 = vmatmul.bf16.gmra.mxu0 %v3186
        %v3266 = vpop.f32.mrf.mxu0
        %v3267 = vadd.f32 0.0, %v3266
        %v3268 = vpop.f32.mrf.mxu0
        %v3269 = vadd.f32 0.0, %v3268
        %3270 = vmatmul.bf16.gmra.mxu0 %v3189
        %v3271 = vpop.f32.mrf.mxu0
        %v3272 = vadd.f32 0.0, %v3271
        %v3273 = vpop.f32.mrf.mxu0
        %v3274 = vadd.f32 0.0, %v3273
        %3275 = vmatmul.bf16.gmra.mxu0 %v3192
        %v3276 = vpop.f32.mrf.mxu0
        %v3277 = vadd.f32 0.0, %v3276
        %v3278 = vpop.f32.mrf.mxu0
        %v3279 = vadd.f32 0.0, %v3278
        %3280 = vmatmul.bf16.gmra.mxu0 %v3195
        %v3281 = vpop.f32.mrf.mxu0
        %v3282 = vadd.f32 0.0, %v3281
        %v3283 = vpop.f32.mrf.mxu0
        %v3284 = vadd.f32 0.0, %v3283
        %3285 = vdwg.mxu0
        %v3286 = vadd.f32 %v3004, %v3207
        %v3287 = vadd.f32 %v3005, %v3209
        %v3288 = vadd.f32 %v3006, %v3212
        %v3289 = vadd.f32 %v3007, %v3214
        %v3290 = vadd.f32 %v3008, %v3217
        %v3291 = vadd.f32 %v3009, %v3219
        %v3292 = vadd.f32 %v3010, %v3222
        %v3293 = vadd.f32 %v3011, %v3224
        %v3294 = vadd.f32 %v3012, %v3227
        %v3295 = vadd.f32 %v3013, %v3229
        %v3296 = vadd.f32 %v3014, %v3232
        %v3297 = vadd.f32 %v3015, %v3234
        %v3298 = vadd.f32 %v3016, %v3237
        %v3299 = vadd.f32 %v3017, %v3239
        %v3300 = vadd.f32 %v3018, %v3242
        %v3301 = vadd.f32 %v3019, %v3244
        %v3302 = vadd.f32 %v3020, %v3247
        %v3303 = vadd.f32 %v3021, %v3249
        %v3304 = vadd.f32 %v3022, %v3252
        %v3305 = vadd.f32 %v3023, %v3254
        %v3306 = vadd.f32 %v3024, %v3257
        %v3307 = vadd.f32 %v3025, %v3259
        %v3308 = vadd.f32 %v3026, %v3262
        %v3309 = vadd.f32 %v3027, %v3264
        %v3310 = vadd.f32 %v3028, %v3267
        %v3311 = vadd.f32 %v3029, %v3269
        %v3312 = vadd.f32 %v3030, %v3272
        %v3313 = vadd.f32 %v3031, %v3274
        %v3314 = vadd.f32 %v3032, %v3277
        %v3315 = vadd.f32 %v3033, %v3279
        %v3316 = vadd.f32 %v3034, %v3282
        %v3317 = vadd.f32 %v3035, %v3284
        %v3318 = vld [vmem:[%s2] sm:$0x1]
        %v3320 = vperm.slane %v3318, 0
        %v3322 = vmul.f32 %v3286, %v3320
        %v3323 = vmul.f32 %v3287, %v3320
        %v3324 = vmul.f32 %v3288, %v3320
        %v3325 = vmul.f32 %v3289, %v3320
        %v3326 = vmul.f32 %v3290, %v3320
        %v3327 = vmul.f32 %v3291, %v3320
        %v3328 = vmul.f32 %v3292, %v3320
        %v3329 = vmul.f32 %v3293, %v3320
        %v3330 = vmul.f32 %v3294, %v3320
        %v3331 = vmul.f32 %v3295, %v3320
        %v3332 = vmul.f32 %v3296, %v3320
        %v3333 = vmul.f32 %v3297, %v3320
        %v3334 = vmul.f32 %v3298, %v3320
        %v3335 = vmul.f32 %v3299, %v3320
        %v3336 = vmul.f32 %v3300, %v3320
        %v3337 = vmul.f32 %v3301, %v3320
        %v3338 = vmul.f32 %v3302, %v3320
        %v3339 = vmul.f32 %v3303, %v3320
        %v3340 = vmul.f32 %v3304, %v3320
        %v3341 = vmul.f32 %v3305, %v3320
        %v3342 = vmul.f32 %v3306, %v3320
        %v3343 = vmul.f32 %v3307, %v3320
        %v3344 = vmul.f32 %v3308, %v3320
        %v3345 = vmul.f32 %v3309, %v3320
        %v3346 = vmul.f32 %v3310, %v3320
        %v3347 = vmul.f32 %v3311, %v3320
        %v3348 = vmul.f32 %v3312, %v3320
        %v3349 = vmul.f32 %v3313, %v3320
        %v3350 = vmul.f32 %v3314, %v3320
        %v3351 = vmul.f32 %v3315, %v3320
        %v3352 = vmul.f32 %v3316, %v3320
        %v3353 = vmul.f32 %v3317, %v3320
        %v3354 = vld [vmem:[%s3] sm:$0x1]
        %v3356 = vperm.slane %v3354, 0
        %v3358 = vadd.f32 %v3322, %v3356
        %v3359 = vadd.f32 %v3323, %v3356
        %v3360 = vadd.f32 %v3324, %v3356
        %v3361 = vadd.f32 %v3325, %v3356
        %v3362 = vadd.f32 %v3326, %v3356
        %v3363 = vadd.f32 %v3327, %v3356
        %v3364 = vadd.f32 %v3328, %v3356
        %v3365 = vadd.f32 %v3329, %v3356
        %v3366 = vadd.f32 %v3330, %v3356
        %v3367 = vadd.f32 %v3331, %v3356
        %v3368 = vadd.f32 %v3332, %v3356
        %v3369 = vadd.f32 %v3333, %v3356
        %v3370 = vadd.f32 %v3334, %v3356
        %v3371 = vadd.f32 %v3335, %v3356
        %v3372 = vadd.f32 %v3336, %v3356
        %v3373 = vadd.f32 %v3337, %v3356
        %v3374 = vadd.f32 %v3338, %v3356
        %v3375 = vadd.f32 %v3339, %v3356
        %v3376 = vadd.f32 %v3340, %v3356
        %v3377 = vadd.f32 %v3341, %v3356
        %v3378 = vadd.f32 %v3342, %v3356
        %v3379 = vadd.f32 %v3343, %v3356
        %v3380 = vadd.f32 %v3344, %v3356
        %v3381 = vadd.f32 %v3345, %v3356
        %v3382 = vadd.f32 %v3346, %v3356
        %v3383 = vadd.f32 %v3347, %v3356
        %v3384 = vadd.f32 %v3348, %v3356
        %v3385 = vadd.f32 %v3349, %v3356
        %v3386 = vadd.f32 %v3350, %v3356
        %v3387 = vadd.f32 %v3351, %v3356
        %v3388 = vadd.f32 %v3352, %v3356
        %v3389 = vadd.f32 %v3353, %v3356
        %v3390 = vmax.f32 %v3358, 0.0
        %v3391 = vmax.f32 %v3359, 0.0
        %v3392 = vmax.f32 %v3360, 0.0
        %v3393 = vmax.f32 %v3361, 0.0
        %v3394 = vmax.f32 %v3362, 0.0
        %v3395 = vmax.f32 %v3363, 0.0
        %v3396 = vmax.f32 %v3364, 0.0
        %v3397 = vmax.f32 %v3365, 0.0
        %v3398 = vmax.f32 %v3366, 0.0
        %v3399 = vmax.f32 %v3367, 0.0
        %v3400 = vmax.f32 %v3368, 0.0
        %v3401 = vmax.f32 %v3369, 0.0
        %v3402 = vmax.f32 %v3370, 0.0
        %v3403 = vmax.f32 %v3371, 0.0
        %v3404 = vmax.f32 %v3372, 0.0
        %v3405 = vmax.f32 %v3373, 0.0
        %v3406 = vmax.f32 %v3374, 0.0
        %v3407 = vmax.f32 %v3375, 0.0
        %v3408 = vmax.f32 %v3376, 0.0
        %v3409 = vmax.f32 %v3377, 0.0
        %v3410 = vmax.f32 %v3378, 0.0
        %v3411 = vmax.f32 %v3379, 0.0
        %v3412 = vmax.f32 %v3380, 0.0
        %v3413 = vmax.f32 %v3381, 0.0
        %v3414 = vmax.f32 %v3382, 0.0
        %v3415 = vmax.f32 %v3383, 0.0
        %v3416 = vmax.f32 %v3384, 0.0
        %v3417 = vmax.f32 %v3385, 0.0
        %v3418 = vmax.f32 %v3386, 0.0
        %v3419 = vmax.f32 %v3387, 0.0
        %v3420 = vmax.f32 %v3388, 0.0
        %v3421 = vmax.f32 %v3389, 0.0
        %3422 = vst.msk [vmem:[%s190] sm:$0xff] %vm229, %v3390
        %3423 = vst.msk [vmem:[%s190 + $0x8] sm:$0xff] %vm229, %v3391
        %3424 = vst.msk [vmem:[%s190 + $0x10] sm:$0xff] %vm229, %v3392
        %3425 = vst.msk [vmem:[%s190 + $0x18] sm:$0xff] %vm229, %v3393
        %3426 = vst.msk [vmem:[%s190 + $0x20] sm:$0xff] %vm229, %v3394
        %3427 = vst.msk [vmem:[%s190 + $0x28] sm:$0xff] %vm229, %v3395
        %3428 = vst.msk [vmem:[%s190 + $0x30] sm:$0xff] %vm229, %v3396
        %3429 = vst.msk [vmem:[%s190 + $0x38] sm:$0xff] %vm229, %v3397
        %3430 = vst.msk [vmem:[%s190 + $0x40] sm:$0xff] %vm229, %v3398
        %3431 = vst.msk [vmem:[%s190 + $0x48] sm:$0xff] %vm229, %v3399
        %3432 = vst.msk [vmem:[%s190 + $0x50] sm:$0xff] %vm229, %v3400
        %3433 = vst.msk [vmem:[%s190 + $0x58] sm:$0xff] %vm229, %v3401
        %3434 = vst.msk [vmem:[%s190 + $0x60] sm:$0xff] %vm229, %v3402
        %3435 = vst.msk [vmem:[%s190 + $0x68] sm:$0xff] %vm229, %v3403
        %3436 = vst.msk [vmem:[%s190 + $0x70] sm:$0xff] %vm229, %v3404
        %3437 = vst.msk [vmem:[%s190 + $0x78] sm:$0xff] %vm229, %v3405
        %3438 = vst.msk [vmem:[%s190 + $0x80] sm:$0xff] %vm229, %v3406
        %3439 = vst.msk [vmem:[%s190 + $0x88] sm:$0xff] %vm229, %v3407
        %3440 = vst.msk [vmem:[%s190 + $0x90] sm:$0xff] %vm229, %v3408
        %3441 = vst.msk [vmem:[%s190 + $0x98] sm:$0xff] %vm229, %v3409
        %3442 = vst.msk [vmem:[%s190 + $0xa0] sm:$0xff] %vm229, %v3410
        %3443 = vst.msk [vmem:[%s190 + $0xa8] sm:$0xff] %vm229, %v3411
        %3444 = vst.msk [vmem:[%s190 + $0xb0] sm:$0xff] %vm229, %v3412
        %3445 = vst.msk [vmem:[%s190 + $0xb8] sm:$0xff] %vm229, %v3413
        %3446 = vst.msk [vmem:[%s190 + $0xc0] sm:$0xff] %vm229, %v3414
        %3447 = vst.msk [vmem:[%s190 + $0xc8] sm:$0xff] %vm229, %v3415
        %3448 = vst.msk [vmem:[%s190 + $0xd0] sm:$0xff] %vm229, %v3416
        %3449 = vst.msk [vmem:[%s190 + $0xd8] sm:$0xff] %vm229, %v3417
        %3450 = vst.msk [vmem:[%s190 + $0xe0] sm:$0xff] %vm229, %v3418
        %3451 = vst.msk [vmem:[%s190 + $0xe8] sm:$0xff] %vm229, %v3419
        %3452 = vst.msk [vmem:[%s190 + $0xf0] sm:$0xff] %vm229, %v3420
        %3453 = vst.msk [vmem:[%s190 + $0xf8] sm:$0xff] %vm229, %v3421
        %s3454 = sand.u32 %s115, 1
        %s3455 = scalar_lea.sflag [#allocation4], %s3454
        %s3456 = sand.u32 %s115, 1
        %s3457 = smul.addr %s3456, 256
        %s3458 = scalar_lea.vmem [#allocation3], %s3457
        // Predicated region
        $region37: #{up_pallas.5} parent=35 // pred_check
          %p3459 = pneg %p125
        $region38: #{up_pallas.5} parent=35 // pred_check_branch
          %3461 = sbr.rel (%p3459) target = $region40
        $region39: #{up_pallas.5} parent=35 // pred_region
          %3463 = vsyncadd %s3455, 0
          %s3464 = smul.addr %s18, 32
          %s3465 = smul.addr %s3464, 8
          %s3466 = scalar_lea.hbm %s4, %s3465
          %s3467 = sshll.u32 %s3458, 4
          %s3468 = int_to_ptr.vmem [resolvable:$true] %s3467
          %s3469 = sshll.u32 %s3466, 4
          %s3470 = int_to_ptr.hbm [resolvable:$true] %s3469
          %3475 = dma.vmem_to_hbm [thread:$0]  %s3468, 4096, %s3470, %s3455, 128, 128, 8
        $region40: #{up_pallas.5} parent=35 // pred_fallthru
          _
      $region36: #{up_pallas.5} parent=5 // pred_fallthru
        _
      %p3476 = scmp.le.s32.totalorder 2, %s13
      // Predicated region
      $region41: #{up_pallas.5} parent=5 // pred_check
        %p3477 = pneg %p3476
      $region42: #{up_pallas.5} parent=5 // pred_check_branch
        %3479 = sbr.rel (%p3477) target = $region44
      $region43: #{up_pallas.5} parent=5 // pred_region
        %s3480 = ssub.s32 %s13, 2
        // Predicated region
        $region45: #{up_pallas.5} parent=43 // pred_check
          %p3481 = pneg %p131
        $region46: #{up_pallas.5} parent=43 // pred_check_branch
          %3483 = sbr.rel (%p3481) target = $region48
        $region47: #{up_pallas.5} parent=43 // pred_region
          %s3484 = sand.u32 %s116, 1
          %s3485 = scalar_lea.sflag [#allocation4], %s3484
          %s3486 = sand.u32 %s116, 1
          %s3487 = smul.addr %s3486, 256
          %s3488 = scalar_lea.vmem [#allocation3], %s3487
          %3490 = dma.done %s3485, 4096
        $region48: #{up_pallas.5} parent=43 // pred_fallthru
          _
      $region44: #{up_pallas.5} parent=5 // pred_fallthru
        _
    $region6: #{up_pallas.5} parent=1 // loop_footer
      %s17 = sadd.s32 1, %s13
    $region7: #{up_pallas.5} parent=1 // loop_footer_branch
      %12 = sbr.rel target = $region3
    $region8: #{up_pallas.5} parent=1 // loop_exit
      _
    %3491 = vsyncpa [#allocation4], 1
    %s3492 = scalar_lea.sflag [#allocation4], 1
    %3493 = vsyncpa %s3492, 1

// kernel: up_pallas.4
$region0: #{up_pallas.4}
  #allocation0 [shape = 'u32[]', space=smem, size = 0x4, offset = 0x4, fixed_abs, tag = 'smem constant byte address 0x4 - core index']
  #allocation1 [shape = 'u32[72,128]{1,0:T(1,128)}', space=vmem, size = 0x9000, scoped, tag = 'internal scratch']
  #allocation2 [shape = 'f32[290,128]{1,0:T(8,128)}', space=vmem, size = 0x25000, scoped, tag = 'scratch operand']
  %s0 = inlined_call_operand.vmem [shape: bf16[2,256,128], index: 0, kind: input, shape index: {}]
  %s1 = inlined_call_operand.vmem [shape: bf16[2,256,128], index: 1, kind: input, shape index: {}]
  %s2 = inlined_call_operand.vmem [shape: bf16[3,3,128,64], index: 2, kind: input, shape index: {}]
  %s3 = inlined_call_operand.vmem [shape: f32[1,64], index: 3, kind: input, shape index: {}]
  %s4 = inlined_call_operand.vmem [shape: f32[1,64], index: 4, kind: input, shape index: {}]
  %s5 = inlined_call_operand.vmem [shape: bf16[2,256,64], index: 5, kind: output, shape index: {}]
  %s6 = sld [smem:[#allocation0]]
  $region53: #{up_pallas.4} parent=0
    _
  %s8 = ssub.s32 1, %s6
  %s9 = scalar_select 0, %s8, %s6
  loop: start=0, step=1, limit=4
  $region2: #{up_pallas.4} parent=0 // loop_pre_header
    _
  $region3: #{up_pallas.4} parent=0 // loop_header
    %s11 = sphi 0, %s15
    %p12 = scmp.ge.s32.totalorder %s11, 4
    %s21 = sphi 0, %s23
    %s24 = sphi 0, %s21
    %s25 = sphi 0, %s24
    %s41 = sphi 0, %s25
    %s47 = sphi 0, %s49
    %s50 = sphi 0, %s47
    %s51 = sphi 0, %s50
    %s67 = sphi 0, %s51
    %s71 = sphi 0, %s71
    %s73 = sphi 0, %s71
    %s74 = sphi 0, %s73
    %s88 = sphi 0, %s74
    %s92 = sphi 0, %s92
    %s94 = sphi 0, %s92
    %s95 = sphi 0, %s94
    %s109 = sphi 0, %s95
    %s113 = sphi 0, %s113
    %s115 = sphi 0, %s113
    %s116 = sphi 0, %s115
    %s130 = sphi 0, %s116
    %s136 = sphi 0, %s138
    %s139 = sphi 0, %s136
    %s140 = sphi 0, %s139
    %s156 = sphi 0, %s140
  $region4: #{up_pallas.4} parent=0 // loop_header_branch
    %14 = sbr.rel (%p12) target = $region8
  $region5: #{up_pallas.4} parent=0 // loop_body
    %s16 = ssub.s32 %s11, 1
    %s17 = ssub.s32 %s11, 2
    %s18 = sadd.s32 %s11, 1
    %s19 = ssub.s32 %s11, %s18
    %p20 = scmp.eq.s32.totalorder %s19, 0
    %s22 = sadd.s32 %s21, 1
    %s23 = scalar_select %p20, %s21, %s22
    %p26 = pneg %p20
    %p27 = scmp.eq.s32.totalorder %s11, 1
    %p28 = por %p26, %p27
    %p29 = scmp.ne.s32.totalorder %s21, %s24
    %p30 = scmp.eq.s32.totalorder %s11, 0
    %p31 = por %p29, %p30
    %p32 = scmp.ne.s32.totalorder %s21, %s24
    %p33 = scmp.eq.s32.totalorder %s16, 1
    %p34 = por %p32, %p33
    %p35 = scmp.ne.s32.totalorder %s24, %s25
    %p36 = scmp.eq.s32.totalorder %s16, 0
    %p37 = por %p35, %p36
    %p38 = scmp.ne.s32.totalorder %s24, %s25
    %p39 = scmp.eq.s32.totalorder %s17, 1
    %p40 = por %p38, %p39
    %p42 = scmp.ne.s32.totalorder %s25, %s41
    %p43 = scmp.eq.s32.totalorder %s17, 0
    %p44 = por %p42, %p43
    %s45 = ssub.s32 %s11, %s18
    %p46 = scmp.eq.s32.totalorder %s45, 0
    %s48 = sadd.s32 %s47, 1
    %s49 = scalar_select %p46, %s47, %s48
    %p52 = pneg %p46
    %p53 = scmp.eq.s32.totalorder %s11, 1
    %p54 = por %p52, %p53
    %p55 = scmp.ne.s32.totalorder %s47, %s50
    %p56 = scmp.eq.s32.totalorder %s11, 0
    %p57 = por %p55, %p56
    %p58 = scmp.ne.s32.totalorder %s47, %s50
    %p59 = scmp.eq.s32.totalorder %s16, 1
    %p60 = por %p58, %p59
    %p61 = scmp.ne.s32.totalorder %s50, %s51
    %p62 = scmp.eq.s32.totalorder %s16, 0
    %p63 = por %p61, %p62
    %p64 = scmp.ne.s32.totalorder %s50, %s51
    %p65 = scmp.eq.s32.totalorder %s17, 1
    %p66 = por %p64, %p65
    %p68 = scmp.ne.s32.totalorder %s51, %s67
    %p69 = scmp.eq.s32.totalorder %s17, 0
    %p70 = por %p68, %p69
    %s72 = sadd.s32 %s71, 1
    %p75 = scmp.eq.s32.totalorder %s11, 1
    %p76 = scmp.ne.s32.totalorder %s71, %s73
    %p77 = scmp.eq.s32.totalorder %s11, 0
    %p78 = por %p76, %p77
    %p79 = scmp.ne.s32.totalorder %s71, %s73
    %p80 = scmp.eq.s32.totalorder %s16, 1
    %p81 = por %p79, %p80
    %p82 = scmp.ne.s32.totalorder %s73, %s74
    %p83 = scmp.eq.s32.totalorder %s16, 0
    %p84 = por %p82, %p83
    %p85 = scmp.ne.s32.totalorder %s73, %s74
    %p86 = scmp.eq.s32.totalorder %s17, 1
    %p87 = por %p85, %p86
    %p89 = scmp.ne.s32.totalorder %s74, %s88
    %p90 = scmp.eq.s32.totalorder %s17, 0
    %p91 = por %p89, %p90
    %s93 = sadd.s32 %s92, 1
    %p96 = scmp.eq.s32.totalorder %s11, 1
    %p97 = scmp.ne.s32.totalorder %s92, %s94
    %p98 = scmp.eq.s32.totalorder %s11, 0
    %p99 = por %p97, %p98
    %p100 = scmp.ne.s32.totalorder %s92, %s94
    %p101 = scmp.eq.s32.totalorder %s16, 1
    %p102 = por %p100, %p101
    %p103 = scmp.ne.s32.totalorder %s94, %s95
    %p104 = scmp.eq.s32.totalorder %s16, 0
    %p105 = por %p103, %p104
    %p106 = scmp.ne.s32.totalorder %s94, %s95
    %p107 = scmp.eq.s32.totalorder %s17, 1
    %p108 = por %p106, %p107
    %p110 = scmp.ne.s32.totalorder %s95, %s109
    %p111 = scmp.eq.s32.totalorder %s17, 0
    %p112 = por %p110, %p111
    %s114 = sadd.s32 %s113, 1
    %p117 = scmp.eq.s32.totalorder %s11, 1
    %p118 = scmp.ne.s32.totalorder %s113, %s115
    %p119 = scmp.eq.s32.totalorder %s11, 0
    %p120 = por %p118, %p119
    %p121 = scmp.ne.s32.totalorder %s113, %s115
    %p122 = scmp.eq.s32.totalorder %s16, 1
    %p123 = por %p121, %p122
    %p124 = scmp.ne.s32.totalorder %s115, %s116
    %p125 = scmp.eq.s32.totalorder %s16, 0
    %p126 = por %p124, %p125
    %p127 = scmp.ne.s32.totalorder %s115, %s116
    %p128 = scmp.eq.s32.totalorder %s17, 1
    %p129 = por %p127, %p128
    %p131 = scmp.ne.s32.totalorder %s116, %s130
    %p132 = scmp.eq.s32.totalorder %s17, 0
    %p133 = por %p131, %p132
    %s134 = ssub.s32 %s11, %s18
    %p135 = scmp.eq.s32.totalorder %s134, 0
    %s137 = sadd.s32 %s136, 1
    %s138 = scalar_select %p135, %s136, %s137
    %p141 = pneg %p135
    %p142 = scmp.eq.s32.totalorder %s11, 1
    %p143 = por %p141, %p142
    %p144 = scmp.ne.s32.totalorder %s136, %s139
    %p145 = scmp.eq.s32.totalorder %s11, 0
    %p146 = por %p144, %p145
    %p147 = scmp.ne.s32.totalorder %s136, %s139
    %p148 = scmp.eq.s32.totalorder %s16, 1
    %p149 = por %p147, %p148
    %p150 = scmp.ne.s32.totalorder %s139, %s140
    %p151 = scmp.eq.s32.totalorder %s16, 0
    %p152 = por %p150, %p151
    %p153 = scmp.ne.s32.totalorder %s139, %s140
    %p154 = scmp.eq.s32.totalorder %s17, 1
    %p155 = por %p153, %p154
    %p157 = scmp.ne.s32.totalorder %s140, %s156
    %p158 = scmp.eq.s32.totalorder %s17, 0
    %p159 = por %p157, %p158
    %p160 = scmp.le.s32.totalorder 1, %s11
    %p161 = scmp.lt.s32.totalorder %s11, 3
    %p162 = pnand %p160, %p161
    %p163 = pneg %p162
    // Predicated region
    $region9: #{up_pallas.4} parent=5 // pred_check
      _
    $region10: #{up_pallas.4} parent=5 // pred_check_branch
      %165 = sbr.rel (%p162) target = $region12
    $region11: #{up_pallas.4} parent=5 // pred_region
      %s166 = ssub.s32 %s11, 1
      // Predicated region
      $region13: #{up_pallas.4} parent=11 // pred_check
        %p167 = pneg %p84
      $region14: #{up_pallas.4} parent=11 // pred_check_branch
        %169 = sbr.rel (%p167) target = $region16
      $region15: #{up_pallas.4} parent=11 // pred_region
        _
      $region16: #{up_pallas.4} parent=11 // pred_fallthru
        _
      // Predicated region
      $region17: #{up_pallas.4} parent=11 // pred_check
        %p170 = pneg %p105
      $region18: #{up_pallas.4} parent=11 // pred_check_branch
        %172 = sbr.rel (%p170) target = $region20
      $region19: #{up_pallas.4} parent=11 // pred_region
        _
      $region20: #{up_pallas.4} parent=11 // pred_fallthru
        _
      // Predicated region
      $region21: #{up_pallas.4} parent=11 // pred_check
        %p173 = pneg %p126
      $region22: #{up_pallas.4} parent=11 // pred_check_branch
        %175 = sbr.rel (%p173) target = $region24
      $region23: #{up_pallas.4} parent=11 // pred_region
        _
      $region24: #{up_pallas.4} parent=11 // pred_fallthru
        _
    $region12: #{up_pallas.4} parent=5 // pred_fallthru
      _
    %p176 = scmp.lt.s32.totalorder %s11, 2
    // Predicated region
    $region25: #{up_pallas.4} parent=5 // pred_check
      %p177 = pneg %p176
    $region26: #{up_pallas.4} parent=5 // pred_check_branch
      %179 = sbr.rel (%p177) target = $region28
    $region27: #{up_pallas.4} parent=5 // pred_region
      // Predicated region
      $region29: #{up_pallas.4} parent=27 // pred_check
        %p180 = pneg %p31
      $region30: #{up_pallas.4} parent=27 // pred_check_branch
        %182 = sbr.rel (%p180) target = $region32
      $region31: #{up_pallas.4} parent=27 // pred_region
        %p183 = scmp.lt.s32.totalorder %s11, 1
        %s184 = scalar_select %p183, %s11, 1
        %s185 = smul.addr %s184, 32
        %s186 = smul.addr %s185, 4
        %s187 = scalar_lea.vmem %s0, %s186
      $region32: #{up_pallas.4} parent=27 // pred_fallthru
        _
      // Predicated region
      $region33: #{up_pallas.4} parent=27 // pred_check
        %p188 = pneg %p57
      $region34: #{up_pallas.4} parent=27 // pred_check_branch
        %190 = sbr.rel (%p188) target = $region36
      $region35: #{up_pallas.4} parent=27 // pred_region
        %p191 = scmp.lt.s32.totalorder %s11, 1
        %s192 = scalar_select %p191, %s11, 1
        %s193 = smul.addr %s192, 32
        %s194 = smul.addr %s193, 4
        %s195 = scalar_lea.vmem %s1, %s194
      $region36: #{up_pallas.4} parent=27 // pred_fallthru
        _
    $region28: #{up_pallas.4} parent=5 // pred_fallthru
      _
    %p196 = scmp.le.s32.totalorder 1, %s11
    %p197 = scmp.lt.s32.totalorder %s11, 3
    %p198 = pnand %p196, %p197
    %p199 = pneg %p198
    // Predicated region
    $region37: #{up_pallas.4} parent=5 // pred_check
      _
    $region38: #{up_pallas.4} parent=5 // pred_check_branch
      %201 = sbr.rel (%p198) target = $region40
    $region39: #{up_pallas.4} parent=5 // pred_region
      %s202 = ssub.s32 %s11, 1
      %p203 = scmp.lt.s32.totalorder %s16, 1
      %s204 = scalar_select %p203, %s16, 1
      %s205 = smul.addr %s204, 32
      %s206 = smul.addr %s205, 4
      %s207 = scalar_lea.vmem %s0, %s206
      %p208 = pneg %p37
      %p209 = pneg %p34
      %p210 = scmp.lt.s32.totalorder %s16, 1
      %s211 = scalar_select %p210, %s16, 1
      %s212 = smul.addr %s211, 32
      %s213 = smul.addr %s212, 4
      %s214 = scalar_lea.vmem %s1, %s213
      %p215 = pneg %p63
      %p216 = pneg %p60
      %p217 = pneg %p84
      %p218 = pneg %p81
      %p219 = pneg %p105
      %p220 = pneg %p102
      %p221 = pneg %p126
      %p222 = pneg %p123
      %p223 = pneg %p152
      %p224 = pneg %p149
      %p225 = scmp.lt.s32.totalorder %s16, 1
      %s226 = scalar_select %p225, %s16, 1
      %s227 = smul.addr %s226, 32
      %s228 = smul.addr %s227, 4
      %s229 = scalar_lea.vmem %s5, %s228
      %p230 = scmp.lt.s32.totalorder %s16, 1
      %s231 = scalar_select %p230, %s16, 1
      %s232 = smul.addr %s231, 32
      %s233 = smul.addr %s232, 4
      %s234 = scalar_lea.vmem %s0, %s233
      %p235 = scmp.lt.s32.totalorder %s16, 1
      %s236 = scalar_select %p235, %s16, 1
      %s237 = smul.addr %s236, 32
      %s238 = smul.addr %s237, 4
      %s239 = scalar_lea.vmem %s1, %s238
      %p240 = scmp.lt.s32.totalorder %s16, 1
      %s241 = scalar_select %p240, %s16, 1
      %s242 = smul.addr %s241, 32
      %s243 = smul.addr %s242, 4
      %s244 = scalar_lea.vmem %s5, %s243
      %v245 = vld [vmem:[%s234] sm:$0xf]
      %v246 = vld [vmem:[%s234 + $0x4] sm:$0xf]
      %v247 = vld [vmem:[%s234 + $0x8] sm:$0xf]
      %v248 = vld [vmem:[%s234 + $0xc] sm:$0xf]
      %v249 = vld [vmem:[%s234 + $0x10] sm:$0xf]
      %v250 = vld [vmem:[%s234 + $0x14] sm:$0xf]
      %v251 = vld [vmem:[%s234 + $0x18] sm:$0xf]
      %v252 = vld [vmem:[%s234 + $0x1c] sm:$0xf]
      %v253 = vld [vmem:[%s234 + $0x20] sm:$0xf]
      %v254 = vld [vmem:[%s234 + $0x24] sm:$0xf]
      %v255 = vld [vmem:[%s234 + $0x28] sm:$0xf]
      %v256 = vld [vmem:[%s234 + $0x2c] sm:$0xf]
      %v257 = vld [vmem:[%s234 + $0x30] sm:$0xf]
      %v258 = vld [vmem:[%s234 + $0x34] sm:$0xf]
      %v259 = vld [vmem:[%s234 + $0x38] sm:$0xf]
      %v260 = vld [vmem:[%s234 + $0x3c] sm:$0xf]
      %v261 = vld [vmem:[%s234 + $0x40] sm:$0xf]
      %v262 = vld [vmem:[%s234 + $0x44] sm:$0xf]
      %v263 = vld [vmem:[%s234 + $0x48] sm:$0xf]
      %v264 = vld [vmem:[%s234 + $0x4c] sm:$0xf]
      %v265 = vld [vmem:[%s234 + $0x50] sm:$0xf]
      %v266 = vld [vmem:[%s234 + $0x54] sm:$0xf]
      %v267 = vld [vmem:[%s234 + $0x58] sm:$0xf]
      %v268 = vld [vmem:[%s234 + $0x5c] sm:$0xf]
      %v269 = vld [vmem:[%s234 + $0x60] sm:$0xf]
      %v270 = vld [vmem:[%s234 + $0x64] sm:$0xf]
      %v271 = vld [vmem:[%s234 + $0x68] sm:$0xf]
      %v272 = vld [vmem:[%s234 + $0x6c] sm:$0xf]
      %v273 = vld [vmem:[%s234 + $0x70] sm:$0xf]
      %v274 = vld [vmem:[%s234 + $0x74] sm:$0xf]
      %v275 = vld [vmem:[%s234 + $0x78] sm:$0xf]
      %v276 = vld [vmem:[%s234 + $0x7c] sm:$0xf]
      %v277 = vunpack.c.l.bf16 %v245
      %v278 = vunpack.c.l.bf16 %v246
      %v279 = vunpack.c.l.bf16 %v247
      %v280 = vunpack.c.l.bf16 %v248
      %v281 = vunpack.c.l.bf16 %v249
      %v282 = vunpack.c.l.bf16 %v250
      %v283 = vunpack.c.l.bf16 %v251
      %v284 = vunpack.c.l.bf16 %v252
      %v285 = vunpack.c.l.bf16 %v253
      %v286 = vunpack.c.l.bf16 %v254
      %v287 = vunpack.c.l.bf16 %v255
      %v288 = vunpack.c.l.bf16 %v256
      %v289 = vunpack.c.l.bf16 %v257
      %v290 = vunpack.c.l.bf16 %v258
      %v291 = vunpack.c.l.bf16 %v259
      %v292 = vunpack.c.l.bf16 %v260
      %v293 = vunpack.c.l.bf16 %v261
      %v294 = vunpack.c.l.bf16 %v262
      %v295 = vunpack.c.l.bf16 %v263
      %v296 = vunpack.c.l.bf16 %v264
      %v297 = vunpack.c.l.bf16 %v265
      %v298 = vunpack.c.l.bf16 %v266
      %v299 = vunpack.c.l.bf16 %v267
      %v300 = vunpack.c.l.bf16 %v268
      %v301 = vunpack.c.l.bf16 %v269
      %v302 = vunpack.c.l.bf16 %v270
      %v303 = vunpack.c.l.bf16 %v271
      %v304 = vunpack.c.l.bf16 %v272
      %v305 = vunpack.c.l.bf16 %v273
      %v306 = vunpack.c.l.bf16 %v274
      %v307 = vunpack.c.l.bf16 %v275
      %v308 = vunpack.c.l.bf16 %v276
      %v309 = vld [vmem:[%s239] sm:$0xf]
      %v310 = vld [vmem:[%s239 + $0x4] sm:$0xf]
      %v311 = vld [vmem:[%s239 + $0x8] sm:$0xf]
      %v312 = vld [vmem:[%s239 + $0xc] sm:$0xf]
      %v313 = vld [vmem:[%s239 + $0x10] sm:$0xf]
      %v314 = vld [vmem:[%s239 + $0x14] sm:$0xf]
      %v315 = vld [vmem:[%s239 + $0x18] sm:$0xf]
      %v316 = vld [vmem:[%s239 + $0x1c] sm:$0xf]
      %v317 = vld [vmem:[%s239 + $0x20] sm:$0xf]
      %v318 = vld [vmem:[%s239 + $0x24] sm:$0xf]
      %v319 = vld [vmem:[%s239 + $0x28] sm:$0xf]
      %v320 = vld [vmem:[%s239 + $0x2c] sm:$0xf]
      %v321 = vld [vmem:[%s239 + $0x30] sm:$0xf]
      %v322 = vld [vmem:[%s239 + $0x34] sm:$0xf]
      %v323 = vld [vmem:[%s239 + $0x38] sm:$0xf]
      %v324 = vld [vmem:[%s239 + $0x3c] sm:$0xf]
      %v325 = vld [vmem:[%s239 + $0x40] sm:$0xf]
      %v326 = vld [vmem:[%s239 + $0x44] sm:$0xf]
      %v327 = vld [vmem:[%s239 + $0x48] sm:$0xf]
      %v328 = vld [vmem:[%s239 + $0x4c] sm:$0xf]
      %v329 = vld [vmem:[%s239 + $0x50] sm:$0xf]
      %v330 = vld [vmem:[%s239 + $0x54] sm:$0xf]
      %v331 = vld [vmem:[%s239 + $0x58] sm:$0xf]
      %v332 = vld [vmem:[%s239 + $0x5c] sm:$0xf]
      %v333 = vld [vmem:[%s239 + $0x60] sm:$0xf]
      %v334 = vld [vmem:[%s239 + $0x64] sm:$0xf]
      %v335 = vld [vmem:[%s239 + $0x68] sm:$0xf]
      %v336 = vld [vmem:[%s239 + $0x6c] sm:$0xf]
      %v337 = vld [vmem:[%s239 + $0x70] sm:$0xf]
      %v338 = vld [vmem:[%s239 + $0x74] sm:$0xf]
      %v339 = vld [vmem:[%s239 + $0x78] sm:$0xf]
      %v340 = vld [vmem:[%s239 + $0x7c] sm:$0xf]
      %v341 = vunpack.c.l.bf16 %v309
      %v342 = vunpack.c.l.bf16 %v310
      %v343 = vunpack.c.l.bf16 %v311
      %v344 = vunpack.c.l.bf16 %v312
      %v345 = vunpack.c.l.bf16 %v313
      %v346 = vunpack.c.l.bf16 %v314
      %v347 = vunpack.c.l.bf16 %v315
      %v348 = vunpack.c.l.bf16 %v316
      %v349 = vunpack.c.l.bf16 %v317
      %v350 = vunpack.c.l.bf16 %v318
      %v351 = vunpack.c.l.bf16 %v319
      %v352 = vunpack.c.l.bf16 %v320
      %v353 = vunpack.c.l.bf16 %v321
      %v354 = vunpack.c.l.bf16 %v322
      %v355 = vunpack.c.l.bf16 %v323
      %v356 = vunpack.c.l.bf16 %v324
      %v357 = vunpack.c.l.bf16 %v325
      %v358 = vunpack.c.l.bf16 %v326
      %v359 = vunpack.c.l.bf16 %v327
      %v360 = vunpack.c.l.bf16 %v328
      %v361 = vunpack.c.l.bf16 %v329
      %v362 = vunpack.c.l.bf16 %v330
      %v363 = vunpack.c.l.bf16 %v331
      %v364 = vunpack.c.l.bf16 %v332
      %v365 = vunpack.c.l.bf16 %v333
      %v366 = vunpack.c.l.bf16 %v334
      %v367 = vunpack.c.l.bf16 %v335
      %v368 = vunpack.c.l.bf16 %v336
      %v369 = vunpack.c.l.bf16 %v337
      %v370 = vunpack.c.l.bf16 %v338
      %v371 = vunpack.c.l.bf16 %v339
      %v372 = vunpack.c.l.bf16 %v340
      %v373 = vadd.f32 %v277, %v341
      %v374 = vadd.f32 %v278, %v342
      %v375 = vadd.f32 %v279, %v343
      %v376 = vadd.f32 %v280, %v344
      %v377 = vadd.f32 %v281, %v345
      %v378 = vadd.f32 %v282, %v346
      %v379 = vadd.f32 %v283, %v347
      %v380 = vadd.f32 %v284, %v348
      %v381 = vadd.f32 %v285, %v349
      %v382 = vadd.f32 %v286, %v350
      %v383 = vadd.f32 %v287, %v351
      %v384 = vadd.f32 %v288, %v352
      %v385 = vadd.f32 %v289, %v353
      %v386 = vadd.f32 %v290, %v354
      %v387 = vadd.f32 %v291, %v355
      %v388 = vadd.f32 %v292, %v356
      %v389 = vadd.f32 %v293, %v357
      %v390 = vadd.f32 %v294, %v358
      %v391 = vadd.f32 %v295, %v359
      %v392 = vadd.f32 %v296, %v360
      %v393 = vadd.f32 %v297, %v361
      %v394 = vadd.f32 %v298, %v362
      %v395 = vadd.f32 %v299, %v363
      %v396 = vadd.f32 %v300, %v364
      %v397 = vadd.f32 %v301, %v365
      %v398 = vadd.f32 %v302, %v366
      %v399 = vadd.f32 %v303, %v367
      %v400 = vadd.f32 %v304, %v368
      %v401 = vadd.f32 %v305, %v369
      %v402 = vadd.f32 %v306, %v370
      %v403 = vadd.f32 %v307, %v371
      %v404 = vadd.f32 %v308, %v372
      %405 = vst [vmem:[#allocation2] sm:$0xff] 0.0
      %406 = vst [vmem:[#allocation2 + $0x8] sm:$0xff] 0.0
      %407 = vst [vmem:[#allocation2 + $0x10] sm:$0xff] 0.0
      %408 = vst [vmem:[#allocation2 + $0x18] sm:$0xff] 0.0
      %409 = vst [vmem:[#allocation2 + $0x20] sm:$0xff] 0.0
      %410 = vst [vmem:[#allocation2 + $0x28] sm:$0xff] 0.0
      %411 = vst [vmem:[#allocation2 + $0x30] sm:$0xff] 0.0
      %412 = vst [vmem:[#allocation2 + $0x38] sm:$0xff] 0.0
      %413 = vst [vmem:[#allocation2 + $0x40] sm:$0xff] 0.0
      %414 = vst [vmem:[#allocation2 + $0x48] sm:$0xff] 0.0
      %415 = vst [vmem:[#allocation2 + $0x50] sm:$0xff] 0.0
      %416 = vst [vmem:[#allocation2 + $0x58] sm:$0xff] 0.0
      %417 = vst [vmem:[#allocation2 + $0x60] sm:$0xff] 0.0
      %418 = vst [vmem:[#allocation2 + $0x68] sm:$0xff] 0.0
      %419 = vst [vmem:[#allocation2 + $0x70] sm:$0xff] 0.0
      %420 = vst [vmem:[#allocation2 + $0x78] sm:$0xff] 0.0
      %421 = vst [vmem:[#allocation2 + $0x80] sm:$0xff] 0.0
      %422 = vst [vmem:[#allocation2 + $0x88] sm:$0xff] 0.0
      %423 = vst [vmem:[#allocation2 + $0x90] sm:$0xff] 0.0
      %424 = vst [vmem:[#allocation2 + $0x98] sm:$0xff] 0.0
      %425 = vst [vmem:[#allocation2 + $0xa0] sm:$0xff] 0.0
      %426 = vst [vmem:[#allocation2 + $0xa8] sm:$0xff] 0.0
      %427 = vst [vmem:[#allocation2 + $0xb0] sm:$0xff] 0.0
      %428 = vst [vmem:[#allocation2 + $0xb8] sm:$0xff] 0.0
      %429 = vst [vmem:[#allocation2 + $0xc0] sm:$0xff] 0.0
      %430 = vst [vmem:[#allocation2 + $0xc8] sm:$0xff] 0.0
      %431 = vst [vmem:[#allocation2 + $0xd0] sm:$0xff] 0.0
      %432 = vst [vmem:[#allocation2 + $0xd8] sm:$0xff] 0.0
      %433 = vst [vmem:[#allocation2 + $0xe0] sm:$0xff] 0.0
      %434 = vst [vmem:[#allocation2 + $0xe8] sm:$0xff] 0.0
      %435 = vst [vmem:[#allocation2 + $0xf0] sm:$0xff] 0.0
      %436 = vst [vmem:[#allocation2 + $0xf8] sm:$0xff] 0.0
      %437 = vst [vmem:[#allocation2 + $0x100] sm:$0xff] 0.0
      %438 = vst [vmem:[#allocation2 + $0x108] sm:$0xff] 0.0
      %439 = vst [vmem:[#allocation2 + $0x110] sm:$0xff] 0.0
      %440 = vst [vmem:[#allocation2 + $0x118] sm:$0xff] 0.0
      %441 = vst [vmem:[#allocation2 + $0x120] sm:$0x3] 0.0
      %442 = vst [vmem:[#allocation2 + $0x11] sm:$0xff] %v373
      %443 = vst [vmem:[#allocation2 + $0x19] sm:$0xff] %v374
      %444 = vst [vmem:[#allocation2 + $0x21] sm:$0xff] %v375
      %445 = vst [vmem:[#allocation2 + $0x29] sm:$0xff] %v376
      %446 = vst [vmem:[#allocation2 + $0x31] sm:$0xff] %v377
      %447 = vst [vmem:[#allocation2 + $0x39] sm:$0xff] %v378
      %448 = vst [vmem:[#allocation2 + $0x41] sm:$0xff] %v379
      %449 = vst [vmem:[#allocation2 + $0x49] sm:$0xff] %v380
      %450 = vst [vmem:[#allocation2 + $0x51] sm:$0xff] %v381
      %451 = vst [vmem:[#allocation2 + $0x59] sm:$0xff] %v382
      %452 = vst [vmem:[#allocation2 + $0x61] sm:$0xff] %v383
      %453 = vst [vmem:[#allocation2 + $0x69] sm:$0xff] %v384
      %454 = vst [vmem:[#allocation2 + $0x71] sm:$0xff] %v385
      %455 = vst [vmem:[#allocation2 + $0x79] sm:$0xff] %v386
      %456 = vst [vmem:[#allocation2 + $0x81] sm:$0xff] %v387
      %457 = vst [vmem:[#allocation2 + $0x89] sm:$0xff] %v388
      %458 = vst [vmem:[#allocation2 + $0x91] sm:$0xff] %v389
      %459 = vst [vmem:[#allocation2 + $0x99] sm:$0xff] %v390
      %460 = vst [vmem:[#allocation2 + $0xa1] sm:$0xff] %v391
      %461 = vst [vmem:[#allocation2 + $0xa9] sm:$0xff] %v392
      %462 = vst [vmem:[#allocation2 + $0xb1] sm:$0xff] %v393
      %463 = vst [vmem:[#allocation2 + $0xb9] sm:$0xff] %v394
      %464 = vst [vmem:[#allocation2 + $0xc1] sm:$0xff] %v395
      %465 = vst [vmem:[#allocation2 + $0xc9] sm:$0xff] %v396
      %466 = vst [vmem:[#allocation2 + $0xd1] sm:$0xff] %v397
      %467 = vst [vmem:[#allocation2 + $0xd9] sm:$0xff] %v398
      %468 = vst [vmem:[#allocation2 + $0xe1] sm:$0xff] %v399
      %469 = vst [vmem:[#allocation2 + $0xe9] sm:$0xff] %v400
      %470 = vst [vmem:[#allocation2 + $0xf1] sm:$0xff] %v401
      %471 = vst [vmem:[#allocation2 + $0xf9] sm:$0xff] %v402
      %472 = vst [vmem:[#allocation2 + $0x101] sm:$0xff] %v403
      %473 = vst [vmem:[#allocation2 + $0x109] sm:$0xff] %v404
      %v474 = vlaneseq
      %v475 = vshrl.u32 %v474, 7
      %v476 = vadd.s32 %v475, 8
      %v477 = vadd.s32 %v475, 16
      %v478 = vadd.s32 %v475, 24
      %v479 = vadd.s32 %v475, 32
      %v480 = vadd.s32 %v475, 40
      %v481 = vadd.s32 %v475, 48
      %v482 = vadd.s32 %v475, 56
      %v483 = vadd.s32 %v475, 64
      %v484 = vadd.s32 %v475, 72
      %v485 = vadd.s32 %v475, 80
      %v486 = vadd.s32 %v475, 88
      %v487 = vadd.s32 %v475, 96
      %v488 = vadd.s32 %v475, 104
      %v489 = vadd.s32 %v475, 112
      %v490 = vadd.s32 %v475, 120
      %v491 = vadd.s32 %v475, 128
      %v492 = vadd.s32 %v475, 136
      %v493 = vadd.s32 %v475, 144
      %v494 = vadd.s32 %v475, 152
      %v495 = vadd.s32 %v475, 160
      %v496 = vadd.s32 %v475, 168
      %v497 = vadd.s32 %v475, 176
      %v498 = vadd.s32 %v475, 184
      %v499 = vadd.s32 %v475, 192
      %v500 = vadd.s32 %v475, 200
      %v501 = vadd.s32 %v475, 208
      %v502 = vadd.s32 %v475, 216
      %v503 = vadd.s32 %v475, 224
      %v504 = vadd.s32 %v475, 232
      %v505 = vadd.s32 %v475, 240
      %v506 = vadd.s32 %v475, 248
      %vm507 = vcmp.lt.s32.totalorder %v475, 0
      %v508 = vsub.s32 0, %v475
      %v509 = vsel %vm507, %v508, %v475
      %v510 = vshrl.u32 %v509, 4
      %v511 = vand.u32 %v509, 15
      %v512 = vsub.s32 0, %v511
      %v513 = vsel %vm507, %v512, %v511
      %vm514 = vcmp.lt.s32.totalorder %v476, 0
      %v515 = vsub.s32 0, %v476
      %v516 = vsel %vm514, %v515, %v476
      %v517 = vshrl.u32 %v516, 4
      %v518 = vand.u32 %v516, 15
      %v519 = vsub.s32 0, %v518
      %v520 = vsel %vm514, %v519, %v518
      %vm521 = vcmp.lt.s32.totalorder %v477, 0
      %v522 = vsub.s32 0, %v477
      %v523 = vsel %vm521, %v522, %v477
      %v524 = vshrl.u32 %v523, 4
      %v525 = vand.u32 %v523, 15
      %v526 = vsub.s32 0, %v525
      %v527 = vsel %vm521, %v526, %v525
      %vm528 = vcmp.lt.s32.totalorder %v478, 0
      %v529 = vsub.s32 0, %v478
      %v530 = vsel %vm528, %v529, %v478
      %v531 = vshrl.u32 %v530, 4
      %v532 = vand.u32 %v530, 15
      %v533 = vsub.s32 0, %v532
      %v534 = vsel %vm528, %v533, %v532
      %vm535 = vcmp.lt.s32.totalorder %v479, 0
      %v536 = vsub.s32 0, %v479
      %v537 = vsel %vm535, %v536, %v479
      %v538 = vshrl.u32 %v537, 4
      %v539 = vand.u32 %v537, 15
      %v540 = vsub.s32 0, %v539
      %v541 = vsel %vm535, %v540, %v539
      %vm542 = vcmp.lt.s32.totalorder %v480, 0
      %v543 = vsub.s32 0, %v480
      %v544 = vsel %vm542, %v543, %v480
      %v545 = vshrl.u32 %v544, 4
      %v546 = vand.u32 %v544, 15
      %v547 = vsub.s32 0, %v546
      %v548 = vsel %vm542, %v547, %v546
      %vm549 = vcmp.lt.s32.totalorder %v481, 0
      %v550 = vsub.s32 0, %v481
      %v551 = vsel %vm549, %v550, %v481
      %v552 = vshrl.u32 %v551, 4
      %v553 = vand.u32 %v551, 15
      %v554 = vsub.s32 0, %v553
      %v555 = vsel %vm549, %v554, %v553
      %vm556 = vcmp.lt.s32.totalorder %v482, 0
      %v557 = vsub.s32 0, %v482
      %v558 = vsel %vm556, %v557, %v482
      %v559 = vshrl.u32 %v558, 4
      %v560 = vand.u32 %v558, 15
      %v561 = vsub.s32 0, %v560
      %v562 = vsel %vm556, %v561, %v560
      %vm563 = vcmp.lt.s32.totalorder %v483, 0
      %v564 = vsub.s32 0, %v483
      %v565 = vsel %vm563, %v564, %v483
      %v566 = vshrl.u32 %v565, 4
      %v567 = vand.u32 %v565, 15
      %v568 = vsub.s32 0, %v567
      %v569 = vsel %vm563, %v568, %v567
      %vm570 = vcmp.lt.s32.totalorder %v484, 0
      %v571 = vsub.s32 0, %v484
      %v572 = vsel %vm570, %v571, %v484
      %v573 = vshrl.u32 %v572, 4
      %v574 = vand.u32 %v572, 15
      %v575 = vsub.s32 0, %v574
      %v576 = vsel %vm570, %v575, %v574
      %vm577 = vcmp.lt.s32.totalorder %v485, 0
      %v578 = vsub.s32 0, %v485
      %v579 = vsel %vm577, %v578, %v485
      %v580 = vshrl.u32 %v579, 4
      %v581 = vand.u32 %v579, 15
      %v582 = vsub.s32 0, %v581
      %v583 = vsel %vm577, %v582, %v581
      %vm584 = vcmp.lt.s32.totalorder %v486, 0
      %v585 = vsub.s32 0, %v486
      %v586 = vsel %vm584, %v585, %v486
      %v587 = vshrl.u32 %v586, 4
      %v588 = vand.u32 %v586, 15
      %v589 = vsub.s32 0, %v588
      %v590 = vsel %vm584, %v589, %v588
      %vm591 = vcmp.lt.s32.totalorder %v487, 0
      %v592 = vsub.s32 0, %v487
      %v593 = vsel %vm591, %v592, %v487
      %v594 = vshrl.u32 %v593, 4
      %v595 = vand.u32 %v593, 15
      %v596 = vsub.s32 0, %v595
      %v597 = vsel %vm591, %v596, %v595
      %vm598 = vcmp.lt.s32.totalorder %v488, 0
      %v599 = vsub.s32 0, %v488
      %v600 = vsel %vm598, %v599, %v488
      %v601 = vshrl.u32 %v600, 4
      %v602 = vand.u32 %v600, 15
      %v603 = vsub.s32 0, %v602
      %v604 = vsel %vm598, %v603, %v602
      %vm605 = vcmp.lt.s32.totalorder %v489, 0
      %v606 = vsub.s32 0, %v489
      %v607 = vsel %vm605, %v606, %v489
      %v608 = vshrl.u32 %v607, 4
      %v609 = vand.u32 %v607, 15
      %v610 = vsub.s32 0, %v609
      %v611 = vsel %vm605, %v610, %v609
      %vm612 = vcmp.lt.s32.totalorder %v490, 0
      %v613 = vsub.s32 0, %v490
      %v614 = vsel %vm612, %v613, %v490
      %v615 = vshrl.u32 %v614, 4
      %v616 = vand.u32 %v614, 15
      %v617 = vsub.s32 0, %v616
      %v618 = vsel %vm612, %v617, %v616
      %vm619 = vcmp.lt.s32.totalorder %v491, 0
      %v620 = vsub.s32 0, %v491
      %v621 = vsel %vm619, %v620, %v491
      %v622 = vshrl.u32 %v621, 4
      %v623 = vand.u32 %v621, 15
      %v624 = vsub.s32 0, %v623
      %v625 = vsel %vm619, %v624, %v623
      %vm626 = vcmp.lt.s32.totalorder %v492, 0
      %v627 = vsub.s32 0, %v492
      %v628 = vsel %vm626, %v627, %v492
      %v629 = vshrl.u32 %v628, 4
      %v630 = vand.u32 %v628, 15
      %v631 = vsub.s32 0, %v630
      %v632 = vsel %vm626, %v631, %v630
      %vm633 = vcmp.lt.s32.totalorder %v493, 0
      %v634 = vsub.s32 0, %v493
      %v635 = vsel %vm633, %v634, %v493
      %v636 = vshrl.u32 %v635, 4
      %v637 = vand.u32 %v635, 15
      %v638 = vsub.s32 0, %v637
      %v639 = vsel %vm633, %v638, %v637
      %vm640 = vcmp.lt.s32.totalorder %v494, 0
      %v641 = vsub.s32 0, %v494
      %v642 = vsel %vm640, %v641, %v494
      %v643 = vshrl.u32 %v642, 4
      %v644 = vand.u32 %v642, 15
      %v645 = vsub.s32 0, %v644
      %v646 = vsel %vm640, %v645, %v644
      %vm647 = vcmp.lt.s32.totalorder %v495, 0
      %v648 = vsub.s32 0, %v495
      %v649 = vsel %vm647, %v648, %v495
      %v650 = vshrl.u32 %v649, 4
      %v651 = vand.u32 %v649, 15
      %v652 = vsub.s32 0, %v651
      %v653 = vsel %vm647, %v652, %v651
      %vm654 = vcmp.lt.s32.totalorder %v496, 0
      %v655 = vsub.s32 0, %v496
      %v656 = vsel %vm654, %v655, %v496
      %v657 = vshrl.u32 %v656, 4
      %v658 = vand.u32 %v656, 15
      %v659 = vsub.s32 0, %v658
      %v660 = vsel %vm654, %v659, %v658
      %vm661 = vcmp.lt.s32.totalorder %v497, 0
      %v662 = vsub.s32 0, %v497
      %v663 = vsel %vm661, %v662, %v497
      %v664 = vshrl.u32 %v663, 4
      %v665 = vand.u32 %v663, 15
      %v666 = vsub.s32 0, %v665
      %v667 = vsel %vm661, %v666, %v665
      %vm668 = vcmp.lt.s32.totalorder %v498, 0
      %v669 = vsub.s32 0, %v498
      %v670 = vsel %vm668, %v669, %v498
      %v671 = vshrl.u32 %v670, 4
      %v672 = vand.u32 %v670, 15
      %v673 = vsub.s32 0, %v672
      %v674 = vsel %vm668, %v673, %v672
      %vm675 = vcmp.lt.s32.totalorder %v499, 0
      %v676 = vsub.s32 0, %v499
      %v677 = vsel %vm675, %v676, %v499
      %v678 = vshrl.u32 %v677, 4
      %v679 = vand.u32 %v677, 15
      %v680 = vsub.s32 0, %v679
      %v681 = vsel %vm675, %v680, %v679
      %vm682 = vcmp.lt.s32.totalorder %v500, 0
      %v683 = vsub.s32 0, %v500
      %v684 = vsel %vm682, %v683, %v500
      %v685 = vshrl.u32 %v684, 4
      %v686 = vand.u32 %v684, 15
      %v687 = vsub.s32 0, %v686
      %v688 = vsel %vm682, %v687, %v686
      %vm689 = vcmp.lt.s32.totalorder %v501, 0
      %v690 = vsub.s32 0, %v501
      %v691 = vsel %vm689, %v690, %v501
      %v692 = vshrl.u32 %v691, 4
      %v693 = vand.u32 %v691, 15
      %v694 = vsub.s32 0, %v693
      %v695 = vsel %vm689, %v694, %v693
      %vm696 = vcmp.lt.s32.totalorder %v502, 0
      %v697 = vsub.s32 0, %v502
      %v698 = vsel %vm696, %v697, %v502
      %v699 = vshrl.u32 %v698, 4
      %v700 = vand.u32 %v698, 15
      %v701 = vsub.s32 0, %v700
      %v702 = vsel %vm696, %v701, %v700
      %vm703 = vcmp.lt.s32.totalorder %v503, 0
      %v704 = vsub.s32 0, %v503
      %v705 = vsel %vm703, %v704, %v503
      %v706 = vshrl.u32 %v705, 4
      %v707 = vand.u32 %v705, 15
      %v708 = vsub.s32 0, %v707
      %v709 = vsel %vm703, %v708, %v707
      %vm710 = vcmp.lt.s32.totalorder %v504, 0
      %v711 = vsub.s32 0, %v504
      %v712 = vsel %vm710, %v711, %v504
      %v713 = vshrl.u32 %v712, 4
      %v714 = vand.u32 %v712, 15
      %v715 = vsub.s32 0, %v714
      %v716 = vsel %vm710, %v715, %v714
      %vm717 = vcmp.lt.s32.totalorder %v505, 0
      %v718 = vsub.s32 0, %v505
      %v719 = vsel %vm717, %v718, %v505
      %v720 = vshrl.u32 %v719, 4
      %v721 = vand.u32 %v719, 15
      %v722 = vsub.s32 0, %v721
      %v723 = vsel %vm717, %v722, %v721
      %vm724 = vcmp.lt.s32.totalorder %v506, 0
      %v725 = vsub.s32 0, %v506
      %v726 = vsel %vm724, %v725, %v506
      %v727 = vshrl.u32 %v726, 4
      %v728 = vand.u32 %v726, 15
      %v729 = vsub.s32 0, %v728
      %v730 = vsel %vm724, %v729, %v728
      %vm731 = vcmp.ne.s32.totalorder %v513, 0
      %vm732 = vcmp.ne.s32.totalorder %v520, 0
      %vm733 = vcmp.ne.s32.totalorder %v527, 0
      %vm734 = vcmp.ne.s32.totalorder %v534, 0
      %vm735 = vcmp.ne.s32.totalorder %v541, 0
      %vm736 = vcmp.ne.s32.totalorder %v548, 0
      %vm737 = vcmp.ne.s32.totalorder %v555, 0
      %vm738 = vcmp.ne.s32.totalorder %v562, 0
      %vm739 = vcmp.ne.s32.totalorder %v569, 0
      %vm740 = vcmp.ne.s32.totalorder %v576, 0
      %vm741 = vcmp.ne.s32.totalorder %v583, 0
      %vm742 = vcmp.ne.s32.totalorder %v590, 0
      %vm743 = vcmp.ne.s32.totalorder %v597, 0
      %vm744 = vcmp.ne.s32.totalorder %v604, 0
      %vm745 = vcmp.ne.s32.totalorder %v611, 0
      %vm746 = vcmp.ne.s32.totalorder %v618, 0
      %vm747 = vcmp.ne.s32.totalorder %v625, 0
      %vm748 = vcmp.ne.s32.totalorder %v632, 0
      %vm749 = vcmp.ne.s32.totalorder %v639, 0
      %vm750 = vcmp.ne.s32.totalorder %v646, 0
      %vm751 = vcmp.ne.s32.totalorder %v653, 0
      %vm752 = vcmp.ne.s32.totalorder %v660, 0
      %vm753 = vcmp.ne.s32.totalorder %v667, 0
      %vm754 = vcmp.ne.s32.totalorder %v674, 0
      %vm755 = vcmp.ne.s32.totalorder %v681, 0
      %vm756 = vcmp.ne.s32.totalorder %v688, 0
      %vm757 = vcmp.ne.s32.totalorder %v695, 0
      %vm758 = vcmp.ne.s32.totalorder %v702, 0
      %vm759 = vcmp.ne.s32.totalorder %v709, 0
      %vm760 = vcmp.ne.s32.totalorder %v716, 0
      %vm761 = vcmp.ne.s32.totalorder %v723, 0
      %vm762 = vcmp.ne.s32.totalorder %v730, 0
      %vm763 = vcmp.lt.s32.totalorder %v513, 0
      %vm764 = vcmp.lt.s32.totalorder %v520, 0
      %vm765 = vcmp.lt.s32.totalorder %v527, 0
      %vm766 = vcmp.lt.s32.totalorder %v534, 0
      %vm767 = vcmp.lt.s32.totalorder %v541, 0
      %vm768 = vcmp.lt.s32.totalorder %v548, 0
      %vm769 = vcmp.lt.s32.totalorder %v555, 0
      %vm770 = vcmp.lt.s32.totalorder %v562, 0
      %vm771 = vcmp.lt.s32.totalorder %v569, 0
      %vm772 = vcmp.lt.s32.totalorder %v576, 0
      %vm773 = vcmp.lt.s32.totalorder %v583, 0
      %vm774 = vcmp.lt.s32.totalorder %v590, 0
      %vm775 = vcmp.lt.s32.totalorder %v597, 0
      %vm776 = vcmp.lt.s32.totalorder %v604, 0
      %vm777 = vcmp.lt.s32.totalorder %v611, 0
      %vm778 = vcmp.lt.s32.totalorder %v618, 0
      %vm779 = vcmp.lt.s32.totalorder %v625, 0
      %vm780 = vcmp.lt.s32.totalorder %v632, 0
      %vm781 = vcmp.lt.s32.totalorder %v639, 0
      %vm782 = vcmp.lt.s32.totalorder %v646, 0
      %vm783 = vcmp.lt.s32.totalorder %v653, 0
      %vm784 = vcmp.lt.s32.totalorder %v660, 0
      %vm785 = vcmp.lt.s32.totalorder %v667, 0
      %vm786 = vcmp.lt.s32.totalorder %v674, 0
      %vm787 = vcmp.lt.s32.totalorder %v681, 0
      %vm788 = vcmp.lt.s32.totalorder %v688, 0
      %vm789 = vcmp.lt.s32.totalorder %v695, 0
      %vm790 = vcmp.lt.s32.totalorder %v702, 0
      %vm791 = vcmp.lt.s32.totalorder %v709, 0
      %vm792 = vcmp.lt.s32.totalorder %v716, 0
      %vm793 = vcmp.lt.s32.totalorder %v723, 0
      %vm794 = vcmp.lt.s32.totalorder %v730, 0
      %vm795 = vmand %vm763, %vm731
      %vm796 = vmand %vm764, %vm732
      %vm797 = vmand %vm765, %vm733
      %vm798 = vmand %vm766, %vm734
      %vm799 = vmand %vm767, %vm735
      %vm800 = vmand %vm768, %vm736
      %vm801 = vmand %vm769, %vm737
      %vm802 = vmand %vm770, %vm738
      %vm803 = vmand %vm771, %vm739
      %vm804 = vmand %vm772, %vm740
      %vm805 = vmand %vm773, %vm741
      %vm806 = vmand %vm774, %vm742
      %vm807 = vmand %vm775, %vm743
      %vm808 = vmand %vm776, %vm744
      %vm809 = vmand %vm777, %vm745
      %vm810 = vmand %vm778, %vm746
      %vm811 = vmand %vm779, %vm747
      %vm812 = vmand %vm780, %vm748
      %vm813 = vmand %vm781, %vm749
      %vm814 = vmand %vm782, %vm750
      %vm815 = vmand %vm783, %vm751
      %vm816 = vmand %vm784, %vm752
      %vm817 = vmand %vm785, %vm753
      %vm818 = vmand %vm786, %vm754
      %vm819 = vmand %vm787, %vm755
      %vm820 = vmand %vm788, %vm756
      %vm821 = vmand %vm789, %vm757
      %vm822 = vmand %vm790, %vm758
      %vm823 = vmand %vm791, %vm759
      %vm824 = vmand %vm792, %vm760
      %vm825 = vmand %vm793, %vm761
      %vm826 = vmand %vm794, %vm762
      %v827 = vadd.s32 %v513, 16
      %v828 = vadd.s32 %v520, 16
      %v829 = vadd.s32 %v527, 16
      %v830 = vadd.s32 %v534, 16
      %v831 = vadd.s32 %v541, 16
      %v832 = vadd.s32 %v548, 16
      %v833 = vadd.s32 %v555, 16
      %v834 = vadd.s32 %v562, 16
      %v835 = vadd.s32 %v569, 16
      %v836 = vadd.s32 %v576, 16
      %v837 = vadd.s32 %v583, 16
      %v838 = vadd.s32 %v590, 16
      %v839 = vadd.s32 %v597, 16
      %v840 = vadd.s32 %v604, 16
      %v841 = vadd.s32 %v611, 16
      %v842 = vadd.s32 %v618, 16
      %v843 = vadd.s32 %v625, 16
      %v844 = vadd.s32 %v632, 16
      %v845 = vadd.s32 %v639, 16
      %v846 = vadd.s32 %v646, 16
      %v847 = vadd.s32 %v653, 16
      %v848 = vadd.s32 %v660, 16
      %v849 = vadd.s32 %v667, 16
      %v850 = vadd.s32 %v674, 16
      %v851 = vadd.s32 %v681, 16
      %v852 = vadd.s32 %v688, 16
      %v853 = vadd.s32 %v695, 16
      %v854 = vadd.s32 %v702, 16
      %v855 = vadd.s32 %v709, 16
      %v856 = vadd.s32 %v716, 16
      %v857 = vadd.s32 %v723, 16
      %v858 = vadd.s32 %v730, 16
      %v859 = vsel %vm795, %v827, %v513
      %v860 = vsel %vm796, %v828, %v520
      %v861 = vsel %vm797, %v829, %v527
      %v862 = vsel %vm798, %v830, %v534
      %v863 = vsel %vm799, %v831, %v541
      %v864 = vsel %vm800, %v832, %v548
      %v865 = vsel %vm801, %v833, %v555
      %v866 = vsel %vm802, %v834, %v562
      %v867 = vsel %vm803, %v835, %v569
      %v868 = vsel %vm804, %v836, %v576
      %v869 = vsel %vm805, %v837, %v583
      %v870 = vsel %vm806, %v838, %v590
      %v871 = vsel %vm807, %v839, %v597
      %v872 = vsel %vm808, %v840, %v604
      %v873 = vsel %vm809, %v841, %v611
      %v874 = vsel %vm810, %v842, %v618
      %v875 = vsel %vm811, %v843, %v625
      %v876 = vsel %vm812, %v844, %v632
      %v877 = vsel %vm813, %v845, %v639
      %v878 = vsel %vm814, %v846, %v646
      %v879 = vsel %vm815, %v847, %v653
      %v880 = vsel %vm816, %v848, %v660
      %v881 = vsel %vm817, %v849, %v667
      %v882 = vsel %vm818, %v850, %v674
      %v883 = vsel %vm819, %v851, %v681
      %v884 = vsel %vm820, %v852, %v688
      %v885 = vsel %vm821, %v853, %v695
      %v886 = vsel %vm822, %v854, %v702
      %v887 = vsel %vm823, %v855, %v709
      %v888 = vsel %vm824, %v856, %v716
      %v889 = vsel %vm825, %v857, %v723
      %v890 = vsel %vm826, %v858, %v730
      %vm891 = vcmp.ne.s32.totalorder %v859, 0
      %vm892 = vcmp.ne.s32.totalorder %v860, 0
      %vm893 = vcmp.ne.s32.totalorder %v861, 0
      %vm894 = vcmp.ne.s32.totalorder %v862, 0
      %vm895 = vcmp.ne.s32.totalorder %v863, 0
      %vm896 = vcmp.ne.s32.totalorder %v864, 0
      %vm897 = vcmp.ne.s32.totalorder %v865, 0
      %vm898 = vcmp.ne.s32.totalorder %v866, 0
      %vm899 = vcmp.ne.s32.totalorder %v867, 0
      %vm900 = vcmp.ne.s32.totalorder %v868, 0
      %vm901 = vcmp.ne.s32.totalorder %v869, 0
      %vm902 = vcmp.ne.s32.totalorder %v870, 0
      %vm903 = vcmp.ne.s32.totalorder %v871, 0
      %vm904 = vcmp.ne.s32.totalorder %v872, 0
      %vm905 = vcmp.ne.s32.totalorder %v873, 0
      %vm906 = vcmp.ne.s32.totalorder %v874, 0
      %vm907 = vcmp.ne.s32.totalorder %v875, 0
      %vm908 = vcmp.ne.s32.totalorder %v876, 0
      %vm909 = vcmp.ne.s32.totalorder %v877, 0
      %vm910 = vcmp.ne.s32.totalorder %v878, 0
      %vm911 = vcmp.ne.s32.totalorder %v879, 0
      %vm912 = vcmp.ne.s32.totalorder %v880, 0
      %vm913 = vcmp.ne.s32.totalorder %v881, 0
      %vm914 = vcmp.ne.s32.totalorder %v882, 0
      %vm915 = vcmp.ne.s32.totalorder %v883, 0
      %vm916 = vcmp.ne.s32.totalorder %v884, 0
      %vm917 = vcmp.ne.s32.totalorder %v885, 0
      %vm918 = vcmp.ne.s32.totalorder %v886, 0
      %vm919 = vcmp.ne.s32.totalorder %v887, 0
      %vm920 = vcmp.ne.s32.totalorder %v888, 0
      %vm921 = vcmp.ne.s32.totalorder %v889, 0
      %vm922 = vcmp.ne.s32.totalorder %v890, 0
      %vm923 = vcmp.ne.s32.totalorder %v859, 15
      %vm924 = vcmp.ne.s32.totalorder %v860, 15
      %vm925 = vcmp.ne.s32.totalorder %v861, 15
      %vm926 = vcmp.ne.s32.totalorder %v862, 15
      %vm927 = vcmp.ne.s32.totalorder %v863, 15
      %vm928 = vcmp.ne.s32.totalorder %v864, 15
      %vm929 = vcmp.ne.s32.totalorder %v865, 15
      %vm930 = vcmp.ne.s32.totalorder %v866, 15
      %vm931 = vcmp.ne.s32.totalorder %v867, 15
      %vm932 = vcmp.ne.s32.totalorder %v868, 15
      %vm933 = vcmp.ne.s32.totalorder %v869, 15
      %vm934 = vcmp.ne.s32.totalorder %v870, 15
      %vm935 = vcmp.ne.s32.totalorder %v871, 15
      %vm936 = vcmp.ne.s32.totalorder %v872, 15
      %vm937 = vcmp.ne.s32.totalorder %v873, 15
      %vm938 = vcmp.ne.s32.totalorder %v874, 15
      %vm939 = vcmp.ne.s32.totalorder %v875, 15
      %vm940 = vcmp.ne.s32.totalorder %v876, 15
      %vm941 = vcmp.ne.s32.totalorder %v877, 15
      %vm942 = vcmp.ne.s32.totalorder %v878, 15
      %vm943 = vcmp.ne.s32.totalorder %v879, 15
      %vm944 = vcmp.ne.s32.totalorder %v880, 15
      %vm945 = vcmp.ne.s32.totalorder %v881, 15
      %vm946 = vcmp.ne.s32.totalorder %v882, 15
      %vm947 = vcmp.ne.s32.totalorder %v883, 15
      %vm948 = vcmp.ne.s32.totalorder %v884, 15
      %vm949 = vcmp.ne.s32.totalorder %v885, 15
      %vm950 = vcmp.ne.s32.totalorder %v886, 15
      %vm951 = vcmp.ne.s32.totalorder %v887, 15
      %vm952 = vcmp.ne.s32.totalorder %v888, 15
      %vm953 = vcmp.ne.s32.totalorder %v889, 15
      %vm954 = vcmp.ne.s32.totalorder %v890, 15
      %v955 = vld [vmem:[#allocation2] sm:$0xff]
      %v956 = vld [vmem:[#allocation2 + $0x8] sm:$0xff]
      %v957 = vld [vmem:[#allocation2 + $0x10] sm:$0xff]
      %v958 = vld [vmem:[#allocation2 + $0x18] sm:$0xff]
      %v959 = vld [vmem:[#allocation2 + $0x20] sm:$0xff]
      %v960 = vld [vmem:[#allocation2 + $0x28] sm:$0xff]
      %v961 = vld [vmem:[#allocation2 + $0x30] sm:$0xff]
      %v962 = vld [vmem:[#allocation2 + $0x38] sm:$0xff]
      %v963 = vld [vmem:[#allocation2 + $0x40] sm:$0xff]
      %v964 = vld [vmem:[#allocation2 + $0x48] sm:$0xff]
      %v965 = vld [vmem:[#allocation2 + $0x50] sm:$0xff]
      %v966 = vld [vmem:[#allocation2 + $0x58] sm:$0xff]
      %v967 = vld [vmem:[#allocation2 + $0x60] sm:$0xff]
      %v968 = vld [vmem:[#allocation2 + $0x68] sm:$0xff]
      %v969 = vld [vmem:[#allocation2 + $0x70] sm:$0xff]
      %v970 = vld [vmem:[#allocation2 + $0x78] sm:$0xff]
      %v971 = vld [vmem:[#allocation2 + $0x80] sm:$0xff]
      %v972 = vld [vmem:[#allocation2 + $0x88] sm:$0xff]
      %v973 = vld [vmem:[#allocation2 + $0x90] sm:$0xff]
      %v974 = vld [vmem:[#allocation2 + $0x98] sm:$0xff]
      %v975 = vld [vmem:[#allocation2 + $0xa0] sm:$0xff]
      %v976 = vld [vmem:[#allocation2 + $0xa8] sm:$0xff]
      %v977 = vld [vmem:[#allocation2 + $0xb0] sm:$0xff]
      %v978 = vld [vmem:[#allocation2 + $0xb8] sm:$0xff]
      %v979 = vld [vmem:[#allocation2 + $0xc0] sm:$0xff]
      %v980 = vld [vmem:[#allocation2 + $0xc8] sm:$0xff]
      %v981 = vld [vmem:[#allocation2 + $0xd0] sm:$0xff]
      %v982 = vld [vmem:[#allocation2 + $0xd8] sm:$0xff]
      %v983 = vld [vmem:[#allocation2 + $0xe0] sm:$0xff]
      %v984 = vld [vmem:[#allocation2 + $0xe8] sm:$0xff]
      %v985 = vld [vmem:[#allocation2 + $0xf0] sm:$0xff]
      %v986 = vld [vmem:[#allocation2 + $0xf8] sm:$0xff]
      %v987 = vsel %vm891, 1, 0
      %v988 = vsel %vm892, 1, 0
      %v989 = vsel %vm893, 1, 0
      %v990 = vsel %vm894, 1, 0
      %v991 = vsel %vm895, 1, 0
      %v992 = vsel %vm896, 1, 0
      %v993 = vsel %vm897, 1, 0
      %v994 = vsel %vm898, 1, 0
      %v995 = vsel %vm899, 1, 0
      %v996 = vsel %vm900, 1, 0
      %v997 = vsel %vm901, 1, 0
      %v998 = vsel %vm902, 1, 0
      %v999 = vsel %vm903, 1, 0
      %v1000 = vsel %vm904, 1, 0
      %v1001 = vsel %vm905, 1, 0
      %v1002 = vsel %vm906, 1, 0
      %v1003 = vsel %vm907, 1, 0
      %v1004 = vsel %vm908, 1, 0
      %v1005 = vsel %vm909, 1, 0
      %v1006 = vsel %vm910, 1, 0
      %v1007 = vsel %vm911, 1, 0
      %v1008 = vsel %vm912, 1, 0
      %v1009 = vsel %vm913, 1, 0
      %v1010 = vsel %vm914, 1, 0
      %v1011 = vsel %vm915, 1, 0
      %v1012 = vsel %vm916, 1, 0
      %v1013 = vsel %vm917, 1, 0
      %v1014 = vsel %vm918, 1, 0
      %v1015 = vsel %vm919, 1, 0
      %v1016 = vsel %vm920, 1, 0
      %v1017 = vsel %vm921, 1, 0
      %v1018 = vsel %vm922, 1, 0
      %vm1019 = vcmp.eq.s32.totalorder %v987, 1
      %vm1020 = vcmp.eq.s32.totalorder %v988, 1
      %vm1021 = vcmp.eq.s32.totalorder %v989, 1
      %vm1022 = vcmp.eq.s32.totalorder %v990, 1
      %vm1023 = vcmp.eq.s32.totalorder %v991, 1
      %vm1024 = vcmp.eq.s32.totalorder %v992, 1
      %vm1025 = vcmp.eq.s32.totalorder %v993, 1
      %vm1026 = vcmp.eq.s32.totalorder %v994, 1
      %vm1027 = vcmp.eq.s32.totalorder %v995, 1
      %vm1028 = vcmp.eq.s32.totalorder %v996, 1
      %vm1029 = vcmp.eq.s32.totalorder %v997, 1
      %vm1030 = vcmp.eq.s32.totalorder %v998, 1
      %vm1031 = vcmp.eq.s32.totalorder %v999, 1
      %vm1032 = vcmp.eq.s32.totalorder %v1000, 1
      %vm1033 = vcmp.eq.s32.totalorder %v1001, 1
      %vm1034 = vcmp.eq.s32.totalorder %v1002, 1
      %vm1035 = vcmp.eq.s32.totalorder %v1003, 1
      %vm1036 = vcmp.eq.s32.totalorder %v1004, 1
      %vm1037 = vcmp.eq.s32.totalorder %v1005, 1
      %vm1038 = vcmp.eq.s32.totalorder %v1006, 1
      %vm1039 = vcmp.eq.s32.totalorder %v1007, 1
      %vm1040 = vcmp.eq.s32.totalorder %v1008, 1
      %vm1041 = vcmp.eq.s32.totalorder %v1009, 1
      %vm1042 = vcmp.eq.s32.totalorder %v1010, 1
      %vm1043 = vcmp.eq.s32.totalorder %v1011, 1
      %vm1044 = vcmp.eq.s32.totalorder %v1012, 1
      %vm1045 = vcmp.eq.s32.totalorder %v1013, 1
      %vm1046 = vcmp.eq.s32.totalorder %v1014, 1
      %vm1047 = vcmp.eq.s32.totalorder %v1015, 1
      %vm1048 = vcmp.eq.s32.totalorder %v1016, 1
      %vm1049 = vcmp.eq.s32.totalorder %v1017, 1
      %vm1050 = vcmp.eq.s32.totalorder %v1018, 1
      %v1051 = vsel %vm1019, %v955, 0.0
      %v1052 = vsel %vm1020, %v956, 0.0
      %v1053 = vsel %vm1021, %v957, 0.0
      %v1054 = vsel %vm1022, %v958, 0.0
      %v1055 = vsel %vm1023, %v959, 0.0
      %v1056 = vsel %vm1024, %v960, 0.0
      %v1057 = vsel %vm1025, %v961, 0.0
      %v1058 = vsel %vm1026, %v962, 0.0
      %v1059 = vsel %vm1027, %v963, 0.0
      %v1060 = vsel %vm1028, %v964, 0.0
      %v1061 = vsel %vm1029, %v965, 0.0
      %v1062 = vsel %vm1030, %v966, 0.0
      %v1063 = vsel %vm1031, %v967, 0.0
      %v1064 = vsel %vm1032, %v968, 0.0
      %v1065 = vsel %vm1033, %v969, 0.0
      %v1066 = vsel %vm1034, %v970, 0.0
      %v1067 = vsel %vm1035, %v971, 0.0
      %v1068 = vsel %vm1036, %v972, 0.0
      %v1069 = vsel %vm1037, %v973, 0.0
      %v1070 = vsel %vm1038, %v974, 0.0
      %v1071 = vsel %vm1039, %v975, 0.0
      %v1072 = vsel %vm1040, %v976, 0.0
      %v1073 = vsel %vm1041, %v977, 0.0
      %v1074 = vsel %vm1042, %v978, 0.0
      %v1075 = vsel %vm1043, %v979, 0.0
      %v1076 = vsel %vm1044, %v980, 0.0
      %v1077 = vsel %vm1045, %v981, 0.0
      %v1078 = vsel %vm1046, %v982, 0.0
      %v1079 = vsel %vm1047, %v983, 0.0
      %v1080 = vsel %vm1048, %v984, 0.0
      %v1081 = vsel %vm1049, %v985, 0.0
      %v1082 = vsel %vm1050, %v986, 0.0
      %v1083 = vpack.c.bf16 %v1052, %v1051
      %v1084 = vpack.c.bf16 %v1054, %v1053
      %v1085 = vpack.c.bf16 %v1056, %v1055
      %v1086 = vpack.c.bf16 %v1058, %v1057
      %v1087 = vpack.c.bf16 %v1060, %v1059
      %v1088 = vpack.c.bf16 %v1062, %v1061
      %v1089 = vpack.c.bf16 %v1064, %v1063
      %v1090 = vpack.c.bf16 %v1066, %v1065
      %v1091 = vpack.c.bf16 %v1068, %v1067
      %v1092 = vpack.c.bf16 %v1070, %v1069
      %v1093 = vpack.c.bf16 %v1072, %v1071
      %v1094 = vpack.c.bf16 %v1074, %v1073
      %v1095 = vpack.c.bf16 %v1076, %v1075
      %v1096 = vpack.c.bf16 %v1078, %v1077
      %v1097 = vpack.c.bf16 %v1080, %v1079
      %v1098 = vpack.c.bf16 %v1082, %v1081
      %v1099 = vld [vmem:[%s2] sm:$0xf]
      %v1100 = vld [vmem:[%s2 + $0x4] sm:$0xf]
      %v1101 = vld [vmem:[%s2 + $0x8] sm:$0xf]
      %v1102 = vld [vmem:[%s2 + $0xc] sm:$0xf]
      %v1103 = vld [vmem:[%s2 + $0x10] sm:$0xf]
      %v1104 = vld [vmem:[%s2 + $0x14] sm:$0xf]
      %v1105 = vld [vmem:[%s2 + $0x18] sm:$0xf]
      %v1106 = vld [vmem:[%s2 + $0x1c] sm:$0xf]
      %v1107 = vld [vmem:[%s2 + $0x20] sm:$0xf]
      %v1108 = vld [vmem:[%s2 + $0x24] sm:$0xf]
      %v1109 = vld [vmem:[%s2 + $0x28] sm:$0xf]
      %v1110 = vld [vmem:[%s2 + $0x2c] sm:$0xf]
      %v1111 = vld [vmem:[%s2 + $0x30] sm:$0xf]
      %v1112 = vld [vmem:[%s2 + $0x34] sm:$0xf]
      %v1113 = vld [vmem:[%s2 + $0x38] sm:$0xf]
      %v1114 = vld [vmem:[%s2 + $0x3c] sm:$0xf]
      %v1115 = vld [vmem:[#allocation2 + $0x1] sm:$0xff]
      %v1116 = vld [vmem:[#allocation2 + $0x9] sm:$0xff]
      %v1117 = vld [vmem:[#allocation2 + $0x11] sm:$0xff]
      %v1118 = vld [vmem:[#allocation2 + $0x19] sm:$0xff]
      %v1119 = vld [vmem:[#allocation2 + $0x21] sm:$0xff]
      %v1120 = vld [vmem:[#allocation2 + $0x29] sm:$0xff]
      %v1121 = vld [vmem:[#allocation2 + $0x31] sm:$0xff]
      %v1122 = vld [vmem:[#allocation2 + $0x39] sm:$0xff]
      %v1123 = vld [vmem:[#allocation2 + $0x41] sm:$0xff]
      %v1124 = vld [vmem:[#allocation2 + $0x49] sm:$0xff]
      %v1125 = vld [vmem:[#allocation2 + $0x51] sm:$0xff]
      %v1126 = vld [vmem:[#allocation2 + $0x59] sm:$0xff]
      %v1127 = vld [vmem:[#allocation2 + $0x61] sm:$0xff]
      %v1128 = vld [vmem:[#allocation2 + $0x69] sm:$0xff]
      %v1129 = vld [vmem:[#allocation2 + $0x71] sm:$0xff]
      %v1130 = vld [vmem:[#allocation2 + $0x79] sm:$0xff]
      %v1131 = vld [vmem:[#allocation2 + $0x81] sm:$0xff]
      %v1132 = vld [vmem:[#allocation2 + $0x89] sm:$0xff]
      %v1133 = vld [vmem:[#allocation2 + $0x91] sm:$0xff]
      %v1134 = vld [vmem:[#allocation2 + $0x99] sm:$0xff]
      %v1135 = vld [vmem:[#allocation2 + $0xa1] sm:$0xff]
      %v1136 = vld [vmem:[#allocation2 + $0xa9] sm:$0xff]
      %v1137 = vld [vmem:[#allocation2 + $0xb1] sm:$0xff]
      %v1138 = vld [vmem:[#allocation2 + $0xb9] sm:$0xff]
      %v1139 = vld [vmem:[#allocation2 + $0xc1] sm:$0xff]
      %v1140 = vld [vmem:[#allocation2 + $0xc9] sm:$0xff]
      %v1141 = vld [vmem:[#allocation2 + $0xd1] sm:$0xff]
      %v1142 = vld [vmem:[#allocation2 + $0xd9] sm:$0xff]
      %v1143 = vld [vmem:[#allocation2 + $0xe1] sm:$0xff]
      %v1144 = vld [vmem:[#allocation2 + $0xe9] sm:$0xff]
      %v1145 = vld [vmem:[#allocation2 + $0xf1] sm:$0xff]
      %v1146 = vld [vmem:[#allocation2 + $0xf9] sm:$0xff]
      %v1147 = vpack.c.bf16 %v1116, %v1115
      %v1148 = vpack.c.bf16 %v1118, %v1117
      %v1149 = vpack.c.bf16 %v1120, %v1119
      %v1150 = vpack.c.bf16 %v1122, %v1121
      %v1151 = vpack.c.bf16 %v1124, %v1123
      %v1152 = vpack.c.bf16 %v1126, %v1125
      %v1153 = vpack.c.bf16 %v1128, %v1127
      %v1154 = vpack.c.bf16 %v1130, %v1129
      %v1155 = vpack.c.bf16 %v1132, %v1131
      %v1156 = vpack.c.bf16 %v1134, %v1133
      %v1157 = vpack.c.bf16 %v1136, %v1135
      %v1158 = vpack.c.bf16 %v1138, %v1137
      %v1159 = vpack.c.bf16 %v1140, %v1139
      %v1160 = vpack.c.bf16 %v1142, %v1141
      %v1161 = vpack.c.bf16 %v1144, %v1143
      %v1162 = vpack.c.bf16 %v1146, %v1145
      %s1163 = scalar_lea.vmem %s2, 64
      %v1164 = vld [vmem:[%s1163] sm:$0xf]
      %v1165 = vld [vmem:[%s1163 + $0x4] sm:$0xf]
      %v1166 = vld [vmem:[%s1163 + $0x8] sm:$0xf]
      %v1167 = vld [vmem:[%s1163 + $0xc] sm:$0xf]
      %v1168 = vld [vmem:[%s1163 + $0x10] sm:$0xf]
      %v1169 = vld [vmem:[%s1163 + $0x14] sm:$0xf]
      %v1170 = vld [vmem:[%s1163 + $0x18] sm:$0xf]
      %v1171 = vld [vmem:[%s1163 + $0x1c] sm:$0xf]
      %v1172 = vld [vmem:[%s1163 + $0x20] sm:$0xf]
      %v1173 = vld [vmem:[%s1163 + $0x24] sm:$0xf]
      %v1174 = vld [vmem:[%s1163 + $0x28] sm:$0xf]
      %v1175 = vld [vmem:[%s1163 + $0x2c] sm:$0xf]
      %v1176 = vld [vmem:[%s1163 + $0x30] sm:$0xf]
      %v1177 = vld [vmem:[%s1163 + $0x34] sm:$0xf]
      %v1178 = vld [vmem:[%s1163 + $0x38] sm:$0xf]
      %v1179 = vld [vmem:[%s1163 + $0x3c] sm:$0xf]
      %v1196 = vunpack.c.l.b16 %v1164
      %v1197 = vunpack.c.l.b16 %v1165
      %v1198 = vunpack.c.l.b16 %v1166
      %v1199 = vunpack.c.l.b16 %v1167
      %v1200 = vunpack.c.l.b16 %v1168
      %v1201 = vunpack.c.l.b16 %v1169
      %v1202 = vunpack.c.l.b16 %v1170
      %v1203 = vunpack.c.l.b16 %v1171
      %v1204 = vunpack.c.l.b16 %v1172
      %v1205 = vunpack.c.l.b16 %v1173
      %v1206 = vunpack.c.l.b16 %v1174
      %v1207 = vunpack.c.l.b16 %v1175
      %v1208 = vunpack.c.l.b16 %v1176
      %v1209 = vunpack.c.l.b16 %v1177
      %v1210 = vunpack.c.l.b16 %v1178
      %v1211 = vunpack.c.l.b16 %v1179
      %v1212 = vpack.c.b16 %v1197, %v1196
      %v1213 = vpack.c.b16 %v1199, %v1198
      %v1214 = vpack.c.b16 %v1201, %v1200
      %v1215 = vpack.c.b16 %v1203, %v1202
      %v1216 = vpack.c.b16 %v1205, %v1204
      %v1217 = vpack.c.b16 %v1207, %v1206
      %v1218 = vpack.c.b16 %v1209, %v1208
      %v1219 = vpack.c.b16 %v1211, %v1210
      %1228 = vmatpush.bf16.msra.mxu0 %v1219
      %1229 = vmatpush.bf16.msra.mxu0 %v1218
      %1230 = vmatpush.bf16.msra.mxu0 %v1217
      %1231 = vmatpush.bf16.msra.mxu0 %v1216
      %1232 = vmatpush.bf16.msra.mxu0 %v1215
      %1233 = vmatpush.bf16.msra.mxu0 %v1214
      %1234 = vmatpush.bf16.msra.mxu0 %v1213
      %1235 = vmatpush.bf16.msra.mxu0 %v1212
      %1236 = vmatmul.bf16.gmra.mxu0 %v1147
      %v1237 = vpop.f32.mrf.mxu0
      %v1238 = vadd.f32 0.0, %v1237
      %v1239 = vpop.f32.mrf.mxu0
      %v1240 = vadd.f32 0.0, %v1239
      %1241 = vmatmul.bf16.gmra.mxu0 %v1148
      %v1242 = vpop.f32.mrf.mxu0
      %v1243 = vadd.f32 0.0, %v1242
      %v1244 = vpop.f32.mrf.mxu0
      %v1245 = vadd.f32 0.0, %v1244
      %1246 = vmatmul.bf16.gmra.mxu0 %v1149
      %v1247 = vpop.f32.mrf.mxu0
      %v1248 = vadd.f32 0.0, %v1247
      %v1249 = vpop.f32.mrf.mxu0
      %v1250 = vadd.f32 0.0, %v1249
      %1251 = vmatmul.bf16.gmra.mxu0 %v1150
      %v1252 = vpop.f32.mrf.mxu0
      %v1253 = vadd.f32 0.0, %v1252
      %v1254 = vpop.f32.mrf.mxu0
      %v1255 = vadd.f32 0.0, %v1254
      %1256 = vmatmul.bf16.gmra.mxu0 %v1151
      %v1257 = vpop.f32.mrf.mxu0
      %v1258 = vadd.f32 0.0, %v1257
      %v1259 = vpop.f32.mrf.mxu0
      %v1260 = vadd.f32 0.0, %v1259
      %1261 = vmatmul.bf16.gmra.mxu0 %v1152
      %v1262 = vpop.f32.mrf.mxu0
      %v1263 = vadd.f32 0.0, %v1262
      %v1264 = vpop.f32.mrf.mxu0
      %v1265 = vadd.f32 0.0, %v1264
      %1266 = vmatmul.bf16.gmra.mxu0 %v1153
      %v1267 = vpop.f32.mrf.mxu0
      %v1268 = vadd.f32 0.0, %v1267
      %v1269 = vpop.f32.mrf.mxu0
      %v1270 = vadd.f32 0.0, %v1269
      %1271 = vmatmul.bf16.gmra.mxu0 %v1154
      %v1272 = vpop.f32.mrf.mxu0
      %v1273 = vadd.f32 0.0, %v1272
      %v1274 = vpop.f32.mrf.mxu0
      %v1275 = vadd.f32 0.0, %v1274
      %1276 = vmatmul.bf16.gmra.mxu0 %v1155
      %v1277 = vpop.f32.mrf.mxu0
      %v1278 = vadd.f32 0.0, %v1277
      %v1279 = vpop.f32.mrf.mxu0
      %v1280 = vadd.f32 0.0, %v1279
      %1281 = vmatmul.bf16.gmra.mxu0 %v1156
      %v1282 = vpop.f32.mrf.mxu0
      %v1283 = vadd.f32 0.0, %v1282
      %v1284 = vpop.f32.mrf.mxu0
      %v1285 = vadd.f32 0.0, %v1284
      %1286 = vmatmul.bf16.gmra.mxu0 %v1157
      %v1287 = vpop.f32.mrf.mxu0
      %v1288 = vadd.f32 0.0, %v1287
      %v1289 = vpop.f32.mrf.mxu0
      %v1290 = vadd.f32 0.0, %v1289
      %1291 = vmatmul.bf16.gmra.mxu0 %v1158
      %v1292 = vpop.f32.mrf.mxu0
      %v1293 = vadd.f32 0.0, %v1292
      %v1294 = vpop.f32.mrf.mxu0
      %v1295 = vadd.f32 0.0, %v1294
      %1296 = vmatmul.bf16.gmra.mxu0 %v1159
      %v1297 = vpop.f32.mrf.mxu0
      %v1298 = vadd.f32 0.0, %v1297
      %v1299 = vpop.f32.mrf.mxu0
      %v1300 = vadd.f32 0.0, %v1299
      %1301 = vmatmul.bf16.gmra.mxu0 %v1160
      %v1302 = vpop.f32.mrf.mxu0
      %v1303 = vadd.f32 0.0, %v1302
      %v1304 = vpop.f32.mrf.mxu0
      %v1305 = vadd.f32 0.0, %v1304
      %1306 = vmatmul.bf16.gmra.mxu0 %v1161
      %v1307 = vpop.f32.mrf.mxu0
      %v1308 = vadd.f32 0.0, %v1307
      %v1309 = vpop.f32.mrf.mxu0
      %v1310 = vadd.f32 0.0, %v1309
      %1311 = vmatmul.bf16.gmra.mxu0 %v1162
      %v1312 = vpop.f32.mrf.mxu0
      %v1313 = vadd.f32 0.0, %v1312
      %v1314 = vpop.f32.mrf.mxu0
      %v1315 = vadd.f32 0.0, %v1314
      %1316 = vdwg.mxu0
      %v1333 = vunpack.c.l.b16 %v1099
      %v1334 = vunpack.c.l.b16 %v1100
      %v1335 = vunpack.c.l.b16 %v1101
      %v1336 = vunpack.c.l.b16 %v1102
      %v1337 = vunpack.c.l.b16 %v1103
      %v1338 = vunpack.c.l.b16 %v1104
      %v1339 = vunpack.c.l.b16 %v1105
      %v1340 = vunpack.c.l.b16 %v1106
      %v1341 = vunpack.c.l.b16 %v1107
      %v1342 = vunpack.c.l.b16 %v1108
      %v1343 = vunpack.c.l.b16 %v1109
      %v1344 = vunpack.c.l.b16 %v1110
      %v1345 = vunpack.c.l.b16 %v1111
      %v1346 = vunpack.c.l.b16 %v1112
      %v1347 = vunpack.c.l.b16 %v1113
      %v1348 = vunpack.c.l.b16 %v1114
      %v1349 = vpack.c.b16 %v1334, %v1333
      %v1350 = vpack.c.b16 %v1336, %v1335
      %v1351 = vpack.c.b16 %v1338, %v1337
      %v1352 = vpack.c.b16 %v1340, %v1339
      %v1353 = vpack.c.b16 %v1342, %v1341
      %v1354 = vpack.c.b16 %v1344, %v1343
      %v1355 = vpack.c.b16 %v1346, %v1345
      %v1356 = vpack.c.b16 %v1348, %v1347
      %1365 = vmatpush.bf16.msra.mxu0 %v1356
      %1366 = vmatpush.bf16.msra.mxu0 %v1355
      %1367 = vmatpush.bf16.msra.mxu0 %v1354
      %1368 = vmatpush.bf16.msra.mxu0 %v1353
      %1369 = vmatpush.bf16.msra.mxu0 %v1352
      %1370 = vmatpush.bf16.msra.mxu0 %v1351
      %1371 = vmatpush.bf16.msra.mxu0 %v1350
      %1372 = vmatpush.bf16.msra.mxu0 %v1349
      %1373 = vmatmul.bf16.gmra.mxu0 %v1083
      %v1374 = vpop.f32.mrf.mxu0
      %v1375 = vadd.f32 %v1238, %v1374
      %v1376 = vpop.f32.mrf.mxu0
      %v1377 = vadd.f32 %v1240, %v1376
      %1378 = vmatmul.bf16.gmra.mxu0 %v1084
      %v1379 = vpop.f32.mrf.mxu0
      %v1380 = vadd.f32 %v1243, %v1379
      %v1381 = vpop.f32.mrf.mxu0
      %v1382 = vadd.f32 %v1245, %v1381
      %1383 = vmatmul.bf16.gmra.mxu0 %v1085
      %v1384 = vpop.f32.mrf.mxu0
      %v1385 = vadd.f32 %v1248, %v1384
      %v1386 = vpop.f32.mrf.mxu0
      %v1387 = vadd.f32 %v1250, %v1386
      %1388 = vmatmul.bf16.gmra.mxu0 %v1086
      %v1389 = vpop.f32.mrf.mxu0
      %v1390 = vadd.f32 %v1253, %v1389
      %v1391 = vpop.f32.mrf.mxu0
      %v1392 = vadd.f32 %v1255, %v1391
      %1393 = vmatmul.bf16.gmra.mxu0 %v1087
      %v1394 = vpop.f32.mrf.mxu0
      %v1395 = vadd.f32 %v1258, %v1394
      %v1396 = vpop.f32.mrf.mxu0
      %v1397 = vadd.f32 %v1260, %v1396
      %1398 = vmatmul.bf16.gmra.mxu0 %v1088
      %v1399 = vpop.f32.mrf.mxu0
      %v1400 = vadd.f32 %v1263, %v1399
      %v1401 = vpop.f32.mrf.mxu0
      %v1402 = vadd.f32 %v1265, %v1401
      %1403 = vmatmul.bf16.gmra.mxu0 %v1089
      %v1404 = vpop.f32.mrf.mxu0
      %v1405 = vadd.f32 %v1268, %v1404
      %v1406 = vpop.f32.mrf.mxu0
      %v1407 = vadd.f32 %v1270, %v1406
      %1408 = vmatmul.bf16.gmra.mxu0 %v1090
      %v1409 = vpop.f32.mrf.mxu0
      %v1410 = vadd.f32 %v1273, %v1409
      %v1411 = vpop.f32.mrf.mxu0
      %v1412 = vadd.f32 %v1275, %v1411
      %1413 = vmatmul.bf16.gmra.mxu0 %v1091
      %v1414 = vpop.f32.mrf.mxu0
      %v1415 = vadd.f32 %v1278, %v1414
      %v1416 = vpop.f32.mrf.mxu0
      %v1417 = vadd.f32 %v1280, %v1416
      %1418 = vmatmul.bf16.gmra.mxu0 %v1092
      %v1419 = vpop.f32.mrf.mxu0
      %v1420 = vadd.f32 %v1283, %v1419
      %v1421 = vpop.f32.mrf.mxu0
      %v1422 = vadd.f32 %v1285, %v1421
      %1423 = vmatmul.bf16.gmra.mxu0 %v1093
      %v1424 = vpop.f32.mrf.mxu0
      %v1425 = vadd.f32 %v1288, %v1424
      %v1426 = vpop.f32.mrf.mxu0
      %v1427 = vadd.f32 %v1290, %v1426
      %1428 = vmatmul.bf16.gmra.mxu0 %v1094
      %v1429 = vpop.f32.mrf.mxu0
      %v1430 = vadd.f32 %v1293, %v1429
      %v1431 = vpop.f32.mrf.mxu0
      %v1432 = vadd.f32 %v1295, %v1431
      %1433 = vmatmul.bf16.gmra.mxu0 %v1095
      %v1434 = vpop.f32.mrf.mxu0
      %v1435 = vadd.f32 %v1298, %v1434
      %v1436 = vpop.f32.mrf.mxu0
      %v1437 = vadd.f32 %v1300, %v1436
      %1438 = vmatmul.bf16.gmra.mxu0 %v1096
      %v1439 = vpop.f32.mrf.mxu0
      %v1440 = vadd.f32 %v1303, %v1439
      %v1441 = vpop.f32.mrf.mxu0
      %v1442 = vadd.f32 %v1305, %v1441
      %1443 = vmatmul.bf16.gmra.mxu0 %v1097
      %v1444 = vpop.f32.mrf.mxu0
      %v1445 = vadd.f32 %v1308, %v1444
      %v1446 = vpop.f32.mrf.mxu0
      %v1447 = vadd.f32 %v1310, %v1446
      %1448 = vmatmul.bf16.gmra.mxu0 %v1098
      %v1449 = vpop.f32.mrf.mxu0
      %v1450 = vadd.f32 %v1313, %v1449
      %v1451 = vpop.f32.mrf.mxu0
      %v1452 = vadd.f32 %v1315, %v1451
      %1453 = vdwg.mxu0
      %v1454 = vld [vmem:[#allocation2 + $0x2] sm:$0xff]
      %v1455 = vld [vmem:[#allocation2 + $0xa] sm:$0xff]
      %v1456 = vld [vmem:[#allocation2 + $0x12] sm:$0xff]
      %v1457 = vld [vmem:[#allocation2 + $0x1a] sm:$0xff]
      %v1458 = vld [vmem:[#allocation2 + $0x22] sm:$0xff]
      %v1459 = vld [vmem:[#allocation2 + $0x2a] sm:$0xff]
      %v1460 = vld [vmem:[#allocation2 + $0x32] sm:$0xff]
      %v1461 = vld [vmem:[#allocation2 + $0x3a] sm:$0xff]
      %v1462 = vld [vmem:[#allocation2 + $0x42] sm:$0xff]
      %v1463 = vld [vmem:[#allocation2 + $0x4a] sm:$0xff]
      %v1464 = vld [vmem:[#allocation2 + $0x52] sm:$0xff]
      %v1465 = vld [vmem:[#allocation2 + $0x5a] sm:$0xff]
      %v1466 = vld [vmem:[#allocation2 + $0x62] sm:$0xff]
      %v1467 = vld [vmem:[#allocation2 + $0x6a] sm:$0xff]
      %v1468 = vld [vmem:[#allocation2 + $0x72] sm:$0xff]
      %v1469 = vld [vmem:[#allocation2 + $0x7a] sm:$0xff]
      %v1470 = vld [vmem:[#allocation2 + $0x82] sm:$0xff]
      %v1471 = vld [vmem:[#allocation2 + $0x8a] sm:$0xff]
      %v1472 = vld [vmem:[#allocation2 + $0x92] sm:$0xff]
      %v1473 = vld [vmem:[#allocation2 + $0x9a] sm:$0xff]
      %v1474 = vld [vmem:[#allocation2 + $0xa2] sm:$0xff]
      %v1475 = vld [vmem:[#allocation2 + $0xaa] sm:$0xff]
      %v1476 = vld [vmem:[#allocation2 + $0xb2] sm:$0xff]
      %v1477 = vld [vmem:[#allocation2 + $0xba] sm:$0xff]
      %v1478 = vld [vmem:[#allocation2 + $0xc2] sm:$0xff]
      %v1479 = vld [vmem:[#allocation2 + $0xca] sm:$0xff]
      %v1480 = vld [vmem:[#allocation2 + $0xd2] sm:$0xff]
      %v1481 = vld [vmem:[#allocation2 + $0xda] sm:$0xff]
      %v1482 = vld [vmem:[#allocation2 + $0xe2] sm:$0xff]
      %v1483 = vld [vmem:[#allocation2 + $0xea] sm:$0xff]
      %v1484 = vld [vmem:[#allocation2 + $0xf2] sm:$0xff]
      %v1485 = vld [vmem:[#allocation2 + $0xfa] sm:$0xff]
      %v1486 = vsel %vm923, 1, 0
      %v1487 = vsel %vm924, 1, 0
      %v1488 = vsel %vm925, 1, 0
      %v1489 = vsel %vm926, 1, 0
      %v1490 = vsel %vm927, 1, 0
      %v1491 = vsel %vm928, 1, 0
      %v1492 = vsel %vm929, 1, 0
      %v1493 = vsel %vm930, 1, 0
      %v1494 = vsel %vm931, 1, 0
      %v1495 = vsel %vm932, 1, 0
      %v1496 = vsel %vm933, 1, 0
      %v1497 = vsel %vm934, 1, 0
      %v1498 = vsel %vm935, 1, 0
      %v1499 = vsel %vm936, 1, 0
      %v1500 = vsel %vm937, 1, 0
      %v1501 = vsel %vm938, 1, 0
      %v1502 = vsel %vm939, 1, 0
      %v1503 = vsel %vm940, 1, 0
      %v1504 = vsel %vm941, 1, 0
      %v1505 = vsel %vm942, 1, 0
      %v1506 = vsel %vm943, 1, 0
      %v1507 = vsel %vm944, 1, 0
      %v1508 = vsel %vm945, 1, 0
      %v1509 = vsel %vm946, 1, 0
      %v1510 = vsel %vm947, 1, 0
      %v1511 = vsel %vm948, 1, 0
      %v1512 = vsel %vm949, 1, 0
      %v1513 = vsel %vm950, 1, 0
      %v1514 = vsel %vm951, 1, 0
      %v1515 = vsel %vm952, 1, 0
      %v1516 = vsel %vm953, 1, 0
      %v1517 = vsel %vm954, 1, 0
      %vm1518 = vcmp.eq.s32.totalorder %v1486, 1
      %vm1519 = vcmp.eq.s32.totalorder %v1487, 1
      %vm1520 = vcmp.eq.s32.totalorder %v1488, 1
      %vm1521 = vcmp.eq.s32.totalorder %v1489, 1
      %vm1522 = vcmp.eq.s32.totalorder %v1490, 1
      %vm1523 = vcmp.eq.s32.totalorder %v1491, 1
      %vm1524 = vcmp.eq.s32.totalorder %v1492, 1
      %vm1525 = vcmp.eq.s32.totalorder %v1493, 1
      %vm1526 = vcmp.eq.s32.totalorder %v1494, 1
      %vm1527 = vcmp.eq.s32.totalorder %v1495, 1
      %vm1528 = vcmp.eq.s32.totalorder %v1496, 1
      %vm1529 = vcmp.eq.s32.totalorder %v1497, 1
      %vm1530 = vcmp.eq.s32.totalorder %v1498, 1
      %vm1531 = vcmp.eq.s32.totalorder %v1499, 1
      %vm1532 = vcmp.eq.s32.totalorder %v1500, 1
      %vm1533 = vcmp.eq.s32.totalorder %v1501, 1
      %vm1534 = vcmp.eq.s32.totalorder %v1502, 1
      %vm1535 = vcmp.eq.s32.totalorder %v1503, 1
      %vm1536 = vcmp.eq.s32.totalorder %v1504, 1
      %vm1537 = vcmp.eq.s32.totalorder %v1505, 1
      %vm1538 = vcmp.eq.s32.totalorder %v1506, 1
      %vm1539 = vcmp.eq.s32.totalorder %v1507, 1
      %vm1540 = vcmp.eq.s32.totalorder %v1508, 1
      %vm1541 = vcmp.eq.s32.totalorder %v1509, 1
      %vm1542 = vcmp.eq.s32.totalorder %v1510, 1
      %vm1543 = vcmp.eq.s32.totalorder %v1511, 1
      %vm1544 = vcmp.eq.s32.totalorder %v1512, 1
      %vm1545 = vcmp.eq.s32.totalorder %v1513, 1
      %vm1546 = vcmp.eq.s32.totalorder %v1514, 1
      %vm1547 = vcmp.eq.s32.totalorder %v1515, 1
      %vm1548 = vcmp.eq.s32.totalorder %v1516, 1
      %vm1549 = vcmp.eq.s32.totalorder %v1517, 1
      %v1550 = vsel %vm1518, %v1454, 0.0
      %v1551 = vsel %vm1519, %v1455, 0.0
      %v1552 = vsel %vm1520, %v1456, 0.0
      %v1553 = vsel %vm1521, %v1457, 0.0
      %v1554 = vsel %vm1522, %v1458, 0.0
      %v1555 = vsel %vm1523, %v1459, 0.0
      %v1556 = vsel %vm1524, %v1460, 0.0
      %v1557 = vsel %vm1525, %v1461, 0.0
      %v1558 = vsel %vm1526, %v1462, 0.0
      %v1559 = vsel %vm1527, %v1463, 0.0
      %v1560 = vsel %vm1528, %v1464, 0.0
      %v1561 = vsel %vm1529, %v1465, 0.0
      %v1562 = vsel %vm1530, %v1466, 0.0
      %v1563 = vsel %vm1531, %v1467, 0.0
      %v1564 = vsel %vm1532, %v1468, 0.0
      %v1565 = vsel %vm1533, %v1469, 0.0
      %v1566 = vsel %vm1534, %v1470, 0.0
      %v1567 = vsel %vm1535, %v1471, 0.0
      %v1568 = vsel %vm1536, %v1472, 0.0
      %v1569 = vsel %vm1537, %v1473, 0.0
      %v1570 = vsel %vm1538, %v1474, 0.0
      %v1571 = vsel %vm1539, %v1475, 0.0
      %v1572 = vsel %vm1540, %v1476, 0.0
      %v1573 = vsel %vm1541, %v1477, 0.0
      %v1574 = vsel %vm1542, %v1478, 0.0
      %v1575 = vsel %vm1543, %v1479, 0.0
      %v1576 = vsel %vm1544, %v1480, 0.0
      %v1577 = vsel %vm1545, %v1481, 0.0
      %v1578 = vsel %vm1546, %v1482, 0.0
      %v1579 = vsel %vm1547, %v1483, 0.0
      %v1580 = vsel %vm1548, %v1484, 0.0
      %v1581 = vsel %vm1549, %v1485, 0.0
      %v1582 = vpack.c.bf16 %v1551, %v1550
      %v1583 = vpack.c.bf16 %v1553, %v1552
      %v1584 = vpack.c.bf16 %v1555, %v1554
      %v1585 = vpack.c.bf16 %v1557, %v1556
      %v1586 = vpack.c.bf16 %v1559, %v1558
      %v1587 = vpack.c.bf16 %v1561, %v1560
      %v1588 = vpack.c.bf16 %v1563, %v1562
      %v1589 = vpack.c.bf16 %v1565, %v1564
      %v1590 = vpack.c.bf16 %v1567, %v1566
      %v1591 = vpack.c.bf16 %v1569, %v1568
      %v1592 = vpack.c.bf16 %v1571, %v1570
      %v1593 = vpack.c.bf16 %v1573, %v1572
      %v1594 = vpack.c.bf16 %v1575, %v1574
      %v1595 = vpack.c.bf16 %v1577, %v1576
      %v1596 = vpack.c.bf16 %v1579, %v1578
      %v1597 = vpack.c.bf16 %v1581, %v1580
      %s1598 = scalar_lea.vmem %s2, 128
      %v1599 = vld [vmem:[%s1598] sm:$0xf]
      %v1600 = vld [vmem:[%s1598 + $0x4] sm:$0xf]
      %v1601 = vld [vmem:[%s1598 + $0x8] sm:$0xf]
      %v1602 = vld [vmem:[%s1598 + $0xc] sm:$0xf]
      %v1603 = vld [vmem:[%s1598 + $0x10] sm:$0xf]
      %v1604 = vld [vmem:[%s1598 + $0x14] sm:$0xf]
      %v1605 = vld [vmem:[%s1598 + $0x18] sm:$0xf]
      %v1606 = vld [vmem:[%s1598 + $0x1c] sm:$0xf]
      %v1607 = vld [vmem:[%s1598 + $0x20] sm:$0xf]
      %v1608 = vld [vmem:[%s1598 + $0x24] sm:$0xf]
      %v1609 = vld [vmem:[%s1598 + $0x28] sm:$0xf]
      %v1610 = vld [vmem:[%s1598 + $0x2c] sm:$0xf]
      %v1611 = vld [vmem:[%s1598 + $0x30] sm:$0xf]
      %v1612 = vld [vmem:[%s1598 + $0x34] sm:$0xf]
      %v1613 = vld [vmem:[%s1598 + $0x38] sm:$0xf]
      %v1614 = vld [vmem:[%s1598 + $0x3c] sm:$0xf]
      %v1631 = vunpack.c.l.b16 %v1599
      %v1632 = vunpack.c.l.b16 %v1600
      %v1633 = vunpack.c.l.b16 %v1601
      %v1634 = vunpack.c.l.b16 %v1602
      %v1635 = vunpack.c.l.b16 %v1603
      %v1636 = vunpack.c.l.b16 %v1604
      %v1637 = vunpack.c.l.b16 %v1605
      %v1638 = vunpack.c.l.b16 %v1606
      %v1639 = vunpack.c.l.b16 %v1607
      %v1640 = vunpack.c.l.b16 %v1608
      %v1641 = vunpack.c.l.b16 %v1609
      %v1642 = vunpack.c.l.b16 %v1610
      %v1643 = vunpack.c.l.b16 %v1611
      %v1644 = vunpack.c.l.b16 %v1612
      %v1645 = vunpack.c.l.b16 %v1613
      %v1646 = vunpack.c.l.b16 %v1614
      %v1647 = vpack.c.b16 %v1632, %v1631
      %v1648 = vpack.c.b16 %v1634, %v1633
      %v1649 = vpack.c.b16 %v1636, %v1635
      %v1650 = vpack.c.b16 %v1638, %v1637
      %v1651 = vpack.c.b16 %v1640, %v1639
      %v1652 = vpack.c.b16 %v1642, %v1641
      %v1653 = vpack.c.b16 %v1644, %v1643
      %v1654 = vpack.c.b16 %v1646, %v1645
      %1663 = vmatpush.bf16.msra.mxu0 %v1654
      %1664 = vmatpush.bf16.msra.mxu0 %v1653
      %1665 = vmatpush.bf16.msra.mxu0 %v1652
      %1666 = vmatpush.bf16.msra.mxu0 %v1651
      %1667 = vmatpush.bf16.msra.mxu0 %v1650
      %1668 = vmatpush.bf16.msra.mxu0 %v1649
      %1669 = vmatpush.bf16.msra.mxu0 %v1648
      %1670 = vmatpush.bf16.msra.mxu0 %v1647
      %1671 = vmatmul.bf16.gmra.mxu0 %v1582
      %v1672 = vpop.f32.mrf.mxu0
      %v1673 = vadd.f32 0.0, %v1672
      %v1674 = vpop.f32.mrf.mxu0
      %v1675 = vadd.f32 0.0, %v1674
      %1676 = vmatmul.bf16.gmra.mxu0 %v1583
      %v1677 = vpop.f32.mrf.mxu0
      %v1678 = vadd.f32 0.0, %v1677
      %v1679 = vpop.f32.mrf.mxu0
      %v1680 = vadd.f32 0.0, %v1679
      %1681 = vmatmul.bf16.gmra.mxu0 %v1584
      %v1682 = vpop.f32.mrf.mxu0
      %v1683 = vadd.f32 0.0, %v1682
      %v1684 = vpop.f32.mrf.mxu0
      %v1685 = vadd.f32 0.0, %v1684
      %1686 = vmatmul.bf16.gmra.mxu0 %v1585
      %v1687 = vpop.f32.mrf.mxu0
      %v1688 = vadd.f32 0.0, %v1687
      %v1689 = vpop.f32.mrf.mxu0
      %v1690 = vadd.f32 0.0, %v1689
      %1691 = vmatmul.bf16.gmra.mxu0 %v1586
      %v1692 = vpop.f32.mrf.mxu0
      %v1693 = vadd.f32 0.0, %v1692
      %v1694 = vpop.f32.mrf.mxu0
      %v1695 = vadd.f32 0.0, %v1694
      %1696 = vmatmul.bf16.gmra.mxu0 %v1587
      %v1697 = vpop.f32.mrf.mxu0
      %v1698 = vadd.f32 0.0, %v1697
      %v1699 = vpop.f32.mrf.mxu0
      %v1700 = vadd.f32 0.0, %v1699
      %1701 = vmatmul.bf16.gmra.mxu0 %v1588
      %v1702 = vpop.f32.mrf.mxu0
      %v1703 = vadd.f32 0.0, %v1702
      %v1704 = vpop.f32.mrf.mxu0
      %v1705 = vadd.f32 0.0, %v1704
      %1706 = vmatmul.bf16.gmra.mxu0 %v1589
      %v1707 = vpop.f32.mrf.mxu0
      %v1708 = vadd.f32 0.0, %v1707
      %v1709 = vpop.f32.mrf.mxu0
      %v1710 = vadd.f32 0.0, %v1709
      %1711 = vmatmul.bf16.gmra.mxu0 %v1590
      %v1712 = vpop.f32.mrf.mxu0
      %v1713 = vadd.f32 0.0, %v1712
      %v1714 = vpop.f32.mrf.mxu0
      %v1715 = vadd.f32 0.0, %v1714
      %1716 = vmatmul.bf16.gmra.mxu0 %v1591
      %v1717 = vpop.f32.mrf.mxu0
      %v1718 = vadd.f32 0.0, %v1717
      %v1719 = vpop.f32.mrf.mxu0
      %v1720 = vadd.f32 0.0, %v1719
      %1721 = vmatmul.bf16.gmra.mxu0 %v1592
      %v1722 = vpop.f32.mrf.mxu0
      %v1723 = vadd.f32 0.0, %v1722
      %v1724 = vpop.f32.mrf.mxu0
      %v1725 = vadd.f32 0.0, %v1724
      %1726 = vmatmul.bf16.gmra.mxu0 %v1593
      %v1727 = vpop.f32.mrf.mxu0
      %v1728 = vadd.f32 0.0, %v1727
      %v1729 = vpop.f32.mrf.mxu0
      %v1730 = vadd.f32 0.0, %v1729
      %1731 = vmatmul.bf16.gmra.mxu0 %v1594
      %v1732 = vpop.f32.mrf.mxu0
      %v1733 = vadd.f32 0.0, %v1732
      %v1734 = vpop.f32.mrf.mxu0
      %v1735 = vadd.f32 0.0, %v1734
      %1736 = vmatmul.bf16.gmra.mxu0 %v1595
      %v1737 = vpop.f32.mrf.mxu0
      %v1738 = vadd.f32 0.0, %v1737
      %v1739 = vpop.f32.mrf.mxu0
      %v1740 = vadd.f32 0.0, %v1739
      %1741 = vmatmul.bf16.gmra.mxu0 %v1596
      %v1742 = vpop.f32.mrf.mxu0
      %v1743 = vadd.f32 0.0, %v1742
      %v1744 = vpop.f32.mrf.mxu0
      %v1745 = vadd.f32 0.0, %v1744
      %1746 = vmatmul.bf16.gmra.mxu0 %v1597
      %v1747 = vpop.f32.mrf.mxu0
      %v1748 = vadd.f32 0.0, %v1747
      %v1749 = vpop.f32.mrf.mxu0
      %v1750 = vadd.f32 0.0, %v1749
      %1751 = vdwg.mxu0
      %v1752 = vadd.f32 %v1375, %v1673
      %v1753 = vadd.f32 %v1377, %v1675
      %v1754 = vadd.f32 %v1380, %v1678
      %v1755 = vadd.f32 %v1382, %v1680
      %v1756 = vadd.f32 %v1385, %v1683
      %v1757 = vadd.f32 %v1387, %v1685
      %v1758 = vadd.f32 %v1390, %v1688
      %v1759 = vadd.f32 %v1392, %v1690
      %v1760 = vadd.f32 %v1395, %v1693
      %v1761 = vadd.f32 %v1397, %v1695
      %v1762 = vadd.f32 %v1400, %v1698
      %v1763 = vadd.f32 %v1402, %v1700
      %v1764 = vadd.f32 %v1405, %v1703
      %v1765 = vadd.f32 %v1407, %v1705
      %v1766 = vadd.f32 %v1410, %v1708
      %v1767 = vadd.f32 %v1412, %v1710
      %v1768 = vadd.f32 %v1415, %v1713
      %v1769 = vadd.f32 %v1417, %v1715
      %v1770 = vadd.f32 %v1420, %v1718
      %v1771 = vadd.f32 %v1422, %v1720
      %v1772 = vadd.f32 %v1425, %v1723
      %v1773 = vadd.f32 %v1427, %v1725
      %v1774 = vadd.f32 %v1430, %v1728
      %v1775 = vadd.f32 %v1432, %v1730
      %v1776 = vadd.f32 %v1435, %v1733
      %v1777 = vadd.f32 %v1437, %v1735
      %v1778 = vadd.f32 %v1440, %v1738
      %v1779 = vadd.f32 %v1442, %v1740
      %v1780 = vadd.f32 %v1445, %v1743
      %v1781 = vadd.f32 %v1447, %v1745
      %v1782 = vadd.f32 %v1450, %v1748
      %v1783 = vadd.f32 %v1452, %v1750
      %v1784 = vld [vmem:[#allocation2 + $0x10] sm:$0xff]
      %v1785 = vld [vmem:[#allocation2 + $0x18] sm:$0xff]
      %v1786 = vld [vmem:[#allocation2 + $0x20] sm:$0xff]
      %v1787 = vld [vmem:[#allocation2 + $0x28] sm:$0xff]
      %v1788 = vld [vmem:[#allocation2 + $0x30] sm:$0xff]
      %v1789 = vld [vmem:[#allocation2 + $0x38] sm:$0xff]
      %v1790 = vld [vmem:[#allocation2 + $0x40] sm:$0xff]
      %v1791 = vld [vmem:[#allocation2 + $0x48] sm:$0xff]
      %v1792 = vld [vmem:[#allocation2 + $0x50] sm:$0xff]
      %v1793 = vld [vmem:[#allocation2 + $0x58] sm:$0xff]
      %v1794 = vld [vmem:[#allocation2 + $0x60] sm:$0xff]
      %v1795 = vld [vmem:[#allocation2 + $0x68] sm:$0xff]
      %v1796 = vld [vmem:[#allocation2 + $0x70] sm:$0xff]
      %v1797 = vld [vmem:[#allocation2 + $0x78] sm:$0xff]
      %v1798 = vld [vmem:[#allocation2 + $0x80] sm:$0xff]
      %v1799 = vld [vmem:[#allocation2 + $0x88] sm:$0xff]
      %v1800 = vld [vmem:[#allocation2 + $0x90] sm:$0xff]
      %v1801 = vld [vmem:[#allocation2 + $0x98] sm:$0xff]
      %v1802 = vld [vmem:[#allocation2 + $0xa0] sm:$0xff]
      %v1803 = vld [vmem:[#allocation2 + $0xa8] sm:$0xff]
      %v1804 = vld [vmem:[#allocation2 + $0xb0] sm:$0xff]
      %v1805 = vld [vmem:[#allocation2 + $0xb8] sm:$0xff]
      %v1806 = vld [vmem:[#allocation2 + $0xc0] sm:$0xff]
      %v1807 = vld [vmem:[#allocation2 + $0xc8] sm:$0xff]
      %v1808 = vld [vmem:[#allocation2 + $0xd0] sm:$0xff]
      %v1809 = vld [vmem:[#allocation2 + $0xd8] sm:$0xff]
      %v1810 = vld [vmem:[#allocation2 + $0xe0] sm:$0xff]
      %v1811 = vld [vmem:[#allocation2 + $0xe8] sm:$0xff]
      %v1812 = vld [vmem:[#allocation2 + $0xf0] sm:$0xff]
      %v1813 = vld [vmem:[#allocation2 + $0xf8] sm:$0xff]
      %v1814 = vld [vmem:[#allocation2 + $0x100] sm:$0xff]
      %v1815 = vld [vmem:[#allocation2 + $0x108] sm:$0xff]
      %v1816 = vsel %vm1019, %v1784, 0.0
      %v1817 = vsel %vm1020, %v1785, 0.0
      %v1818 = vsel %vm1021, %v1786, 0.0
      %v1819 = vsel %vm1022, %v1787, 0.0
      %v1820 = vsel %vm1023, %v1788, 0.0
      %v1821 = vsel %vm1024, %v1789, 0.0
      %v1822 = vsel %vm1025, %v1790, 0.0
      %v1823 = vsel %vm1026, %v1791, 0.0
      %v1824 = vsel %vm1027, %v1792, 0.0
      %v1825 = vsel %vm1028, %v1793, 0.0
      %v1826 = vsel %vm1029, %v1794, 0.0
      %v1827 = vsel %vm1030, %v1795, 0.0
      %v1828 = vsel %vm1031, %v1796, 0.0
      %v1829 = vsel %vm1032, %v1797, 0.0
      %v1830 = vsel %vm1033, %v1798, 0.0
      %v1831 = vsel %vm1034, %v1799, 0.0
      %v1832 = vsel %vm1035, %v1800, 0.0
      %v1833 = vsel %vm1036, %v1801, 0.0
      %v1834 = vsel %vm1037, %v1802, 0.0
      %v1835 = vsel %vm1038, %v1803, 0.0
      %v1836 = vsel %vm1039, %v1804, 0.0
      %v1837 = vsel %vm1040, %v1805, 0.0
      %v1838 = vsel %vm1041, %v1806, 0.0
      %v1839 = vsel %vm1042, %v1807, 0.0
      %v1840 = vsel %vm1043, %v1808, 0.0
      %v1841 = vsel %vm1044, %v1809, 0.0
      %v1842 = vsel %vm1045, %v1810, 0.0
      %v1843 = vsel %vm1046, %v1811, 0.0
      %v1844 = vsel %vm1047, %v1812, 0.0
      %v1845 = vsel %vm1048, %v1813, 0.0
      %v1846 = vsel %vm1049, %v1814, 0.0
      %v1847 = vsel %vm1050, %v1815, 0.0
      %v1848 = vpack.c.bf16 %v1817, %v1816
      %v1849 = vpack.c.bf16 %v1819, %v1818
      %v1850 = vpack.c.bf16 %v1821, %v1820
      %v1851 = vpack.c.bf16 %v1823, %v1822
      %v1852 = vpack.c.bf16 %v1825, %v1824
      %v1853 = vpack.c.bf16 %v1827, %v1826
      %v1854 = vpack.c.bf16 %v1829, %v1828
      %v1855 = vpack.c.bf16 %v1831, %v1830
      %v1856 = vpack.c.bf16 %v1833, %v1832
      %v1857 = vpack.c.bf16 %v1835, %v1834
      %v1858 = vpack.c.bf16 %v1837, %v1836
      %v1859 = vpack.c.bf16 %v1839, %v1838
      %v1860 = vpack.c.bf16 %v1841, %v1840
      %v1861 = vpack.c.bf16 %v1843, %v1842
      %v1862 = vpack.c.bf16 %v1845, %v1844
      %v1863 = vpack.c.bf16 %v1847, %v1846
      %s1864 = scalar_lea.vmem %s2, 192
      %v1865 = vld [vmem:[%s1864] sm:$0xf]
      %v1866 = vld [vmem:[%s1864 + $0x4] sm:$0xf]
      %v1867 = vld [vmem:[%s1864 + $0x8] sm:$0xf]
      %v1868 = vld [vmem:[%s1864 + $0xc] sm:$0xf]
      %v1869 = vld [vmem:[%s1864 + $0x10] sm:$0xf]
      %v1870 = vld [vmem:[%s1864 + $0x14] sm:$0xf]
      %v1871 = vld [vmem:[%s1864 + $0x18] sm:$0xf]
      %v1872 = vld [vmem:[%s1864 + $0x1c] sm:$0xf]
      %v1873 = vld [vmem:[%s1864 + $0x20] sm:$0xf]
      %v1874 = vld [vmem:[%s1864 + $0x24] sm:$0xf]
      %v1875 = vld [vmem:[%s1864 + $0x28] sm:$0xf]
      %v1876 = vld [vmem:[%s1864 + $0x2c] sm:$0xf]
      %v1877 = vld [vmem:[%s1864 + $0x30] sm:$0xf]
      %v1878 = vld [vmem:[%s1864 + $0x34] sm:$0xf]
      %v1879 = vld [vmem:[%s1864 + $0x38] sm:$0xf]
      %v1880 = vld [vmem:[%s1864 + $0x3c] sm:$0xf]
      %v1897 = vunpack.c.l.b16 %v1865
      %v1898 = vunpack.c.l.b16 %v1866
      %v1899 = vunpack.c.l.b16 %v1867
      %v1900 = vunpack.c.l.b16 %v1868
      %v1901 = vunpack.c.l.b16 %v1869
      %v1902 = vunpack.c.l.b16 %v1870
      %v1903 = vunpack.c.l.b16 %v1871
      %v1904 = vunpack.c.l.b16 %v1872
      %v1905 = vunpack.c.l.b16 %v1873
      %v1906 = vunpack.c.l.b16 %v1874
      %v1907 = vunpack.c.l.b16 %v1875
      %v1908 = vunpack.c.l.b16 %v1876
      %v1909 = vunpack.c.l.b16 %v1877
      %v1910 = vunpack.c.l.b16 %v1878
      %v1911 = vunpack.c.l.b16 %v1879
      %v1912 = vunpack.c.l.b16 %v1880
      %v1913 = vpack.c.b16 %v1898, %v1897
      %v1914 = vpack.c.b16 %v1900, %v1899
      %v1915 = vpack.c.b16 %v1902, %v1901
      %v1916 = vpack.c.b16 %v1904, %v1903
      %v1917 = vpack.c.b16 %v1906, %v1905
      %v1918 = vpack.c.b16 %v1908, %v1907
      %v1919 = vpack.c.b16 %v1910, %v1909
      %v1920 = vpack.c.b16 %v1912, %v1911
      %1929 = vmatpush.bf16.msra.mxu0 %v1920
      %1930 = vmatpush.bf16.msra.mxu0 %v1919
      %1931 = vmatpush.bf16.msra.mxu0 %v1918
      %1932 = vmatpush.bf16.msra.mxu0 %v1917
      %1933 = vmatpush.bf16.msra.mxu0 %v1916
      %1934 = vmatpush.bf16.msra.mxu0 %v1915
      %1935 = vmatpush.bf16.msra.mxu0 %v1914
      %1936 = vmatpush.bf16.msra.mxu0 %v1913
      %1937 = vmatmul.bf16.gmra.mxu0 %v1848
      %v1938 = vpop.f32.mrf.mxu0
      %v1939 = vadd.f32 0.0, %v1938
      %v1940 = vpop.f32.mrf.mxu0
      %v1941 = vadd.f32 0.0, %v1940
      %1942 = vmatmul.bf16.gmra.mxu0 %v1849
      %v1943 = vpop.f32.mrf.mxu0
      %v1944 = vadd.f32 0.0, %v1943
      %v1945 = vpop.f32.mrf.mxu0
      %v1946 = vadd.f32 0.0, %v1945
      %1947 = vmatmul.bf16.gmra.mxu0 %v1850
      %v1948 = vpop.f32.mrf.mxu0
      %v1949 = vadd.f32 0.0, %v1948
      %v1950 = vpop.f32.mrf.mxu0
      %v1951 = vadd.f32 0.0, %v1950
      %1952 = vmatmul.bf16.gmra.mxu0 %v1851
      %v1953 = vpop.f32.mrf.mxu0
      %v1954 = vadd.f32 0.0, %v1953
      %v1955 = vpop.f32.mrf.mxu0
      %v1956 = vadd.f32 0.0, %v1955
      %1957 = vmatmul.bf16.gmra.mxu0 %v1852
      %v1958 = vpop.f32.mrf.mxu0
      %v1959 = vadd.f32 0.0, %v1958
      %v1960 = vpop.f32.mrf.mxu0
      %v1961 = vadd.f32 0.0, %v1960
      %1962 = vmatmul.bf16.gmra.mxu0 %v1853
      %v1963 = vpop.f32.mrf.mxu0
      %v1964 = vadd.f32 0.0, %v1963
      %v1965 = vpop.f32.mrf.mxu0
      %v1966 = vadd.f32 0.0, %v1965
      %1967 = vmatmul.bf16.gmra.mxu0 %v1854
      %v1968 = vpop.f32.mrf.mxu0
      %v1969 = vadd.f32 0.0, %v1968
      %v1970 = vpop.f32.mrf.mxu0
      %v1971 = vadd.f32 0.0, %v1970
      %1972 = vmatmul.bf16.gmra.mxu0 %v1855
      %v1973 = vpop.f32.mrf.mxu0
      %v1974 = vadd.f32 0.0, %v1973
      %v1975 = vpop.f32.mrf.mxu0
      %v1976 = vadd.f32 0.0, %v1975
      %1977 = vmatmul.bf16.gmra.mxu0 %v1856
      %v1978 = vpop.f32.mrf.mxu0
      %v1979 = vadd.f32 0.0, %v1978
      %v1980 = vpop.f32.mrf.mxu0
      %v1981 = vadd.f32 0.0, %v1980
      %1982 = vmatmul.bf16.gmra.mxu0 %v1857
      %v1983 = vpop.f32.mrf.mxu0
      %v1984 = vadd.f32 0.0, %v1983
      %v1985 = vpop.f32.mrf.mxu0
      %v1986 = vadd.f32 0.0, %v1985
      %1987 = vmatmul.bf16.gmra.mxu0 %v1858
      %v1988 = vpop.f32.mrf.mxu0
      %v1989 = vadd.f32 0.0, %v1988
      %v1990 = vpop.f32.mrf.mxu0
      %v1991 = vadd.f32 0.0, %v1990
      %1992 = vmatmul.bf16.gmra.mxu0 %v1859
      %v1993 = vpop.f32.mrf.mxu0
      %v1994 = vadd.f32 0.0, %v1993
      %v1995 = vpop.f32.mrf.mxu0
      %v1996 = vadd.f32 0.0, %v1995
      %1997 = vmatmul.bf16.gmra.mxu0 %v1860
      %v1998 = vpop.f32.mrf.mxu0
      %v1999 = vadd.f32 0.0, %v1998
      %v2000 = vpop.f32.mrf.mxu0
      %v2001 = vadd.f32 0.0, %v2000
      %2002 = vmatmul.bf16.gmra.mxu0 %v1861
      %v2003 = vpop.f32.mrf.mxu0
      %v2004 = vadd.f32 0.0, %v2003
      %v2005 = vpop.f32.mrf.mxu0
      %v2006 = vadd.f32 0.0, %v2005
      %2007 = vmatmul.bf16.gmra.mxu0 %v1862
      %v2008 = vpop.f32.mrf.mxu0
      %v2009 = vadd.f32 0.0, %v2008
      %v2010 = vpop.f32.mrf.mxu0
      %v2011 = vadd.f32 0.0, %v2010
      %2012 = vmatmul.bf16.gmra.mxu0 %v1863
      %v2013 = vpop.f32.mrf.mxu0
      %v2014 = vadd.f32 0.0, %v2013
      %v2015 = vpop.f32.mrf.mxu0
      %v2016 = vadd.f32 0.0, %v2015
      %2017 = vdwg.mxu0
      %v2018 = vadd.f32 %v1752, %v1939
      %v2019 = vadd.f32 %v1753, %v1941
      %v2020 = vadd.f32 %v1754, %v1944
      %v2021 = vadd.f32 %v1755, %v1946
      %v2022 = vadd.f32 %v1756, %v1949
      %v2023 = vadd.f32 %v1757, %v1951
      %v2024 = vadd.f32 %v1758, %v1954
      %v2025 = vadd.f32 %v1759, %v1956
      %v2026 = vadd.f32 %v1760, %v1959
      %v2027 = vadd.f32 %v1761, %v1961
      %v2028 = vadd.f32 %v1762, %v1964
      %v2029 = vadd.f32 %v1763, %v1966
      %v2030 = vadd.f32 %v1764, %v1969
      %v2031 = vadd.f32 %v1765, %v1971
      %v2032 = vadd.f32 %v1766, %v1974
      %v2033 = vadd.f32 %v1767, %v1976
      %v2034 = vadd.f32 %v1768, %v1979
      %v2035 = vadd.f32 %v1769, %v1981
      %v2036 = vadd.f32 %v1770, %v1984
      %v2037 = vadd.f32 %v1771, %v1986
      %v2038 = vadd.f32 %v1772, %v1989
      %v2039 = vadd.f32 %v1773, %v1991
      %v2040 = vadd.f32 %v1774, %v1994
      %v2041 = vadd.f32 %v1775, %v1996
      %v2042 = vadd.f32 %v1776, %v1999
      %v2043 = vadd.f32 %v1777, %v2001
      %v2044 = vadd.f32 %v1778, %v2004
      %v2045 = vadd.f32 %v1779, %v2006
      %v2046 = vadd.f32 %v1780, %v2009
      %v2047 = vadd.f32 %v1781, %v2011
      %v2048 = vadd.f32 %v1782, %v2014
      %v2049 = vadd.f32 %v1783, %v2016
      %v2050 = vld [vmem:[#allocation2 + $0x11] sm:$0xff]
      %v2051 = vld [vmem:[#allocation2 + $0x19] sm:$0xff]
      %v2052 = vld [vmem:[#allocation2 + $0x21] sm:$0xff]
      %v2053 = vld [vmem:[#allocation2 + $0x29] sm:$0xff]
      %v2054 = vld [vmem:[#allocation2 + $0x31] sm:$0xff]
      %v2055 = vld [vmem:[#allocation2 + $0x39] sm:$0xff]
      %v2056 = vld [vmem:[#allocation2 + $0x41] sm:$0xff]
      %v2057 = vld [vmem:[#allocation2 + $0x49] sm:$0xff]
      %v2058 = vld [vmem:[#allocation2 + $0x51] sm:$0xff]
      %v2059 = vld [vmem:[#allocation2 + $0x59] sm:$0xff]
      %v2060 = vld [vmem:[#allocation2 + $0x61] sm:$0xff]
      %v2061 = vld [vmem:[#allocation2 + $0x69] sm:$0xff]
      %v2062 = vld [vmem:[#allocation2 + $0x71] sm:$0xff]
      %v2063 = vld [vmem:[#allocation2 + $0x79] sm:$0xff]
      %v2064 = vld [vmem:[#allocation2 + $0x81] sm:$0xff]
      %v2065 = vld [vmem:[#allocation2 + $0x89] sm:$0xff]
      %v2066 = vld [vmem:[#allocation2 + $0x91] sm:$0xff]
      %v2067 = vld [vmem:[#allocation2 + $0x99] sm:$0xff]
      %v2068 = vld [vmem:[#allocation2 + $0xa1] sm:$0xff]
      %v2069 = vld [vmem:[#allocation2 + $0xa9] sm:$0xff]
      %v2070 = vld [vmem:[#allocation2 + $0xb1] sm:$0xff]
      %v2071 = vld [vmem:[#allocation2 + $0xb9] sm:$0xff]
      %v2072 = vld [vmem:[#allocation2 + $0xc1] sm:$0xff]
      %v2073 = vld [vmem:[#allocation2 + $0xc9] sm:$0xff]
      %v2074 = vld [vmem:[#allocation2 + $0xd1] sm:$0xff]
      %v2075 = vld [vmem:[#allocation2 + $0xd9] sm:$0xff]
      %v2076 = vld [vmem:[#allocation2 + $0xe1] sm:$0xff]
      %v2077 = vld [vmem:[#allocation2 + $0xe9] sm:$0xff]
      %v2078 = vld [vmem:[#allocation2 + $0xf1] sm:$0xff]
      %v2079 = vld [vmem:[#allocation2 + $0xf9] sm:$0xff]
      %v2080 = vld [vmem:[#allocation2 + $0x101] sm:$0xff]
      %v2081 = vld [vmem:[#allocation2 + $0x109] sm:$0xff]
      %v2082 = vpack.c.bf16 %v2051, %v2050
      %v2083 = vpack.c.bf16 %v2053, %v2052
      %v2084 = vpack.c.bf16 %v2055, %v2054
      %v2085 = vpack.c.bf16 %v2057, %v2056
      %v2086 = vpack.c.bf16 %v2059, %v2058
      %v2087 = vpack.c.bf16 %v2061, %v2060
      %v2088 = vpack.c.bf16 %v2063, %v2062
      %v2089 = vpack.c.bf16 %v2065, %v2064
      %v2090 = vpack.c.bf16 %v2067, %v2066
      %v2091 = vpack.c.bf16 %v2069, %v2068
      %v2092 = vpack.c.bf16 %v2071, %v2070
      %v2093 = vpack.c.bf16 %v2073, %v2072
      %v2094 = vpack.c.bf16 %v2075, %v2074
      %v2095 = vpack.c.bf16 %v2077, %v2076
      %v2096 = vpack.c.bf16 %v2079, %v2078
      %v2097 = vpack.c.bf16 %v2081, %v2080
      %s2098 = scalar_lea.vmem %s2, 256
      %v2099 = vld [vmem:[%s2098] sm:$0xf]
      %v2100 = vld [vmem:[%s2098 + $0x4] sm:$0xf]
      %v2101 = vld [vmem:[%s2098 + $0x8] sm:$0xf]
      %v2102 = vld [vmem:[%s2098 + $0xc] sm:$0xf]
      %v2103 = vld [vmem:[%s2098 + $0x10] sm:$0xf]
      %v2104 = vld [vmem:[%s2098 + $0x14] sm:$0xf]
      %v2105 = vld [vmem:[%s2098 + $0x18] sm:$0xf]
      %v2106 = vld [vmem:[%s2098 + $0x1c] sm:$0xf]
      %v2107 = vld [vmem:[%s2098 + $0x20] sm:$0xf]
      %v2108 = vld [vmem:[%s2098 + $0x24] sm:$0xf]
      %v2109 = vld [vmem:[%s2098 + $0x28] sm:$0xf]
      %v2110 = vld [vmem:[%s2098 + $0x2c] sm:$0xf]
      %v2111 = vld [vmem:[%s2098 + $0x30] sm:$0xf]
      %v2112 = vld [vmem:[%s2098 + $0x34] sm:$0xf]
      %v2113 = vld [vmem:[%s2098 + $0x38] sm:$0xf]
      %v2114 = vld [vmem:[%s2098 + $0x3c] sm:$0xf]
      %v2131 = vunpack.c.l.b16 %v2099
      %v2132 = vunpack.c.l.b16 %v2100
      %v2133 = vunpack.c.l.b16 %v2101
      %v2134 = vunpack.c.l.b16 %v2102
      %v2135 = vunpack.c.l.b16 %v2103
      %v2136 = vunpack.c.l.b16 %v2104
      %v2137 = vunpack.c.l.b16 %v2105
      %v2138 = vunpack.c.l.b16 %v2106
      %v2139 = vunpack.c.l.b16 %v2107
      %v2140 = vunpack.c.l.b16 %v2108
      %v2141 = vunpack.c.l.b16 %v2109
      %v2142 = vunpack.c.l.b16 %v2110
      %v2143 = vunpack.c.l.b16 %v2111
      %v2144 = vunpack.c.l.b16 %v2112
      %v2145 = vunpack.c.l.b16 %v2113
      %v2146 = vunpack.c.l.b16 %v2114
      %v2147 = vpack.c.b16 %v2132, %v2131
      %v2148 = vpack.c.b16 %v2134, %v2133
      %v2149 = vpack.c.b16 %v2136, %v2135
      %v2150 = vpack.c.b16 %v2138, %v2137
      %v2151 = vpack.c.b16 %v2140, %v2139
      %v2152 = vpack.c.b16 %v2142, %v2141
      %v2153 = vpack.c.b16 %v2144, %v2143
      %v2154 = vpack.c.b16 %v2146, %v2145
      %2163 = vmatpush.bf16.msra.mxu0 %v2154
      %2164 = vmatpush.bf16.msra.mxu0 %v2153
      %2165 = vmatpush.bf16.msra.mxu0 %v2152
      %2166 = vmatpush.bf16.msra.mxu0 %v2151
      %2167 = vmatpush.bf16.msra.mxu0 %v2150
      %2168 = vmatpush.bf16.msra.mxu0 %v2149
      %2169 = vmatpush.bf16.msra.mxu0 %v2148
      %2170 = vmatpush.bf16.msra.mxu0 %v2147
      %2171 = vmatmul.bf16.gmra.mxu0 %v2082
      %v2172 = vpop.f32.mrf.mxu0
      %v2173 = vadd.f32 0.0, %v2172
      %v2174 = vpop.f32.mrf.mxu0
      %v2175 = vadd.f32 0.0, %v2174
      %2176 = vmatmul.bf16.gmra.mxu0 %v2083
      %v2177 = vpop.f32.mrf.mxu0
      %v2178 = vadd.f32 0.0, %v2177
      %v2179 = vpop.f32.mrf.mxu0
      %v2180 = vadd.f32 0.0, %v2179
      %2181 = vmatmul.bf16.gmra.mxu0 %v2084
      %v2182 = vpop.f32.mrf.mxu0
      %v2183 = vadd.f32 0.0, %v2182
      %v2184 = vpop.f32.mrf.mxu0
      %v2185 = vadd.f32 0.0, %v2184
      %2186 = vmatmul.bf16.gmra.mxu0 %v2085
      %v2187 = vpop.f32.mrf.mxu0
      %v2188 = vadd.f32 0.0, %v2187
      %v2189 = vpop.f32.mrf.mxu0
      %v2190 = vadd.f32 0.0, %v2189
      %2191 = vmatmul.bf16.gmra.mxu0 %v2086
      %v2192 = vpop.f32.mrf.mxu0
      %v2193 = vadd.f32 0.0, %v2192
      %v2194 = vpop.f32.mrf.mxu0
      %v2195 = vadd.f32 0.0, %v2194
      %2196 = vmatmul.bf16.gmra.mxu0 %v2087
      %v2197 = vpop.f32.mrf.mxu0
      %v2198 = vadd.f32 0.0, %v2197
      %v2199 = vpop.f32.mrf.mxu0
      %v2200 = vadd.f32 0.0, %v2199
      %2201 = vmatmul.bf16.gmra.mxu0 %v2088
      %v2202 = vpop.f32.mrf.mxu0
      %v2203 = vadd.f32 0.0, %v2202
      %v2204 = vpop.f32.mrf.mxu0
      %v2205 = vadd.f32 0.0, %v2204
      %2206 = vmatmul.bf16.gmra.mxu0 %v2089
      %v2207 = vpop.f32.mrf.mxu0
      %v2208 = vadd.f32 0.0, %v2207
      %v2209 = vpop.f32.mrf.mxu0
      %v2210 = vadd.f32 0.0, %v2209
      %2211 = vmatmul.bf16.gmra.mxu0 %v2090
      %v2212 = vpop.f32.mrf.mxu0
      %v2213 = vadd.f32 0.0, %v2212
      %v2214 = vpop.f32.mrf.mxu0
      %v2215 = vadd.f32 0.0, %v2214
      %2216 = vmatmul.bf16.gmra.mxu0 %v2091
      %v2217 = vpop.f32.mrf.mxu0
      %v2218 = vadd.f32 0.0, %v2217
      %v2219 = vpop.f32.mrf.mxu0
      %v2220 = vadd.f32 0.0, %v2219
      %2221 = vmatmul.bf16.gmra.mxu0 %v2092
      %v2222 = vpop.f32.mrf.mxu0
      %v2223 = vadd.f32 0.0, %v2222
      %v2224 = vpop.f32.mrf.mxu0
      %v2225 = vadd.f32 0.0, %v2224
      %2226 = vmatmul.bf16.gmra.mxu0 %v2093
      %v2227 = vpop.f32.mrf.mxu0
      %v2228 = vadd.f32 0.0, %v2227
      %v2229 = vpop.f32.mrf.mxu0
      %v2230 = vadd.f32 0.0, %v2229
      %2231 = vmatmul.bf16.gmra.mxu0 %v2094
      %v2232 = vpop.f32.mrf.mxu0
      %v2233 = vadd.f32 0.0, %v2232
      %v2234 = vpop.f32.mrf.mxu0
      %v2235 = vadd.f32 0.0, %v2234
      %2236 = vmatmul.bf16.gmra.mxu0 %v2095
      %v2237 = vpop.f32.mrf.mxu0
      %v2238 = vadd.f32 0.0, %v2237
      %v2239 = vpop.f32.mrf.mxu0
      %v2240 = vadd.f32 0.0, %v2239
      %2241 = vmatmul.bf16.gmra.mxu0 %v2096
      %v2242 = vpop.f32.mrf.mxu0
      %v2243 = vadd.f32 0.0, %v2242
      %v2244 = vpop.f32.mrf.mxu0
      %v2245 = vadd.f32 0.0, %v2244
      %2246 = vmatmul.bf16.gmra.mxu0 %v2097
      %v2247 = vpop.f32.mrf.mxu0
      %v2248 = vadd.f32 0.0, %v2247
      %v2249 = vpop.f32.mrf.mxu0
      %v2250 = vadd.f32 0.0, %v2249
      %2251 = vdwg.mxu0
      %v2252 = vadd.f32 %v2018, %v2173
      %v2253 = vadd.f32 %v2019, %v2175
      %v2254 = vadd.f32 %v2020, %v2178
      %v2255 = vadd.f32 %v2021, %v2180
      %v2256 = vadd.f32 %v2022, %v2183
      %v2257 = vadd.f32 %v2023, %v2185
      %v2258 = vadd.f32 %v2024, %v2188
      %v2259 = vadd.f32 %v2025, %v2190
      %v2260 = vadd.f32 %v2026, %v2193
      %v2261 = vadd.f32 %v2027, %v2195
      %v2262 = vadd.f32 %v2028, %v2198
      %v2263 = vadd.f32 %v2029, %v2200
      %v2264 = vadd.f32 %v2030, %v2203
      %v2265 = vadd.f32 %v2031, %v2205
      %v2266 = vadd.f32 %v2032, %v2208
      %v2267 = vadd.f32 %v2033, %v2210
      %v2268 = vadd.f32 %v2034, %v2213
      %v2269 = vadd.f32 %v2035, %v2215
      %v2270 = vadd.f32 %v2036, %v2218
      %v2271 = vadd.f32 %v2037, %v2220
      %v2272 = vadd.f32 %v2038, %v2223
      %v2273 = vadd.f32 %v2039, %v2225
      %v2274 = vadd.f32 %v2040, %v2228
      %v2275 = vadd.f32 %v2041, %v2230
      %v2276 = vadd.f32 %v2042, %v2233
      %v2277 = vadd.f32 %v2043, %v2235
      %v2278 = vadd.f32 %v2044, %v2238
      %v2279 = vadd.f32 %v2045, %v2240
      %v2280 = vadd.f32 %v2046, %v2243
      %v2281 = vadd.f32 %v2047, %v2245
      %v2282 = vadd.f32 %v2048, %v2248
      %v2283 = vadd.f32 %v2049, %v2250
      %v2284 = vld [vmem:[#allocation2 + $0x12] sm:$0xff]
      %v2285 = vld [vmem:[#allocation2 + $0x1a] sm:$0xff]
      %v2286 = vld [vmem:[#allocation2 + $0x22] sm:$0xff]
      %v2287 = vld [vmem:[#allocation2 + $0x2a] sm:$0xff]
      %v2288 = vld [vmem:[#allocation2 + $0x32] sm:$0xff]
      %v2289 = vld [vmem:[#allocation2 + $0x3a] sm:$0xff]
      %v2290 = vld [vmem:[#allocation2 + $0x42] sm:$0xff]
      %v2291 = vld [vmem:[#allocation2 + $0x4a] sm:$0xff]
      %v2292 = vld [vmem:[#allocation2 + $0x52] sm:$0xff]
      %v2293 = vld [vmem:[#allocation2 + $0x5a] sm:$0xff]
      %v2294 = vld [vmem:[#allocation2 + $0x62] sm:$0xff]
      %v2295 = vld [vmem:[#allocation2 + $0x6a] sm:$0xff]
      %v2296 = vld [vmem:[#allocation2 + $0x72] sm:$0xff]
      %v2297 = vld [vmem:[#allocation2 + $0x7a] sm:$0xff]
      %v2298 = vld [vmem:[#allocation2 + $0x82] sm:$0xff]
      %v2299 = vld [vmem:[#allocation2 + $0x8a] sm:$0xff]
      %v2300 = vld [vmem:[#allocation2 + $0x92] sm:$0xff]
      %v2301 = vld [vmem:[#allocation2 + $0x9a] sm:$0xff]
      %v2302 = vld [vmem:[#allocation2 + $0xa2] sm:$0xff]
      %v2303 = vld [vmem:[#allocation2 + $0xaa] sm:$0xff]
      %v2304 = vld [vmem:[#allocation2 + $0xb2] sm:$0xff]
      %v2305 = vld [vmem:[#allocation2 + $0xba] sm:$0xff]
      %v2306 = vld [vmem:[#allocation2 + $0xc2] sm:$0xff]
      %v2307 = vld [vmem:[#allocation2 + $0xca] sm:$0xff]
      %v2308 = vld [vmem:[#allocation2 + $0xd2] sm:$0xff]
      %v2309 = vld [vmem:[#allocation2 + $0xda] sm:$0xff]
      %v2310 = vld [vmem:[#allocation2 + $0xe2] sm:$0xff]
      %v2311 = vld [vmem:[#allocation2 + $0xea] sm:$0xff]
      %v2312 = vld [vmem:[#allocation2 + $0xf2] sm:$0xff]
      %v2313 = vld [vmem:[#allocation2 + $0xfa] sm:$0xff]
      %v2314 = vld [vmem:[#allocation2 + $0x102] sm:$0xff]
      %v2315 = vld [vmem:[#allocation2 + $0x10a] sm:$0xff]
      %v2316 = vsel %vm1518, %v2284, 0.0
      %v2317 = vsel %vm1519, %v2285, 0.0
      %v2318 = vsel %vm1520, %v2286, 0.0
      %v2319 = vsel %vm1521, %v2287, 0.0
      %v2320 = vsel %vm1522, %v2288, 0.0
      %v2321 = vsel %vm1523, %v2289, 0.0
      %v2322 = vsel %vm1524, %v2290, 0.0
      %v2323 = vsel %vm1525, %v2291, 0.0
      %v2324 = vsel %vm1526, %v2292, 0.0
      %v2325 = vsel %vm1527, %v2293, 0.0
      %v2326 = vsel %vm1528, %v2294, 0.0
      %v2327 = vsel %vm1529, %v2295, 0.0
      %v2328 = vsel %vm1530, %v2296, 0.0
      %v2329 = vsel %vm1531, %v2297, 0.0
      %v2330 = vsel %vm1532, %v2298, 0.0
      %v2331 = vsel %vm1533, %v2299, 0.0
      %v2332 = vsel %vm1534, %v2300, 0.0
      %v2333 = vsel %vm1535, %v2301, 0.0
      %v2334 = vsel %vm1536, %v2302, 0.0
      %v2335 = vsel %vm1537, %v2303, 0.0
      %v2336 = vsel %vm1538, %v2304, 0.0
      %v2337 = vsel %vm1539, %v2305, 0.0
      %v2338 = vsel %vm1540, %v2306, 0.0
      %v2339 = vsel %vm1541, %v2307, 0.0
      %v2340 = vsel %vm1542, %v2308, 0.0
      %v2341 = vsel %vm1543, %v2309, 0.0
      %v2342 = vsel %vm1544, %v2310, 0.0
      %v2343 = vsel %vm1545, %v2311, 0.0
      %v2344 = vsel %vm1546, %v2312, 0.0
      %v2345 = vsel %vm1547, %v2313, 0.0
      %v2346 = vsel %vm1548, %v2314, 0.0
      %v2347 = vsel %vm1549, %v2315, 0.0
      %v2348 = vpack.c.bf16 %v2317, %v2316
      %v2349 = vpack.c.bf16 %v2319, %v2318
      %v2350 = vpack.c.bf16 %v2321, %v2320
      %v2351 = vpack.c.bf16 %v2323, %v2322
      %v2352 = vpack.c.bf16 %v2325, %v2324
      %v2353 = vpack.c.bf16 %v2327, %v2326
      %v2354 = vpack.c.bf16 %v2329, %v2328
      %v2355 = vpack.c.bf16 %v2331, %v2330
      %v2356 = vpack.c.bf16 %v2333, %v2332
      %v2357 = vpack.c.bf16 %v2335, %v2334
      %v2358 = vpack.c.bf16 %v2337, %v2336
      %v2359 = vpack.c.bf16 %v2339, %v2338
      %v2360 = vpack.c.bf16 %v2341, %v2340
      %v2361 = vpack.c.bf16 %v2343, %v2342
      %v2362 = vpack.c.bf16 %v2345, %v2344
      %v2363 = vpack.c.bf16 %v2347, %v2346
      %s2364 = scalar_lea.vmem %s2, 320
      %v2365 = vld [vmem:[%s2364] sm:$0xf]
      %v2366 = vld [vmem:[%s2364 + $0x4] sm:$0xf]
      %v2367 = vld [vmem:[%s2364 + $0x8] sm:$0xf]
      %v2368 = vld [vmem:[%s2364 + $0xc] sm:$0xf]
      %v2369 = vld [vmem:[%s2364 + $0x10] sm:$0xf]
      %v2370 = vld [vmem:[%s2364 + $0x14] sm:$0xf]
      %v2371 = vld [vmem:[%s2364 + $0x18] sm:$0xf]
      %v2372 = vld [vmem:[%s2364 + $0x1c] sm:$0xf]
      %v2373 = vld [vmem:[%s2364 + $0x20] sm:$0xf]
      %v2374 = vld [vmem:[%s2364 + $0x24] sm:$0xf]
      %v2375 = vld [vmem:[%s2364 + $0x28] sm:$0xf]
      %v2376 = vld [vmem:[%s2364 + $0x2c] sm:$0xf]
      %v2377 = vld [vmem:[%s2364 + $0x30] sm:$0xf]
      %v2378 = vld [vmem:[%s2364 + $0x34] sm:$0xf]
      %v2379 = vld [vmem:[%s2364 + $0x38] sm:$0xf]
      %v2380 = vld [vmem:[%s2364 + $0x3c] sm:$0xf]
      %v2397 = vunpack.c.l.b16 %v2365
      %v2398 = vunpack.c.l.b16 %v2366
      %v2399 = vunpack.c.l.b16 %v2367
      %v2400 = vunpack.c.l.b16 %v2368
      %v2401 = vunpack.c.l.b16 %v2369
      %v2402 = vunpack.c.l.b16 %v2370
      %v2403 = vunpack.c.l.b16 %v2371
      %v2404 = vunpack.c.l.b16 %v2372
      %v2405 = vunpack.c.l.b16 %v2373
      %v2406 = vunpack.c.l.b16 %v2374
      %v2407 = vunpack.c.l.b16 %v2375
      %v2408 = vunpack.c.l.b16 %v2376
      %v2409 = vunpack.c.l.b16 %v2377
      %v2410 = vunpack.c.l.b16 %v2378
      %v2411 = vunpack.c.l.b16 %v2379
      %v2412 = vunpack.c.l.b16 %v2380
      %v2413 = vpack.c.b16 %v2398, %v2397
      %v2414 = vpack.c.b16 %v2400, %v2399
      %v2415 = vpack.c.b16 %v2402, %v2401
      %v2416 = vpack.c.b16 %v2404, %v2403
      %v2417 = vpack.c.b16 %v2406, %v2405
      %v2418 = vpack.c.b16 %v2408, %v2407
      %v2419 = vpack.c.b16 %v2410, %v2409
      %v2420 = vpack.c.b16 %v2412, %v2411
      %2429 = vmatpush.bf16.msra.mxu0 %v2420
      %2430 = vmatpush.bf16.msra.mxu0 %v2419
      %2431 = vmatpush.bf16.msra.mxu0 %v2418
      %2432 = vmatpush.bf16.msra.mxu0 %v2417
      %2433 = vmatpush.bf16.msra.mxu0 %v2416
      %2434 = vmatpush.bf16.msra.mxu0 %v2415
      %2435 = vmatpush.bf16.msra.mxu0 %v2414
      %2436 = vmatpush.bf16.msra.mxu0 %v2413
      %2437 = vmatmul.bf16.gmra.mxu0 %v2348
      %v2438 = vpop.f32.mrf.mxu0
      %v2439 = vadd.f32 0.0, %v2438
      %v2440 = vpop.f32.mrf.mxu0
      %v2441 = vadd.f32 0.0, %v2440
      %2442 = vmatmul.bf16.gmra.mxu0 %v2349
      %v2443 = vpop.f32.mrf.mxu0
      %v2444 = vadd.f32 0.0, %v2443
      %v2445 = vpop.f32.mrf.mxu0
      %v2446 = vadd.f32 0.0, %v2445
      %2447 = vmatmul.bf16.gmra.mxu0 %v2350
      %v2448 = vpop.f32.mrf.mxu0
      %v2449 = vadd.f32 0.0, %v2448
      %v2450 = vpop.f32.mrf.mxu0
      %v2451 = vadd.f32 0.0, %v2450
      %2452 = vmatmul.bf16.gmra.mxu0 %v2351
      %v2453 = vpop.f32.mrf.mxu0
      %v2454 = vadd.f32 0.0, %v2453
      %v2455 = vpop.f32.mrf.mxu0
      %v2456 = vadd.f32 0.0, %v2455
      %2457 = vmatmul.bf16.gmra.mxu0 %v2352
      %v2458 = vpop.f32.mrf.mxu0
      %v2459 = vadd.f32 0.0, %v2458
      %v2460 = vpop.f32.mrf.mxu0
      %v2461 = vadd.f32 0.0, %v2460
      %2462 = vmatmul.bf16.gmra.mxu0 %v2353
      %v2463 = vpop.f32.mrf.mxu0
      %v2464 = vadd.f32 0.0, %v2463
      %v2465 = vpop.f32.mrf.mxu0
      %v2466 = vadd.f32 0.0, %v2465
      %2467 = vmatmul.bf16.gmra.mxu0 %v2354
      %v2468 = vpop.f32.mrf.mxu0
      %v2469 = vadd.f32 0.0, %v2468
      %v2470 = vpop.f32.mrf.mxu0
      %v2471 = vadd.f32 0.0, %v2470
      %2472 = vmatmul.bf16.gmra.mxu0 %v2355
      %v2473 = vpop.f32.mrf.mxu0
      %v2474 = vadd.f32 0.0, %v2473
      %v2475 = vpop.f32.mrf.mxu0
      %v2476 = vadd.f32 0.0, %v2475
      %2477 = vmatmul.bf16.gmra.mxu0 %v2356
      %v2478 = vpop.f32.mrf.mxu0
      %v2479 = vadd.f32 0.0, %v2478
      %v2480 = vpop.f32.mrf.mxu0
      %v2481 = vadd.f32 0.0, %v2480
      %2482 = vmatmul.bf16.gmra.mxu0 %v2357
      %v2483 = vpop.f32.mrf.mxu0
      %v2484 = vadd.f32 0.0, %v2483
      %v2485 = vpop.f32.mrf.mxu0
      %v2486 = vadd.f32 0.0, %v2485
      %2487 = vmatmul.bf16.gmra.mxu0 %v2358
      %v2488 = vpop.f32.mrf.mxu0
      %v2489 = vadd.f32 0.0, %v2488
      %v2490 = vpop.f32.mrf.mxu0
      %v2491 = vadd.f32 0.0, %v2490
      %2492 = vmatmul.bf16.gmra.mxu0 %v2359
      %v2493 = vpop.f32.mrf.mxu0
      %v2494 = vadd.f32 0.0, %v2493
      %v2495 = vpop.f32.mrf.mxu0
      %v2496 = vadd.f32 0.0, %v2495
      %2497 = vmatmul.bf16.gmra.mxu0 %v2360
      %v2498 = vpop.f32.mrf.mxu0
      %v2499 = vadd.f32 0.0, %v2498
      %v2500 = vpop.f32.mrf.mxu0
      %v2501 = vadd.f32 0.0, %v2500
      %2502 = vmatmul.bf16.gmra.mxu0 %v2361
      %v2503 = vpop.f32.mrf.mxu0
      %v2504 = vadd.f32 0.0, %v2503
      %v2505 = vpop.f32.mrf.mxu0
      %v2506 = vadd.f32 0.0, %v2505
      %2507 = vmatmul.bf16.gmra.mxu0 %v2362
      %v2508 = vpop.f32.mrf.mxu0
      %v2509 = vadd.f32 0.0, %v2508
      %v2510 = vpop.f32.mrf.mxu0
      %v2511 = vadd.f32 0.0, %v2510
      %2512 = vmatmul.bf16.gmra.mxu0 %v2363
      %v2513 = vpop.f32.mrf.mxu0
      %v2514 = vadd.f32 0.0, %v2513
      %v2515 = vpop.f32.mrf.mxu0
      %v2516 = vadd.f32 0.0, %v2515
      %2517 = vdwg.mxu0
      %v2518 = vadd.f32 %v2252, %v2439
      %v2519 = vadd.f32 %v2253, %v2441
      %v2520 = vadd.f32 %v2254, %v2444
      %v2521 = vadd.f32 %v2255, %v2446
      %v2522 = vadd.f32 %v2256, %v2449
      %v2523 = vadd.f32 %v2257, %v2451
      %v2524 = vadd.f32 %v2258, %v2454
      %v2525 = vadd.f32 %v2259, %v2456
      %v2526 = vadd.f32 %v2260, %v2459
      %v2527 = vadd.f32 %v2261, %v2461
      %v2528 = vadd.f32 %v2262, %v2464
      %v2529 = vadd.f32 %v2263, %v2466
      %v2530 = vadd.f32 %v2264, %v2469
      %v2531 = vadd.f32 %v2265, %v2471
      %v2532 = vadd.f32 %v2266, %v2474
      %v2533 = vadd.f32 %v2267, %v2476
      %v2534 = vadd.f32 %v2268, %v2479
      %v2535 = vadd.f32 %v2269, %v2481
      %v2536 = vadd.f32 %v2270, %v2484
      %v2537 = vadd.f32 %v2271, %v2486
      %v2538 = vadd.f32 %v2272, %v2489
      %v2539 = vadd.f32 %v2273, %v2491
      %v2540 = vadd.f32 %v2274, %v2494
      %v2541 = vadd.f32 %v2275, %v2496
      %v2542 = vadd.f32 %v2276, %v2499
      %v2543 = vadd.f32 %v2277, %v2501
      %v2544 = vadd.f32 %v2278, %v2504
      %v2545 = vadd.f32 %v2279, %v2506
      %v2546 = vadd.f32 %v2280, %v2509
      %v2547 = vadd.f32 %v2281, %v2511
      %v2548 = vadd.f32 %v2282, %v2514
      %v2549 = vadd.f32 %v2283, %v2516
      %v2550 = vld [vmem:[#allocation2 + $0x20] sm:$0xff]
      %v2551 = vld [vmem:[#allocation2 + $0x28] sm:$0xff]
      %v2552 = vld [vmem:[#allocation2 + $0x30] sm:$0xff]
      %v2553 = vld [vmem:[#allocation2 + $0x38] sm:$0xff]
      %v2554 = vld [vmem:[#allocation2 + $0x40] sm:$0xff]
      %v2555 = vld [vmem:[#allocation2 + $0x48] sm:$0xff]
      %v2556 = vld [vmem:[#allocation2 + $0x50] sm:$0xff]
      %v2557 = vld [vmem:[#allocation2 + $0x58] sm:$0xff]
      %v2558 = vld [vmem:[#allocation2 + $0x60] sm:$0xff]
      %v2559 = vld [vmem:[#allocation2 + $0x68] sm:$0xff]
      %v2560 = vld [vmem:[#allocation2 + $0x70] sm:$0xff]
      %v2561 = vld [vmem:[#allocation2 + $0x78] sm:$0xff]
      %v2562 = vld [vmem:[#allocation2 + $0x80] sm:$0xff]
      %v2563 = vld [vmem:[#allocation2 + $0x88] sm:$0xff]
      %v2564 = vld [vmem:[#allocation2 + $0x90] sm:$0xff]
      %v2565 = vld [vmem:[#allocation2 + $0x98] sm:$0xff]
      %v2566 = vld [vmem:[#allocation2 + $0xa0] sm:$0xff]
      %v2567 = vld [vmem:[#allocation2 + $0xa8] sm:$0xff]
      %v2568 = vld [vmem:[#allocation2 + $0xb0] sm:$0xff]
      %v2569 = vld [vmem:[#allocation2 + $0xb8] sm:$0xff]
      %v2570 = vld [vmem:[#allocation2 + $0xc0] sm:$0xff]
      %v2571 = vld [vmem:[#allocation2 + $0xc8] sm:$0xff]
      %v2572 = vld [vmem:[#allocation2 + $0xd0] sm:$0xff]
      %v2573 = vld [vmem:[#allocation2 + $0xd8] sm:$0xff]
      %v2574 = vld [vmem:[#allocation2 + $0xe0] sm:$0xff]
      %v2575 = vld [vmem:[#allocation2 + $0xe8] sm:$0xff]
      %v2576 = vld [vmem:[#allocation2 + $0xf0] sm:$0xff]
      %v2577 = vld [vmem:[#allocation2 + $0xf8] sm:$0xff]
      %v2578 = vld [vmem:[#allocation2 + $0x100] sm:$0xff]
      %v2579 = vld [vmem:[#allocation2 + $0x108] sm:$0xff]
      %v2580 = vld [vmem:[#allocation2 + $0x110] sm:$0xff]
      %v2581 = vld [vmem:[#allocation2 + $0x118] sm:$0xff]
      %v2582 = vsel %vm1019, %v2550, 0.0
      %v2583 = vsel %vm1020, %v2551, 0.0
      %v2584 = vsel %vm1021, %v2552, 0.0
      %v2585 = vsel %vm1022, %v2553, 0.0
      %v2586 = vsel %vm1023, %v2554, 0.0
      %v2587 = vsel %vm1024, %v2555, 0.0
      %v2588 = vsel %vm1025, %v2556, 0.0
      %v2589 = vsel %vm1026, %v2557, 0.0
      %v2590 = vsel %vm1027, %v2558, 0.0
      %v2591 = vsel %vm1028, %v2559, 0.0
      %v2592 = vsel %vm1029, %v2560, 0.0
      %v2593 = vsel %vm1030, %v2561, 0.0
      %v2594 = vsel %vm1031, %v2562, 0.0
      %v2595 = vsel %vm1032, %v2563, 0.0
      %v2596 = vsel %vm1033, %v2564, 0.0
      %v2597 = vsel %vm1034, %v2565, 0.0
      %v2598 = vsel %vm1035, %v2566, 0.0
      %v2599 = vsel %vm1036, %v2567, 0.0
      %v2600 = vsel %vm1037, %v2568, 0.0
      %v2601 = vsel %vm1038, %v2569, 0.0
      %v2602 = vsel %vm1039, %v2570, 0.0
      %v2603 = vsel %vm1040, %v2571, 0.0
      %v2604 = vsel %vm1041, %v2572, 0.0
      %v2605 = vsel %vm1042, %v2573, 0.0
      %v2606 = vsel %vm1043, %v2574, 0.0
      %v2607 = vsel %vm1044, %v2575, 0.0
      %v2608 = vsel %vm1045, %v2576, 0.0
      %v2609 = vsel %vm1046, %v2577, 0.0
      %v2610 = vsel %vm1047, %v2578, 0.0
      %v2611 = vsel %vm1048, %v2579, 0.0
      %v2612 = vsel %vm1049, %v2580, 0.0
      %v2613 = vsel %vm1050, %v2581, 0.0
      %v2614 = vpack.c.bf16 %v2583, %v2582
      %v2615 = vpack.c.bf16 %v2585, %v2584
      %v2616 = vpack.c.bf16 %v2587, %v2586
      %v2617 = vpack.c.bf16 %v2589, %v2588
      %v2618 = vpack.c.bf16 %v2591, %v2590
      %v2619 = vpack.c.bf16 %v2593, %v2592
      %v2620 = vpack.c.bf16 %v2595, %v2594
      %v2621 = vpack.c.bf16 %v2597, %v2596
      %v2622 = vpack.c.bf16 %v2599, %v2598
      %v2623 = vpack.c.bf16 %v2601, %v2600
      %v2624 = vpack.c.bf16 %v2603, %v2602
      %v2625 = vpack.c.bf16 %v2605, %v2604
      %v2626 = vpack.c.bf16 %v2607, %v2606
      %v2627 = vpack.c.bf16 %v2609, %v2608
      %v2628 = vpack.c.bf16 %v2611, %v2610
      %v2629 = vpack.c.bf16 %v2613, %v2612
      %s2630 = scalar_lea.vmem %s2, 384
      %v2631 = vld [vmem:[%s2630] sm:$0xf]
      %v2632 = vld [vmem:[%s2630 + $0x4] sm:$0xf]
      %v2633 = vld [vmem:[%s2630 + $0x8] sm:$0xf]
      %v2634 = vld [vmem:[%s2630 + $0xc] sm:$0xf]
      %v2635 = vld [vmem:[%s2630 + $0x10] sm:$0xf]
      %v2636 = vld [vmem:[%s2630 + $0x14] sm:$0xf]
      %v2637 = vld [vmem:[%s2630 + $0x18] sm:$0xf]
      %v2638 = vld [vmem:[%s2630 + $0x1c] sm:$0xf]
      %v2639 = vld [vmem:[%s2630 + $0x20] sm:$0xf]
      %v2640 = vld [vmem:[%s2630 + $0x24] sm:$0xf]
      %v2641 = vld [vmem:[%s2630 + $0x28] sm:$0xf]
      %v2642 = vld [vmem:[%s2630 + $0x2c] sm:$0xf]
      %v2643 = vld [vmem:[%s2630 + $0x30] sm:$0xf]
      %v2644 = vld [vmem:[%s2630 + $0x34] sm:$0xf]
      %v2645 = vld [vmem:[%s2630 + $0x38] sm:$0xf]
      %v2646 = vld [vmem:[%s2630 + $0x3c] sm:$0xf]
      %v2663 = vunpack.c.l.b16 %v2631
      %v2664 = vunpack.c.l.b16 %v2632
      %v2665 = vunpack.c.l.b16 %v2633
      %v2666 = vunpack.c.l.b16 %v2634
      %v2667 = vunpack.c.l.b16 %v2635
      %v2668 = vunpack.c.l.b16 %v2636
      %v2669 = vunpack.c.l.b16 %v2637
      %v2670 = vunpack.c.l.b16 %v2638
      %v2671 = vunpack.c.l.b16 %v2639
      %v2672 = vunpack.c.l.b16 %v2640
      %v2673 = vunpack.c.l.b16 %v2641
      %v2674 = vunpack.c.l.b16 %v2642
      %v2675 = vunpack.c.l.b16 %v2643
      %v2676 = vunpack.c.l.b16 %v2644
      %v2677 = vunpack.c.l.b16 %v2645
      %v2678 = vunpack.c.l.b16 %v2646
      %v2679 = vpack.c.b16 %v2664, %v2663
      %v2680 = vpack.c.b16 %v2666, %v2665
      %v2681 = vpack.c.b16 %v2668, %v2667
      %v2682 = vpack.c.b16 %v2670, %v2669
      %v2683 = vpack.c.b16 %v2672, %v2671
      %v2684 = vpack.c.b16 %v2674, %v2673
      %v2685 = vpack.c.b16 %v2676, %v2675
      %v2686 = vpack.c.b16 %v2678, %v2677
      %2695 = vmatpush.bf16.msra.mxu0 %v2686
      %2696 = vmatpush.bf16.msra.mxu0 %v2685
      %2697 = vmatpush.bf16.msra.mxu0 %v2684
      %2698 = vmatpush.bf16.msra.mxu0 %v2683
      %2699 = vmatpush.bf16.msra.mxu0 %v2682
      %2700 = vmatpush.bf16.msra.mxu0 %v2681
      %2701 = vmatpush.bf16.msra.mxu0 %v2680
      %2702 = vmatpush.bf16.msra.mxu0 %v2679
      %2703 = vmatmul.bf16.gmra.mxu0 %v2614
      %v2704 = vpop.f32.mrf.mxu0
      %v2705 = vadd.f32 0.0, %v2704
      %v2706 = vpop.f32.mrf.mxu0
      %v2707 = vadd.f32 0.0, %v2706
      %2708 = vmatmul.bf16.gmra.mxu0 %v2615
      %v2709 = vpop.f32.mrf.mxu0
      %v2710 = vadd.f32 0.0, %v2709
      %v2711 = vpop.f32.mrf.mxu0
      %v2712 = vadd.f32 0.0, %v2711
      %2713 = vmatmul.bf16.gmra.mxu0 %v2616
      %v2714 = vpop.f32.mrf.mxu0
      %v2715 = vadd.f32 0.0, %v2714
      %v2716 = vpop.f32.mrf.mxu0
      %v2717 = vadd.f32 0.0, %v2716
      %2718 = vmatmul.bf16.gmra.mxu0 %v2617
      %v2719 = vpop.f32.mrf.mxu0
      %v2720 = vadd.f32 0.0, %v2719
      %v2721 = vpop.f32.mrf.mxu0
      %v2722 = vadd.f32 0.0, %v2721
      %2723 = vmatmul.bf16.gmra.mxu0 %v2618
      %v2724 = vpop.f32.mrf.mxu0
      %v2725 = vadd.f32 0.0, %v2724
      %v2726 = vpop.f32.mrf.mxu0
      %v2727 = vadd.f32 0.0, %v2726
      %2728 = vmatmul.bf16.gmra.mxu0 %v2619
      %v2729 = vpop.f32.mrf.mxu0
      %v2730 = vadd.f32 0.0, %v2729
      %v2731 = vpop.f32.mrf.mxu0
      %v2732 = vadd.f32 0.0, %v2731
      %2733 = vmatmul.bf16.gmra.mxu0 %v2620
      %v2734 = vpop.f32.mrf.mxu0
      %v2735 = vadd.f32 0.0, %v2734
      %v2736 = vpop.f32.mrf.mxu0
      %v2737 = vadd.f32 0.0, %v2736
      %2738 = vmatmul.bf16.gmra.mxu0 %v2621
      %v2739 = vpop.f32.mrf.mxu0
      %v2740 = vadd.f32 0.0, %v2739
      %v2741 = vpop.f32.mrf.mxu0
      %v2742 = vadd.f32 0.0, %v2741
      %2743 = vmatmul.bf16.gmra.mxu0 %v2622
      %v2744 = vpop.f32.mrf.mxu0
      %v2745 = vadd.f32 0.0, %v2744
      %v2746 = vpop.f32.mrf.mxu0
      %v2747 = vadd.f32 0.0, %v2746
      %2748 = vmatmul.bf16.gmra.mxu0 %v2623
      %v2749 = vpop.f32.mrf.mxu0
      %v2750 = vadd.f32 0.0, %v2749
      %v2751 = vpop.f32.mrf.mxu0
      %v2752 = vadd.f32 0.0, %v2751
      %2753 = vmatmul.bf16.gmra.mxu0 %v2624
      %v2754 = vpop.f32.mrf.mxu0
      %v2755 = vadd.f32 0.0, %v2754
      %v2756 = vpop.f32.mrf.mxu0
      %v2757 = vadd.f32 0.0, %v2756
      %2758 = vmatmul.bf16.gmra.mxu0 %v2625
      %v2759 = vpop.f32.mrf.mxu0
      %v2760 = vadd.f32 0.0, %v2759
      %v2761 = vpop.f32.mrf.mxu0
      %v2762 = vadd.f32 0.0, %v2761
      %2763 = vmatmul.bf16.gmra.mxu0 %v2626
      %v2764 = vpop.f32.mrf.mxu0
      %v2765 = vadd.f32 0.0, %v2764
      %v2766 = vpop.f32.mrf.mxu0
      %v2767 = vadd.f32 0.0, %v2766
      %2768 = vmatmul.bf16.gmra.mxu0 %v2627
      %v2769 = vpop.f32.mrf.mxu0
      %v2770 = vadd.f32 0.0, %v2769
      %v2771 = vpop.f32.mrf.mxu0
      %v2772 = vadd.f32 0.0, %v2771
      %2773 = vmatmul.bf16.gmra.mxu0 %v2628
      %v2774 = vpop.f32.mrf.mxu0
      %v2775 = vadd.f32 0.0, %v2774
      %v2776 = vpop.f32.mrf.mxu0
      %v2777 = vadd.f32 0.0, %v2776
      %2778 = vmatmul.bf16.gmra.mxu0 %v2629
      %v2779 = vpop.f32.mrf.mxu0
      %v2780 = vadd.f32 0.0, %v2779
      %v2781 = vpop.f32.mrf.mxu0
      %v2782 = vadd.f32 0.0, %v2781
      %2783 = vdwg.mxu0
      %v2784 = vadd.f32 %v2518, %v2705
      %v2785 = vadd.f32 %v2519, %v2707
      %v2786 = vadd.f32 %v2520, %v2710
      %v2787 = vadd.f32 %v2521, %v2712
      %v2788 = vadd.f32 %v2522, %v2715
      %v2789 = vadd.f32 %v2523, %v2717
      %v2790 = vadd.f32 %v2524, %v2720
      %v2791 = vadd.f32 %v2525, %v2722
      %v2792 = vadd.f32 %v2526, %v2725
      %v2793 = vadd.f32 %v2527, %v2727
      %v2794 = vadd.f32 %v2528, %v2730
      %v2795 = vadd.f32 %v2529, %v2732
      %v2796 = vadd.f32 %v2530, %v2735
      %v2797 = vadd.f32 %v2531, %v2737
      %v2798 = vadd.f32 %v2532, %v2740
      %v2799 = vadd.f32 %v2533, %v2742
      %v2800 = vadd.f32 %v2534, %v2745
      %v2801 = vadd.f32 %v2535, %v2747
      %v2802 = vadd.f32 %v2536, %v2750
      %v2803 = vadd.f32 %v2537, %v2752
      %v2804 = vadd.f32 %v2538, %v2755
      %v2805 = vadd.f32 %v2539, %v2757
      %v2806 = vadd.f32 %v2540, %v2760
      %v2807 = vadd.f32 %v2541, %v2762
      %v2808 = vadd.f32 %v2542, %v2765
      %v2809 = vadd.f32 %v2543, %v2767
      %v2810 = vadd.f32 %v2544, %v2770
      %v2811 = vadd.f32 %v2545, %v2772
      %v2812 = vadd.f32 %v2546, %v2775
      %v2813 = vadd.f32 %v2547, %v2777
      %v2814 = vadd.f32 %v2548, %v2780
      %v2815 = vadd.f32 %v2549, %v2782
      %v2816 = vld [vmem:[#allocation2 + $0x21] sm:$0xff]
      %v2817 = vld [vmem:[#allocation2 + $0x29] sm:$0xff]
      %v2818 = vld [vmem:[#allocation2 + $0x31] sm:$0xff]
      %v2819 = vld [vmem:[#allocation2 + $0x39] sm:$0xff]
      %v2820 = vld [vmem:[#allocation2 + $0x41] sm:$0xff]
      %v2821 = vld [vmem:[#allocation2 + $0x49] sm:$0xff]
      %v2822 = vld [vmem:[#allocation2 + $0x51] sm:$0xff]
      %v2823 = vld [vmem:[#allocation2 + $0x59] sm:$0xff]
      %v2824 = vld [vmem:[#allocation2 + $0x61] sm:$0xff]
      %v2825 = vld [vmem:[#allocation2 + $0x69] sm:$0xff]
      %v2826 = vld [vmem:[#allocation2 + $0x71] sm:$0xff]
      %v2827 = vld [vmem:[#allocation2 + $0x79] sm:$0xff]
      %v2828 = vld [vmem:[#allocation2 + $0x81] sm:$0xff]
      %v2829 = vld [vmem:[#allocation2 + $0x89] sm:$0xff]
      %v2830 = vld [vmem:[#allocation2 + $0x91] sm:$0xff]
      %v2831 = vld [vmem:[#allocation2 + $0x99] sm:$0xff]
      %v2832 = vld [vmem:[#allocation2 + $0xa1] sm:$0xff]
      %v2833 = vld [vmem:[#allocation2 + $0xa9] sm:$0xff]
      %v2834 = vld [vmem:[#allocation2 + $0xb1] sm:$0xff]
      %v2835 = vld [vmem:[#allocation2 + $0xb9] sm:$0xff]
      %v2836 = vld [vmem:[#allocation2 + $0xc1] sm:$0xff]
      %v2837 = vld [vmem:[#allocation2 + $0xc9] sm:$0xff]
      %v2838 = vld [vmem:[#allocation2 + $0xd1] sm:$0xff]
      %v2839 = vld [vmem:[#allocation2 + $0xd9] sm:$0xff]
      %v2840 = vld [vmem:[#allocation2 + $0xe1] sm:$0xff]
      %v2841 = vld [vmem:[#allocation2 + $0xe9] sm:$0xff]
      %v2842 = vld [vmem:[#allocation2 + $0xf1] sm:$0xff]
      %v2843 = vld [vmem:[#allocation2 + $0xf9] sm:$0xff]
      %v2844 = vld [vmem:[#allocation2 + $0x101] sm:$0xff]
      %v2845 = vld [vmem:[#allocation2 + $0x109] sm:$0xff]
      %v2846 = vld [vmem:[#allocation2 + $0x111] sm:$0xff]
      %v2847 = vld [vmem:[#allocation2 + $0x119] sm:$0xff]
      %v2848 = vpack.c.bf16 %v2817, %v2816
      %v2849 = vpack.c.bf16 %v2819, %v2818
      %v2850 = vpack.c.bf16 %v2821, %v2820
      %v2851 = vpack.c.bf16 %v2823, %v2822
      %v2852 = vpack.c.bf16 %v2825, %v2824
      %v2853 = vpack.c.bf16 %v2827, %v2826
      %v2854 = vpack.c.bf16 %v2829, %v2828
      %v2855 = vpack.c.bf16 %v2831, %v2830
      %v2856 = vpack.c.bf16 %v2833, %v2832
      %v2857 = vpack.c.bf16 %v2835, %v2834
      %v2858 = vpack.c.bf16 %v2837, %v2836
      %v2859 = vpack.c.bf16 %v2839, %v2838
      %v2860 = vpack.c.bf16 %v2841, %v2840
      %v2861 = vpack.c.bf16 %v2843, %v2842
      %v2862 = vpack.c.bf16 %v2845, %v2844
      %v2863 = vpack.c.bf16 %v2847, %v2846
      %s2864 = scalar_lea.vmem %s2, 448
      %v2865 = vld [vmem:[%s2864] sm:$0xf]
      %v2866 = vld [vmem:[%s2864 + $0x4] sm:$0xf]
      %v2867 = vld [vmem:[%s2864 + $0x8] sm:$0xf]
      %v2868 = vld [vmem:[%s2864 + $0xc] sm:$0xf]
      %v2869 = vld [vmem:[%s2864 + $0x10] sm:$0xf]
      %v2870 = vld [vmem:[%s2864 + $0x14] sm:$0xf]
      %v2871 = vld [vmem:[%s2864 + $0x18] sm:$0xf]
      %v2872 = vld [vmem:[%s2864 + $0x1c] sm:$0xf]
      %v2873 = vld [vmem:[%s2864 + $0x20] sm:$0xf]
      %v2874 = vld [vmem:[%s2864 + $0x24] sm:$0xf]
      %v2875 = vld [vmem:[%s2864 + $0x28] sm:$0xf]
      %v2876 = vld [vmem:[%s2864 + $0x2c] sm:$0xf]
      %v2877 = vld [vmem:[%s2864 + $0x30] sm:$0xf]
      %v2878 = vld [vmem:[%s2864 + $0x34] sm:$0xf]
      %v2879 = vld [vmem:[%s2864 + $0x38] sm:$0xf]
      %v2880 = vld [vmem:[%s2864 + $0x3c] sm:$0xf]
      %v2897 = vunpack.c.l.b16 %v2865
      %v2898 = vunpack.c.l.b16 %v2866
      %v2899 = vunpack.c.l.b16 %v2867
      %v2900 = vunpack.c.l.b16 %v2868
      %v2901 = vunpack.c.l.b16 %v2869
      %v2902 = vunpack.c.l.b16 %v2870
      %v2903 = vunpack.c.l.b16 %v2871
      %v2904 = vunpack.c.l.b16 %v2872
      %v2905 = vunpack.c.l.b16 %v2873
      %v2906 = vunpack.c.l.b16 %v2874
      %v2907 = vunpack.c.l.b16 %v2875
      %v2908 = vunpack.c.l.b16 %v2876
      %v2909 = vunpack.c.l.b16 %v2877
      %v2910 = vunpack.c.l.b16 %v2878
      %v2911 = vunpack.c.l.b16 %v2879
      %v2912 = vunpack.c.l.b16 %v2880
      %v2913 = vpack.c.b16 %v2898, %v2897
      %v2914 = vpack.c.b16 %v2900, %v2899
      %v2915 = vpack.c.b16 %v2902, %v2901
      %v2916 = vpack.c.b16 %v2904, %v2903
      %v2917 = vpack.c.b16 %v2906, %v2905
      %v2918 = vpack.c.b16 %v2908, %v2907
      %v2919 = vpack.c.b16 %v2910, %v2909
      %v2920 = vpack.c.b16 %v2912, %v2911
      %2929 = vmatpush.bf16.msra.mxu0 %v2920
      %2930 = vmatpush.bf16.msra.mxu0 %v2919
      %2931 = vmatpush.bf16.msra.mxu0 %v2918
      %2932 = vmatpush.bf16.msra.mxu0 %v2917
      %2933 = vmatpush.bf16.msra.mxu0 %v2916
      %2934 = vmatpush.bf16.msra.mxu0 %v2915
      %2935 = vmatpush.bf16.msra.mxu0 %v2914
      %2936 = vmatpush.bf16.msra.mxu0 %v2913
      %2937 = vmatmul.bf16.gmra.mxu0 %v2848
      %v2938 = vpop.f32.mrf.mxu0
      %v2939 = vadd.f32 0.0, %v2938
      %v2940 = vpop.f32.mrf.mxu0
      %v2941 = vadd.f32 0.0, %v2940
      %2942 = vmatmul.bf16.gmra.mxu0 %v2849
      %v2943 = vpop.f32.mrf.mxu0
      %v2944 = vadd.f32 0.0, %v2943
      %v2945 = vpop.f32.mrf.mxu0
      %v2946 = vadd.f32 0.0, %v2945
      %2947 = vmatmul.bf16.gmra.mxu0 %v2850
      %v2948 = vpop.f32.mrf.mxu0
      %v2949 = vadd.f32 0.0, %v2948
      %v2950 = vpop.f32.mrf.mxu0
      %v2951 = vadd.f32 0.0, %v2950
      %2952 = vmatmul.bf16.gmra.mxu0 %v2851
      %v2953 = vpop.f32.mrf.mxu0
      %v2954 = vadd.f32 0.0, %v2953
      %v2955 = vpop.f32.mrf.mxu0
      %v2956 = vadd.f32 0.0, %v2955
      %2957 = vmatmul.bf16.gmra.mxu0 %v2852
      %v2958 = vpop.f32.mrf.mxu0
      %v2959 = vadd.f32 0.0, %v2958
      %v2960 = vpop.f32.mrf.mxu0
      %v2961 = vadd.f32 0.0, %v2960
      %2962 = vmatmul.bf16.gmra.mxu0 %v2853
      %v2963 = vpop.f32.mrf.mxu0
      %v2964 = vadd.f32 0.0, %v2963
      %v2965 = vpop.f32.mrf.mxu0
      %v2966 = vadd.f32 0.0, %v2965
      %2967 = vmatmul.bf16.gmra.mxu0 %v2854
      %v2968 = vpop.f32.mrf.mxu0
      %v2969 = vadd.f32 0.0, %v2968
      %v2970 = vpop.f32.mrf.mxu0
      %v2971 = vadd.f32 0.0, %v2970
      %2972 = vmatmul.bf16.gmra.mxu0 %v2855
      %v2973 = vpop.f32.mrf.mxu0
      %v2974 = vadd.f32 0.0, %v2973
      %v2975 = vpop.f32.mrf.mxu0
      %v2976 = vadd.f32 0.0, %v2975
      %2977 = vmatmul.bf16.gmra.mxu0 %v2856
      %v2978 = vpop.f32.mrf.mxu0
      %v2979 = vadd.f32 0.0, %v2978
      %v2980 = vpop.f32.mrf.mxu0
      %v2981 = vadd.f32 0.0, %v2980
      %2982 = vmatmul.bf16.gmra.mxu0 %v2857
      %v2983 = vpop.f32.mrf.mxu0
      %v2984 = vadd.f32 0.0, %v2983
      %v2985 = vpop.f32.mrf.mxu0
      %v2986 = vadd.f32 0.0, %v2985
      %2987 = vmatmul.bf16.gmra.mxu0 %v2858
      %v2988 = vpop.f32.mrf.mxu0
      %v2989 = vadd.f32 0.0, %v2988
      %v2990 = vpop.f32.mrf.mxu0
      %v2991 = vadd.f32 0.0, %v2990
      %2992 = vmatmul.bf16.gmra.mxu0 %v2859
      %v2993 = vpop.f32.mrf.mxu0
      %v2994 = vadd.f32 0.0, %v2993
      %v2995 = vpop.f32.mrf.mxu0
      %v2996 = vadd.f32 0.0, %v2995
      %2997 = vmatmul.bf16.gmra.mxu0 %v2860
      %v2998 = vpop.f32.mrf.mxu0
      %v2999 = vadd.f32 0.0, %v2998
      %v3000 = vpop.f32.mrf.mxu0
      %v3001 = vadd.f32 0.0, %v3000
      %3002 = vmatmul.bf16.gmra.mxu0 %v2861
      %v3003 = vpop.f32.mrf.mxu0
      %v3004 = vadd.f32 0.0, %v3003
      %v3005 = vpop.f32.mrf.mxu0
      %v3006 = vadd.f32 0.0, %v3005
      %3007 = vmatmul.bf16.gmra.mxu0 %v2862
      %v3008 = vpop.f32.mrf.mxu0
      %v3009 = vadd.f32 0.0, %v3008
      %v3010 = vpop.f32.mrf.mxu0
      %v3011 = vadd.f32 0.0, %v3010
      %3012 = vmatmul.bf16.gmra.mxu0 %v2863
      %v3013 = vpop.f32.mrf.mxu0
      %v3014 = vadd.f32 0.0, %v3013
      %v3015 = vpop.f32.mrf.mxu0
      %v3016 = vadd.f32 0.0, %v3015
      %3017 = vdwg.mxu0
      %v3018 = vadd.f32 %v2784, %v2939
      %v3019 = vadd.f32 %v2785, %v2941
      %v3020 = vadd.f32 %v2786, %v2944
      %v3021 = vadd.f32 %v2787, %v2946
      %v3022 = vadd.f32 %v2788, %v2949
      %v3023 = vadd.f32 %v2789, %v2951
      %v3024 = vadd.f32 %v2790, %v2954
      %v3025 = vadd.f32 %v2791, %v2956
      %v3026 = vadd.f32 %v2792, %v2959
      %v3027 = vadd.f32 %v2793, %v2961
      %v3028 = vadd.f32 %v2794, %v2964
      %v3029 = vadd.f32 %v2795, %v2966
      %v3030 = vadd.f32 %v2796, %v2969
      %v3031 = vadd.f32 %v2797, %v2971
      %v3032 = vadd.f32 %v2798, %v2974
      %v3033 = vadd.f32 %v2799, %v2976
      %v3034 = vadd.f32 %v2800, %v2979
      %v3035 = vadd.f32 %v2801, %v2981
      %v3036 = vadd.f32 %v2802, %v2984
      %v3037 = vadd.f32 %v2803, %v2986
      %v3038 = vadd.f32 %v2804, %v2989
      %v3039 = vadd.f32 %v2805, %v2991
      %v3040 = vadd.f32 %v2806, %v2994
      %v3041 = vadd.f32 %v2807, %v2996
      %v3042 = vadd.f32 %v2808, %v2999
      %v3043 = vadd.f32 %v2809, %v3001
      %v3044 = vadd.f32 %v2810, %v3004
      %v3045 = vadd.f32 %v2811, %v3006
      %v3046 = vadd.f32 %v2812, %v3009
      %v3047 = vadd.f32 %v2813, %v3011
      %v3048 = vadd.f32 %v2814, %v3014
      %v3049 = vadd.f32 %v2815, %v3016
      %v3050 = vld [vmem:[#allocation2 + $0x22] sm:$0xff]
      %v3051 = vld [vmem:[#allocation2 + $0x2a] sm:$0xff]
      %v3052 = vld [vmem:[#allocation2 + $0x32] sm:$0xff]
      %v3053 = vld [vmem:[#allocation2 + $0x3a] sm:$0xff]
      %v3054 = vld [vmem:[#allocation2 + $0x42] sm:$0xff]
      %v3055 = vld [vmem:[#allocation2 + $0x4a] sm:$0xff]
      %v3056 = vld [vmem:[#allocation2 + $0x52] sm:$0xff]
      %v3057 = vld [vmem:[#allocation2 + $0x5a] sm:$0xff]
      %v3058 = vld [vmem:[#allocation2 + $0x62] sm:$0xff]
      %v3059 = vld [vmem:[#allocation2 + $0x6a] sm:$0xff]
      %v3060 = vld [vmem:[#allocation2 + $0x72] sm:$0xff]
      %v3061 = vld [vmem:[#allocation2 + $0x7a] sm:$0xff]
      %v3062 = vld [vmem:[#allocation2 + $0x82] sm:$0xff]
      %v3063 = vld [vmem:[#allocation2 + $0x8a] sm:$0xff]
      %v3064 = vld [vmem:[#allocation2 + $0x92] sm:$0xff]
      %v3065 = vld [vmem:[#allocation2 + $0x9a] sm:$0xff]
      %v3066 = vld [vmem:[#allocation2 + $0xa2] sm:$0xff]
      %v3067 = vld [vmem:[#allocation2 + $0xaa] sm:$0xff]
      %v3068 = vld [vmem:[#allocation2 + $0xb2] sm:$0xff]
      %v3069 = vld [vmem:[#allocation2 + $0xba] sm:$0xff]
      %v3070 = vld [vmem:[#allocation2 + $0xc2] sm:$0xff]
      %v3071 = vld [vmem:[#allocation2 + $0xca] sm:$0xff]
      %v3072 = vld [vmem:[#allocation2 + $0xd2] sm:$0xff]
      %v3073 = vld [vmem:[#allocation2 + $0xda] sm:$0xff]
      %v3074 = vld [vmem:[#allocation2 + $0xe2] sm:$0xff]
      %v3075 = vld [vmem:[#allocation2 + $0xea] sm:$0xff]
      %v3076 = vld [vmem:[#allocation2 + $0xf2] sm:$0xff]
      %v3077 = vld [vmem:[#allocation2 + $0xfa] sm:$0xff]
      %v3078 = vld [vmem:[#allocation2 + $0x102] sm:$0xff]
      %v3079 = vld [vmem:[#allocation2 + $0x10a] sm:$0xff]
      %v3080 = vld [vmem:[#allocation2 + $0x112] sm:$0xff]
      %v3081 = vld [vmem:[#allocation2 + $0x11a] sm:$0xff]
      %v3082 = vsel %vm1518, %v3050, 0.0
      %v3083 = vsel %vm1519, %v3051, 0.0
      %v3084 = vsel %vm1520, %v3052, 0.0
      %v3085 = vsel %vm1521, %v3053, 0.0
      %v3086 = vsel %vm1522, %v3054, 0.0
      %v3087 = vsel %vm1523, %v3055, 0.0
      %v3088 = vsel %vm1524, %v3056, 0.0
      %v3089 = vsel %vm1525, %v3057, 0.0
      %v3090 = vsel %vm1526, %v3058, 0.0
      %v3091 = vsel %vm1527, %v3059, 0.0
      %v3092 = vsel %vm1528, %v3060, 0.0
      %v3093 = vsel %vm1529, %v3061, 0.0
      %v3094 = vsel %vm1530, %v3062, 0.0
      %v3095 = vsel %vm1531, %v3063, 0.0
      %v3096 = vsel %vm1532, %v3064, 0.0
      %v3097 = vsel %vm1533, %v3065, 0.0
      %v3098 = vsel %vm1534, %v3066, 0.0
      %v3099 = vsel %vm1535, %v3067, 0.0
      %v3100 = vsel %vm1536, %v3068, 0.0
      %v3101 = vsel %vm1537, %v3069, 0.0
      %v3102 = vsel %vm1538, %v3070, 0.0
      %v3103 = vsel %vm1539, %v3071, 0.0
      %v3104 = vsel %vm1540, %v3072, 0.0
      %v3105 = vsel %vm1541, %v3073, 0.0
      %v3106 = vsel %vm1542, %v3074, 0.0
      %v3107 = vsel %vm1543, %v3075, 0.0
      %v3108 = vsel %vm1544, %v3076, 0.0
      %v3109 = vsel %vm1545, %v3077, 0.0
      %v3110 = vsel %vm1546, %v3078, 0.0
      %v3111 = vsel %vm1547, %v3079, 0.0
      %v3112 = vsel %vm1548, %v3080, 0.0
      %v3113 = vsel %vm1549, %v3081, 0.0
      %v3114 = vpack.c.bf16 %v3083, %v3082
      %v3115 = vpack.c.bf16 %v3085, %v3084
      %v3116 = vpack.c.bf16 %v3087, %v3086
      %v3117 = vpack.c.bf16 %v3089, %v3088
      %v3118 = vpack.c.bf16 %v3091, %v3090
      %v3119 = vpack.c.bf16 %v3093, %v3092
      %v3120 = vpack.c.bf16 %v3095, %v3094
      %v3121 = vpack.c.bf16 %v3097, %v3096
      %v3122 = vpack.c.bf16 %v3099, %v3098
      %v3123 = vpack.c.bf16 %v3101, %v3100
      %v3124 = vpack.c.bf16 %v3103, %v3102
      %v3125 = vpack.c.bf16 %v3105, %v3104
      %v3126 = vpack.c.bf16 %v3107, %v3106
      %v3127 = vpack.c.bf16 %v3109, %v3108
      %v3128 = vpack.c.bf16 %v3111, %v3110
      %v3129 = vpack.c.bf16 %v3113, %v3112
      %s3130 = scalar_lea.vmem %s2, 512
      %v3131 = vld [vmem:[%s3130] sm:$0xf]
      %v3132 = vld [vmem:[%s3130 + $0x4] sm:$0xf]
      %v3133 = vld [vmem:[%s3130 + $0x8] sm:$0xf]
      %v3134 = vld [vmem:[%s3130 + $0xc] sm:$0xf]
      %v3135 = vld [vmem:[%s3130 + $0x10] sm:$0xf]
      %v3136 = vld [vmem:[%s3130 + $0x14] sm:$0xf]
      %v3137 = vld [vmem:[%s3130 + $0x18] sm:$0xf]
      %v3138 = vld [vmem:[%s3130 + $0x1c] sm:$0xf]
      %v3139 = vld [vmem:[%s3130 + $0x20] sm:$0xf]
      %v3140 = vld [vmem:[%s3130 + $0x24] sm:$0xf]
      %v3141 = vld [vmem:[%s3130 + $0x28] sm:$0xf]
      %v3142 = vld [vmem:[%s3130 + $0x2c] sm:$0xf]
      %v3143 = vld [vmem:[%s3130 + $0x30] sm:$0xf]
      %v3144 = vld [vmem:[%s3130 + $0x34] sm:$0xf]
      %v3145 = vld [vmem:[%s3130 + $0x38] sm:$0xf]
      %v3146 = vld [vmem:[%s3130 + $0x3c] sm:$0xf]
      %v3163 = vunpack.c.l.b16 %v3131
      %v3164 = vunpack.c.l.b16 %v3132
      %v3165 = vunpack.c.l.b16 %v3133
      %v3166 = vunpack.c.l.b16 %v3134
      %v3167 = vunpack.c.l.b16 %v3135
      %v3168 = vunpack.c.l.b16 %v3136
      %v3169 = vunpack.c.l.b16 %v3137
      %v3170 = vunpack.c.l.b16 %v3138
      %v3171 = vunpack.c.l.b16 %v3139
      %v3172 = vunpack.c.l.b16 %v3140
      %v3173 = vunpack.c.l.b16 %v3141
      %v3174 = vunpack.c.l.b16 %v3142
      %v3175 = vunpack.c.l.b16 %v3143
      %v3176 = vunpack.c.l.b16 %v3144
      %v3177 = vunpack.c.l.b16 %v3145
      %v3178 = vunpack.c.l.b16 %v3146
      %v3179 = vpack.c.b16 %v3164, %v3163
      %v3180 = vpack.c.b16 %v3166, %v3165
      %v3181 = vpack.c.b16 %v3168, %v3167
      %v3182 = vpack.c.b16 %v3170, %v3169
      %v3183 = vpack.c.b16 %v3172, %v3171
      %v3184 = vpack.c.b16 %v3174, %v3173
      %v3185 = vpack.c.b16 %v3176, %v3175
      %v3186 = vpack.c.b16 %v3178, %v3177
      %3195 = vmatpush.bf16.msra.mxu0 %v3186
      %3196 = vmatpush.bf16.msra.mxu0 %v3185
      %3197 = vmatpush.bf16.msra.mxu0 %v3184
      %3198 = vmatpush.bf16.msra.mxu0 %v3183
      %3199 = vmatpush.bf16.msra.mxu0 %v3182
      %3200 = vmatpush.bf16.msra.mxu0 %v3181
      %3201 = vmatpush.bf16.msra.mxu0 %v3180
      %3202 = vmatpush.bf16.msra.mxu0 %v3179
      %3203 = vmatmul.bf16.gmra.mxu0 %v3114
      %v3204 = vpop.f32.mrf.mxu0
      %v3205 = vadd.f32 0.0, %v3204
      %v3206 = vpop.f32.mrf.mxu0
      %v3207 = vadd.f32 0.0, %v3206
      %3208 = vmatmul.bf16.gmra.mxu0 %v3115
      %v3209 = vpop.f32.mrf.mxu0
      %v3210 = vadd.f32 0.0, %v3209
      %v3211 = vpop.f32.mrf.mxu0
      %v3212 = vadd.f32 0.0, %v3211
      %3213 = vmatmul.bf16.gmra.mxu0 %v3116
      %v3214 = vpop.f32.mrf.mxu0
      %v3215 = vadd.f32 0.0, %v3214
      %v3216 = vpop.f32.mrf.mxu0
      %v3217 = vadd.f32 0.0, %v3216
      %3218 = vmatmul.bf16.gmra.mxu0 %v3117
      %v3219 = vpop.f32.mrf.mxu0
      %v3220 = vadd.f32 0.0, %v3219
      %v3221 = vpop.f32.mrf.mxu0
      %v3222 = vadd.f32 0.0, %v3221
      %3223 = vmatmul.bf16.gmra.mxu0 %v3118
      %v3224 = vpop.f32.mrf.mxu0
      %v3225 = vadd.f32 0.0, %v3224
      %v3226 = vpop.f32.mrf.mxu0
      %v3227 = vadd.f32 0.0, %v3226
      %3228 = vmatmul.bf16.gmra.mxu0 %v3119
      %v3229 = vpop.f32.mrf.mxu0
      %v3230 = vadd.f32 0.0, %v3229
      %v3231 = vpop.f32.mrf.mxu0
      %v3232 = vadd.f32 0.0, %v3231
      %3233 = vmatmul.bf16.gmra.mxu0 %v3120
      %v3234 = vpop.f32.mrf.mxu0
      %v3235 = vadd.f32 0.0, %v3234
      %v3236 = vpop.f32.mrf.mxu0
      %v3237 = vadd.f32 0.0, %v3236
      %3238 = vmatmul.bf16.gmra.mxu0 %v3121
      %v3239 = vpop.f32.mrf.mxu0
      %v3240 = vadd.f32 0.0, %v3239
      %v3241 = vpop.f32.mrf.mxu0
      %v3242 = vadd.f32 0.0, %v3241
      %3243 = vmatmul.bf16.gmra.mxu0 %v3122
      %v3244 = vpop.f32.mrf.mxu0
      %v3245 = vadd.f32 0.0, %v3244
      %v3246 = vpop.f32.mrf.mxu0
      %v3247 = vadd.f32 0.0, %v3246
      %3248 = vmatmul.bf16.gmra.mxu0 %v3123
      %v3249 = vpop.f32.mrf.mxu0
      %v3250 = vadd.f32 0.0, %v3249
      %v3251 = vpop.f32.mrf.mxu0
      %v3252 = vadd.f32 0.0, %v3251
      %3253 = vmatmul.bf16.gmra.mxu0 %v3124
      %v3254 = vpop.f32.mrf.mxu0
      %v3255 = vadd.f32 0.0, %v3254
      %v3256 = vpop.f32.mrf.mxu0
      %v3257 = vadd.f32 0.0, %v3256
      %3258 = vmatmul.bf16.gmra.mxu0 %v3125
      %v3259 = vpop.f32.mrf.mxu0
      %v3260 = vadd.f32 0.0, %v3259
      %v3261 = vpop.f32.mrf.mxu0
      %v3262 = vadd.f32 0.0, %v3261
      %3263 = vmatmul.bf16.gmra.mxu0 %v3126
      %v3264 = vpop.f32.mrf.mxu0
      %v3265 = vadd.f32 0.0, %v3264
      %v3266 = vpop.f32.mrf.mxu0
      %v3267 = vadd.f32 0.0, %v3266
      %3268 = vmatmul.bf16.gmra.mxu0 %v3127
      %v3269 = vpop.f32.mrf.mxu0
      %v3270 = vadd.f32 0.0, %v3269
      %v3271 = vpop.f32.mrf.mxu0
      %v3272 = vadd.f32 0.0, %v3271
      %3273 = vmatmul.bf16.gmra.mxu0 %v3128
      %v3274 = vpop.f32.mrf.mxu0
      %v3275 = vadd.f32 0.0, %v3274
      %v3276 = vpop.f32.mrf.mxu0
      %v3277 = vadd.f32 0.0, %v3276
      %3278 = vmatmul.bf16.gmra.mxu0 %v3129
      %v3279 = vpop.f32.mrf.mxu0
      %v3280 = vadd.f32 0.0, %v3279
      %v3281 = vpop.f32.mrf.mxu0
      %v3282 = vadd.f32 0.0, %v3281
      %3283 = vdwg.mxu0
      %v3284 = vadd.f32 %v3018, %v3205
      %v3285 = vadd.f32 %v3019, %v3207
      %v3286 = vadd.f32 %v3020, %v3210
      %v3287 = vadd.f32 %v3021, %v3212
      %v3288 = vadd.f32 %v3022, %v3215
      %v3289 = vadd.f32 %v3023, %v3217
      %v3290 = vadd.f32 %v3024, %v3220
      %v3291 = vadd.f32 %v3025, %v3222
      %v3292 = vadd.f32 %v3026, %v3225
      %v3293 = vadd.f32 %v3027, %v3227
      %v3294 = vadd.f32 %v3028, %v3230
      %v3295 = vadd.f32 %v3029, %v3232
      %v3296 = vadd.f32 %v3030, %v3235
      %v3297 = vadd.f32 %v3031, %v3237
      %v3298 = vadd.f32 %v3032, %v3240
      %v3299 = vadd.f32 %v3033, %v3242
      %v3300 = vadd.f32 %v3034, %v3245
      %v3301 = vadd.f32 %v3035, %v3247
      %v3302 = vadd.f32 %v3036, %v3250
      %v3303 = vadd.f32 %v3037, %v3252
      %v3304 = vadd.f32 %v3038, %v3255
      %v3305 = vadd.f32 %v3039, %v3257
      %v3306 = vadd.f32 %v3040, %v3260
      %v3307 = vadd.f32 %v3041, %v3262
      %v3308 = vadd.f32 %v3042, %v3265
      %v3309 = vadd.f32 %v3043, %v3267
      %v3310 = vadd.f32 %v3044, %v3270
      %v3311 = vadd.f32 %v3045, %v3272
      %v3312 = vadd.f32 %v3046, %v3275
      %v3313 = vadd.f32 %v3047, %v3277
      %v3314 = vadd.f32 %v3048, %v3280
      %v3315 = vadd.f32 %v3049, %v3282
      %v3316 = vld [vmem:[%s3] sm:$0x1]
      %v3318 = vperm.slane %v3316, 0
      %v3320 = vmul.f32 %v3284, %v3318
      %v3321 = vmul.f32 %v3285, %v3318
      %v3322 = vmul.f32 %v3286, %v3318
      %v3323 = vmul.f32 %v3287, %v3318
      %v3324 = vmul.f32 %v3288, %v3318
      %v3325 = vmul.f32 %v3289, %v3318
      %v3326 = vmul.f32 %v3290, %v3318
      %v3327 = vmul.f32 %v3291, %v3318
      %v3328 = vmul.f32 %v3292, %v3318
      %v3329 = vmul.f32 %v3293, %v3318
      %v3330 = vmul.f32 %v3294, %v3318
      %v3331 = vmul.f32 %v3295, %v3318
      %v3332 = vmul.f32 %v3296, %v3318
      %v3333 = vmul.f32 %v3297, %v3318
      %v3334 = vmul.f32 %v3298, %v3318
      %v3335 = vmul.f32 %v3299, %v3318
      %v3336 = vmul.f32 %v3300, %v3318
      %v3337 = vmul.f32 %v3301, %v3318
      %v3338 = vmul.f32 %v3302, %v3318
      %v3339 = vmul.f32 %v3303, %v3318
      %v3340 = vmul.f32 %v3304, %v3318
      %v3341 = vmul.f32 %v3305, %v3318
      %v3342 = vmul.f32 %v3306, %v3318
      %v3343 = vmul.f32 %v3307, %v3318
      %v3344 = vmul.f32 %v3308, %v3318
      %v3345 = vmul.f32 %v3309, %v3318
      %v3346 = vmul.f32 %v3310, %v3318
      %v3347 = vmul.f32 %v3311, %v3318
      %v3348 = vmul.f32 %v3312, %v3318
      %v3349 = vmul.f32 %v3313, %v3318
      %v3350 = vmul.f32 %v3314, %v3318
      %v3351 = vmul.f32 %v3315, %v3318
      %v3352 = vld [vmem:[%s4] sm:$0x1]
      %v3354 = vperm.slane %v3352, 0
      %v3356 = vadd.f32 %v3320, %v3354
      %v3357 = vadd.f32 %v3321, %v3354
      %v3358 = vadd.f32 %v3322, %v3354
      %v3359 = vadd.f32 %v3323, %v3354
      %v3360 = vadd.f32 %v3324, %v3354
      %v3361 = vadd.f32 %v3325, %v3354
      %v3362 = vadd.f32 %v3326, %v3354
      %v3363 = vadd.f32 %v3327, %v3354
      %v3364 = vadd.f32 %v3328, %v3354
      %v3365 = vadd.f32 %v3329, %v3354
      %v3366 = vadd.f32 %v3330, %v3354
      %v3367 = vadd.f32 %v3331, %v3354
      %v3368 = vadd.f32 %v3332, %v3354
      %v3369 = vadd.f32 %v3333, %v3354
      %v3370 = vadd.f32 %v3334, %v3354
      %v3371 = vadd.f32 %v3335, %v3354
      %v3372 = vadd.f32 %v3336, %v3354
      %v3373 = vadd.f32 %v3337, %v3354
      %v3374 = vadd.f32 %v3338, %v3354
      %v3375 = vadd.f32 %v3339, %v3354
      %v3376 = vadd.f32 %v3340, %v3354
      %v3377 = vadd.f32 %v3341, %v3354
      %v3378 = vadd.f32 %v3342, %v3354
      %v3379 = vadd.f32 %v3343, %v3354
      %v3380 = vadd.f32 %v3344, %v3354
      %v3381 = vadd.f32 %v3345, %v3354
      %v3382 = vadd.f32 %v3346, %v3354
      %v3383 = vadd.f32 %v3347, %v3354
      %v3384 = vadd.f32 %v3348, %v3354
      %v3385 = vadd.f32 %v3349, %v3354
      %v3386 = vadd.f32 %v3350, %v3354
      %v3387 = vadd.f32 %v3351, %v3354
      %v3388 = vmax.f32 %v3356, 0.0
      %v3389 = vmax.f32 %v3357, 0.0
      %v3390 = vmax.f32 %v3358, 0.0
      %v3391 = vmax.f32 %v3359, 0.0
      %v3392 = vmax.f32 %v3360, 0.0
      %v3393 = vmax.f32 %v3361, 0.0
      %v3394 = vmax.f32 %v3362, 0.0
      %v3395 = vmax.f32 %v3363, 0.0
      %v3396 = vmax.f32 %v3364, 0.0
      %v3397 = vmax.f32 %v3365, 0.0
      %v3398 = vmax.f32 %v3366, 0.0
      %v3399 = vmax.f32 %v3367, 0.0
      %v3400 = vmax.f32 %v3368, 0.0
      %v3401 = vmax.f32 %v3369, 0.0
      %v3402 = vmax.f32 %v3370, 0.0
      %v3403 = vmax.f32 %v3371, 0.0
      %v3404 = vmax.f32 %v3372, 0.0
      %v3405 = vmax.f32 %v3373, 0.0
      %v3406 = vmax.f32 %v3374, 0.0
      %v3407 = vmax.f32 %v3375, 0.0
      %v3408 = vmax.f32 %v3376, 0.0
      %v3409 = vmax.f32 %v3377, 0.0
      %v3410 = vmax.f32 %v3378, 0.0
      %v3411 = vmax.f32 %v3379, 0.0
      %v3412 = vmax.f32 %v3380, 0.0
      %v3413 = vmax.f32 %v3381, 0.0
      %v3414 = vmax.f32 %v3382, 0.0
      %v3415 = vmax.f32 %v3383, 0.0
      %v3416 = vmax.f32 %v3384, 0.0
      %v3417 = vmax.f32 %v3385, 0.0
      %v3418 = vmax.f32 %v3386, 0.0
      %v3419 = vmax.f32 %v3387, 0.0
      %v3420 = vpack.c.bf16 %v3388, %v3388
      %v3421 = vpack.c.bf16 %v3389, %v3389
      %v3422 = vpack.c.bf16 %v3390, %v3390
      %v3423 = vpack.c.bf16 %v3391, %v3391
      %v3424 = vpack.c.bf16 %v3392, %v3392
      %v3425 = vpack.c.bf16 %v3393, %v3393
      %v3426 = vpack.c.bf16 %v3394, %v3394
      %v3427 = vpack.c.bf16 %v3395, %v3395
      %v3428 = vpack.c.bf16 %v3396, %v3396
      %v3429 = vpack.c.bf16 %v3397, %v3397
      %v3430 = vpack.c.bf16 %v3398, %v3398
      %v3431 = vpack.c.bf16 %v3399, %v3399
      %v3432 = vpack.c.bf16 %v3400, %v3400
      %v3433 = vpack.c.bf16 %v3401, %v3401
      %v3434 = vpack.c.bf16 %v3402, %v3402
      %v3435 = vpack.c.bf16 %v3403, %v3403
      %v3436 = vpack.c.bf16 %v3404, %v3404
      %v3437 = vpack.c.bf16 %v3405, %v3405
      %v3438 = vpack.c.bf16 %v3406, %v3406
      %v3439 = vpack.c.bf16 %v3407, %v3407
      %v3440 = vpack.c.bf16 %v3408, %v3408
      %v3441 = vpack.c.bf16 %v3409, %v3409
      %v3442 = vpack.c.bf16 %v3410, %v3410
      %v3443 = vpack.c.bf16 %v3411, %v3411
      %v3444 = vpack.c.bf16 %v3412, %v3412
      %v3445 = vpack.c.bf16 %v3413, %v3413
      %v3446 = vpack.c.bf16 %v3414, %v3414
      %v3447 = vpack.c.bf16 %v3415, %v3415
      %v3448 = vpack.c.bf16 %v3416, %v3416
      %v3449 = vpack.c.bf16 %v3417, %v3417
      %v3450 = vpack.c.bf16 %v3418, %v3418
      %v3451 = vpack.c.bf16 %v3419, %v3419
      %vm3452 = vcmask 519168
      %3453 = vst.msk [vmem:[%s244] sm:$0xf] %vm3452, %v3420
      %3454 = vst.msk [vmem:[%s244 + $0x4] sm:$0xf] %vm3452, %v3421
      %3455 = vst.msk [vmem:[%s244 + $0x8] sm:$0xf] %vm3452, %v3422
      %3456 = vst.msk [vmem:[%s244 + $0xc] sm:$0xf] %vm3452, %v3423
      %3457 = vst.msk [vmem:[%s244 + $0x10] sm:$0xf] %vm3452, %v3424
      %3458 = vst.msk [vmem:[%s244 + $0x14] sm:$0xf] %vm3452, %v3425
      %3459 = vst.msk [vmem:[%s244 + $0x18] sm:$0xf] %vm3452, %v3426
      %3460 = vst.msk [vmem:[%s244 + $0x1c] sm:$0xf] %vm3452, %v3427
      %3461 = vst.msk [vmem:[%s244 + $0x20] sm:$0xf] %vm3452, %v3428
      %3462 = vst.msk [vmem:[%s244 + $0x24] sm:$0xf] %vm3452, %v3429
      %3463 = vst.msk [vmem:[%s244 + $0x28] sm:$0xf] %vm3452, %v3430
      %3464 = vst.msk [vmem:[%s244 + $0x2c] sm:$0xf] %vm3452, %v3431
      %3465 = vst.msk [vmem:[%s244 + $0x30] sm:$0xf] %vm3452, %v3432
      %3466 = vst.msk [vmem:[%s244 + $0x34] sm:$0xf] %vm3452, %v3433
      %3467 = vst.msk [vmem:[%s244 + $0x38] sm:$0xf] %vm3452, %v3434
      %3468 = vst.msk [vmem:[%s244 + $0x3c] sm:$0xf] %vm3452, %v3435
      %3469 = vst.msk [vmem:[%s244 + $0x40] sm:$0xf] %vm3452, %v3436
      %3470 = vst.msk [vmem:[%s244 + $0x44] sm:$0xf] %vm3452, %v3437
      %3471 = vst.msk [vmem:[%s244 + $0x48] sm:$0xf] %vm3452, %v3438
      %3472 = vst.msk [vmem:[%s244 + $0x4c] sm:$0xf] %vm3452, %v3439
      %3473 = vst.msk [vmem:[%s244 + $0x50] sm:$0xf] %vm3452, %v3440
      %3474 = vst.msk [vmem:[%s244 + $0x54] sm:$0xf] %vm3452, %v3441
      %3475 = vst.msk [vmem:[%s244 + $0x58] sm:$0xf] %vm3452, %v3442
      %3476 = vst.msk [vmem:[%s244 + $0x5c] sm:$0xf] %vm3452, %v3443
      %3477 = vst.msk [vmem:[%s244 + $0x60] sm:$0xf] %vm3452, %v3444
      %3478 = vst.msk [vmem:[%s244 + $0x64] sm:$0xf] %vm3452, %v3445
      %3479 = vst.msk [vmem:[%s244 + $0x68] sm:$0xf] %vm3452, %v3446
      %3480 = vst.msk [vmem:[%s244 + $0x6c] sm:$0xf] %vm3452, %v3447
      %3481 = vst.msk [vmem:[%s244 + $0x70] sm:$0xf] %vm3452, %v3448
      %3482 = vst.msk [vmem:[%s244 + $0x74] sm:$0xf] %vm3452, %v3449
      %3483 = vst.msk [vmem:[%s244 + $0x78] sm:$0xf] %vm3452, %v3450
      %3484 = vst.msk [vmem:[%s244 + $0x7c] sm:$0xf] %vm3452, %v3451
      %p3485 = scmp.lt.s32.totalorder %s16, 1
      %s3486 = scalar_select %p3485, %s16, 1
      %s3487 = smul.addr %s3486, 32
      %s3488 = smul.addr %s3487, 4
      %s3489 = scalar_lea.vmem %s5, %s3488
      // Predicated region
      $region41: #{up_pallas.4} parent=39 // pred_check
        %p3490 = pneg %p149
      $region42: #{up_pallas.4} parent=39 // pred_check_branch
        %3492 = sbr.rel (%p3490) target = $region44
      $region43: #{up_pallas.4} parent=39 // pred_region
        _
      $region44: #{up_pallas.4} parent=39 // pred_fallthru
        _
    $region40: #{up_pallas.4} parent=5 // pred_fallthru
      _
    %p3493 = scmp.le.s32.totalorder 2, %s11
    // Predicated region
    $region45: #{up_pallas.4} parent=5 // pred_check
      %p3494 = pneg %p3493
    $region46: #{up_pallas.4} parent=5 // pred_check_branch
      %3496 = sbr.rel (%p3494) target = $region48
    $region47: #{up_pallas.4} parent=5 // pred_region
      %s3497 = ssub.s32 %s11, 2
      // Predicated region
      $region49: #{up_pallas.4} parent=47 // pred_check
        %p3498 = pneg %p155
      $region50: #{up_pallas.4} parent=47 // pred_check_branch
        %3500 = sbr.rel (%p3498) target = $region52
      $region51: #{up_pallas.4} parent=47 // pred_region
        %p3501 = scmp.lt.s32.totalorder %s17, 1
        %s3502 = scalar_select %p3501, %s17, 1
        %s3503 = smul.addr %s3502, 32
        %s3504 = smul.addr %s3503, 4
        %s3505 = scalar_lea.vmem %s5, %s3504
      $region52: #{up_pallas.4} parent=47 // pred_fallthru
        _
    $region48: #{up_pallas.4} parent=5 // pred_fallthru
      _
  $region6: #{up_pallas.4} parent=0 // loop_footer
    %s15 = sadd.s32 1, %s11
  $region7: #{up_pallas.4} parent=0 // loop_footer_branch
    %10 = sbr.rel target = $region3
  $region8: #{up_pallas.4} parent=0 // loop_exit
    _

</llo_original>
